<compile_context>
chip_gen: v7x
topology: tpu7x:2x2x1
jax: 0.10.0
libtpu: 0.0.40
codegen_flags: <defaults>
</compile_context>

<pallas_src>
import numpy as np
import jax
import jax.numpy as jnp
from jax import lax
from jax.experimental import pallas as pl
from jax.experimental.pallas import tpu as pltpu

# ---- static dims implied by the PyTorch module ------------------------------
H_IN = W_IN = 98                  # input spatial size
C1_OUT, K1 = 8, 7
H1 = W1S = H_IN - K1 + 1          # 92  (conv1 'valid' output)
HP1 = WP1 = H1 // 2               # 46  (after 2x2 maxpool)
C2_OUT, C2_IN, K2 = 10, 8, 5
H2 = W2S = HP1 - K2 + 1           # 42  (conv2 'valid' output)
HP2 = WP2 = H2 // 2               # 21  (after 2x2 maxpool)
FC_IN = C2_OUT * HP2 * WP2        # 4410
FC_HID = 32

R_BLK = 14                        # grid_sample: output rows per inner step
N_BLK = H_IN // R_BLK             # 7
LW = R_BLK * W_IN                 # 1372 lanes per blocked output row-slab


# ---------------------------------------------------------------------------
# Parameter pre-processing (glue): band matrices turn 'valid' conv into a
# single matmul, selection matrices turn 2x2 maxpool into matmuls.
# ---------------------------------------------------------------------------
def make_band(w, w_in, w_out):
    """M[ky][ci*w_in + q, o*w_out + x] = w[o, ci, ky, q - x]  for 0 <= q-x < K."""
    cout, cin, k, _ = w.shape
    m = np.zeros((k, cin * w_in, cout * w_out), np.float32)
    for ky in range(k):
        for o in range(cout):
            for ci in range(cin):
                for x in range(w_out):
                    for kx in range(k):
                        m[ky, ci * w_in + x + kx, o * w_out + x] = w[o, ci, ky, kx]
    return m


def make_pool_mats(c, h_out, w_out):
    """Row/column selection matrices for 2x2 stride-2 maxpool on (h_out, c*w_out)."""
    hp, wp = h_out // 2, w_out // 2
    r0 = np.zeros((hp, h_out), np.float32)
    r1 = np.zeros((hp, h_out), np.float32)
    for p in range(hp):
        r0[p, 2 * p] = 1.0
        r1[p, 2 * p + 1] = 1.0
    c0 = np.zeros((c * w_out, c * wp), np.float32)
    c1 = np.zeros((c * w_out, c * wp), np.float32)
    for o in range(c):
        for q in range(wp):
            c0[o * w_out + 2 * q, o * wp + q] = 1.0
            c1[o * w_out + 2 * q + 1, o * wp + q] = 1.0
    return r0, r1, c0, c1


# ---------------------------------------------------------------------------
# Kernel 1: localization network  conv1 -> pool -> relu -> conv2 -> pool -> relu
# MXU matmuls run on bf16 operands with f32 accumulation.  Each conv is a
# single matmul (shifted row windows concatenated along the K axis).
# ---------------------------------------------------------------------------
def loc_kernel(x_ref, m1_ref, b1_ref, r1a_ref, r1b_ref, c1a_ref, c1b_ref,
               m2_ref, b2_ref, r2a_ref, r2b_ref, c2a_ref, c2b_ref, out_ref):
    img = x_ref[0].astype(jnp.bfloat16)                      # (98, 98)

    # conv1 (valid, k=7): concat 7 shifted row windows along K -> one matmul
    lhs1 = jnp.concatenate([img[ky:ky + H1, :] for ky in range(K1)], axis=1)
    conv1 = jnp.dot(lhs1, m1_ref[...],                        # (92,686)@(686,736)
                    preferred_element_type=jnp.float32)
    conv1 = (conv1 + b1_ref[...]).astype(jnp.bfloat16)        # (92, 736)

    # maxpool 2x2 stride 2 + relu: 2 row-selection matmuls + max, then 2
    # column-selection matmuls + max -> (46, 8*46)
    t0 = jnp.dot(r1a_ref[...], conv1, preferred_element_type=jnp.float32)
    t1 = jnp.dot(r1b_ref[...], conv1, preferred_element_type=jnp.float32)
    pr = jnp.maximum(t0, t1).astype(jnp.bfloat16)             # (46, 736)
    u0 = jnp.dot(pr, c1a_ref[...], preferred_element_type=jnp.float32)
    u1 = jnp.dot(pr, c1b_ref[...], preferred_element_type=jnp.float32)
    p1 = jnp.maximum(jnp.maximum(u0, u1), 0.0).astype(jnp.bfloat16)  # (46, 368)

    # conv2 (valid, k=5): concat 5 shifted row windows along K -> one matmul
    lhs2 = jnp.concatenate([p1[ky:ky + H2, :] for ky in range(K2)], axis=1)
    conv2 = jnp.dot(lhs2, m2_ref[...],                        # (42,1840)@(1840,420)
                    preferred_element_type=jnp.float32)
    conv2 = (conv2 + b2_ref[...]).astype(jnp.bfloat16)        # (42, 420)

    # maxpool 2x2 stride 2 + relu -> (21, 10*21)
    s0 = jnp.dot(r2a_ref[...], conv2, preferred_element_type=jnp.float32)
    s1 = jnp.dot(r2b_ref[...], conv2, preferred_element_type=jnp.float32)
    qr = jnp.maximum(s0, s1).astype(jnp.bfloat16)             # (21, 420)
    v0 = jnp.dot(qr, c2a_ref[...], preferred_element_type=jnp.float32)
    v1 = jnp.dot(qr, c2b_ref[...], preferred_element_type=jnp.float32)
    out_ref[0] = jnp.maximum(jnp.maximum(v0, v1), 0.0)        # (21, 210)


# ---------------------------------------------------------------------------
# Kernel 2: fc_loc  (Linear -> ReLU -> Linear), f32 (tiny), batched over images
# ---------------------------------------------------------------------------
def fc_kernel(xs_ref, w1_ref, b1_ref, w2_ref, b2_ref, out_ref):
    h = jnp.dot(xs_ref[...], w1_ref[...], preferred_element_type=jnp.float32)
    h = jnp.maximum(h + b1_ref[...], 0.0)
    out_ref[...] = (jnp.dot(h, w2_ref[...], preferred_element_type=jnp.float32)
                    + b2_ref[...])


# ---------------------------------------------------------------------------
# Kernel 3: affine_grid + grid_sample (bilinear, zeros padding, align_corners=False)
# Blocked over R_BLK=14 output rows per step: one (98,98)@(98,1372) matmul,
# one elementwise multiply + sublane reduction, one lane-dense 1372-lane store.
# All loop-invariant index math is hoisted out of the (unrolled) block loop.
# ---------------------------------------------------------------------------
def sample_kernel(theta_ref, x_ref, out_ref):
    n = pl.program_id(0)
    t00 = theta_ref[n, 0]
    t01 = theta_ref[n, 1]
    t02 = theta_ref[n, 2]
    t10 = theta_ref[n, 3]
    t11 = theta_ref[n, 4]
    t12 = theta_ref[n, 5]

    img = x_ref[0]                                            # (98, 98) f32

    # ---- loop-invariant index math (built once per image) -------------------
    # blocked lane l -> (r = l // W, x = l % W) built without integer division
    lane = lax.broadcasted_iota(jnp.int32, (1, LW), 1).astype(jnp.float32)
    r_of_l = jnp.floor((lane + 0.5) * (1.0 / W_IN))           # 0..R_BLK-1
    x_of_l = lane - r_of_l * W_IN                             # 0..W_IN-1 (exact)
    xn = (2.0 * x_of_l + 1.0) * (1.0 / W_IN) - 1.0            # (1, LW)
    gx_base = t00 * xn + t02
    gy_base = t10 * xn + t12
    # one source row/col index slab reused for both weight matrices (H == W)
    rowf = lax.broadcasted_iota(jnp.int32, (H_IN, LW), 0).astype(jnp.float32)

    # ---- 7 blocks of 14 output rows, statically unrolled ---------------------
    for blk in range(N_BLK):
        yrow = jnp.float32(blk * R_BLK) + r_of_l
        yn = (2.0 * yrow + 1.0) * (1.0 / H_IN) - 1.0
        gx = gx_base + t01 * yn
        gy = gy_base + t11 * yn
        ix = ((gx + 1.0) * W_IN - 1.0) * 0.5                  # source col coord
        iy = ((gy + 1.0) * H_IN - 1.0) * 0.5                  # source row coord
        # arithmetic bilinear hat weights: max(0, 1 - |idx - coord|).
        # Taps outside [0, 97] get weight 0 -> zeros padding, exactly as the
        # previous compare/select construction (align_corners=False).
        wxm = jnp.maximum(1.0 - jnp.abs(rowf - ix), 0.0)      # (W_IN, LW)
        wym = jnp.maximum(1.0 - jnp.abs(rowf - iy), 0.0)      # (H_IN, LW)
        g = jnp.dot(img, wxm, preferred_element_type=jnp.float32)   # (H_IN, LW)
        zsum = jnp.sum(wym * g, axis=0, keepdims=True)              # (1, LW)
        out_ref[0, pl.ds(blk, 1), :] = zsum                   # lane-dense store


# ---------------------------------------------------------------------------
# Wrappers
# ---------------------------------------------------------------------------
def localization_features(x_img, params):
    n = x_img.shape[0]
    consts = params["consts"]
    const_specs = [pl.BlockSpec(c.shape, lambda i, nd=c.ndim: (0,) * nd)
                   for c in consts]
    # returns (n, 21, 210) slabs in (h, c*21+w) order; the (c,h,w) flatten
    # permutation is folded into the fc1 weights at init time.
    return pl.pallas_call(
        loc_kernel,
        out_shape=jax.ShapeDtypeStruct((n, HP2, C2_OUT * WP2), jnp.float32),
        grid=(n,),
        in_specs=[pl.BlockSpec((1, H_IN, W_IN), lambda i: (i, 0, 0))] + const_specs,
        out_specs=pl.BlockSpec((1, HP2, C2_OUT * WP2), lambda i: (i, 0, 0)),
        compiler_params=pltpu.CompilerParams(
            dimension_semantics=("parallel",),
            vmem_limit_bytes=32 * 1024 * 1024),
    )(x_img, *consts)


def fc_loc(xs, params):
    n = xs.shape[0]
    return pl.pallas_call(
        fc_kernel,
        out_shape=jax.ShapeDtypeStruct((n, 6), jnp.float32),
    )(xs, params["w_fc1_t"], params["b_fc1_row"],
      params["w_fc2_t"], params["b_fc2_row"])


def grid_sample_affine(x_img, theta_flat):
    n = x_img.shape[0]
    out = pl.pallas_call(
        sample_kernel,
        out_shape=jax.ShapeDtypeStruct((n, N_BLK, LW), jnp.float32),
        grid=(n,),
        in_specs=[pl.BlockSpec(memory_space=pltpu.MemorySpace.SMEM),
                  pl.BlockSpec((1, H_IN, W_IN), lambda i: (i, 0, 0))],
        out_specs=pl.BlockSpec((1, N_BLK, LW), lambda i: (i, 0, 0)),
        compiler_params=pltpu.CompilerParams(
            dimension_semantics=("parallel",),
            vmem_limit_bytes=32 * 1024 * 1024),
    )(theta_flat, x_img)
    # (n, 7, 1372) -> (n, 98, 98): row = blk*14 + r, contiguous reshape (free)
    return out.reshape(n, H_IN, W_IN)


def stn_forward(x, params):
    n = x.shape[0]
    x_img = x[:, 0, :, :]                                    # squeeze C=1
    loc = localization_features(x_img, params)               # (n, 21, 210)
    xs = loc.reshape(n, FC_IN)                               # contiguous, free
    theta_flat = fc_loc(xs, params)
    theta = theta_flat.reshape(n, 2, 3)
    x_t = grid_sample_affine(x_img, theta_flat)
    return x_t.reshape(x.shape), theta


# ---------------------------------------------------------------------------
# Deterministic parameter init (synthetic, mirrors the nn.Module shapes)
# ---------------------------------------------------------------------------
def init_params(key):
    ks = jax.random.split(key, 6)
    w_conv1 = jax.random.normal(ks[0], (C1_OUT, 1, K1, K1), jnp.float32) * 0.1
    b_conv1 = jax.random.normal(ks[1], (C1_OUT,), jnp.float32) * 0.1
    w_conv2 = jax.random.normal(ks[2], (C2_OUT, C2_IN, K2, K2), jnp.float32) * 0.05
    b_conv2 = jax.random.normal(ks[3], (C2_OUT,), jnp.float32) * 0.1
    w_fc1 = jax.random.normal(ks[4], (FC_HID, FC_IN), jnp.float32) * 0.01
    b_fc1 = jax.random.normal(ks[5], (FC_HID,), jnp.float32) * 0.01
    w_fc2 = jnp.zeros((6, FC_HID), jnp.float32)               # as in the module
    b_fc2 = jnp.array([1., 0., 0., 0., 1., 0.], jnp.float32)  # identity transform

    # band matrices stacked along K so each conv is ONE matmul in the kernel
    m1 = make_band(np.asarray(w_conv1), W_IN, W1S)             # (7, 98, 736)
    m1 = m1.reshape(K1 * W_IN, C1_OUT * W1S)                   # (686, 736)
    m2 = make_band(np.asarray(w_conv2), WP1, W2S)              # (5, 368, 420)
    m2 = m2.reshape(K2 * C2_IN * WP1, C2_OUT * W2S)            # (1840, 420)
    b1row = np.repeat(np.asarray(b_conv1), W1S)[None, :].astype(np.float32)
    b2row = np.repeat(np.asarray(b_conv2), W2S)[None, :].astype(np.float32)
    r1a, r1b, c1a, c1b = make_pool_mats(C1_OUT, H1, W1S)
    r2a, r2b, c2a, c2b = make_pool_mats(C2_OUT, H2, W2S)

    # matmul constants in bf16 (selection mats are exact 0/1); biases stay f32
    consts = [
        jnp.asarray(m1, jnp.bfloat16), jnp.asarray(b1row, jnp.float32),
        jnp.asarray(r1a, jnp.bfloat16), jnp.asarray(r1b, jnp.bfloat16),
        jnp.asarray(c1a, jnp.bfloat16), jnp.asarray(c1b, jnp.bfloat16),
        jnp.asarray(m2, jnp.bfloat16), jnp.asarray(b2row, jnp.float32),
        jnp.asarray(r2a, jnp.bfloat16), jnp.asarray(r2b, jnp.bfloat16),
        jnp.asarray(c2a, jnp.bfloat16), jnp.asarray(c2b, jnp.bfloat16),
    ]

    # fold the loc (h, c, w) feature order into the PyTorch-ordered fc1 weights:
    # W'[h*210 + c*21 + w, j] = w_fc1[j, c*441 + h*21 + w]
    w_fc1_t = jnp.transpose(
        w_fc1.reshape(FC_HID, C2_OUT, HP2, WP2), (2, 1, 3, 0)
    ).reshape(FC_IN, FC_HID)

    return dict(
        consts=consts,
        w_fc1_t=w_fc1_t, b_fc1_row=b_fc1[None, :],
        w_fc2_t=w_fc2.T, b_fc2_row=b_fc2[None, :],
        raw=dict(w_conv1=w_conv1, b_conv1=b_conv1,
                 w_conv2=w_conv2, b_conv2=b_conv2),
    )


def reference_localization(x, p):
    dn = ("NCHW", "OIHW", "NCHW")
    y = lax.conv_general_dilated(x, p["raw"]["w_conv1"], (1, 1), "VALID",
                                 dimension_numbers=dn,
                                 precision=lax.Precision.HIGHEST)
    y = y + p["raw"]["b_conv1"][None, :, None, None]
    y = lax.reduce_window(y, -jnp.inf, lax.max, (1, 1, 2, 2), (1, 1, 2, 2), "VALID")
    y = jnp.maximum(y, 0.0)
    y = lax.conv_general_dilated(y, p["raw"]["w_conv2"], (1, 1), "VALID",
                                 dimension_numbers=dn,
                                 precision=lax.Precision.HIGHEST)
    y = y + p["raw"]["b_conv2"][None, :, None, None]
    y = lax.reduce_window(y, -jnp.inf, lax.max, (1, 1, 2, 2), (1, 1, 2, 2), "VALID")
    y = jnp.maximum(y, 0.0)
    return y                                                  # (N, 10, 21, 21)


if __name__ == "__main__":
    key = jax.random.PRNGKey(0)
    pkey, xkey = jax.random.split(key)
    params = init_params(pkey)
    x = jax.random.normal(xkey, (2, 1, H_IN, W_IN), jnp.float32)

    x_t, theta = stn_forward(x, params)
    (x_t, theta) = jax.block_until_ready((x_t, theta))

    assert x_t.shape == (2, 1, H_IN, W_IN)
    assert theta.shape == (2, 2, 3)

    # fc_loc[2] has zero weight + identity bias -> theta must be the identity map.
    ident = jnp.broadcast_to(jnp.array([[1., 0., 0.], [0., 1., 0.]]), (2, 2, 3))
    assert jnp.allclose(theta, ident, atol=1e-5)

    # identity theta -> grid_sample(affine_grid(...)) reproduces the input.
    assert jnp.allclose(x_t, x, atol=1e-3)

    # localization path vs plain-JAX reference (bf16 matmuls, f32 accumulation).
    loc = localization_features(x[:, 0, :, :], params)        # (2, 21, 210)
    loc_nchw = loc.reshape(2, HP2, C2_OUT, WP2).transpose(0, 2, 1, 3)
    ref = reference_localization(x, params)
    assert jnp.allclose(loc_nchw, ref, atol=3e-2, rtol=3e-2)

    print("KERNEL_OK")
</pallas_src>

<mosaic_0001>
module attributes {stable_mosaic.version = 11 : i64} {
  func.func @loc_kernel(%arg0: i32, %arg1: memref<1x98x98xf32, #tpu.memory_space<vmem>>, %arg2: memref<686x736xbf16, #tpu.memory_space<vmem>>, %arg3: memref<1x736xf32, #tpu.memory_space<vmem>>, %arg4: memref<46x92xbf16, #tpu.memory_space<vmem>>, %arg5: memref<46x92xbf16, #tpu.memory_space<vmem>>, %arg6: memref<736x368xbf16, #tpu.memory_space<vmem>>, %arg7: memref<736x368xbf16, #tpu.memory_space<vmem>>, %arg8: memref<1840x420xbf16, #tpu.memory_space<vmem>>, %arg9: memref<1x420xf32, #tpu.memory_space<vmem>>, %arg10: memref<21x42xbf16, #tpu.memory_space<vmem>>, %arg11: memref<21x42xbf16, #tpu.memory_space<vmem>>, %arg12: memref<420x210xbf16, #tpu.memory_space<vmem>>, %arg13: memref<420x210xbf16, #tpu.memory_space<vmem>>, %arg14: memref<1x21x210xf32, #tpu.memory_space<vmem>>) attributes {dimension_semantics = [#tpu.dimension_semantics<parallel>], iteration_bounds = array<i64: 2>, scalar_prefetch = 0 : i64, scratch_operands = 0 : i64, tpu.core_type = #tpu.core_type<tc>, window_params = [{transform_indices = @transform_0, window_bounds = array<i64: 1, 98, 98>}, {pipeline_mode = #tpu.pipeline_mode<synchronous>, transform_indices = @transform_1, window_bounds = array<i64: 686, 736>}, {pipeline_mode = #tpu.pipeline_mode<synchronous>, transform_indices = @transform_2, window_bounds = array<i64: 1, 736>}, {pipeline_mode = #tpu.pipeline_mode<synchronous>, transform_indices = @transform_3, window_bounds = array<i64: 46, 92>}, {pipeline_mode = #tpu.pipeline_mode<synchronous>, transform_indices = @transform_4, window_bounds = array<i64: 46, 92>}, {pipeline_mode = #tpu.pipeline_mode<synchronous>, transform_indices = @transform_5, window_bounds = array<i64: 736, 368>}, {pipeline_mode = #tpu.pipeline_mode<synchronous>, transform_indices = @transform_6, window_bounds = array<i64: 736, 368>}, {pipeline_mode = #tpu.pipeline_mode<synchronous>, transform_indices = @transform_7, window_bounds = array<i64: 1840, 420>}, {pipeline_mode = #tpu.pipeline_mode<synchronous>, transform_indices = @transform_8, window_bounds = array<i64: 1, 420>}, {pipeline_mode = #tpu.pipeline_mode<synchronous>, transform_indices = @transform_9, window_bounds = array<i64: 21, 42>}, {pipeline_mode = #tpu.pipeline_mode<synchronous>, transform_indices = @transform_10, window_bounds = array<i64: 21, 42>}, {pipeline_mode = #tpu.pipeline_mode<synchronous>, transform_indices = @transform_11, window_bounds = array<i64: 420, 210>}, {pipeline_mode = #tpu.pipeline_mode<synchronous>, transform_indices = @transform_12, window_bounds = array<i64: 420, 210>}, {transform_indices = @transform_13, window_bounds = array<i64: 1, 21, 210>}]} {
    %c0 = arith.constant 0 : index
    %c0_0 = arith.constant 0 : index
    %c0_1 = arith.constant 0 : index
    %0 = vector.load %arg1[%c0, %c0_0, %c0_1] : memref<1x98x98xf32, #tpu.memory_space<vmem>>, vector<1x98x98xf32>
    %1 = vector.shape_cast %0 : vector<1x98x98xf32> to vector<98x98xf32>
    %2 = arith.truncf %1 : vector<98x98xf32> to vector<98x98xbf16>
    %3 = vector.extract_strided_slice %2 {offsets = [0, 0], sizes = [92, 98], strides = [1, 1]} : vector<98x98xbf16> to vector<92x98xbf16>
    %4 = vector.extract_strided_slice %2 {offsets = [1, 0], sizes = [92, 98], strides = [1, 1]} : vector<98x98xbf16> to vector<92x98xbf16>
    %5 = vector.extract_strided_slice %2 {offsets = [2, 0], sizes = [92, 98], strides = [1, 1]} : vector<98x98xbf16> to vector<92x98xbf16>
    %6 = vector.extract_strided_slice %2 {offsets = [3, 0], sizes = [92, 98], strides = [1, 1]} : vector<98x98xbf16> to vector<92x98xbf16>
    %7 = vector.extract_strided_slice %2 {offsets = [4, 0], sizes = [92, 98], strides = [1, 1]} : vector<98x98xbf16> to vector<92x98xbf16>
    %8 = vector.extract_strided_slice %2 {offsets = [5, 0], sizes = [92, 98], strides = [1, 1]} : vector<98x98xbf16> to vector<92x98xbf16>
    %9 = vector.extract_strided_slice %2 {offsets = [6, 0], sizes = [92, 98], strides = [1, 1]} : vector<98x98xbf16> to vector<92x98xbf16>
    %10 = tpu.concatenate %3, %4, %5, %6, %7, %8, %9 in 1 : vector<92x98xbf16>, vector<92x98xbf16>, vector<92x98xbf16>, vector<92x98xbf16>, vector<92x98xbf16>, vector<92x98xbf16>, vector<92x98xbf16> -> vector<92x686xbf16>
    %c0_2 = arith.constant 0 : index
    %c0_3 = arith.constant 0 : index
    %11 = vector.load %arg2[%c0_2, %c0_3] : memref<686x736xbf16, #tpu.memory_space<vmem>>, vector<686x736xbf16>
    %cst = arith.constant dense<0.000000e+00> : vector<92x736xf32>
    %12 = tpu.matmul %10, %11, %cst {dimension_numbers = #tpu.dot_dimension_numbers<[1], [0], [0], [1], [0, 0, 1, 1], [], []>} : vector<92x686xbf16>, vector<686x736xbf16>, vector<92x736xf32> -> vector<92x736xf32>
    %c0_4 = arith.constant 0 : index
    %c0_5 = arith.constant 0 : index
    %13 = vector.load %arg3[%c0_4, %c0_5] : memref<1x736xf32, #tpu.memory_space<vmem>>, vector<1x736xf32>
    %14 = vector.broadcast %13 : vector<1x736xf32> to vector<92x736xf32>
    %15 = arith.addf %12, %14 : vector<92x736xf32>
    %16 = arith.truncf %15 : vector<92x736xf32> to vector<92x736xbf16>
    %c0_6 = arith.constant 0 : index
    %c0_7 = arith.constant 0 : index
    %17 = vector.load %arg4[%c0_6, %c0_7] : memref<46x92xbf16, #tpu.memory_space<vmem>>, vector<46x92xbf16>
    %cst_8 = arith.constant dense<0.000000e+00> : vector<46x736xf32>
    %18 = tpu.matmul %17, %16, %cst_8 {dimension_numbers = #tpu.dot_dimension_numbers<[1], [0], [0], [1], [0, 0, 1, 1], [], []>} : vector<46x92xbf16>, vector<92x736xbf16>, vector<46x736xf32> -> vector<46x736xf32>
    %c0_9 = arith.constant 0 : index
    %c0_10 = arith.constant 0 : index
    %19 = vector.load %arg5[%c0_9, %c0_10] : memref<46x92xbf16, #tpu.memory_space<vmem>>, vector<46x92xbf16>
    %cst_11 = arith.constant dense<0.000000e+00> : vector<46x736xf32>
    %20 = tpu.matmul %19, %16, %cst_11 {dimension_numbers = #tpu.dot_dimension_numbers<[1], [0], [0], [1], [0, 0, 1, 1], [], []>} : vector<46x92xbf16>, vector<92x736xbf16>, vector<46x736xf32> -> vector<46x736xf32>
    %21 = arith.maximumf %18, %20 : vector<46x736xf32>
    %22 = arith.truncf %21 : vector<46x736xf32> to vector<46x736xbf16>
    %c0_12 = arith.constant 0 : index
    %c0_13 = arith.constant 0 : index
    %23 = vector.load %arg6[%c0_12, %c0_13] : memref<736x368xbf16, #tpu.memory_space<vmem>>, vector<736x368xbf16>
    %cst_14 = arith.constant dense<0.000000e+00> : vector<46x368xf32>
    %24 = tpu.matmul %22, %23, %cst_14 {dimension_numbers = #tpu.dot_dimension_numbers<[1], [0], [0], [1], [0, 0, 1, 1], [], []>} : vector<46x736xbf16>, vector<736x368xbf16>, vector<46x368xf32> -> vector<46x368xf32>
    %c0_15 = arith.constant 0 : index
    %c0_16 = arith.constant 0 : index
    %25 = vector.load %arg7[%c0_15, %c0_16] : memref<736x368xbf16, #tpu.memory_space<vmem>>, vector<736x368xbf16>
    %cst_17 = arith.constant dense<0.000000e+00> : vector<46x368xf32>
    %26 = tpu.matmul %22, %25, %cst_17 {dimension_numbers = #tpu.dot_dimension_numbers<[1], [0], [0], [1], [0, 0, 1, 1], [], []>} : vector<46x736xbf16>, vector<736x368xbf16>, vector<46x368xf32> -> vector<46x368xf32>
    %27 = arith.maximumf %24, %26 : vector<46x368xf32>
    %cst_18 = arith.constant 0.000000e+00 : f32
    %28 = vector.broadcast %cst_18 : f32 to vector<46x368xf32>
    %29 = arith.maximumf %27, %28 : vector<46x368xf32>
    %30 = arith.truncf %29 : vector<46x368xf32> to vector<46x368xbf16>
    %31 = vector.extract_strided_slice %30 {offsets = [0, 0], sizes = [42, 368], strides = [1, 1]} : vector<46x368xbf16> to vector<42x368xbf16>
    %32 = vector.extract_strided_slice %30 {offsets = [1, 0], sizes = [42, 368], strides = [1, 1]} : vector<46x368xbf16> to vector<42x368xbf16>
    %33 = vector.extract_strided_slice %30 {offsets = [2, 0], sizes = [42, 368], strides = [1, 1]} : vector<46x368xbf16> to vector<42x368xbf16>
    %34 = vector.extract_strided_slice %30 {offsets = [3, 0], sizes = [42, 368], strides = [1, 1]} : vector<46x368xbf16> to vector<42x368xbf16>
    %35 = vector.extract_strided_slice %30 {offsets = [4, 0], sizes = [42, 368], strides = [1, 1]} : vector<46x368xbf16> to vector<42x368xbf16>
    %36 = tpu.concatenate %31, %32, %33, %34, %35 in 1 : vector<42x368xbf16>, vector<42x368xbf16>, vector<42x368xbf16>, vector<42x368xbf16>, vector<42x368xbf16> -> vector<42x1840xbf16>
    %c0_19 = arith.constant 0 : index
    %c0_20 = arith.constant 0 : index
    %37 = vector.load %arg8[%c0_19, %c0_20] : memref<1840x420xbf16, #tpu.memory_space<vmem>>, vector<1840x420xbf16>
    %cst_21 = arith.constant dense<0.000000e+00> : vector<42x420xf32>
    %38 = tpu.matmul %36, %37, %cst_21 {dimension_numbers = #tpu.dot_dimension_numbers<[1], [0], [0], [1], [0, 0, 1, 1], [], []>} : vector<42x1840xbf16>, vector<1840x420xbf16>, vector<42x420xf32> -> vector<42x420xf32>
    %c0_22 = arith.constant 0 : index
    %c0_23 = arith.constant 0 : index
    %39 = vector.load %arg9[%c0_22, %c0_23] : memref<1x420xf32, #tpu.memory_space<vmem>>, vector<1x420xf32>
    %40 = vector.broadcast %39 : vector<1x420xf32> to vector<42x420xf32>
    %41 = arith.addf %38, %40 : vector<42x420xf32>
    %42 = arith.truncf %41 : vector<42x420xf32> to vector<42x420xbf16>
    %c0_24 = arith.constant 0 : index
    %c0_25 = arith.constant 0 : index
    %43 = vector.load %arg10[%c0_24, %c0_25] : memref<21x42xbf16, #tpu.memory_space<vmem>>, vector<21x42xbf16>
    %cst_26 = arith.constant dense<0.000000e+00> : vector<21x420xf32>
    %44 = tpu.matmul %43, %42, %cst_26 {dimension_numbers = #tpu.dot_dimension_numbers<[1], [0], [0], [1], [0, 0, 1, 1], [], []>} : vector<21x42xbf16>, vector<42x420xbf16>, vector<21x420xf32> -> vector<21x420xf32>
    %c0_27 = arith.constant 0 : index
    %c0_28 = arith.constant 0 : index
    %45 = vector.load %arg11[%c0_27, %c0_28] : memref<21x42xbf16, #tpu.memory_space<vmem>>, vector<21x42xbf16>
    %cst_29 = arith.constant dense<0.000000e+00> : vector<21x420xf32>
    %46 = tpu.matmul %45, %42, %cst_29 {dimension_numbers = #tpu.dot_dimension_numbers<[1], [0], [0], [1], [0, 0, 1, 1], [], []>} : vector<21x42xbf16>, vector<42x420xbf16>, vector<21x420xf32> -> vector<21x420xf32>
    %47 = arith.maximumf %44, %46 : vector<21x420xf32>
    %48 = arith.truncf %47 : vector<21x420xf32> to vector<21x420xbf16>
    %c0_30 = arith.constant 0 : index
    %c0_31 = arith.constant 0 : index
    %49 = vector.load %arg12[%c0_30, %c0_31] : memref<420x210xbf16, #tpu.memory_space<vmem>>, vector<420x210xbf16>
    %cst_32 = arith.constant dense<0.000000e+00> : vector<21x210xf32>
    %50 = tpu.matmul %48, %49, %cst_32 {dimension_numbers = #tpu.dot_dimension_numbers<[1], [0], [0], [1], [0, 0, 1, 1], [], []>} : vector<21x420xbf16>, vector<420x210xbf16>, vector<21x210xf32> -> vector<21x210xf32>
    %c0_33 = arith.constant 0 : index
    %c0_34 = arith.constant 0 : index
    %51 = vector.load %arg13[%c0_33, %c0_34] : memref<420x210xbf16, #tpu.memory_space<vmem>>, vector<420x210xbf16>
    %cst_35 = arith.constant dense<0.000000e+00> : vector<21x210xf32>
    %52 = tpu.matmul %48, %51, %cst_35 {dimension_numbers = #tpu.dot_dimension_numbers<[1], [0], [0], [1], [0, 0, 1, 1], [], []>} : vector<21x420xbf16>, vector<420x210xbf16>, vector<21x210xf32> -> vector<21x210xf32>
    %53 = arith.maximumf %50, %52 : vector<21x210xf32>
    %cst_36 = arith.constant 0.000000e+00 : f32
    %54 = vector.broadcast %cst_36 : f32 to vector<21x210xf32>
    %55 = arith.maximumf %53, %54 : vector<21x210xf32>
    %c0_37 = arith.constant 0 : index
    %c0_38 = arith.constant 0 : index
    %c0_39 = arith.constant 0 : index
    %56 = vector.load %arg14[%c0_37, %c0_38, %c0_39] : memref<1x21x210xf32, #tpu.memory_space<vmem>>, vector<1x21x210xf32>
    %57 = vector.shape_cast %56 : vector<1x21x210xf32> to vector<21x210xf32>
    %58 = vector.shape_cast %55 : vector<21x210xf32> to vector<1x21x210xf32>
    tpu.vector_store %arg14[%c0_37, %c0_38, %c0_39], %58 {strides = array<i32>} : memref<1x21x210xf32, #tpu.memory_space<vmem>>, vector<1x21x210xf32>,
    return
  }
  func.func @transform_0(%arg0: i32) -> (i32, i32, i32) {
    %c0_i32 = arith.constant 0 : i32
    %c0_i32_0 = arith.constant 0 : i32
    %c0_i32_1 = arith.constant 0 : i32
    return %arg0, %c0_i32, %c0_i32_0 : i32, i32, i32
  }
  func.func @transform_1(%arg0: i32) -> (i32, i32) {
    %c0_i32 = arith.constant 0 : i32
    %c0_i32_0 = arith.constant 0 : i32
    %c0_i32_1 = arith.constant 0 : i32
    return %c0_i32, %c0_i32_0 : i32, i32
  }
  func.func @transform_2(%arg0: i32) -> (i32, i32) {
    %c0_i32 = arith.constant 0 : i32
    %c0_i32_0 = arith.constant 0 : i32
    %c0_i32_1 = arith.constant 0 : i32
    return %c0_i32, %c0_i32_0 : i32, i32
  }
  func.func @transform_3(%arg0: i32) -> (i32, i32) {
    %c0_i32 = arith.constant 0 : i32
    %c0_i32_0 = arith.constant 0 : i32
    %c0_i32_1 = arith.constant 0 : i32
    return %c0_i32, %c0_i32_0 : i32, i32
  }
  func.func @transform_4(%arg0: i32) -> (i32, i32) {
    %c0_i32 = arith.constant 0 : i32
    %c0_i32_0 = arith.constant 0 : i32
    %c0_i32_1 = arith.constant 0 : i32
    return %c0_i32, %c0_i32_0 : i32, i32
  }
  func.func @transform_5(%arg0: i32) -> (i32, i32) {
    %c0_i32 = arith.constant 0 : i32
    %c0_i32_0 = arith.constant 0 : i32
    %c0_i32_1 = arith.constant 0 : i32
    return %c0_i32, %c0_i32_0 : i32, i32
  }
  func.func @transform_6(%arg0: i32) -> (i32, i32) {
    %c0_i32 = arith.constant 0 : i32
    %c0_i32_0 = arith.constant 0 : i32
    %c0_i32_1 = arith.constant 0 : i32
    return %c0_i32, %c0_i32_0 : i32, i32
  }
  func.func @transform_7(%arg0: i32) -> (i32, i32) {
    %c0_i32 = arith.constant 0 : i32
    %c0_i32_0 = arith.constant 0 : i32
    %c0_i32_1 = arith.constant 0 : i32
    return %c0_i32, %c0_i32_0 : i32, i32
  }
  func.func @transform_8(%arg0: i32) -> (i32, i32) {
    %c0_i32 = arith.constant 0 : i32
    %c0_i32_0 = arith.constant 0 : i32
    %c0_i32_1 = arith.constant 0 : i32
    return %c0_i32, %c0_i32_0 : i32, i32
  }
  func.func @transform_9(%arg0: i32) -> (i32, i32) {
    %c0_i32 = arith.constant 0 : i32
    %c0_i32_0 = arith.constant 0 : i32
    %c0_i32_1 = arith.constant 0 : i32
    return %c0_i32, %c0_i32_0 : i32, i32
  }
  func.func @transform_10(%arg0: i32) -> (i32, i32) {
    %c0_i32 = arith.constant 0 : i32
    %c0_i32_0 = arith.constant 0 : i32
    %c0_i32_1 = arith.constant 0 : i32
    return %c0_i32, %c0_i32_0 : i32, i32
  }
  func.func @transform_11(%arg0: i32) -> (i32, i32) {
    %c0_i32 = arith.constant 0 : i32
    %c0_i32_0 = arith.constant 0 : i32
    %c0_i32_1 = arith.constant 0 : i32
    return %c0_i32, %c0_i32_0 : i32, i32
  }
  func.func @transform_12(%arg0: i32) -> (i32, i32) {
    %c0_i32 = arith.constant 0 : i32
    %c0_i32_0 = arith.constant 0 : i32
    %c0_i32_1 = arith.constant 0 : i32
    return %c0_i32, %c0_i32_0 : i32, i32
  }
  func.func @transform_13(%arg0: i32) -> (i32, i32, i32) {
    %c0_i32 = arith.constant 0 : i32
    %c0_i32_0 = arith.constant 0 : i32
    %c0_i32_1 = arith.constant 0 : i32
    return %arg0, %c0_i32, %c0_i32_0 : i32, i32, i32
  }
}

</mosaic_0001>

<llo_original>
// kernel: tpu_custom_call.1
$region0: #{tpu_custom_call.1}
  #allocation0 [shape = 'u32[]', space=smem, size = 0x4, offset = 0x4, fixed_abs, tag = 'smem constant byte address 0x4 - core index']
  #allocation1 [shape = 'u32[144,128]{1,0:T(1,128)}', space=vmem, size = 0x12000, scoped, tag = 'internal scratch']
  %s0 = inlined_call_operand.vmem [shape: f32[2,98,98], index: 0, kind: input, shape index: {}]
  %s1 = inlined_call_operand.vmem [shape: bf16[686,736], index: 1, kind: input, shape index: {}]
  %s2 = inlined_call_operand.vmem [shape: f32[1,736], index: 2, kind: input, shape index: {}]
  %s3 = inlined_call_operand.vmem [shape: bf16[46,92], index: 3, kind: input, shape index: {}]
  %s4 = inlined_call_operand.vmem [shape: bf16[46,92], index: 4, kind: input, shape index: {}]
  %s5 = inlined_call_operand.vmem [shape: bf16[736,368], index: 5, kind: input, shape index: {}]
  %s6 = inlined_call_operand.vmem [shape: bf16[736,368], index: 6, kind: input, shape index: {}]
  %s7 = inlined_call_operand.vmem [shape: bf16[1840,420], index: 7, kind: input, shape index: {}]
  %s8 = inlined_call_operand.vmem [shape: f32[1,420], index: 8, kind: input, shape index: {}]
  %s9 = inlined_call_operand.vmem [shape: bf16[21,42], index: 9, kind: input, shape index: {}]
  %s10 = inlined_call_operand.vmem [shape: bf16[21,42], index: 10, kind: input, shape index: {}]
  %s11 = inlined_call_operand.vmem [shape: bf16[420,210], index: 11, kind: input, shape index: {}]
  %s12 = inlined_call_operand.vmem [shape: bf16[420,210], index: 12, kind: input, shape index: {}]
  %s13 = inlined_call_operand.vmem [shape: f32[2,21,210], index: 13, kind: output, shape index: {}]
  %s14 = sld [smem:[#allocation0]]
  $region85: #{tpu_custom_call.1} parent=0
    _
  %s16 = ssub.s32 1, %s14
  %s17 = scalar_select 0, %s16, %s14
  loop: start=0, step=1, limit=4
  $region2: #{tpu_custom_call.1} parent=0 // loop_pre_header
    _
  $region3: #{tpu_custom_call.1} parent=0 // loop_header
    %s19 = sphi 0, %s23
    %p20 = scmp.ge.s32.totalorder %s19, 4
    %s29 = sphi 0, %s31
    %s32 = sphi 0, %s29
    %s33 = sphi 0, %s32
    %s49 = sphi 0, %s33
    %s53 = sphi 0, %s53
    %s55 = sphi 0, %s53
    %s56 = sphi 0, %s55
    %s70 = sphi 0, %s56
    %s74 = sphi 0, %s74
    %s76 = sphi 0, %s74
    %s77 = sphi 0, %s76
    %s91 = sphi 0, %s77
    %s95 = sphi 0, %s95
    %s97 = sphi 0, %s95
    %s98 = sphi 0, %s97
    %s112 = sphi 0, %s98
    %s116 = sphi 0, %s116
    %s118 = sphi 0, %s116
    %s119 = sphi 0, %s118
    %s133 = sphi 0, %s119
    %s137 = sphi 0, %s137
    %s139 = sphi 0, %s137
    %s140 = sphi 0, %s139
    %s154 = sphi 0, %s140
    %s158 = sphi 0, %s158
    %s160 = sphi 0, %s158
    %s161 = sphi 0, %s160
    %s175 = sphi 0, %s161
    %s179 = sphi 0, %s179
    %s181 = sphi 0, %s179
    %s182 = sphi 0, %s181
    %s196 = sphi 0, %s182
    %s200 = sphi 0, %s200
    %s202 = sphi 0, %s200
    %s203 = sphi 0, %s202
    %s217 = sphi 0, %s203
    %s221 = sphi 0, %s221
    %s223 = sphi 0, %s221
    %s224 = sphi 0, %s223
    %s238 = sphi 0, %s224
    %s242 = sphi 0, %s242
    %s244 = sphi 0, %s242
    %s245 = sphi 0, %s244
    %s259 = sphi 0, %s245
    %s263 = sphi 0, %s263
    %s265 = sphi 0, %s263
    %s266 = sphi 0, %s265
    %s280 = sphi 0, %s266
    %s284 = sphi 0, %s284
    %s286 = sphi 0, %s284
    %s287 = sphi 0, %s286
    %s301 = sphi 0, %s287
    %s307 = sphi 0, %s309
    %s310 = sphi 0, %s307
    %s311 = sphi 0, %s310
    %s327 = sphi 0, %s311
  $region4: #{tpu_custom_call.1} parent=0 // loop_header_branch
    %22 = sbr.rel (%p20) target = $region8
  $region5: #{tpu_custom_call.1} parent=0 // loop_body
    %s24 = ssub.s32 %s19, 1
    %s25 = ssub.s32 %s19, 2
    %s26 = sadd.s32 %s19, 1
    %s27 = ssub.s32 %s19, %s26
    %p28 = scmp.eq.s32.totalorder %s27, 0
    %s30 = sadd.s32 %s29, 1
    %s31 = scalar_select %p28, %s29, %s30
    %p34 = pneg %p28
    %p35 = scmp.eq.s32.totalorder %s19, 1
    %p36 = por %p34, %p35
    %p37 = scmp.ne.s32.totalorder %s29, %s32
    %p38 = scmp.eq.s32.totalorder %s19, 0
    %p39 = por %p37, %p38
    %p40 = scmp.ne.s32.totalorder %s29, %s32
    %p41 = scmp.eq.s32.totalorder %s24, 1
    %p42 = por %p40, %p41
    %p43 = scmp.ne.s32.totalorder %s32, %s33
    %p44 = scmp.eq.s32.totalorder %s24, 0
    %p45 = por %p43, %p44
    %p46 = scmp.ne.s32.totalorder %s32, %s33
    %p47 = scmp.eq.s32.totalorder %s25, 1
    %p48 = por %p46, %p47
    %p50 = scmp.ne.s32.totalorder %s33, %s49
    %p51 = scmp.eq.s32.totalorder %s25, 0
    %p52 = por %p50, %p51
    %s54 = sadd.s32 %s53, 1
    %p57 = scmp.eq.s32.totalorder %s19, 1
    %p58 = scmp.ne.s32.totalorder %s53, %s55
    %p59 = scmp.eq.s32.totalorder %s19, 0
    %p60 = por %p58, %p59
    %p61 = scmp.ne.s32.totalorder %s53, %s55
    %p62 = scmp.eq.s32.totalorder %s24, 1
    %p63 = por %p61, %p62
    %p64 = scmp.ne.s32.totalorder %s55, %s56
    %p65 = scmp.eq.s32.totalorder %s24, 0
    %p66 = por %p64, %p65
    %p67 = scmp.ne.s32.totalorder %s55, %s56
    %p68 = scmp.eq.s32.totalorder %s25, 1
    %p69 = por %p67, %p68
    %p71 = scmp.ne.s32.totalorder %s56, %s70
    %p72 = scmp.eq.s32.totalorder %s25, 0
    %p73 = por %p71, %p72
    %s75 = sadd.s32 %s74, 1
    %p78 = scmp.eq.s32.totalorder %s19, 1
    %p79 = scmp.ne.s32.totalorder %s74, %s76
    %p80 = scmp.eq.s32.totalorder %s19, 0
    %p81 = por %p79, %p80
    %p82 = scmp.ne.s32.totalorder %s74, %s76
    %p83 = scmp.eq.s32.totalorder %s24, 1
    %p84 = por %p82, %p83
    %p85 = scmp.ne.s32.totalorder %s76, %s77
    %p86 = scmp.eq.s32.totalorder %s24, 0
    %p87 = por %p85, %p86
    %p88 = scmp.ne.s32.totalorder %s76, %s77
    %p89 = scmp.eq.s32.totalorder %s25, 1
    %p90 = por %p88, %p89
    %p92 = scmp.ne.s32.totalorder %s77, %s91
    %p93 = scmp.eq.s32.totalorder %s25, 0
    %p94 = por %p92, %p93
    %s96 = sadd.s32 %s95, 1
    %p99 = scmp.eq.s32.totalorder %s19, 1
    %p100 = scmp.ne.s32.totalorder %s95, %s97
    %p101 = scmp.eq.s32.totalorder %s19, 0
    %p102 = por %p100, %p101
    %p103 = scmp.ne.s32.totalorder %s95, %s97
    %p104 = scmp.eq.s32.totalorder %s24, 1
    %p105 = por %p103, %p104
    %p106 = scmp.ne.s32.totalorder %s97, %s98
    %p107 = scmp.eq.s32.totalorder %s24, 0
    %p108 = por %p106, %p107
    %p109 = scmp.ne.s32.totalorder %s97, %s98
    %p110 = scmp.eq.s32.totalorder %s25, 1
    %p111 = por %p109, %p110
    %p113 = scmp.ne.s32.totalorder %s98, %s112
    %p114 = scmp.eq.s32.totalorder %s25, 0
    %p115 = por %p113, %p114
    %s117 = sadd.s32 %s116, 1
    %p120 = scmp.eq.s32.totalorder %s19, 1
    %p121 = scmp.ne.s32.totalorder %s116, %s118
    %p122 = scmp.eq.s32.totalorder %s19, 0
    %p123 = por %p121, %p122
    %p124 = scmp.ne.s32.totalorder %s116, %s118
    %p125 = scmp.eq.s32.totalorder %s24, 1
    %p126 = por %p124, %p125
    %p127 = scmp.ne.s32.totalorder %s118, %s119
    %p128 = scmp.eq.s32.totalorder %s24, 0
    %p129 = por %p127, %p128
    %p130 = scmp.ne.s32.totalorder %s118, %s119
    %p131 = scmp.eq.s32.totalorder %s25, 1
    %p132 = por %p130, %p131
    %p134 = scmp.ne.s32.totalorder %s119, %s133
    %p135 = scmp.eq.s32.totalorder %s25, 0
    %p136 = por %p134, %p135
    %s138 = sadd.s32 %s137, 1
    %p141 = scmp.eq.s32.totalorder %s19, 1
    %p142 = scmp.ne.s32.totalorder %s137, %s139
    %p143 = scmp.eq.s32.totalorder %s19, 0
    %p144 = por %p142, %p143
    %p145 = scmp.ne.s32.totalorder %s137, %s139
    %p146 = scmp.eq.s32.totalorder %s24, 1
    %p147 = por %p145, %p146
    %p148 = scmp.ne.s32.totalorder %s139, %s140
    %p149 = scmp.eq.s32.totalorder %s24, 0
    %p150 = por %p148, %p149
    %p151 = scmp.ne.s32.totalorder %s139, %s140
    %p152 = scmp.eq.s32.totalorder %s25, 1
    %p153 = por %p151, %p152
    %p155 = scmp.ne.s32.totalorder %s140, %s154
    %p156 = scmp.eq.s32.totalorder %s25, 0
    %p157 = por %p155, %p156
    %s159 = sadd.s32 %s158, 1
    %p162 = scmp.eq.s32.totalorder %s19, 1
    %p163 = scmp.ne.s32.totalorder %s158, %s160
    %p164 = scmp.eq.s32.totalorder %s19, 0
    %p165 = por %p163, %p164
    %p166 = scmp.ne.s32.totalorder %s158, %s160
    %p167 = scmp.eq.s32.totalorder %s24, 1
    %p168 = por %p166, %p167
    %p169 = scmp.ne.s32.totalorder %s160, %s161
    %p170 = scmp.eq.s32.totalorder %s24, 0
    %p171 = por %p169, %p170
    %p172 = scmp.ne.s32.totalorder %s160, %s161
    %p173 = scmp.eq.s32.totalorder %s25, 1
    %p174 = por %p172, %p173
    %p176 = scmp.ne.s32.totalorder %s161, %s175
    %p177 = scmp.eq.s32.totalorder %s25, 0
    %p178 = por %p176, %p177
    %s180 = sadd.s32 %s179, 1
    %p183 = scmp.eq.s32.totalorder %s19, 1
    %p184 = scmp.ne.s32.totalorder %s179, %s181
    %p185 = scmp.eq.s32.totalorder %s19, 0
    %p186 = por %p184, %p185
    %p187 = scmp.ne.s32.totalorder %s179, %s181
    %p188 = scmp.eq.s32.totalorder %s24, 1
    %p189 = por %p187, %p188
    %p190 = scmp.ne.s32.totalorder %s181, %s182
    %p191 = scmp.eq.s32.totalorder %s24, 0
    %p192 = por %p190, %p191
    %p193 = scmp.ne.s32.totalorder %s181, %s182
    %p194 = scmp.eq.s32.totalorder %s25, 1
    %p195 = por %p193, %p194
    %p197 = scmp.ne.s32.totalorder %s182, %s196
    %p198 = scmp.eq.s32.totalorder %s25, 0
    %p199 = por %p197, %p198
    %s201 = sadd.s32 %s200, 1
    %p204 = scmp.eq.s32.totalorder %s19, 1
    %p205 = scmp.ne.s32.totalorder %s200, %s202
    %p206 = scmp.eq.s32.totalorder %s19, 0
    %p207 = por %p205, %p206
    %p208 = scmp.ne.s32.totalorder %s200, %s202
    %p209 = scmp.eq.s32.totalorder %s24, 1
    %p210 = por %p208, %p209
    %p211 = scmp.ne.s32.totalorder %s202, %s203
    %p212 = scmp.eq.s32.totalorder %s24, 0
    %p213 = por %p211, %p212
    %p214 = scmp.ne.s32.totalorder %s202, %s203
    %p215 = scmp.eq.s32.totalorder %s25, 1
    %p216 = por %p214, %p215
    %p218 = scmp.ne.s32.totalorder %s203, %s217
    %p219 = scmp.eq.s32.totalorder %s25, 0
    %p220 = por %p218, %p219
    %s222 = sadd.s32 %s221, 1
    %p225 = scmp.eq.s32.totalorder %s19, 1
    %p226 = scmp.ne.s32.totalorder %s221, %s223
    %p227 = scmp.eq.s32.totalorder %s19, 0
    %p228 = por %p226, %p227
    %p229 = scmp.ne.s32.totalorder %s221, %s223
    %p230 = scmp.eq.s32.totalorder %s24, 1
    %p231 = por %p229, %p230
    %p232 = scmp.ne.s32.totalorder %s223, %s224
    %p233 = scmp.eq.s32.totalorder %s24, 0
    %p234 = por %p232, %p233
    %p235 = scmp.ne.s32.totalorder %s223, %s224
    %p236 = scmp.eq.s32.totalorder %s25, 1
    %p237 = por %p235, %p236
    %p239 = scmp.ne.s32.totalorder %s224, %s238
    %p240 = scmp.eq.s32.totalorder %s25, 0
    %p241 = por %p239, %p240
    %s243 = sadd.s32 %s242, 1
    %p246 = scmp.eq.s32.totalorder %s19, 1
    %p247 = scmp.ne.s32.totalorder %s242, %s244
    %p248 = scmp.eq.s32.totalorder %s19, 0
    %p249 = por %p247, %p248
    %p250 = scmp.ne.s32.totalorder %s242, %s244
    %p251 = scmp.eq.s32.totalorder %s24, 1
    %p252 = por %p250, %p251
    %p253 = scmp.ne.s32.totalorder %s244, %s245
    %p254 = scmp.eq.s32.totalorder %s24, 0
    %p255 = por %p253, %p254
    %p256 = scmp.ne.s32.totalorder %s244, %s245
    %p257 = scmp.eq.s32.totalorder %s25, 1
    %p258 = por %p256, %p257
    %p260 = scmp.ne.s32.totalorder %s245, %s259
    %p261 = scmp.eq.s32.totalorder %s25, 0
    %p262 = por %p260, %p261
    %s264 = sadd.s32 %s263, 1
    %p267 = scmp.eq.s32.totalorder %s19, 1
    %p268 = scmp.ne.s32.totalorder %s263, %s265
    %p269 = scmp.eq.s32.totalorder %s19, 0
    %p270 = por %p268, %p269
    %p271 = scmp.ne.s32.totalorder %s263, %s265
    %p272 = scmp.eq.s32.totalorder %s24, 1
    %p273 = por %p271, %p272
    %p274 = scmp.ne.s32.totalorder %s265, %s266
    %p275 = scmp.eq.s32.totalorder %s24, 0
    %p276 = por %p274, %p275
    %p277 = scmp.ne.s32.totalorder %s265, %s266
    %p278 = scmp.eq.s32.totalorder %s25, 1
    %p279 = por %p277, %p278
    %p281 = scmp.ne.s32.totalorder %s266, %s280
    %p282 = scmp.eq.s32.totalorder %s25, 0
    %p283 = por %p281, %p282
    %s285 = sadd.s32 %s284, 1
    %p288 = scmp.eq.s32.totalorder %s19, 1
    %p289 = scmp.ne.s32.totalorder %s284, %s286
    %p290 = scmp.eq.s32.totalorder %s19, 0
    %p291 = por %p289, %p290
    %p292 = scmp.ne.s32.totalorder %s284, %s286
    %p293 = scmp.eq.s32.totalorder %s24, 1
    %p294 = por %p292, %p293
    %p295 = scmp.ne.s32.totalorder %s286, %s287
    %p296 = scmp.eq.s32.totalorder %s24, 0
    %p297 = por %p295, %p296
    %p298 = scmp.ne.s32.totalorder %s286, %s287
    %p299 = scmp.eq.s32.totalorder %s25, 1
    %p300 = por %p298, %p299
    %p302 = scmp.ne.s32.totalorder %s287, %s301
    %p303 = scmp.eq.s32.totalorder %s25, 0
    %p304 = por %p302, %p303
    %s305 = ssub.s32 %s19, %s26
    %p306 = scmp.eq.s32.totalorder %s305, 0
    %s308 = sadd.s32 %s307, 1
    %s309 = scalar_select %p306, %s307, %s308
    %p312 = pneg %p306
    %p313 = scmp.eq.s32.totalorder %s19, 1
    %p314 = por %p312, %p313
    %p315 = scmp.ne.s32.totalorder %s307, %s310
    %p316 = scmp.eq.s32.totalorder %s19, 0
    %p317 = por %p315, %p316
    %p318 = scmp.ne.s32.totalorder %s307, %s310
    %p319 = scmp.eq.s32.totalorder %s24, 1
    %p320 = por %p318, %p319
    %p321 = scmp.ne.s32.totalorder %s310, %s311
    %p322 = scmp.eq.s32.totalorder %s24, 0
    %p323 = por %p321, %p322
    %p324 = scmp.ne.s32.totalorder %s310, %s311
    %p325 = scmp.eq.s32.totalorder %s25, 1
    %p326 = por %p324, %p325
    %p328 = scmp.ne.s32.totalorder %s311, %s327
    %p329 = scmp.eq.s32.totalorder %s25, 0
    %p330 = por %p328, %p329
    %p331 = scmp.le.s32.totalorder 1, %s19
    %p332 = scmp.lt.s32.totalorder %s19, 3
    %p333 = pnand %p331, %p332
    %p334 = pneg %p333
    // Predicated region
    $region9: #{tpu_custom_call.1} parent=5 // pred_check
      _
    $region10: #{tpu_custom_call.1} parent=5 // pred_check_branch
      %336 = sbr.rel (%p333) target = $region12
    $region11: #{tpu_custom_call.1} parent=5 // pred_region
      %s337 = ssub.s32 %s19, 1
      // Predicated region
      $region13: #{tpu_custom_call.1} parent=11 // pred_check
        %p338 = pneg %p66
      $region14: #{tpu_custom_call.1} parent=11 // pred_check_branch
        %340 = sbr.rel (%p338) target = $region16
      $region15: #{tpu_custom_call.1} parent=11 // pred_region
        _
      $region16: #{tpu_custom_call.1} parent=11 // pred_fallthru
        _
      // Predicated region
      $region17: #{tpu_custom_call.1} parent=11 // pred_check
        %p341 = pneg %p87
      $region18: #{tpu_custom_call.1} parent=11 // pred_check_branch
        %343 = sbr.rel (%p341) target = $region20
      $region19: #{tpu_custom_call.1} parent=11 // pred_region
        _
      $region20: #{tpu_custom_call.1} parent=11 // pred_fallthru
        _
      // Predicated region
      $region21: #{tpu_custom_call.1} parent=11 // pred_check
        %p344 = pneg %p108
      $region22: #{tpu_custom_call.1} parent=11 // pred_check_branch
        %346 = sbr.rel (%p344) target = $region24
      $region23: #{tpu_custom_call.1} parent=11 // pred_region
        _
      $region24: #{tpu_custom_call.1} parent=11 // pred_fallthru
        _
      // Predicated region
      $region25: #{tpu_custom_call.1} parent=11 // pred_check
        %p347 = pneg %p129
      $region26: #{tpu_custom_call.1} parent=11 // pred_check_branch
        %349 = sbr.rel (%p347) target = $region28
      $region27: #{tpu_custom_call.1} parent=11 // pred_region
        _
      $region28: #{tpu_custom_call.1} parent=11 // pred_fallthru
        _
      // Predicated region
      $region29: #{tpu_custom_call.1} parent=11 // pred_check
        %p350 = pneg %p150
      $region30: #{tpu_custom_call.1} parent=11 // pred_check_branch
        %352 = sbr.rel (%p350) target = $region32
      $region31: #{tpu_custom_call.1} parent=11 // pred_region
        _
      $region32: #{tpu_custom_call.1} parent=11 // pred_fallthru
        _
      // Predicated region
      $region33: #{tpu_custom_call.1} parent=11 // pred_check
        %p353 = pneg %p171
      $region34: #{tpu_custom_call.1} parent=11 // pred_check_branch
        %355 = sbr.rel (%p353) target = $region36
      $region35: #{tpu_custom_call.1} parent=11 // pred_region
        _
      $region36: #{tpu_custom_call.1} parent=11 // pred_fallthru
        _
      // Predicated region
      $region37: #{tpu_custom_call.1} parent=11 // pred_check
        %p356 = pneg %p192
      $region38: #{tpu_custom_call.1} parent=11 // pred_check_branch
        %358 = sbr.rel (%p356) target = $region40
      $region39: #{tpu_custom_call.1} parent=11 // pred_region
        _
      $region40: #{tpu_custom_call.1} parent=11 // pred_fallthru
        _
      // Predicated region
      $region41: #{tpu_custom_call.1} parent=11 // pred_check
        %p359 = pneg %p213
      $region42: #{tpu_custom_call.1} parent=11 // pred_check_branch
        %361 = sbr.rel (%p359) target = $region44
      $region43: #{tpu_custom_call.1} parent=11 // pred_region
        _
      $region44: #{tpu_custom_call.1} parent=11 // pred_fallthru
        _
      // Predicated region
      $region45: #{tpu_custom_call.1} parent=11 // pred_check
        %p362 = pneg %p234
      $region46: #{tpu_custom_call.1} parent=11 // pred_check_branch
        %364 = sbr.rel (%p362) target = $region48
      $region47: #{tpu_custom_call.1} parent=11 // pred_region
        _
      $region48: #{tpu_custom_call.1} parent=11 // pred_fallthru
        _
      // Predicated region
      $region49: #{tpu_custom_call.1} parent=11 // pred_check
        %p365 = pneg %p255
      $region50: #{tpu_custom_call.1} parent=11 // pred_check_branch
        %367 = sbr.rel (%p365) target = $region52
      $region51: #{tpu_custom_call.1} parent=11 // pred_region
        _
      $region52: #{tpu_custom_call.1} parent=11 // pred_fallthru
        _
      // Predicated region
      $region53: #{tpu_custom_call.1} parent=11 // pred_check
        %p368 = pneg %p276
      $region54: #{tpu_custom_call.1} parent=11 // pred_check_branch
        %370 = sbr.rel (%p368) target = $region56
      $region55: #{tpu_custom_call.1} parent=11 // pred_region
        _
      $region56: #{tpu_custom_call.1} parent=11 // pred_fallthru
        _
      // Predicated region
      $region57: #{tpu_custom_call.1} parent=11 // pred_check
        %p371 = pneg %p297
      $region58: #{tpu_custom_call.1} parent=11 // pred_check_branch
        %373 = sbr.rel (%p371) target = $region60
      $region59: #{tpu_custom_call.1} parent=11 // pred_region
        _
      $region60: #{tpu_custom_call.1} parent=11 // pred_fallthru
        _
    $region12: #{tpu_custom_call.1} parent=5 // pred_fallthru
      _
    %p374 = scmp.lt.s32.totalorder %s19, 2
    // Predicated region
    $region61: #{tpu_custom_call.1} parent=5 // pred_check
      %p375 = pneg %p374
    $region62: #{tpu_custom_call.1} parent=5 // pred_check_branch
      %377 = sbr.rel (%p375) target = $region64
    $region63: #{tpu_custom_call.1} parent=5 // pred_region
      // Predicated region
      $region65: #{tpu_custom_call.1} parent=63 // pred_check
        %p378 = pneg %p39
      $region66: #{tpu_custom_call.1} parent=63 // pred_check_branch
        %380 = sbr.rel (%p378) target = $region68
      $region67: #{tpu_custom_call.1} parent=63 // pred_region
        %p381 = scmp.lt.s32.totalorder %s19, 1
        %s382 = scalar_select %p381, %s19, 1
        %s383 = smul.addr %s382, 13
        %s384 = smul.addr %s383, 8
        %s385 = scalar_lea.vmem %s0, %s384
      $region68: #{tpu_custom_call.1} parent=63 // pred_fallthru
        _
    $region64: #{tpu_custom_call.1} parent=5 // pred_fallthru
      _
    %p386 = scmp.le.s32.totalorder 1, %s19
    %p387 = scmp.lt.s32.totalorder %s19, 3
    %p388 = pnand %p386, %p387
    %p389 = pneg %p388
    // Predicated region
    $region69: #{tpu_custom_call.1} parent=5 // pred_check
      _
    $region70: #{tpu_custom_call.1} parent=5 // pred_check_branch
      %391 = sbr.rel (%p388) target = $region72
    $region71: #{tpu_custom_call.1} parent=5 // pred_region
      %s392 = ssub.s32 %s19, 1
      %p393 = scmp.lt.s32.totalorder %s24, 1
      %s394 = scalar_select %p393, %s24, 1
      %s395 = smul.addr %s394, 13
      %s396 = smul.addr %s395, 8
      %s397 = scalar_lea.vmem %s0, %s396
      %p398 = pneg %p45
      %p399 = pneg %p42
      %p400 = pneg %p66
      %p401 = pneg %p63
      %p402 = pneg %p87
      %p403 = pneg %p84
      %p404 = pneg %p108
      %p405 = pneg %p105
      %p406 = pneg %p129
      %p407 = pneg %p126
      %p408 = pneg %p150
      %p409 = pneg %p147
      %p410 = pneg %p171
      %p411 = pneg %p168
      %p412 = pneg %p192
      %p413 = pneg %p189
      %p414 = pneg %p213
      %p415 = pneg %p210
      %p416 = pneg %p234
      %p417 = pneg %p231
      %p418 = pneg %p255
      %p419 = pneg %p252
      %p420 = pneg %p276
      %p421 = pneg %p273
      %p422 = pneg %p297
      %p423 = pneg %p294
      %p424 = pneg %p323
      %p425 = pneg %p320
      %p426 = scmp.lt.s32.totalorder %s24, 1
      %s427 = scalar_select %p426, %s24, 1
      %s428 = smul.addr %s427, 6
      %s429 = smul.addr %s428, 8
      %s430 = scalar_lea.vmem %s13, %s429
      %p431 = scmp.lt.s32.totalorder %s24, 1
      %s432 = scalar_select %p431, %s24, 1
      %s433 = smul.addr %s432, 13
      %s434 = smul.addr %s433, 8
      %s435 = scalar_lea.vmem %s0, %s434
      %p436 = scmp.lt.s32.totalorder %s24, 1
      %s437 = scalar_select %p436, %s24, 1
      %s438 = smul.addr %s437, 6
      %s439 = smul.addr %s438, 8
      %s440 = scalar_lea.vmem %s13, %s439
      %v442 = vld [vmem:[%s435] sm:$0xff]
      %v443 = vld [vmem:[%s435 + $0x8] sm:$0xff]
      %v444 = vld [vmem:[%s435 + $0x10] sm:$0xff]
      %v445 = vld [vmem:[%s435 + $0x18] sm:$0xff]
      %v446 = vld [vmem:[%s435 + $0x20] sm:$0xff]
      %v447 = vld [vmem:[%s435 + $0x28] sm:$0xff]
      %v448 = vld [vmem:[%s435 + $0x30] sm:$0xff]
      %v449 = vld [vmem:[%s435 + $0x38] sm:$0xff]
      %v450 = vld [vmem:[%s435 + $0x40] sm:$0xff]
      %v451 = vld [vmem:[%s435 + $0x48] sm:$0xff]
      %v452 = vld [vmem:[%s435 + $0x50] sm:$0xff]
      %v453 = vld [vmem:[%s435 + $0x58] sm:$0xff]
      %v454 = vld [vmem:[%s435 + $0x60] sm:$0x3]
      %v455 = vpack.c.bf16 %v443, %v442
      %v456 = vpack.c.bf16 %v445, %v444
      %v457 = vpack.c.bf16 %v447, %v446
      %v458 = vpack.c.bf16 %v449, %v448
      %v459 = vpack.c.bf16 %v451, %v450
      %v460 = vpack.c.bf16 %v453, %v452
      %v461 = vpack.c.bf16 %v454, %v454
      %vm462 = vsmask.f32 7424
      %v464 = vshrl.u32 %v455, 16
      %v466 = vshll.u32 %v455, 16
      %v468 = vrot.slane %v466, 1
      %v469 = vor.u32 %v464, %v468
      %v471 = vshll.u32 %v456, 16
      %v473 = vrot.slane %v471, 1
      %v474 = vsel %vm462, %v469, %v473
      %v475 = vshrl.u32 %v456, 16
      %v477 = vor.u32 %v475, %v473
      %v479 = vshll.u32 %v457, 16
      %v481 = vrot.slane %v479, 1
      %v482 = vsel %vm462, %v477, %v481
      %v483 = vshrl.u32 %v457, 16
      %v485 = vor.u32 %v483, %v481
      %v487 = vshll.u32 %v458, 16
      %v489 = vrot.slane %v487, 1
      %v490 = vsel %vm462, %v485, %v489
      %v491 = vshrl.u32 %v458, 16
      %v493 = vor.u32 %v491, %v489
      %v495 = vshll.u32 %v459, 16
      %v497 = vrot.slane %v495, 1
      %v498 = vsel %vm462, %v493, %v497
      %v499 = vshrl.u32 %v459, 16
      %v501 = vor.u32 %v499, %v497
      %v503 = vshll.u32 %v460, 16
      %v505 = vrot.slane %v503, 1
      %v506 = vsel %vm462, %v501, %v505
      %v507 = vshrl.u32 %v460, 16
      %v509 = vor.u32 %v507, %v505
      %510 = vrot.lane.b32.xlu0 %v474, 98
      %v511 = vpop.permute.xlu0 %510
      %512 = vrot.lane.b32.xlu0 %v482, 98
      %v513 = vpop.permute.xlu0 %512
      %514 = vrot.lane.b32.xlu0 %v490, 98
      %v515 = vpop.permute.xlu0 %514
      %516 = vrot.lane.b32.xlu0 %v498, 98
      %v517 = vpop.permute.xlu0 %516
      %518 = vrot.lane.b32.xlu0 %v506, 98
      %v519 = vpop.permute.xlu0 %518
      %520 = vrot.lane.b32.xlu0 %v509, 98
      %v521 = vpop.permute.xlu0 %520
      %vm528 = vcmask 1046528
      %v529 = vrot.slane %v455, 1
      %v530 = vrot.slane %v456, 1
      %v531 = vsel %vm528, %v529, %v530
      %v532 = vrot.slane %v457, 1
      %v533 = vsel %vm528, %v530, %v532
      %v534 = vrot.slane %v458, 1
      %v535 = vsel %vm528, %v532, %v534
      %v536 = vrot.slane %v459, 1
      %v537 = vsel %vm528, %v534, %v536
      %v538 = vrot.slane %v460, 1
      %v539 = vsel %vm528, %v536, %v538
      %540 = vrot.lane.b32.xlu0 %v531, 68
      %v541 = vpop.permute.xlu0 %540
      %542 = vrot.lane.b32.xlu0 %v533, 68
      %v543 = vpop.permute.xlu0 %542
      %544 = vrot.lane.b32.xlu0 %v535, 68
      %v545 = vpop.permute.xlu0 %544
      %546 = vrot.lane.b32.xlu0 %v537, 68
      %v547 = vpop.permute.xlu0 %546
      %548 = vrot.lane.b32.xlu0 %v539, 68
      %v549 = vpop.permute.xlu0 %548
      %550 = vrot.lane.b32.xlu0 %v538, 68
      %v551 = vpop.permute.xlu0 %550
      %vm552 = vsmask.f32 6400
      %v553 = vrot.slane %v464, 1
      %v554 = vrot.slane %v466, 2
      %v555 = vor.u32 %v553, %v554
      %v556 = vrot.slane %v475, 1
      %v557 = vrot.slane %v471, 2
      %v558 = vor.u32 %v556, %v557
      %v559 = vsel %vm552, %v555, %v558
      %v560 = vrot.slane %v483, 1
      %v561 = vrot.slane %v479, 2
      %v562 = vor.u32 %v560, %v561
      %v563 = vsel %vm552, %v558, %v562
      %v564 = vrot.slane %v491, 1
      %v565 = vrot.slane %v487, 2
      %v566 = vor.u32 %v564, %v565
      %v567 = vsel %vm552, %v562, %v566
      %v568 = vrot.slane %v499, 1
      %v569 = vrot.slane %v495, 2
      %v570 = vor.u32 %v568, %v569
      %v571 = vsel %vm552, %v566, %v570
      %v572 = vrot.slane %v507, 1
      %v573 = vrot.slane %v503, 2
      %v574 = vor.u32 %v572, %v573
      %v575 = vsel %vm552, %v570, %v574
      %576 = vrot.lane.b32.xlu0 %v559, 38
      %v577 = vpop.permute.xlu0 %576
      %578 = vrot.lane.b32.xlu0 %v563, 38
      %v579 = vpop.permute.xlu0 %578
      %580 = vrot.lane.b32.xlu0 %v567, 38
      %v581 = vpop.permute.xlu0 %580
      %582 = vrot.lane.b32.xlu0 %v571, 38
      %v583 = vpop.permute.xlu0 %582
      %584 = vrot.lane.b32.xlu0 %v575, 38
      %v585 = vpop.permute.xlu0 %584
      %586 = vrot.lane.b32.xlu0 %v574, 38
      %v587 = vpop.permute.xlu0 %586
      %vm588 = vcmask 1045504
      %v589 = vrot.slane %v455, 2
      %v590 = vrot.slane %v456, 2
      %v591 = vsel %vm588, %v589, %v590
      %v592 = vrot.slane %v457, 2
      %v593 = vsel %vm588, %v590, %v592
      %v594 = vrot.slane %v458, 2
      %v595 = vsel %vm588, %v592, %v594
      %v596 = vrot.slane %v459, 2
      %v597 = vsel %vm588, %v594, %v596
      %v598 = vrot.slane %v460, 2
      %v599 = vsel %vm588, %v596, %v598
      %600 = vrot.lane.b32.xlu0 %v591, 8
      %v601 = vpop.permute.xlu0 %600
      %602 = vrot.lane.b32.xlu0 %v593, 8
      %v603 = vpop.permute.xlu0 %602
      %604 = vrot.lane.b32.xlu0 %v595, 8
      %v605 = vpop.permute.xlu0 %604
      %606 = vrot.lane.b32.xlu0 %v597, 8
      %v607 = vpop.permute.xlu0 %606
      %608 = vrot.lane.b32.xlu0 %v599, 8
      %v609 = vpop.permute.xlu0 %608
      %610 = vrot.lane.b32.xlu0 %v598, 8
      %v611 = vpop.permute.xlu0 %610
      %vm612 = vsmask.f32 5376
      %v613 = vrot.slane %v464, 2
      %v614 = vrot.slane %v466, 3
      %v615 = vor.u32 %v613, %v614
      %v616 = vrot.slane %v475, 2
      %v617 = vrot.slane %v471, 3
      %v618 = vor.u32 %v616, %v617
      %v619 = vsel %vm612, %v615, %v618
      %v620 = vrot.slane %v483, 2
      %v621 = vrot.slane %v479, 3
      %v622 = vor.u32 %v620, %v621
      %v623 = vsel %vm612, %v618, %v622
      %v624 = vrot.slane %v491, 2
      %v625 = vrot.slane %v487, 3
      %v626 = vor.u32 %v624, %v625
      %v627 = vsel %vm612, %v622, %v626
      %v628 = vrot.slane %v499, 2
      %v629 = vrot.slane %v495, 3
      %v630 = vor.u32 %v628, %v629
      %v631 = vsel %vm612, %v626, %v630
      %v632 = vrot.slane %v507, 2
      %v633 = vrot.slane %v503, 3
      %v634 = vor.u32 %v632, %v633
      %v635 = vsel %vm612, %v630, %v634
      %v637 = vshll.u32 %v461, 16
      %v639 = vrot.slane %v637, 3
      %v640 = vsel %vm612, %v634, %v639
      %641 = vrot.lane.b32.xlu0 %v619, 106
      %v642 = vpop.permute.xlu0 %641
      %643 = vrot.lane.b32.xlu0 %v623, 106
      %v644 = vpop.permute.xlu0 %643
      %645 = vrot.lane.b32.xlu0 %v627, 106
      %v646 = vpop.permute.xlu0 %645
      %647 = vrot.lane.b32.xlu0 %v631, 106
      %v648 = vpop.permute.xlu0 %647
      %649 = vrot.lane.b32.xlu0 %v635, 106
      %v650 = vpop.permute.xlu0 %649
      %651 = vrot.lane.b32.xlu0 %v640, 106
      %v652 = vpop.permute.xlu0 %651
      %vm654 = vcmask 1044480
      %v655 = vrot.slane %v455, 3
      %v656 = vrot.slane %v456, 3
      %v657 = vsel %vm654, %v655, %v656
      %v658 = vrot.slane %v457, 3
      %v659 = vsel %vm654, %v656, %v658
      %v660 = vrot.slane %v458, 3
      %v661 = vsel %vm654, %v658, %v660
      %v662 = vrot.slane %v459, 3
      %v663 = vsel %vm654, %v660, %v662
      %v664 = vrot.slane %v460, 3
      %v665 = vsel %vm654, %v662, %v664
      %v666 = vrot.slane %v461, 3
      %v667 = vsel %vm654, %v664, %v666
      %668 = vrot.lane.b32.xlu0 %v657, 76
      %v669 = vpop.permute.xlu0 %668
      %670 = vrot.lane.b32.xlu0 %v659, 76
      %v671 = vpop.permute.xlu0 %670
      %672 = vrot.lane.b32.xlu0 %v661, 76
      %v673 = vpop.permute.xlu0 %672
      %674 = vrot.lane.b32.xlu0 %v663, 76
      %v675 = vpop.permute.xlu0 %674
      %676 = vrot.lane.b32.xlu0 %v665, 76
      %v677 = vpop.permute.xlu0 %676
      %678 = vrot.lane.b32.xlu0 %v667, 76
      %v679 = vpop.permute.xlu0 %678
      %vm680 = vcmask 801792
      %v682 = vsel %vm680, %v455, %v511
      %v685 = vsel %vm680, %v456, %v513
      %v688 = vsel %vm680, %v457, %v515
      %v691 = vsel %vm680, %v458, %v517
      %v694 = vsel %vm680, %v459, %v519
      %v697 = vsel %vm680, %v460, %v521
      %vm699 = vcmask 556032
      %v701 = vsel %vm699, %v511, %v541
      %v704 = vsel %vm699, %v513, %v543
      %v707 = vsel %vm699, %v515, %v545
      %v710 = vsel %vm699, %v517, %v547
      %v713 = vsel %vm699, %v519, %v549
      %v716 = vsel %vm699, %v521, %v551
      %vm718 = vcmask 310272
      %v720 = vsel %vm718, %v541, %v577
      %v723 = vsel %vm718, %v543, %v579
      %v726 = vsel %vm718, %v545, %v581
      %v729 = vsel %vm718, %v547, %v583
      %v732 = vsel %vm718, %v549, %v585
      %v735 = vsel %vm718, %v551, %v587
      %vm737 = vcmask 64512
      %v739 = vsel %vm737, %v577, %v601
      %v741 = vsel %vm737, %v579, %v603
      %v743 = vsel %vm737, %v581, %v605
      %v745 = vsel %vm737, %v583, %v607
      %v747 = vsel %vm737, %v585, %v609
      %v749 = vsel %vm737, %v587, %v611
      %vm750 = vcmask 867328
      %v752 = vsel %vm750, %v739, %v642
      %v755 = vsel %vm750, %v741, %v644
      %v758 = vsel %vm750, %v743, %v646
      %v761 = vsel %vm750, %v745, %v648
      %v764 = vsel %vm750, %v747, %v650
      %v767 = vsel %vm750, %v749, %v652
      %vm769 = vcmask 621568
      %v771 = vsel %vm769, %v642, %v669
      %v774 = vsel %vm769, %v644, %v671
      %v777 = vsel %vm769, %v646, %v673
      %v780 = vsel %vm769, %v648, %v675
      %v783 = vsel %vm769, %v650, %v677
      %v786 = vsel %vm769, %v652, %v679
      %v788 = vld [vmem:[%s1] sm:$0xff]
      %v789 = vld [vmem:[%s1 + $0x8] sm:$0xff]
      %v790 = vld [vmem:[%s1 + $0x10] sm:$0xff]
      %v791 = vld [vmem:[%s1 + $0x18] sm:$0xff]
      %v792 = vld [vmem:[%s1 + $0x20] sm:$0xff]
      %v793 = vld [vmem:[%s1 + $0x28] sm:$0xff]
      %v794 = vld [vmem:[%s1 + $0x30] sm:$0xff]
      %v795 = vld [vmem:[%s1 + $0x38] sm:$0xff]
      %v796 = vld [vmem:[%s1 + $0x40] sm:$0xff]
      %v797 = vld [vmem:[%s1 + $0x48] sm:$0xff]
      %v798 = vld [vmem:[%s1 + $0x50] sm:$0xff]
      %v799 = vld [vmem:[%s1 + $0x58] sm:$0xff]
      %v800 = vld [vmem:[%s1 + $0x60] sm:$0xff]
      %v801 = vld [vmem:[%s1 + $0x68] sm:$0xff]
      %v802 = vld [vmem:[%s1 + $0x70] sm:$0xff]
      %v803 = vld [vmem:[%s1 + $0x78] sm:$0xff]
      %v804 = vld [vmem:[%s1 + $0x80] sm:$0xff]
      %v805 = vld [vmem:[%s1 + $0x88] sm:$0xff]
      %v806 = vld [vmem:[%s1 + $0x90] sm:$0xff]
      %v807 = vld [vmem:[%s1 + $0x98] sm:$0xff]
      %v808 = vld [vmem:[%s1 + $0xa0] sm:$0xff]
      %v809 = vld [vmem:[%s1 + $0xa8] sm:$0xff]
      %v810 = vld [vmem:[%s1 + $0xb0] sm:$0xff]
      %v811 = vld [vmem:[%s1 + $0xb8] sm:$0xff]
      %v812 = vld [vmem:[%s1 + $0xc0] sm:$0xff]
      %v813 = vld [vmem:[%s1 + $0xc8] sm:$0xff]
      %v814 = vld [vmem:[%s1 + $0xd0] sm:$0xff]
      %v815 = vld [vmem:[%s1 + $0xd8] sm:$0xff]
      %v816 = vld [vmem:[%s1 + $0xe0] sm:$0xff]
      %v817 = vld [vmem:[%s1 + $0xe8] sm:$0xff]
      %v818 = vld [vmem:[%s1 + $0xf0] sm:$0xff]
      %v819 = vld [vmem:[%s1 + $0xf8] sm:$0xff]
      %v820 = vld [vmem:[%s1 + $0x100] sm:$0xff]
      %v821 = vld [vmem:[%s1 + $0x108] sm:$0xff]
      %v822 = vld [vmem:[%s1 + $0x110] sm:$0xff]
      %v823 = vld [vmem:[%s1 + $0x118] sm:$0xff]
      %v824 = vld [vmem:[%s1 + $0x120] sm:$0xff]
      %v825 = vld [vmem:[%s1 + $0x128] sm:$0xff]
      %v826 = vld [vmem:[%s1 + $0x130] sm:$0xff]
      %v827 = vld [vmem:[%s1 + $0x138] sm:$0xff]
      %v828 = vld [vmem:[%s1 + $0x140] sm:$0xff]
      %v829 = vld [vmem:[%s1 + $0x148] sm:$0xff]
      %v830 = vld [vmem:[%s1 + $0x150] sm:$0xff]
      %v831 = vld [vmem:[%s1 + $0x158] sm:$0xff]
      %v832 = vld [vmem:[%s1 + $0x160] sm:$0xff]
      %v833 = vld [vmem:[%s1 + $0x168] sm:$0xff]
      %v834 = vld [vmem:[%s1 + $0x170] sm:$0xff]
      %v835 = vld [vmem:[%s1 + $0x178] sm:$0xff]
      %v836 = vld [vmem:[%s1 + $0x180] sm:$0xff]
      %v837 = vld [vmem:[%s1 + $0x188] sm:$0xff]
      %v838 = vld [vmem:[%s1 + $0x190] sm:$0xff]
      %v839 = vld [vmem:[%s1 + $0x198] sm:$0xff]
      %v840 = vld [vmem:[%s1 + $0x1a0] sm:$0xff]
      %v841 = vld [vmem:[%s1 + $0x1a8] sm:$0xff]
      %v842 = vld [vmem:[%s1 + $0x1b0] sm:$0xff]
      %v843 = vld [vmem:[%s1 + $0x1b8] sm:$0xff]
      %v844 = vld [vmem:[%s1 + $0x1c0] sm:$0xff]
      %v845 = vld [vmem:[%s1 + $0x1c8] sm:$0xff]
      %v846 = vld [vmem:[%s1 + $0x1d0] sm:$0xff]
      %v847 = vld [vmem:[%s1 + $0x1d8] sm:$0xff]
      %v848 = vld [vmem:[%s1 + $0x1e0] sm:$0xff]
      %v849 = vld [vmem:[%s1 + $0x1e8] sm:$0xff]
      %v850 = vld [vmem:[%s1 + $0x1f0] sm:$0xff]
      %v851 = vld [vmem:[%s1 + $0x1f8] sm:$0xff]
      %v852 = vld [vmem:[%s1 + $0x200] sm:$0xff]
      %v853 = vld [vmem:[%s1 + $0x208] sm:$0xff]
      %v854 = vld [vmem:[%s1 + $0x210] sm:$0xff]
      %v855 = vld [vmem:[%s1 + $0x218] sm:$0xff]
      %v856 = vld [vmem:[%s1 + $0x220] sm:$0xff]
      %v857 = vld [vmem:[%s1 + $0x228] sm:$0xff]
      %v858 = vld [vmem:[%s1 + $0x230] sm:$0xff]
      %v859 = vld [vmem:[%s1 + $0x238] sm:$0xff]
      %v860 = vld [vmem:[%s1 + $0x240] sm:$0xff]
      %v861 = vld [vmem:[%s1 + $0x248] sm:$0xff]
      %v862 = vld [vmem:[%s1 + $0x250] sm:$0xff]
      %v863 = vld [vmem:[%s1 + $0x258] sm:$0xff]
      %v864 = vld [vmem:[%s1 + $0x260] sm:$0xff]
      %v865 = vld [vmem:[%s1 + $0x268] sm:$0xff]
      %v866 = vld [vmem:[%s1 + $0x270] sm:$0xff]
      %v867 = vld [vmem:[%s1 + $0x278] sm:$0xff]
      %v868 = vld [vmem:[%s1 + $0x280] sm:$0xff]
      %v869 = vld [vmem:[%s1 + $0x288] sm:$0xff]
      %v870 = vld [vmem:[%s1 + $0x290] sm:$0xff]
      %v871 = vld [vmem:[%s1 + $0x298] sm:$0xff]
      %v872 = vld [vmem:[%s1 + $0x2a0] sm:$0xff]
      %v873 = vld [vmem:[%s1 + $0x2a8] sm:$0xff]
      %v874 = vld [vmem:[%s1 + $0x2b0] sm:$0xff]
      %v875 = vld [vmem:[%s1 + $0x2b8] sm:$0xff]
      %v876 = vld [vmem:[%s1 + $0x2c0] sm:$0xff]
      %v877 = vld [vmem:[%s1 + $0x2c8] sm:$0xff]
      %v878 = vld [vmem:[%s1 + $0x2d0] sm:$0xff]
      %v879 = vld [vmem:[%s1 + $0x2d8] sm:$0xff]
      %v880 = vld [vmem:[%s1 + $0x2e0] sm:$0xff]
      %v881 = vld [vmem:[%s1 + $0x2e8] sm:$0xff]
      %v882 = vld [vmem:[%s1 + $0x2f0] sm:$0xff]
      %v883 = vld [vmem:[%s1 + $0x2f8] sm:$0xff]
      %v884 = vld [vmem:[%s1 + $0x300] sm:$0xff]
      %v885 = vld [vmem:[%s1 + $0x308] sm:$0xff]
      %v886 = vld [vmem:[%s1 + $0x310] sm:$0xff]
      %v887 = vld [vmem:[%s1 + $0x318] sm:$0xff]
      %v888 = vld [vmem:[%s1 + $0x320] sm:$0xff]
      %v889 = vld [vmem:[%s1 + $0x328] sm:$0xff]
      %v890 = vld [vmem:[%s1 + $0x330] sm:$0xff]
      %v891 = vld [vmem:[%s1 + $0x338] sm:$0xff]
      %v892 = vld [vmem:[%s1 + $0x340] sm:$0xff]
      %v893 = vld [vmem:[%s1 + $0x348] sm:$0xff]
      %v894 = vld [vmem:[%s1 + $0x350] sm:$0xff]
      %v895 = vld [vmem:[%s1 + $0x358] sm:$0xff]
      %v896 = vld [vmem:[%s1 + $0x360] sm:$0xff]
      %v897 = vld [vmem:[%s1 + $0x368] sm:$0xff]
      %v898 = vld [vmem:[%s1 + $0x370] sm:$0xff]
      %v899 = vld [vmem:[%s1 + $0x378] sm:$0xff]
      %v900 = vld [vmem:[%s1 + $0x380] sm:$0xff]
      %v901 = vld [vmem:[%s1 + $0x388] sm:$0xff]
      %v902 = vld [vmem:[%s1 + $0x390] sm:$0xff]
      %v903 = vld [vmem:[%s1 + $0x398] sm:$0xff]
      %v904 = vld [vmem:[%s1 + $0x3a0] sm:$0xff]
      %v905 = vld [vmem:[%s1 + $0x3a8] sm:$0xff]
      %v906 = vld [vmem:[%s1 + $0x3b0] sm:$0xff]
      %v907 = vld [vmem:[%s1 + $0x3b8] sm:$0xff]
      %v908 = vld [vmem:[%s1 + $0x3c0] sm:$0xff]
      %v909 = vld [vmem:[%s1 + $0x3c8] sm:$0xff]
      %v910 = vld [vmem:[%s1 + $0x3d0] sm:$0xff]
      %v911 = vld [vmem:[%s1 + $0x3d8] sm:$0xff]
      %v912 = vld [vmem:[%s1 + $0x3e0] sm:$0xff]
      %v913 = vld [vmem:[%s1 + $0x3e8] sm:$0xff]
      %v914 = vld [vmem:[%s1 + $0x3f0] sm:$0xff]
      %v915 = vld [vmem:[%s1 + $0x3f8] sm:$0xff]
      %v916 = vld [vmem:[%s1 + $0x400] sm:$0xff]
      %v917 = vld [vmem:[%s1 + $0x408] sm:$0xff]
      %v918 = vld [vmem:[%s1 + $0x410] sm:$0xff]
      %v919 = vld [vmem:[%s1 + $0x418] sm:$0xff]
      %v920 = vld [vmem:[%s1 + $0x420] sm:$0xff]
      %v921 = vld [vmem:[%s1 + $0x428] sm:$0xff]
      %v922 = vld [vmem:[%s1 + $0x430] sm:$0xff]
      %v923 = vld [vmem:[%s1 + $0x438] sm:$0xff]
      %v924 = vld [vmem:[%s1 + $0x440] sm:$0xff]
      %v925 = vld [vmem:[%s1 + $0x448] sm:$0xff]
      %v926 = vld [vmem:[%s1 + $0x450] sm:$0xff]
      %v927 = vld [vmem:[%s1 + $0x458] sm:$0xff]
      %v928 = vld [vmem:[%s1 + $0x460] sm:$0xff]
      %v929 = vld [vmem:[%s1 + $0x468] sm:$0xff]
      %v930 = vld [vmem:[%s1 + $0x470] sm:$0xff]
      %v931 = vld [vmem:[%s1 + $0x478] sm:$0xff]
      %v932 = vld [vmem:[%s1 + $0x480] sm:$0xff]
      %v933 = vld [vmem:[%s1 + $0x488] sm:$0xff]
      %v934 = vld [vmem:[%s1 + $0x490] sm:$0xff]
      %v935 = vld [vmem:[%s1 + $0x498] sm:$0xff]
      %v936 = vld [vmem:[%s1 + $0x4a0] sm:$0xff]
      %v937 = vld [vmem:[%s1 + $0x4a8] sm:$0xff]
      %v938 = vld [vmem:[%s1 + $0x4b0] sm:$0xff]
      %v939 = vld [vmem:[%s1 + $0x4b8] sm:$0xff]
      %v940 = vld [vmem:[%s1 + $0x4c0] sm:$0xff]
      %v941 = vld [vmem:[%s1 + $0x4c8] sm:$0xff]
      %v942 = vld [vmem:[%s1 + $0x4d0] sm:$0xff]
      %v943 = vld [vmem:[%s1 + $0x4d8] sm:$0xff]
      %v944 = vld [vmem:[%s1 + $0x4e0] sm:$0xff]
      %v945 = vld [vmem:[%s1 + $0x4e8] sm:$0xff]
      %v946 = vld [vmem:[%s1 + $0x4f0] sm:$0xff]
      %v947 = vld [vmem:[%s1 + $0x4f8] sm:$0xff]
      %v948 = vld [vmem:[%s1 + $0x500] sm:$0xff]
      %v949 = vld [vmem:[%s1 + $0x508] sm:$0xff]
      %v950 = vld [vmem:[%s1 + $0x510] sm:$0xff]
      %v951 = vld [vmem:[%s1 + $0x518] sm:$0xff]
      %v952 = vld [vmem:[%s1 + $0x520] sm:$0xff]
      %v953 = vld [vmem:[%s1 + $0x528] sm:$0xff]
      %v954 = vld [vmem:[%s1 + $0x530] sm:$0xff]
      %v955 = vld [vmem:[%s1 + $0x538] sm:$0xff]
      %v956 = vld [vmem:[%s1 + $0x540] sm:$0xff]
      %v957 = vld [vmem:[%s1 + $0x548] sm:$0xff]
      %v958 = vld [vmem:[%s1 + $0x550] sm:$0xff]
      %v959 = vld [vmem:[%s1 + $0x558] sm:$0xff]
      %v960 = vld [vmem:[%s1 + $0x560] sm:$0xff]
      %v961 = vld [vmem:[%s1 + $0x568] sm:$0xff]
      %v962 = vld [vmem:[%s1 + $0x570] sm:$0xff]
      %v963 = vld [vmem:[%s1 + $0x578] sm:$0xff]
      %v964 = vld [vmem:[%s1 + $0x580] sm:$0xff]
      %v965 = vld [vmem:[%s1 + $0x588] sm:$0xff]
      %v966 = vld [vmem:[%s1 + $0x590] sm:$0xff]
      %v967 = vld [vmem:[%s1 + $0x598] sm:$0xff]
      %v968 = vld [vmem:[%s1 + $0x5a0] sm:$0xff]
      %v969 = vld [vmem:[%s1 + $0x5a8] sm:$0xff]
      %v970 = vld [vmem:[%s1 + $0x5b0] sm:$0xff]
      %v971 = vld [vmem:[%s1 + $0x5b8] sm:$0xff]
      %v972 = vld [vmem:[%s1 + $0x5c0] sm:$0xff]
      %v973 = vld [vmem:[%s1 + $0x5c8] sm:$0xff]
      %v974 = vld [vmem:[%s1 + $0x5d0] sm:$0xff]
      %v975 = vld [vmem:[%s1 + $0x5d8] sm:$0xff]
      %v976 = vld [vmem:[%s1 + $0x5e0] sm:$0xff]
      %v977 = vld [vmem:[%s1 + $0x5e8] sm:$0xff]
      %v978 = vld [vmem:[%s1 + $0x5f0] sm:$0xff]
      %v979 = vld [vmem:[%s1 + $0x5f8] sm:$0xff]
      %v980 = vld [vmem:[%s1 + $0x600] sm:$0xff]
      %v981 = vld [vmem:[%s1 + $0x608] sm:$0xff]
      %v982 = vld [vmem:[%s1 + $0x610] sm:$0xff]
      %v983 = vld [vmem:[%s1 + $0x618] sm:$0xff]
      %v984 = vld [vmem:[%s1 + $0x620] sm:$0xff]
      %v985 = vld [vmem:[%s1 + $0x628] sm:$0xff]
      %v986 = vld [vmem:[%s1 + $0x630] sm:$0xff]
      %v987 = vld [vmem:[%s1 + $0x638] sm:$0xff]
      %v988 = vld [vmem:[%s1 + $0x640] sm:$0xff]
      %v989 = vld [vmem:[%s1 + $0x648] sm:$0xff]
      %v990 = vld [vmem:[%s1 + $0x650] sm:$0xff]
      %v991 = vld [vmem:[%s1 + $0x658] sm:$0xff]
      %v992 = vld [vmem:[%s1 + $0x660] sm:$0xff]
      %v993 = vld [vmem:[%s1 + $0x668] sm:$0xff]
      %v994 = vld [vmem:[%s1 + $0x670] sm:$0xff]
      %v995 = vld [vmem:[%s1 + $0x678] sm:$0xff]
      %v996 = vld [vmem:[%s1 + $0x680] sm:$0xff]
      %v997 = vld [vmem:[%s1 + $0x688] sm:$0xff]
      %v998 = vld [vmem:[%s1 + $0x690] sm:$0xff]
      %v999 = vld [vmem:[%s1 + $0x698] sm:$0xff]
      %v1000 = vld [vmem:[%s1 + $0x6a0] sm:$0xff]
      %v1001 = vld [vmem:[%s1 + $0x6a8] sm:$0xff]
      %v1002 = vld [vmem:[%s1 + $0x6b0] sm:$0xff]
      %v1003 = vld [vmem:[%s1 + $0x6b8] sm:$0xff]
      %v1004 = vld [vmem:[%s1 + $0x6c0] sm:$0xff]
      %v1005 = vld [vmem:[%s1 + $0x6c8] sm:$0xff]
      %v1006 = vld [vmem:[%s1 + $0x6d0] sm:$0xff]
      %v1007 = vld [vmem:[%s1 + $0x6d8] sm:$0xff]
      %v1008 = vld [vmem:[%s1 + $0x6e0] sm:$0xff]
      %v1009 = vld [vmem:[%s1 + $0x6e8] sm:$0xff]
      %v1010 = vld [vmem:[%s1 + $0x6f0] sm:$0xff]
      %v1011 = vld [vmem:[%s1 + $0x6f8] sm:$0xff]
      %v1012 = vld [vmem:[%s1 + $0x700] sm:$0xff]
      %v1013 = vld [vmem:[%s1 + $0x708] sm:$0xff]
      %v1014 = vld [vmem:[%s1 + $0x710] sm:$0xff]
      %v1015 = vld [vmem:[%s1 + $0x718] sm:$0xff]
      %v1016 = vld [vmem:[%s1 + $0x720] sm:$0xff]
      %v1017 = vld [vmem:[%s1 + $0x728] sm:$0xff]
      %v1018 = vld [vmem:[%s1 + $0x730] sm:$0xff]
      %v1019 = vld [vmem:[%s1 + $0x738] sm:$0xff]
      %v1020 = vld [vmem:[%s1 + $0x740] sm:$0xff]
      %v1021 = vld [vmem:[%s1 + $0x748] sm:$0xff]
      %v1022 = vld [vmem:[%s1 + $0x750] sm:$0xff]
      %v1023 = vld [vmem:[%s1 + $0x758] sm:$0xff]
      %v1024 = vld [vmem:[%s1 + $0x760] sm:$0xff]
      %v1025 = vld [vmem:[%s1 + $0x768] sm:$0xff]
      %v1026 = vld [vmem:[%s1 + $0x770] sm:$0xff]
      %v1027 = vld [vmem:[%s1 + $0x778] sm:$0xff]
      %v1028 = vld [vmem:[%s1 + $0x780] sm:$0xff]
      %v1029 = vld [vmem:[%s1 + $0x788] sm:$0xff]
      %v1030 = vld [vmem:[%s1 + $0x790] sm:$0xff]
      %v1031 = vld [vmem:[%s1 + $0x798] sm:$0xff]
      %v1032 = vld [vmem:[%s1 + $0x7a0] sm:$0xff]
      %v1033 = vld [vmem:[%s1 + $0x7a8] sm:$0xff]
      %v1034 = vld [vmem:[%s1 + $0x7b0] sm:$0xff]
      %v1035 = vld [vmem:[%s1 + $0x7b8] sm:$0xff]
      %v1036 = vld [vmem:[%s1 + $0x7c0] sm:$0xff]
      %v1037 = vld [vmem:[%s1 + $0x7c8] sm:$0xff]
      %v1038 = vld [vmem:[%s1 + $0x7d0] sm:$0xff]
      %v1039 = vld [vmem:[%s1 + $0x7d8] sm:$0xff]
      %v1040 = vld [vmem:[%s1 + $0x7e0] sm:$0xff]
      %v1041 = vld [vmem:[%s1 + $0x7e8] sm:$0xff]
      %v1042 = vld [vmem:[%s1 + $0x7f0] sm:$0xff]
      %v1043 = vld [vmem:[%s1 + $0x7f8] sm:$0x77]
      %v1044 = vld [vmem:[%s1 + $0x800] sm:$0x77]
      %v1045 = vld [vmem:[%s1 + $0x808] sm:$0x77]
      %v1046 = vld [vmem:[%s2] sm:$0x3f]
      %v1048 = vlaneseq
      %v1049 = vshrl.u32 %v1048, 7
      %v1050 = vsub.s32 0, %v1049
      %v1051 = vrot.slane %v1046, %v1050
      %v1052 = vlaneseq
      %v1053 = vshrl.u32 %v1052, 7
      %v1054 = vsub.s32 1, %v1053
      %v1055 = vrot.slane %v1046, %v1054
      %v1056 = vlaneseq
      %v1057 = vshrl.u32 %v1056, 7
      %v1058 = vsub.s32 2, %v1057
      %v1059 = vrot.slane %v1046, %v1058
      %v1060 = vlaneseq
      %v1061 = vshrl.u32 %v1060, 7
      %v1062 = vsub.s32 3, %v1061
      %v1063 = vrot.slane %v1046, %v1062
      %v1064 = vlaneseq
      %v1065 = vshrl.u32 %v1064, 7
      %v1066 = vsub.s32 4, %v1065
      %v1067 = vrot.slane %v1046, %v1066
      %v1068 = vlaneseq
      %v1069 = vshrl.u32 %v1068, 7
      %v1070 = vsub.s32 5, %v1069
      %v1071 = vrot.slane %v1046, %v1070
      %v1336 = vunpack.c.l.b16 %v788
      %v1337 = vunpack.c.h.b16 %v788
      %v1338 = vunpack.c.l.b16 %v789
      %v1339 = vunpack.c.h.b16 %v789
      %v1340 = vunpack.c.l.b16 %v790
      %v1341 = vunpack.c.h.b16 %v790
      %v1342 = vunpack.c.l.b16 %v791
      %v1343 = vunpack.c.h.b16 %v791
      %v1344 = vunpack.c.l.b16 %v792
      %v1345 = vunpack.c.h.b16 %v792
      %v1346 = vunpack.c.l.b16 %v793
      %v1347 = vunpack.c.h.b16 %v793
      %v1348 = vunpack.c.l.b16 %v794
      %v1349 = vunpack.c.h.b16 %v794
      %v1350 = vunpack.c.l.b16 %v795
      %v1351 = vunpack.c.h.b16 %v795
      %v1352 = vunpack.c.l.b16 %v796
      %v1353 = vunpack.c.h.b16 %v796
      %v1354 = vunpack.c.l.b16 %v797
      %v1355 = vunpack.c.h.b16 %v797
      %v1356 = vunpack.c.l.b16 %v798
      %v1357 = vunpack.c.h.b16 %v798
      %v1358 = vunpack.c.l.b16 %v799
      %v1359 = vunpack.c.h.b16 %v799
      %v1360 = vunpack.c.l.b16 %v800
      %v1361 = vunpack.c.h.b16 %v800
      %v1362 = vunpack.c.l.b16 %v801
      %v1363 = vunpack.c.h.b16 %v801
      %v1364 = vunpack.c.l.b16 %v802
      %v1365 = vunpack.c.h.b16 %v802
      %v1366 = vunpack.c.l.b16 %v803
      %v1367 = vunpack.c.h.b16 %v803
      %v1368 = vunpack.c.l.b16 %v804
      %v1369 = vunpack.c.h.b16 %v804
      %v1370 = vunpack.c.l.b16 %v805
      %v1371 = vunpack.c.h.b16 %v805
      %v1372 = vunpack.c.l.b16 %v806
      %v1373 = vunpack.c.h.b16 %v806
      %v1374 = vunpack.c.l.b16 %v807
      %v1375 = vunpack.c.h.b16 %v807
      %v1376 = vunpack.c.l.b16 %v808
      %v1377 = vunpack.c.h.b16 %v808
      %v1378 = vunpack.c.l.b16 %v809
      %v1379 = vunpack.c.h.b16 %v809
      %v1380 = vunpack.c.l.b16 %v810
      %v1381 = vunpack.c.h.b16 %v810
      %v1382 = vunpack.c.l.b16 %v811
      %v1383 = vunpack.c.h.b16 %v811
      %v1384 = vunpack.c.l.b16 %v812
      %v1385 = vunpack.c.h.b16 %v812
      %v1386 = vunpack.c.l.b16 %v813
      %v1387 = vunpack.c.h.b16 %v813
      %v1388 = vunpack.c.l.b16 %v814
      %v1389 = vunpack.c.h.b16 %v814
      %v1390 = vunpack.c.l.b16 %v815
      %v1391 = vunpack.c.h.b16 %v815
      %v1392 = vunpack.c.l.b16 %v816
      %v1393 = vunpack.c.h.b16 %v816
      %v1394 = vunpack.c.l.b16 %v817
      %v1395 = vunpack.c.h.b16 %v817
      %v1396 = vunpack.c.l.b16 %v818
      %v1397 = vunpack.c.h.b16 %v818
      %v1398 = vunpack.c.l.b16 %v819
      %v1399 = vunpack.c.h.b16 %v819
      %v1400 = vunpack.c.l.b16 %v820
      %v1401 = vunpack.c.h.b16 %v820
      %v1402 = vunpack.c.l.b16 %v821
      %v1403 = vunpack.c.h.b16 %v821
      %v1404 = vunpack.c.l.b16 %v822
      %v1405 = vunpack.c.h.b16 %v822
      %v1406 = vunpack.c.l.b16 %v823
      %v1407 = vunpack.c.h.b16 %v823
      %v1408 = vunpack.c.l.b16 %v824
      %v1409 = vunpack.c.h.b16 %v824
      %v1410 = vunpack.c.l.b16 %v825
      %v1411 = vunpack.c.h.b16 %v825
      %v1412 = vunpack.c.l.b16 %v826
      %v1413 = vunpack.c.h.b16 %v826
      %v1414 = vunpack.c.l.b16 %v827
      %v1415 = vunpack.c.h.b16 %v827
      %v1416 = vunpack.c.l.b16 %v828
      %v1417 = vunpack.c.h.b16 %v828
      %v1418 = vunpack.c.l.b16 %v829
      %v1419 = vunpack.c.h.b16 %v829
      %v1420 = vunpack.c.l.b16 %v830
      %v1421 = vunpack.c.h.b16 %v830
      %v1422 = vunpack.c.l.b16 %v831
      %v1423 = vunpack.c.h.b16 %v831
      %v1424 = vunpack.c.l.b16 %v832
      %v1425 = vunpack.c.h.b16 %v832
      %v1426 = vunpack.c.l.b16 %v833
      %v1427 = vunpack.c.h.b16 %v833
      %v1428 = vunpack.c.l.b16 %v834
      %v1429 = vunpack.c.h.b16 %v834
      %v1430 = vunpack.c.l.b16 %v835
      %v1431 = vunpack.c.h.b16 %v835
      %v1432 = vunpack.c.l.b16 %v836
      %v1433 = vunpack.c.h.b16 %v836
      %v1434 = vunpack.c.l.b16 %v837
      %v1435 = vunpack.c.h.b16 %v837
      %v1436 = vunpack.c.l.b16 %v838
      %v1437 = vunpack.c.h.b16 %v838
      %v1438 = vunpack.c.l.b16 %v839
      %v1439 = vunpack.c.h.b16 %v839
      %v1440 = vunpack.c.l.b16 %v840
      %v1441 = vunpack.c.h.b16 %v840
      %v1442 = vunpack.c.l.b16 %v841
      %v1443 = vunpack.c.h.b16 %v841
      %v1444 = vunpack.c.l.b16 %v842
      %v1445 = vunpack.c.h.b16 %v842
      %v1446 = vunpack.c.l.b16 %v843
      %v1447 = vunpack.c.h.b16 %v843
      %v1448 = vunpack.c.l.b16 %v844
      %v1449 = vunpack.c.h.b16 %v844
      %v1450 = vunpack.c.l.b16 %v845
      %v1451 = vunpack.c.h.b16 %v845
      %v1452 = vunpack.c.l.b16 %v846
      %v1453 = vunpack.c.h.b16 %v846
      %v1454 = vunpack.c.l.b16 %v847
      %v1455 = vunpack.c.h.b16 %v847
      %v1456 = vunpack.c.l.b16 %v848
      %v1457 = vunpack.c.h.b16 %v848
      %v1458 = vunpack.c.l.b16 %v849
      %v1459 = vunpack.c.h.b16 %v849
      %v1460 = vunpack.c.l.b16 %v850
      %v1461 = vunpack.c.h.b16 %v850
      %v1462 = vunpack.c.l.b16 %v851
      %v1463 = vunpack.c.h.b16 %v851
      %v1464 = vunpack.c.l.b16 %v852
      %v1465 = vunpack.c.h.b16 %v852
      %v1466 = vunpack.c.l.b16 %v853
      %v1467 = vunpack.c.h.b16 %v853
      %v1468 = vunpack.c.l.b16 %v854
      %v1469 = vunpack.c.h.b16 %v854
      %v1470 = vunpack.c.l.b16 %v855
      %v1471 = vunpack.c.h.b16 %v855
      %v1472 = vunpack.c.l.b16 %v856
      %v1473 = vunpack.c.h.b16 %v856
      %v1474 = vunpack.c.l.b16 %v857
      %v1475 = vunpack.c.h.b16 %v857
      %v1476 = vunpack.c.l.b16 %v858
      %v1477 = vunpack.c.h.b16 %v858
      %v1478 = vunpack.c.l.b16 %v859
      %v1479 = vunpack.c.h.b16 %v859
      %v1480 = vunpack.c.l.b16 %v860
      %v1481 = vunpack.c.h.b16 %v860
      %v1482 = vunpack.c.l.b16 %v861
      %v1483 = vunpack.c.h.b16 %v861
      %v1484 = vunpack.c.l.b16 %v862
      %v1485 = vunpack.c.h.b16 %v862
      %v1486 = vunpack.c.l.b16 %v863
      %v1487 = vunpack.c.h.b16 %v863
      %v1488 = vunpack.c.l.b16 %v864
      %v1489 = vunpack.c.h.b16 %v864
      %v1490 = vunpack.c.l.b16 %v865
      %v1491 = vunpack.c.h.b16 %v865
      %v1492 = vunpack.c.l.b16 %v866
      %v1493 = vunpack.c.h.b16 %v866
      %v1494 = vunpack.c.l.b16 %v867
      %v1495 = vunpack.c.h.b16 %v867
      %v1496 = vunpack.c.l.b16 %v868
      %v1497 = vunpack.c.h.b16 %v868
      %v1498 = vunpack.c.l.b16 %v869
      %v1499 = vunpack.c.h.b16 %v869
      %v1500 = vunpack.c.l.b16 %v870
      %v1501 = vunpack.c.h.b16 %v870
      %v1502 = vunpack.c.l.b16 %v871
      %v1503 = vunpack.c.h.b16 %v871
      %v1504 = vunpack.c.l.b16 %v872
      %v1505 = vunpack.c.h.b16 %v872
      %v1506 = vunpack.c.l.b16 %v873
      %v1507 = vunpack.c.h.b16 %v873
      %v1508 = vunpack.c.l.b16 %v874
      %v1509 = vunpack.c.h.b16 %v874
      %v1510 = vunpack.c.l.b16 %v875
      %v1511 = vunpack.c.h.b16 %v875
      %v1512 = vunpack.c.l.b16 %v876
      %v1513 = vunpack.c.h.b16 %v876
      %v1514 = vunpack.c.l.b16 %v877
      %v1515 = vunpack.c.h.b16 %v877
      %v1516 = vunpack.c.l.b16 %v878
      %v1517 = vunpack.c.h.b16 %v878
      %v1518 = vunpack.c.l.b16 %v879
      %v1519 = vunpack.c.h.b16 %v879
      %v1520 = vunpack.c.l.b16 %v880
      %v1521 = vunpack.c.h.b16 %v880
      %v1522 = vunpack.c.l.b16 %v881
      %v1523 = vunpack.c.h.b16 %v881
      %v1524 = vunpack.c.l.b16 %v882
      %v1525 = vunpack.c.h.b16 %v882
      %v1526 = vunpack.c.l.b16 %v883
      %v1527 = vunpack.c.h.b16 %v883
      %v1528 = vunpack.c.l.b16 %v884
      %v1529 = vunpack.c.h.b16 %v884
      %v1530 = vunpack.c.l.b16 %v885
      %v1531 = vunpack.c.h.b16 %v885
      %v1532 = vunpack.c.l.b16 %v886
      %v1533 = vunpack.c.h.b16 %v886
      %v1534 = vunpack.c.l.b16 %v887
      %v1535 = vunpack.c.h.b16 %v887
      %v1536 = vunpack.c.l.b16 %v888
      %v1537 = vunpack.c.h.b16 %v888
      %v1538 = vunpack.c.l.b16 %v889
      %v1539 = vunpack.c.h.b16 %v889
      %v1540 = vunpack.c.l.b16 %v890
      %v1541 = vunpack.c.h.b16 %v890
      %v1542 = vunpack.c.l.b16 %v891
      %v1543 = vunpack.c.h.b16 %v891
      %v1544 = vunpack.c.l.b16 %v892
      %v1545 = vunpack.c.h.b16 %v892
      %v1546 = vunpack.c.l.b16 %v893
      %v1547 = vunpack.c.h.b16 %v893
      %v1548 = vunpack.c.l.b16 %v894
      %v1549 = vunpack.c.h.b16 %v894
      %v1550 = vunpack.c.l.b16 %v895
      %v1551 = vunpack.c.h.b16 %v895
      %v1552 = vunpack.c.l.b16 %v896
      %v1553 = vunpack.c.h.b16 %v896
      %v1554 = vunpack.c.l.b16 %v897
      %v1555 = vunpack.c.h.b16 %v897
      %v1556 = vunpack.c.l.b16 %v898
      %v1557 = vunpack.c.h.b16 %v898
      %v1558 = vunpack.c.l.b16 %v899
      %v1559 = vunpack.c.h.b16 %v899
      %v1560 = vunpack.c.l.b16 %v900
      %v1561 = vunpack.c.h.b16 %v900
      %v1562 = vunpack.c.l.b16 %v901
      %v1563 = vunpack.c.h.b16 %v901
      %v1564 = vunpack.c.l.b16 %v902
      %v1565 = vunpack.c.h.b16 %v902
      %v1566 = vunpack.c.l.b16 %v903
      %v1567 = vunpack.c.h.b16 %v903
      %v1568 = vunpack.c.l.b16 %v904
      %v1569 = vunpack.c.h.b16 %v904
      %v1570 = vunpack.c.l.b16 %v905
      %v1571 = vunpack.c.h.b16 %v905
      %v1572 = vunpack.c.l.b16 %v906
      %v1573 = vunpack.c.h.b16 %v906
      %v1574 = vunpack.c.l.b16 %v907
      %v1575 = vunpack.c.h.b16 %v907
      %v1576 = vunpack.c.l.b16 %v908
      %v1577 = vunpack.c.h.b16 %v908
      %v1578 = vunpack.c.l.b16 %v909
      %v1579 = vunpack.c.h.b16 %v909
      %v1580 = vunpack.c.l.b16 %v910
      %v1581 = vunpack.c.h.b16 %v910
      %v1582 = vunpack.c.l.b16 %v911
      %v1583 = vunpack.c.h.b16 %v911
      %v1584 = vunpack.c.l.b16 %v912
      %v1585 = vunpack.c.h.b16 %v912
      %v1586 = vunpack.c.l.b16 %v913
      %v1587 = vunpack.c.h.b16 %v913
      %v1588 = vunpack.c.l.b16 %v914
      %v1589 = vunpack.c.h.b16 %v914
      %v1590 = vunpack.c.l.b16 %v915
      %v1591 = vunpack.c.h.b16 %v915
      %v1592 = vunpack.c.l.b16 %v916
      %v1593 = vunpack.c.h.b16 %v916
      %v1594 = vunpack.c.l.b16 %v917
      %v1595 = vunpack.c.h.b16 %v917
      %v1596 = vunpack.c.l.b16 %v918
      %v1597 = vunpack.c.h.b16 %v918
      %v1598 = vunpack.c.l.b16 %v919
      %v1599 = vunpack.c.h.b16 %v919
      %v1600 = vunpack.c.l.b16 %v920
      %v1601 = vunpack.c.h.b16 %v920
      %v1602 = vunpack.c.l.b16 %v921
      %v1603 = vunpack.c.h.b16 %v921
      %v1604 = vunpack.c.l.b16 %v922
      %v1605 = vunpack.c.h.b16 %v922
      %v1606 = vunpack.c.l.b16 %v923
      %v1607 = vunpack.c.h.b16 %v923
      %v1608 = vunpack.c.l.b16 %v924
      %v1609 = vunpack.c.h.b16 %v924
      %v1610 = vunpack.c.l.b16 %v925
      %v1611 = vunpack.c.h.b16 %v925
      %v1612 = vunpack.c.l.b16 %v926
      %v1613 = vunpack.c.h.b16 %v926
      %v1614 = vunpack.c.l.b16 %v927
      %v1615 = vunpack.c.h.b16 %v927
      %v1616 = vunpack.c.l.b16 %v928
      %v1617 = vunpack.c.h.b16 %v928
      %v1618 = vunpack.c.l.b16 %v929
      %v1619 = vunpack.c.h.b16 %v929
      %v1620 = vunpack.c.l.b16 %v930
      %v1621 = vunpack.c.h.b16 %v930
      %v1622 = vunpack.c.l.b16 %v931
      %v1623 = vunpack.c.h.b16 %v931
      %v1624 = vunpack.c.l.b16 %v932
      %v1625 = vunpack.c.h.b16 %v932
      %v1626 = vunpack.c.l.b16 %v933
      %v1627 = vunpack.c.h.b16 %v933
      %v1628 = vunpack.c.l.b16 %v934
      %v1629 = vunpack.c.h.b16 %v934
      %v1630 = vunpack.c.l.b16 %v935
      %v1631 = vunpack.c.h.b16 %v935
      %v1632 = vunpack.c.l.b16 %v936
      %v1633 = vunpack.c.h.b16 %v936
      %v1634 = vunpack.c.l.b16 %v937
      %v1635 = vunpack.c.h.b16 %v937
      %v1636 = vunpack.c.l.b16 %v938
      %v1637 = vunpack.c.h.b16 %v938
      %v1638 = vunpack.c.l.b16 %v939
      %v1639 = vunpack.c.h.b16 %v939
      %v1640 = vunpack.c.l.b16 %v940
      %v1641 = vunpack.c.h.b16 %v940
      %v1642 = vunpack.c.l.b16 %v941
      %v1643 = vunpack.c.h.b16 %v941
      %v1644 = vunpack.c.l.b16 %v942
      %v1645 = vunpack.c.h.b16 %v942
      %v1646 = vunpack.c.l.b16 %v943
      %v1647 = vunpack.c.h.b16 %v943
      %v1648 = vunpack.c.l.b16 %v944
      %v1649 = vunpack.c.h.b16 %v944
      %v1650 = vunpack.c.l.b16 %v945
      %v1651 = vunpack.c.h.b16 %v945
      %v1652 = vunpack.c.l.b16 %v946
      %v1653 = vunpack.c.h.b16 %v946
      %v1654 = vunpack.c.l.b16 %v947
      %v1655 = vunpack.c.h.b16 %v947
      %v1656 = vunpack.c.l.b16 %v948
      %v1657 = vunpack.c.h.b16 %v948
      %v1658 = vunpack.c.l.b16 %v949
      %v1659 = vunpack.c.h.b16 %v949
      %v1660 = vunpack.c.l.b16 %v950
      %v1661 = vunpack.c.h.b16 %v950
      %v1662 = vunpack.c.l.b16 %v951
      %v1663 = vunpack.c.h.b16 %v951
      %v1664 = vunpack.c.l.b16 %v952
      %v1665 = vunpack.c.h.b16 %v952
      %v1666 = vunpack.c.l.b16 %v953
      %v1667 = vunpack.c.h.b16 %v953
      %v1668 = vunpack.c.l.b16 %v954
      %v1669 = vunpack.c.h.b16 %v954
      %v1670 = vunpack.c.l.b16 %v955
      %v1671 = vunpack.c.h.b16 %v955
      %v1672 = vunpack.c.l.b16 %v956
      %v1673 = vunpack.c.h.b16 %v956
      %v1674 = vunpack.c.l.b16 %v957
      %v1675 = vunpack.c.h.b16 %v957
      %v1676 = vunpack.c.l.b16 %v958
      %v1677 = vunpack.c.h.b16 %v958
      %v1678 = vunpack.c.l.b16 %v959
      %v1679 = vunpack.c.h.b16 %v959
      %v1680 = vunpack.c.l.b16 %v960
      %v1681 = vunpack.c.h.b16 %v960
      %v1682 = vunpack.c.l.b16 %v961
      %v1683 = vunpack.c.h.b16 %v961
      %v1684 = vunpack.c.l.b16 %v962
      %v1685 = vunpack.c.h.b16 %v962
      %v1686 = vunpack.c.l.b16 %v963
      %v1687 = vunpack.c.h.b16 %v963
      %v1688 = vunpack.c.l.b16 %v964
      %v1689 = vunpack.c.h.b16 %v964
      %v1690 = vunpack.c.l.b16 %v965
      %v1691 = vunpack.c.h.b16 %v965
      %v1692 = vunpack.c.l.b16 %v966
      %v1693 = vunpack.c.h.b16 %v966
      %v1694 = vunpack.c.l.b16 %v967
      %v1695 = vunpack.c.h.b16 %v967
      %v1696 = vunpack.c.l.b16 %v968
      %v1697 = vunpack.c.h.b16 %v968
      %v1698 = vunpack.c.l.b16 %v969
      %v1699 = vunpack.c.h.b16 %v969
      %v1700 = vunpack.c.l.b16 %v970
      %v1701 = vunpack.c.h.b16 %v970
      %v1702 = vunpack.c.l.b16 %v971
      %v1703 = vunpack.c.h.b16 %v971
      %v1704 = vunpack.c.l.b16 %v972
      %v1705 = vunpack.c.h.b16 %v972
      %v1706 = vunpack.c.l.b16 %v973
      %v1707 = vunpack.c.h.b16 %v973
      %v1708 = vunpack.c.l.b16 %v974
      %v1709 = vunpack.c.h.b16 %v974
      %v1710 = vunpack.c.l.b16 %v975
      %v1711 = vunpack.c.h.b16 %v975
      %v1712 = vunpack.c.l.b16 %v976
      %v1713 = vunpack.c.h.b16 %v976
      %v1714 = vunpack.c.l.b16 %v977
      %v1715 = vunpack.c.h.b16 %v977
      %v1716 = vunpack.c.l.b16 %v978
      %v1717 = vunpack.c.h.b16 %v978
      %v1718 = vunpack.c.l.b16 %v979
      %v1719 = vunpack.c.h.b16 %v979
      %v1720 = vunpack.c.l.b16 %v980
      %v1721 = vunpack.c.h.b16 %v980
      %v1722 = vunpack.c.l.b16 %v981
      %v1723 = vunpack.c.h.b16 %v981
      %v1724 = vunpack.c.l.b16 %v982
      %v1725 = vunpack.c.h.b16 %v982
      %v1726 = vunpack.c.l.b16 %v983
      %v1727 = vunpack.c.h.b16 %v983
      %v1728 = vunpack.c.l.b16 %v984
      %v1729 = vunpack.c.h.b16 %v984
      %v1730 = vunpack.c.l.b16 %v985
      %v1731 = vunpack.c.h.b16 %v985
      %v1732 = vunpack.c.l.b16 %v986
      %v1733 = vunpack.c.h.b16 %v986
      %v1734 = vunpack.c.l.b16 %v987
      %v1735 = vunpack.c.h.b16 %v987
      %v1736 = vunpack.c.l.b16 %v988
      %v1737 = vunpack.c.h.b16 %v988
      %v1738 = vunpack.c.l.b16 %v989
      %v1739 = vunpack.c.h.b16 %v989
      %v1740 = vunpack.c.l.b16 %v990
      %v1741 = vunpack.c.h.b16 %v990
      %v1742 = vunpack.c.l.b16 %v991
      %v1743 = vunpack.c.h.b16 %v991
      %v1744 = vunpack.c.l.b16 %v992
      %v1745 = vunpack.c.h.b16 %v992
      %v1746 = vunpack.c.l.b16 %v993
      %v1747 = vunpack.c.h.b16 %v993
      %v1748 = vunpack.c.l.b16 %v994
      %v1749 = vunpack.c.h.b16 %v994
      %v1750 = vunpack.c.l.b16 %v995
      %v1751 = vunpack.c.h.b16 %v995
      %v1752 = vunpack.c.l.b16 %v996
      %v1753 = vunpack.c.h.b16 %v996
      %v1754 = vunpack.c.l.b16 %v997
      %v1755 = vunpack.c.h.b16 %v997
      %v1756 = vunpack.c.l.b16 %v998
      %v1757 = vunpack.c.h.b16 %v998
      %v1758 = vunpack.c.l.b16 %v999
      %v1759 = vunpack.c.h.b16 %v999
      %v1760 = vunpack.c.l.b16 %v1000
      %v1761 = vunpack.c.h.b16 %v1000
      %v1762 = vunpack.c.l.b16 %v1001
      %v1763 = vunpack.c.h.b16 %v1001
      %v1764 = vunpack.c.l.b16 %v1002
      %v1765 = vunpack.c.h.b16 %v1002
      %v1766 = vunpack.c.l.b16 %v1003
      %v1767 = vunpack.c.h.b16 %v1003
      %v1768 = vunpack.c.l.b16 %v1004
      %v1769 = vunpack.c.h.b16 %v1004
      %v1770 = vunpack.c.l.b16 %v1005
      %v1771 = vunpack.c.h.b16 %v1005
      %v1772 = vunpack.c.l.b16 %v1006
      %v1773 = vunpack.c.h.b16 %v1006
      %v1774 = vunpack.c.l.b16 %v1007
      %v1775 = vunpack.c.h.b16 %v1007
      %v1776 = vunpack.c.l.b16 %v1008
      %v1777 = vunpack.c.h.b16 %v1008
      %v1778 = vunpack.c.l.b16 %v1009
      %v1779 = vunpack.c.h.b16 %v1009
      %v1780 = vunpack.c.l.b16 %v1010
      %v1781 = vunpack.c.h.b16 %v1010
      %v1782 = vunpack.c.l.b16 %v1011
      %v1783 = vunpack.c.h.b16 %v1011
      %v1784 = vunpack.c.l.b16 %v1012
      %v1785 = vunpack.c.h.b16 %v1012
      %v1786 = vunpack.c.l.b16 %v1013
      %v1787 = vunpack.c.h.b16 %v1013
      %v1788 = vunpack.c.l.b16 %v1014
      %v1789 = vunpack.c.h.b16 %v1014
      %v1790 = vunpack.c.l.b16 %v1015
      %v1791 = vunpack.c.h.b16 %v1015
      %v1792 = vunpack.c.l.b16 %v1016
      %v1793 = vunpack.c.h.b16 %v1016
      %v1794 = vunpack.c.l.b16 %v1017
      %v1795 = vunpack.c.h.b16 %v1017
      %v1796 = vunpack.c.l.b16 %v1018
      %v1797 = vunpack.c.h.b16 %v1018
      %v1798 = vunpack.c.l.b16 %v1019
      %v1799 = vunpack.c.h.b16 %v1019
      %v1800 = vunpack.c.l.b16 %v1020
      %v1801 = vunpack.c.h.b16 %v1020
      %v1802 = vunpack.c.l.b16 %v1021
      %v1803 = vunpack.c.h.b16 %v1021
      %v1804 = vunpack.c.l.b16 %v1022
      %v1805 = vunpack.c.h.b16 %v1022
      %v1806 = vunpack.c.l.b16 %v1023
      %v1807 = vunpack.c.h.b16 %v1023
      %v1808 = vunpack.c.l.b16 %v1024
      %v1809 = vunpack.c.h.b16 %v1024
      %v1810 = vunpack.c.l.b16 %v1025
      %v1811 = vunpack.c.h.b16 %v1025
      %v1812 = vunpack.c.l.b16 %v1026
      %v1813 = vunpack.c.h.b16 %v1026
      %v1814 = vunpack.c.l.b16 %v1027
      %v1815 = vunpack.c.h.b16 %v1027
      %v1816 = vunpack.c.l.b16 %v1028
      %v1817 = vunpack.c.h.b16 %v1028
      %v1818 = vunpack.c.l.b16 %v1029
      %v1819 = vunpack.c.h.b16 %v1029
      %v1820 = vunpack.c.l.b16 %v1030
      %v1821 = vunpack.c.h.b16 %v1030
      %v1822 = vunpack.c.l.b16 %v1031
      %v1823 = vunpack.c.h.b16 %v1031
      %v1824 = vunpack.c.l.b16 %v1032
      %v1825 = vunpack.c.h.b16 %v1032
      %v1826 = vunpack.c.l.b16 %v1033
      %v1827 = vunpack.c.h.b16 %v1033
      %v1828 = vunpack.c.l.b16 %v1034
      %v1829 = vunpack.c.h.b16 %v1034
      %v1830 = vunpack.c.l.b16 %v1035
      %v1831 = vunpack.c.h.b16 %v1035
      %v1832 = vunpack.c.l.b16 %v1036
      %v1833 = vunpack.c.h.b16 %v1036
      %v1834 = vunpack.c.l.b16 %v1037
      %v1835 = vunpack.c.h.b16 %v1037
      %v1836 = vunpack.c.l.b16 %v1038
      %v1837 = vunpack.c.h.b16 %v1038
      %v1838 = vunpack.c.l.b16 %v1039
      %v1839 = vunpack.c.h.b16 %v1039
      %v1840 = vunpack.c.l.b16 %v1040
      %v1841 = vunpack.c.h.b16 %v1040
      %v1842 = vunpack.c.l.b16 %v1041
      %v1843 = vunpack.c.h.b16 %v1041
      %v1844 = vunpack.c.l.b16 %v1042
      %v1845 = vunpack.c.h.b16 %v1042
      %v1846 = vunpack.c.l.b16 %v1043
      %v1847 = vunpack.c.h.b16 %v1043
      %v1848 = vunpack.c.l.b16 %v1044
      %v1849 = vunpack.c.h.b16 %v1044
      %v1850 = vunpack.c.l.b16 %v1045
      %v1851 = vunpack.c.h.b16 %v1045
      %v1852 = vpack.c.b16 %v1342, %v1336
      %v1853 = vpack.c.b16 %v1343, %v1337
      %v1854 = vpack.c.b16 %v1344, %v1338
      %v1855 = vpack.c.b16 %v1345, %v1339
      %v1856 = vpack.c.b16 %v1346, %v1340
      %v1857 = vpack.c.b16 %v1347, %v1341
      %v1858 = vpack.c.b16 %v1354, %v1348
      %v1859 = vpack.c.b16 %v1355, %v1349
      %v1860 = vpack.c.b16 %v1356, %v1350
      %v1861 = vpack.c.b16 %v1357, %v1351
      %v1862 = vpack.c.b16 %v1358, %v1352
      %v1863 = vpack.c.b16 %v1359, %v1353
      %v1864 = vpack.c.b16 %v1366, %v1360
      %v1865 = vpack.c.b16 %v1367, %v1361
      %v1866 = vpack.c.b16 %v1368, %v1362
      %v1867 = vpack.c.b16 %v1369, %v1363
      %v1868 = vpack.c.b16 %v1370, %v1364
      %v1869 = vpack.c.b16 %v1371, %v1365
      %v1870 = vpack.c.b16 %v1378, %v1372
      %v1871 = vpack.c.b16 %v1379, %v1373
      %v1872 = vpack.c.b16 %v1380, %v1374
      %v1873 = vpack.c.b16 %v1381, %v1375
      %v1874 = vpack.c.b16 %v1382, %v1376
      %v1875 = vpack.c.b16 %v1383, %v1377
      %v1876 = vpack.c.b16 %v1390, %v1384
      %v1877 = vpack.c.b16 %v1391, %v1385
      %v1878 = vpack.c.b16 %v1392, %v1386
      %v1879 = vpack.c.b16 %v1393, %v1387
      %v1880 = vpack.c.b16 %v1394, %v1388
      %v1881 = vpack.c.b16 %v1395, %v1389
      %v1882 = vpack.c.b16 %v1402, %v1396
      %v1883 = vpack.c.b16 %v1403, %v1397
      %v1884 = vpack.c.b16 %v1404, %v1398
      %v1885 = vpack.c.b16 %v1405, %v1399
      %v1886 = vpack.c.b16 %v1406, %v1400
      %v1887 = vpack.c.b16 %v1407, %v1401
      %v1888 = vpack.c.b16 %v1414, %v1408
      %v1889 = vpack.c.b16 %v1415, %v1409
      %v1890 = vpack.c.b16 %v1416, %v1410
      %v1891 = vpack.c.b16 %v1417, %v1411
      %v1892 = vpack.c.b16 %v1418, %v1412
      %v1893 = vpack.c.b16 %v1419, %v1413
      %v1894 = vpack.c.b16 %v1426, %v1420
      %v1895 = vpack.c.b16 %v1427, %v1421
      %v1896 = vpack.c.b16 %v1428, %v1422
      %v1897 = vpack.c.b16 %v1429, %v1423
      %v1898 = vpack.c.b16 %v1430, %v1424
      %v1899 = vpack.c.b16 %v1431, %v1425
      %v1900 = vpack.c.b16 %v1438, %v1432
      %v1901 = vpack.c.b16 %v1439, %v1433
      %v1902 = vpack.c.b16 %v1440, %v1434
      %v1903 = vpack.c.b16 %v1441, %v1435
      %v1904 = vpack.c.b16 %v1442, %v1436
      %v1905 = vpack.c.b16 %v1443, %v1437
      %v1906 = vpack.c.b16 %v1450, %v1444
      %v1907 = vpack.c.b16 %v1451, %v1445
      %v1908 = vpack.c.b16 %v1452, %v1446
      %v1909 = vpack.c.b16 %v1453, %v1447
      %v1910 = vpack.c.b16 %v1454, %v1448
      %v1911 = vpack.c.b16 %v1455, %v1449
      %v1912 = vpack.c.b16 %v1462, %v1456
      %v1913 = vpack.c.b16 %v1463, %v1457
      %v1914 = vpack.c.b16 %v1464, %v1458
      %v1915 = vpack.c.b16 %v1465, %v1459
      %v1916 = vpack.c.b16 %v1466, %v1460
      %v1917 = vpack.c.b16 %v1467, %v1461
      %v1918 = vpack.c.b16 %v1474, %v1468
      %v1919 = vpack.c.b16 %v1475, %v1469
      %v1920 = vpack.c.b16 %v1476, %v1470
      %v1921 = vpack.c.b16 %v1477, %v1471
      %v1922 = vpack.c.b16 %v1478, %v1472
      %v1923 = vpack.c.b16 %v1479, %v1473
      %v1924 = vpack.c.b16 %v1486, %v1480
      %v1925 = vpack.c.b16 %v1487, %v1481
      %v1926 = vpack.c.b16 %v1488, %v1482
      %v1927 = vpack.c.b16 %v1489, %v1483
      %v1928 = vpack.c.b16 %v1490, %v1484
      %v1929 = vpack.c.b16 %v1491, %v1485
      %v1930 = vpack.c.b16 %v1498, %v1492
      %v1931 = vpack.c.b16 %v1499, %v1493
      %v1932 = vpack.c.b16 %v1500, %v1494
      %v1933 = vpack.c.b16 %v1501, %v1495
      %v1934 = vpack.c.b16 %v1502, %v1496
      %v1935 = vpack.c.b16 %v1503, %v1497
      %v1936 = vpack.c.b16 %v1510, %v1504
      %v1937 = vpack.c.b16 %v1511, %v1505
      %v1938 = vpack.c.b16 %v1512, %v1506
      %v1939 = vpack.c.b16 %v1513, %v1507
      %v1940 = vpack.c.b16 %v1514, %v1508
      %v1941 = vpack.c.b16 %v1515, %v1509
      %v1942 = vpack.c.b16 %v1522, %v1516
      %v1943 = vpack.c.b16 %v1523, %v1517
      %v1944 = vpack.c.b16 %v1524, %v1518
      %v1945 = vpack.c.b16 %v1525, %v1519
      %v1946 = vpack.c.b16 %v1526, %v1520
      %v1947 = vpack.c.b16 %v1527, %v1521
      %v1948 = vpack.c.b16 %v1534, %v1528
      %v1949 = vpack.c.b16 %v1535, %v1529
      %v1950 = vpack.c.b16 %v1536, %v1530
      %v1951 = vpack.c.b16 %v1537, %v1531
      %v1952 = vpack.c.b16 %v1538, %v1532
      %v1953 = vpack.c.b16 %v1539, %v1533
      %v1954 = vpack.c.b16 %v1546, %v1540
      %v1955 = vpack.c.b16 %v1547, %v1541
      %v1956 = vpack.c.b16 %v1548, %v1542
      %v1957 = vpack.c.b16 %v1549, %v1543
      %v1958 = vpack.c.b16 %v1550, %v1544
      %v1959 = vpack.c.b16 %v1551, %v1545
      %v1960 = vpack.c.b16 %v1558, %v1552
      %v1961 = vpack.c.b16 %v1559, %v1553
      %v1962 = vpack.c.b16 %v1560, %v1554
      %v1963 = vpack.c.b16 %v1561, %v1555
      %v1964 = vpack.c.b16 %v1562, %v1556
      %v1965 = vpack.c.b16 %v1563, %v1557
      %v1966 = vpack.c.b16 %v1570, %v1564
      %v1967 = vpack.c.b16 %v1571, %v1565
      %v1968 = vpack.c.b16 %v1572, %v1566
      %v1969 = vpack.c.b16 %v1573, %v1567
      %v1970 = vpack.c.b16 %v1574, %v1568
      %v1971 = vpack.c.b16 %v1575, %v1569
      %v1972 = vpack.c.b16 %v1582, %v1576
      %v1973 = vpack.c.b16 %v1583, %v1577
      %v1974 = vpack.c.b16 %v1584, %v1578
      %v1975 = vpack.c.b16 %v1585, %v1579
      %v1976 = vpack.c.b16 %v1586, %v1580
      %v1977 = vpack.c.b16 %v1587, %v1581
      %v1978 = vpack.c.b16 %v1594, %v1588
      %v1979 = vpack.c.b16 %v1595, %v1589
      %v1980 = vpack.c.b16 %v1596, %v1590
      %v1981 = vpack.c.b16 %v1597, %v1591
      %v1982 = vpack.c.b16 %v1598, %v1592
      %v1983 = vpack.c.b16 %v1599, %v1593
      %v1984 = vpack.c.b16 %v1606, %v1600
      %v1985 = vpack.c.b16 %v1607, %v1601
      %v1986 = vpack.c.b16 %v1608, %v1602
      %v1987 = vpack.c.b16 %v1609, %v1603
      %v1988 = vpack.c.b16 %v1610, %v1604
      %v1989 = vpack.c.b16 %v1611, %v1605
      %v1990 = vpack.c.b16 %v1618, %v1612
      %v1991 = vpack.c.b16 %v1619, %v1613
      %v1992 = vpack.c.b16 %v1620, %v1614
      %v1993 = vpack.c.b16 %v1621, %v1615
      %v1994 = vpack.c.b16 %v1622, %v1616
      %v1995 = vpack.c.b16 %v1623, %v1617
      %v1996 = vpack.c.b16 %v1630, %v1624
      %v1997 = vpack.c.b16 %v1631, %v1625
      %v1998 = vpack.c.b16 %v1632, %v1626
      %v1999 = vpack.c.b16 %v1633, %v1627
      %v2000 = vpack.c.b16 %v1634, %v1628
      %v2001 = vpack.c.b16 %v1635, %v1629
      %v2002 = vpack.c.b16 %v1642, %v1636
      %v2003 = vpack.c.b16 %v1643, %v1637
      %v2004 = vpack.c.b16 %v1644, %v1638
      %v2005 = vpack.c.b16 %v1645, %v1639
      %v2006 = vpack.c.b16 %v1646, %v1640
      %v2007 = vpack.c.b16 %v1647, %v1641
      %v2008 = vpack.c.b16 %v1654, %v1648
      %v2009 = vpack.c.b16 %v1655, %v1649
      %v2010 = vpack.c.b16 %v1656, %v1650
      %v2011 = vpack.c.b16 %v1657, %v1651
      %v2012 = vpack.c.b16 %v1658, %v1652
      %v2013 = vpack.c.b16 %v1659, %v1653
      %v2014 = vpack.c.b16 %v1666, %v1660
      %v2015 = vpack.c.b16 %v1667, %v1661
      %v2016 = vpack.c.b16 %v1668, %v1662
      %v2017 = vpack.c.b16 %v1669, %v1663
      %v2018 = vpack.c.b16 %v1670, %v1664
      %v2019 = vpack.c.b16 %v1671, %v1665
      %v2020 = vpack.c.b16 %v1678, %v1672
      %v2021 = vpack.c.b16 %v1679, %v1673
      %v2022 = vpack.c.b16 %v1680, %v1674
      %v2023 = vpack.c.b16 %v1681, %v1675
      %v2024 = vpack.c.b16 %v1682, %v1676
      %v2025 = vpack.c.b16 %v1683, %v1677
      %v2026 = vpack.c.b16 %v1690, %v1684
      %v2027 = vpack.c.b16 %v1691, %v1685
      %v2028 = vpack.c.b16 %v1692, %v1686
      %v2029 = vpack.c.b16 %v1693, %v1687
      %v2030 = vpack.c.b16 %v1694, %v1688
      %v2031 = vpack.c.b16 %v1695, %v1689
      %v2032 = vpack.c.b16 %v1702, %v1696
      %v2033 = vpack.c.b16 %v1703, %v1697
      %v2034 = vpack.c.b16 %v1704, %v1698
      %v2035 = vpack.c.b16 %v1705, %v1699
      %v2036 = vpack.c.b16 %v1706, %v1700
      %v2037 = vpack.c.b16 %v1707, %v1701
      %v2038 = vpack.c.b16 %v1714, %v1708
      %v2039 = vpack.c.b16 %v1715, %v1709
      %v2040 = vpack.c.b16 %v1716, %v1710
      %v2041 = vpack.c.b16 %v1717, %v1711
      %v2042 = vpack.c.b16 %v1718, %v1712
      %v2043 = vpack.c.b16 %v1719, %v1713
      %v2044 = vpack.c.b16 %v1726, %v1720
      %v2045 = vpack.c.b16 %v1727, %v1721
      %v2046 = vpack.c.b16 %v1728, %v1722
      %v2047 = vpack.c.b16 %v1729, %v1723
      %v2048 = vpack.c.b16 %v1730, %v1724
      %v2049 = vpack.c.b16 %v1731, %v1725
      %v2050 = vpack.c.b16 %v1738, %v1732
      %v2051 = vpack.c.b16 %v1739, %v1733
      %v2052 = vpack.c.b16 %v1740, %v1734
      %v2053 = vpack.c.b16 %v1741, %v1735
      %v2054 = vpack.c.b16 %v1742, %v1736
      %v2055 = vpack.c.b16 %v1743, %v1737
      %v2056 = vpack.c.b16 %v1750, %v1744
      %v2057 = vpack.c.b16 %v1751, %v1745
      %v2058 = vpack.c.b16 %v1752, %v1746
      %v2059 = vpack.c.b16 %v1753, %v1747
      %v2060 = vpack.c.b16 %v1754, %v1748
      %v2061 = vpack.c.b16 %v1755, %v1749
      %v2062 = vpack.c.b16 %v1762, %v1756
      %v2063 = vpack.c.b16 %v1763, %v1757
      %v2064 = vpack.c.b16 %v1764, %v1758
      %v2065 = vpack.c.b16 %v1765, %v1759
      %v2066 = vpack.c.b16 %v1766, %v1760
      %v2067 = vpack.c.b16 %v1767, %v1761
      %v2068 = vpack.c.b16 %v1774, %v1768
      %v2069 = vpack.c.b16 %v1775, %v1769
      %v2070 = vpack.c.b16 %v1776, %v1770
      %v2071 = vpack.c.b16 %v1777, %v1771
      %v2072 = vpack.c.b16 %v1778, %v1772
      %v2073 = vpack.c.b16 %v1779, %v1773
      %v2074 = vpack.c.b16 %v1786, %v1780
      %v2075 = vpack.c.b16 %v1787, %v1781
      %v2076 = vpack.c.b16 %v1788, %v1782
      %v2077 = vpack.c.b16 %v1789, %v1783
      %v2078 = vpack.c.b16 %v1790, %v1784
      %v2079 = vpack.c.b16 %v1791, %v1785
      %v2080 = vpack.c.b16 %v1798, %v1792
      %v2081 = vpack.c.b16 %v1799, %v1793
      %v2082 = vpack.c.b16 %v1800, %v1794
      %v2083 = vpack.c.b16 %v1801, %v1795
      %v2084 = vpack.c.b16 %v1802, %v1796
      %v2085 = vpack.c.b16 %v1803, %v1797
      %v2086 = vpack.c.b16 %v1810, %v1804
      %v2087 = vpack.c.b16 %v1811, %v1805
      %v2088 = vpack.c.b16 %v1812, %v1806
      %v2089 = vpack.c.b16 %v1813, %v1807
      %v2090 = vpack.c.b16 %v1814, %v1808
      %v2091 = vpack.c.b16 %v1815, %v1809
      %v2092 = vpack.c.b16 %v1822, %v1816
      %v2093 = vpack.c.b16 %v1823, %v1817
      %v2094 = vpack.c.b16 %v1824, %v1818
      %v2095 = vpack.c.b16 %v1825, %v1819
      %v2096 = vpack.c.b16 %v1826, %v1820
      %v2097 = vpack.c.b16 %v1827, %v1821
      %v2098 = vpack.c.b16 %v1834, %v1828
      %v2099 = vpack.c.b16 %v1835, %v1829
      %v2100 = vpack.c.b16 %v1836, %v1830
      %v2101 = vpack.c.b16 %v1837, %v1831
      %v2102 = vpack.c.b16 %v1838, %v1832
      %v2103 = vpack.c.b16 %v1839, %v1833
      %v2104 = vpack.c.b16 %v1846, %v1840
      %v2105 = vpack.c.b16 %v1847, %v1841
      %v2106 = vpack.c.b16 %v1848, %v1842
      %v2107 = vpack.c.b16 %v1849, %v1843
      %v2108 = vpack.c.b16 %v1850, %v1844
      %v2109 = vpack.c.b16 %v1851, %v1845
      %vm2362 = vcmask 375808
      %v2363 = vsel %vm2362, %v669, 0
      %v2365 = vsel %vm2362, %v671, 0
      %v2367 = vsel %vm2362, %v673, 0
      %v2369 = vsel %vm2362, %v675, 0
      %v2371 = vsel %vm2362, %v677, 0
      %v2373 = vsel %vm2362, %v679, 0
      %vm2375 = vcmask 1046528
      %v2377 = vsel %vm2375, %v2104, 0
      %v2380 = vsel %vm2375, %v2105, 0
      %v2383 = vsel %vm2375, %v2106, 0
      %v2386 = vsel %vm2375, %v2107, 0
      %v2389 = vsel %vm2375, %v2108, 0
      %v2392 = vsel %vm2375, %v2109, 0
      %2394 = vmatprep.subr.bf16.mxu0 %v1853
      %2395 = vmatpush1.bf16.msra.mxu0 %v1852
      %2396 = vmatprep.subr.bf16.mxu0 %v1859
      %2397 = vmatpush1.bf16.msra.mxu0 %v1858
      %2398 = vmatprep.subr.bf16.mxu0 %v1865
      %2399 = vmatpush1.bf16.msra.mxu0 %v1864
      %2400 = vmatprep.subr.bf16.mxu0 %v1871
      %2401 = vmatpush1.bf16.msra.mxu0 %v1870
      %2402 = vmatprep.subr.bf16.mxu0 %v1877
      %2403 = vmatpush1.bf16.msra.mxu0 %v1876
      %2404 = vmatprep.subr.bf16.mxu0 %v1883
      %2405 = vmatpush1.bf16.msra.mxu0 %v1882
      %2406 = vmatprep.subr.bf16.mxu0 %v1889
      %2407 = vmatpush1.bf16.msra.mxu0 %v1888
      %2408 = vmatprep.subr.bf16.mxu0 %v1895
      %2409 = vmatpush1.bf16.msra.mxu0 %v1894
      %2410 = vmatprep.subr.bf16.mxu0 %v1901
      %2411 = vmatpush1.bf16.msra.mxu0 %v1900
      %2412 = vmatprep.subr.bf16.mxu0 %v1907
      %2413 = vmatpush1.bf16.msra.mxu0 %v1906
      %2414 = vmatprep.subr.bf16.mxu0 %v1913
      %2415 = vmatpush1.bf16.msra.mxu0 %v1912
      %2416 = vmatprep.subr.bf16.mxu0 %v1919
      %2417 = vmatpush1.bf16.msra.mxu0 %v1918
      %2418 = vmatprep.subr.bf16.mxu0 %v1925
      %2419 = vmatpush1.bf16.msra.mxu0 %v1924
      %2420 = vmatprep.subr.bf16.mxu0 %v1931
      %2421 = vmatpush1.bf16.msra.mxu0 %v1930
      %2422 = vmatprep.subr.bf16.mxu0 %v1937
      %2423 = vmatpush1.bf16.msra.mxu0 %v1936
      %2424 = vmatprep.subr.bf16.mxu0 %v1943
      %2425 = vmatpush1.bf16.msra.mxu0 %v1942
      %2426 = vmatprep.mubr.bf16.mxu0 %v701
      %2427 = vmatmul.mubr.bf16.gmra.mrb[0].mxu0 %v682
      %v2428 = vpop.f32.mrb[0].mxu0
      %v2429 = vadd.f32 %v1051, %v2428
      %v2430 = vpop.f32.mrb[0].mxu0
      %v2431 = vadd.f32 %v1055, %v2430
      %v2432 = vpop.f32.mrb[0].mxu0
      %v2433 = vadd.f32 %v1051, %v2432
      %v2434 = vpop.f32.mrb[0].mxu0
      %v2435 = vadd.f32 %v1055, %v2434
      %2436 = vmatprep.mubr.bf16.mxu0 %v704
      %2437 = vmatmul.mubr.bf16.gmra.mrb[0].mxu0 %v685
      %v2438 = vpop.f32.mrb[0].mxu0
      %v2439 = vadd.f32 %v1051, %v2438
      %v2440 = vpop.f32.mrb[0].mxu0
      %v2441 = vadd.f32 %v1055, %v2440
      %v2442 = vpop.f32.mrb[0].mxu0
      %v2443 = vadd.f32 %v1051, %v2442
      %v2444 = vpop.f32.mrb[0].mxu0
      %v2445 = vadd.f32 %v1055, %v2444
      %2446 = vmatprep.mubr.bf16.mxu0 %v707
      %2447 = vmatmul.mubr.bf16.gmra.mrb[0].mxu0 %v688
      %v2448 = vpop.f32.mrb[0].mxu0
      %v2449 = vadd.f32 %v1051, %v2448
      %v2450 = vpop.f32.mrb[0].mxu0
      %v2451 = vadd.f32 %v1055, %v2450
      %v2452 = vpop.f32.mrb[0].mxu0
      %v2453 = vadd.f32 %v1051, %v2452
      %v2454 = vpop.f32.mrb[0].mxu0
      %v2455 = vadd.f32 %v1055, %v2454
      %2456 = vmatprep.mubr.bf16.mxu0 %v710
      %2457 = vmatmul.mubr.bf16.gmra.mrb[0].mxu0 %v691
      %v2458 = vpop.f32.mrb[0].mxu0
      %v2459 = vadd.f32 %v1051, %v2458
      %v2460 = vpop.f32.mrb[0].mxu0
      %v2461 = vadd.f32 %v1055, %v2460
      %v2462 = vpop.f32.mrb[0].mxu0
      %v2463 = vadd.f32 %v1051, %v2462
      %v2464 = vpop.f32.mrb[0].mxu0
      %v2465 = vadd.f32 %v1055, %v2464
      %2466 = vmatprep.mubr.bf16.mxu0 %v713
      %2467 = vmatmul.mubr.bf16.gmra.mrb[0].mxu0 %v694
      %v2468 = vpop.f32.mrb[0].mxu0
      %v2469 = vadd.f32 %v1051, %v2468
      %v2470 = vpop.f32.mrb[0].mxu0
      %v2471 = vadd.f32 %v1055, %v2470
      %v2472 = vpop.f32.mrb[0].mxu0
      %v2473 = vadd.f32 %v1051, %v2472
      %v2474 = vpop.f32.mrb[0].mxu0
      %v2475 = vadd.f32 %v1055, %v2474
      %2476 = vmatprep.mubr.bf16.mxu0 %v716
      %2477 = vmatmul.mubr.bf16.gmra.mrb[0].mxu0 %v697
      %v2478 = vpop.f32.mrb[0].mxu0
      %v2479 = vadd.f32 %v1051, %v2478
      %v2480 = vpop.f32.mrb[0].mxu0
      %v2481 = vadd.f32 %v1055, %v2480
      %v2482 = vpop.f32.mrb[0].mxu0
      %v2483 = vadd.f32 %v1051, %v2482
      %v2484 = vpop.f32.mrb[0].mxu0
      %v2485 = vadd.f32 %v1055, %v2484
      %2486 = vdwg.mxu0
      %2487 = vmatprep.subr.bf16.mxu0 %v1949
      %2488 = vmatpush1.bf16.msra.mxu0 %v1948
      %2489 = vmatprep.subr.bf16.mxu0 %v1955
      %2490 = vmatpush1.bf16.msra.mxu0 %v1954
      %2491 = vmatprep.subr.bf16.mxu0 %v1961
      %2492 = vmatpush1.bf16.msra.mxu0 %v1960
      %2493 = vmatprep.subr.bf16.mxu0 %v1967
      %2494 = vmatpush1.bf16.msra.mxu0 %v1966
      %2495 = vmatprep.subr.bf16.mxu0 %v1973
      %2496 = vmatpush1.bf16.msra.mxu0 %v1972
      %2497 = vmatprep.subr.bf16.mxu0 %v1979
      %2498 = vmatpush1.bf16.msra.mxu0 %v1978
      %2499 = vmatprep.subr.bf16.mxu0 %v1985
      %2500 = vmatpush1.bf16.msra.mxu0 %v1984
      %2501 = vmatprep.subr.bf16.mxu0 %v1991
      %2502 = vmatpush1.bf16.msra.mxu0 %v1990
      %2503 = vmatprep.subr.bf16.mxu0 %v1997
      %2504 = vmatpush1.bf16.msra.mxu0 %v1996
      %2505 = vmatprep.subr.bf16.mxu0 %v2003
      %2506 = vmatpush1.bf16.msra.mxu0 %v2002
      %2507 = vmatprep.subr.bf16.mxu0 %v2009
      %2508 = vmatpush1.bf16.msra.mxu0 %v2008
      %2509 = vmatprep.subr.bf16.mxu0 %v2015
      %2510 = vmatpush1.bf16.msra.mxu0 %v2014
      %2511 = vmatprep.subr.bf16.mxu0 %v2021
      %2512 = vmatpush1.bf16.msra.mxu0 %v2020
      %2513 = vmatprep.subr.bf16.mxu0 %v2027
      %2514 = vmatpush1.bf16.msra.mxu0 %v2026
      %2515 = vmatprep.subr.bf16.mxu0 %v2033
      %2516 = vmatpush1.bf16.msra.mxu0 %v2032
      %2517 = vmatprep.subr.bf16.mxu0 %v2039
      %2518 = vmatpush1.bf16.msra.mxu0 %v2038
      %2519 = vmatprep.mubr.bf16.mxu0 %v752
      %2520 = vmatmul.mubr.bf16.gmra.mrb[0].mxu0 %v720
      %v2521 = vpop.f32.mrb[0].mxu0
      %v2522 = vadd.f32 %v2429, %v2521
      %v2523 = vpop.f32.mrb[0].mxu0
      %v2524 = vadd.f32 %v2431, %v2523
      %v2525 = vpop.f32.mrb[0].mxu0
      %v2526 = vadd.f32 %v2433, %v2525
      %v2527 = vpop.f32.mrb[0].mxu0
      %v2528 = vadd.f32 %v2435, %v2527
      %2529 = vmatprep.mubr.bf16.mxu0 %v755
      %2530 = vmatmul.mubr.bf16.gmra.mrb[0].mxu0 %v723
      %v2531 = vpop.f32.mrb[0].mxu0
      %v2532 = vadd.f32 %v2439, %v2531
      %v2533 = vpop.f32.mrb[0].mxu0
      %v2534 = vadd.f32 %v2441, %v2533
      %v2535 = vpop.f32.mrb[0].mxu0
      %v2536 = vadd.f32 %v2443, %v2535
      %v2537 = vpop.f32.mrb[0].mxu0
      %v2538 = vadd.f32 %v2445, %v2537
      %2539 = vmatprep.mubr.bf16.mxu0 %v758
      %2540 = vmatmul.mubr.bf16.gmra.mrb[0].mxu0 %v726
      %v2541 = vpop.f32.mrb[0].mxu0
      %v2542 = vadd.f32 %v2449, %v2541
      %v2543 = vpop.f32.mrb[0].mxu0
      %v2544 = vadd.f32 %v2451, %v2543
      %v2545 = vpop.f32.mrb[0].mxu0
      %v2546 = vadd.f32 %v2453, %v2545
      %v2547 = vpop.f32.mrb[0].mxu0
      %v2548 = vadd.f32 %v2455, %v2547
      %2549 = vmatprep.mubr.bf16.mxu0 %v761
      %2550 = vmatmul.mubr.bf16.gmra.mrb[0].mxu0 %v729
      %v2551 = vpop.f32.mrb[0].mxu0
      %v2552 = vadd.f32 %v2459, %v2551
      %v2553 = vpop.f32.mrb[0].mxu0
      %v2554 = vadd.f32 %v2461, %v2553
      %v2555 = vpop.f32.mrb[0].mxu0
      %v2556 = vadd.f32 %v2463, %v2555
      %v2557 = vpop.f32.mrb[0].mxu0
      %v2558 = vadd.f32 %v2465, %v2557
      %2559 = vmatprep.mubr.bf16.mxu0 %v764
      %2560 = vmatmul.mubr.bf16.gmra.mrb[0].mxu0 %v732
      %v2561 = vpop.f32.mrb[0].mxu0
      %v2562 = vadd.f32 %v2469, %v2561
      %v2563 = vpop.f32.mrb[0].mxu0
      %v2564 = vadd.f32 %v2471, %v2563
      %v2565 = vpop.f32.mrb[0].mxu0
      %v2566 = vadd.f32 %v2473, %v2565
      %v2567 = vpop.f32.mrb[0].mxu0
      %v2568 = vadd.f32 %v2475, %v2567
      %2569 = vmatprep.mubr.bf16.mxu0 %v767
      %2570 = vmatmul.mubr.bf16.gmra.mrb[0].mxu0 %v735
      %v2571 = vpop.f32.mrb[0].mxu0
      %v2572 = vadd.f32 %v2479, %v2571
      %v2573 = vpop.f32.mrb[0].mxu0
      %v2574 = vadd.f32 %v2481, %v2573
      %v2575 = vpop.f32.mrb[0].mxu0
      %v2576 = vadd.f32 %v2483, %v2575
      %v2577 = vpop.f32.mrb[0].mxu0
      %v2578 = vadd.f32 %v2485, %v2577
      %2579 = vdwg.mxu0
      %2580 = vmatprep.subr.bf16.mxu0 %v2045
      %2581 = vmatpush1.bf16.msra.mxu0 %v2044
      %2582 = vmatprep.subr.bf16.mxu0 %v2051
      %2583 = vmatpush1.bf16.msra.mxu0 %v2050
      %2584 = vmatprep.subr.bf16.mxu0 %v2057
      %2585 = vmatpush1.bf16.msra.mxu0 %v2056
      %2586 = vmatprep.subr.bf16.mxu0 %v2063
      %2587 = vmatpush1.bf16.msra.mxu0 %v2062
      %2588 = vmatprep.subr.bf16.mxu0 %v2069
      %2589 = vmatpush1.bf16.msra.mxu0 %v2068
      %2590 = vmatprep.subr.bf16.mxu0 %v2075
      %2591 = vmatpush1.bf16.msra.mxu0 %v2074
      %2592 = vmatprep.subr.bf16.mxu0 %v2081
      %2593 = vmatpush1.bf16.msra.mxu0 %v2080
      %2594 = vmatprep.subr.bf16.mxu0 %v2087
      %2595 = vmatpush1.bf16.msra.mxu0 %v2086
      %2596 = vmatprep.subr.bf16.mxu0 %v2093
      %2597 = vmatpush1.bf16.msra.mxu0 %v2092
      %2598 = vmatprep.subr.bf16.mxu0 %v2099
      %2599 = vmatpush1.bf16.msra.mxu0 %v2098
      %2600 = vmatprep.subr.bf16.mxu0 %v2380
      %2601 = vmatpush1.bf16.msra.mxu0 %v2377
      %2602 = vmatprep.subr.bf16.mxu0 0
      %2603 = vmatpush1.bf16.msra.mxu0 0
      %2604 = vmatprep.subr.bf16.mxu0 0
      %2605 = vmatpush1.bf16.msra.mxu0 0
      %2606 = vmatprep.subr.bf16.mxu0 0
      %2607 = vmatpush1.bf16.msra.mxu0 0
      %2608 = vmatprep.subr.bf16.mxu0 0
      %2609 = vmatpush1.bf16.msra.mxu0 0
      %2610 = vmatprep.subr.bf16.mxu0 0
      %2611 = vmatpush1.bf16.msra.mxu0 0
      %2612 = vmatprep.mubr.bf16.mxu0 %v2363
      %2613 = vmatmul.mubr.bf16.gmra.mrb[0].mxu0 %v771
      %v2614 = vpop.f32.mrb[0].mxu0
      %v2615 = vadd.f32 %v2522, %v2614
      %v2616 = vpop.f32.mrb[0].mxu0
      %v2617 = vadd.f32 %v2524, %v2616
      %v2618 = vpop.f32.mrb[0].mxu0
      %v2619 = vadd.f32 %v2526, %v2618
      %v2620 = vpop.f32.mrb[0].mxu0
      %v2621 = vadd.f32 %v2528, %v2620
      %2622 = vmatprep.mubr.bf16.mxu0 %v2365
      %2623 = vmatmul.mubr.bf16.gmra.mrb[0].mxu0 %v774
      %v2624 = vpop.f32.mrb[0].mxu0
      %v2625 = vadd.f32 %v2532, %v2624
      %v2626 = vpop.f32.mrb[0].mxu0
      %v2627 = vadd.f32 %v2534, %v2626
      %v2628 = vpop.f32.mrb[0].mxu0
      %v2629 = vadd.f32 %v2536, %v2628
      %v2630 = vpop.f32.mrb[0].mxu0
      %v2631 = vadd.f32 %v2538, %v2630
      %2632 = vmatprep.mubr.bf16.mxu0 %v2367
      %2633 = vmatmul.mubr.bf16.gmra.mrb[0].mxu0 %v777
      %v2634 = vpop.f32.mrb[0].mxu0
      %v2635 = vadd.f32 %v2542, %v2634
      %v2636 = vpop.f32.mrb[0].mxu0
      %v2637 = vadd.f32 %v2544, %v2636
      %v2638 = vpop.f32.mrb[0].mxu0
      %v2639 = vadd.f32 %v2546, %v2638
      %v2640 = vpop.f32.mrb[0].mxu0
      %v2641 = vadd.f32 %v2548, %v2640
      %2642 = vmatprep.mubr.bf16.mxu0 %v2369
      %2643 = vmatmul.mubr.bf16.gmra.mrb[0].mxu0 %v780
      %v2644 = vpop.f32.mrb[0].mxu0
      %v2645 = vadd.f32 %v2552, %v2644
      %v2646 = vpop.f32.mrb[0].mxu0
      %v2647 = vadd.f32 %v2554, %v2646
      %v2648 = vpop.f32.mrb[0].mxu0
      %v2649 = vadd.f32 %v2556, %v2648
      %v2650 = vpop.f32.mrb[0].mxu0
      %v2651 = vadd.f32 %v2558, %v2650
      %2652 = vmatprep.mubr.bf16.mxu0 %v2371
      %2653 = vmatmul.mubr.bf16.gmra.mrb[0].mxu0 %v783
      %v2654 = vpop.f32.mrb[0].mxu0
      %v2655 = vadd.f32 %v2562, %v2654
      %v2656 = vpop.f32.mrb[0].mxu0
      %v2657 = vadd.f32 %v2564, %v2656
      %v2658 = vpop.f32.mrb[0].mxu0
      %v2659 = vadd.f32 %v2566, %v2658
      %v2660 = vpop.f32.mrb[0].mxu0
      %v2661 = vadd.f32 %v2568, %v2660
      %2662 = vmatprep.mubr.bf16.mxu0 %v2373
      %2663 = vmatmul.mubr.bf16.gmra.mrb[0].mxu0 %v786
      %v2664 = vpop.f32.mrb[0].mxu0
      %v2665 = vadd.f32 %v2572, %v2664
      %v2666 = vpop.f32.mrb[0].mxu0
      %v2667 = vadd.f32 %v2574, %v2666
      %v2668 = vpop.f32.mrb[0].mxu0
      %v2669 = vadd.f32 %v2576, %v2668
      %v2670 = vpop.f32.mrb[0].mxu0
      %v2671 = vadd.f32 %v2578, %v2670
      %2672 = vdwg.mxu0
      %2673 = vmatprep.subr.bf16.mxu0 %v1855
      %2674 = vmatpush1.bf16.msra.mxu0 %v1854
      %2675 = vmatprep.subr.bf16.mxu0 %v1861
      %2676 = vmatpush1.bf16.msra.mxu0 %v1860
      %2677 = vmatprep.subr.bf16.mxu0 %v1867
      %2678 = vmatpush1.bf16.msra.mxu0 %v1866
      %2679 = vmatprep.subr.bf16.mxu0 %v1873
      %2680 = vmatpush1.bf16.msra.mxu0 %v1872
      %2681 = vmatprep.subr.bf16.mxu0 %v1879
      %2682 = vmatpush1.bf16.msra.mxu0 %v1878
      %2683 = vmatprep.subr.bf16.mxu0 %v1885
      %2684 = vmatpush1.bf16.msra.mxu0 %v1884
      %2685 = vmatprep.subr.bf16.mxu0 %v1891
      %2686 = vmatpush1.bf16.msra.mxu0 %v1890
      %2687 = vmatprep.subr.bf16.mxu0 %v1897
      %2688 = vmatpush1.bf16.msra.mxu0 %v1896
      %2689 = vmatprep.subr.bf16.mxu0 %v1903
      %2690 = vmatpush1.bf16.msra.mxu0 %v1902
      %2691 = vmatprep.subr.bf16.mxu0 %v1909
      %2692 = vmatpush1.bf16.msra.mxu0 %v1908
      %2693 = vmatprep.subr.bf16.mxu0 %v1915
      %2694 = vmatpush1.bf16.msra.mxu0 %v1914
      %2695 = vmatprep.subr.bf16.mxu0 %v1921
      %2696 = vmatpush1.bf16.msra.mxu0 %v1920
      %2697 = vmatprep.subr.bf16.mxu0 %v1927
      %2698 = vmatpush1.bf16.msra.mxu0 %v1926
      %2699 = vmatprep.subr.bf16.mxu0 %v1933
      %2700 = vmatpush1.bf16.msra.mxu0 %v1932
      %2701 = vmatprep.subr.bf16.mxu0 %v1939
      %2702 = vmatpush1.bf16.msra.mxu0 %v1938
      %2703 = vmatprep.subr.bf16.mxu0 %v1945
      %2704 = vmatpush1.bf16.msra.mxu0 %v1944
      %2705 = vmatprep.mubr.bf16.mxu0 %v701
      %2706 = vmatmul.mubr.bf16.gmra.mrb[0].mxu0 %v682
      %v2707 = vpop.f32.mrb[0].mxu0
      %v2708 = vadd.f32 %v1059, %v2707
      %v2709 = vpop.f32.mrb[0].mxu0
      %v2710 = vadd.f32 %v1063, %v2709
      %v2711 = vpop.f32.mrb[0].mxu0
      %v2712 = vadd.f32 %v1059, %v2711
      %v2713 = vpop.f32.mrb[0].mxu0
      %v2714 = vadd.f32 %v1063, %v2713
      %2715 = vmatprep.mubr.bf16.mxu0 %v704
      %2716 = vmatmul.mubr.bf16.gmra.mrb[0].mxu0 %v685
      %v2717 = vpop.f32.mrb[0].mxu0
      %v2718 = vadd.f32 %v1059, %v2717
      %v2719 = vpop.f32.mrb[0].mxu0
      %v2720 = vadd.f32 %v1063, %v2719
      %v2721 = vpop.f32.mrb[0].mxu0
      %v2722 = vadd.f32 %v1059, %v2721
      %v2723 = vpop.f32.mrb[0].mxu0
      %v2724 = vadd.f32 %v1063, %v2723
      %2725 = vmatprep.mubr.bf16.mxu0 %v707
      %2726 = vmatmul.mubr.bf16.gmra.mrb[0].mxu0 %v688
      %v2727 = vpop.f32.mrb[0].mxu0
      %v2728 = vadd.f32 %v1059, %v2727
      %v2729 = vpop.f32.mrb[0].mxu0
      %v2730 = vadd.f32 %v1063, %v2729
      %v2731 = vpop.f32.mrb[0].mxu0
      %v2732 = vadd.f32 %v1059, %v2731
      %v2733 = vpop.f32.mrb[0].mxu0
      %v2734 = vadd.f32 %v1063, %v2733
      %2735 = vmatprep.mubr.bf16.mxu0 %v710
      %2736 = vmatmul.mubr.bf16.gmra.mrb[0].mxu0 %v691
      %v2737 = vpop.f32.mrb[0].mxu0
      %v2738 = vadd.f32 %v1059, %v2737
      %v2739 = vpop.f32.mrb[0].mxu0
      %v2740 = vadd.f32 %v1063, %v2739
      %v2741 = vpop.f32.mrb[0].mxu0
      %v2742 = vadd.f32 %v1059, %v2741
      %v2743 = vpop.f32.mrb[0].mxu0
      %v2744 = vadd.f32 %v1063, %v2743
      %2745 = vmatprep.mubr.bf16.mxu0 %v713
      %2746 = vmatmul.mubr.bf16.gmra.mrb[0].mxu0 %v694
      %v2747 = vpop.f32.mrb[0].mxu0
      %v2748 = vadd.f32 %v1059, %v2747
      %v2749 = vpop.f32.mrb[0].mxu0
      %v2750 = vadd.f32 %v1063, %v2749
      %v2751 = vpop.f32.mrb[0].mxu0
      %v2752 = vadd.f32 %v1059, %v2751
      %v2753 = vpop.f32.mrb[0].mxu0
      %v2754 = vadd.f32 %v1063, %v2753
      %2755 = vmatprep.mubr.bf16.mxu0 %v716
      %2756 = vmatmul.mubr.bf16.gmra.mrb[0].mxu0 %v697
      %v2757 = vpop.f32.mrb[0].mxu0
      %v2758 = vadd.f32 %v1059, %v2757
      %v2759 = vpop.f32.mrb[0].mxu0
      %v2760 = vadd.f32 %v1063, %v2759
      %v2761 = vpop.f32.mrb[0].mxu0
      %v2762 = vadd.f32 %v1059, %v2761
      %v2763 = vpop.f32.mrb[0].mxu0
      %v2764 = vadd.f32 %v1063, %v2763
      %2765 = vdwg.mxu0
      %2766 = vmatprep.subr.bf16.mxu0 %v1951
      %2767 = vmatpush1.bf16.msra.mxu0 %v1950
      %2768 = vmatprep.subr.bf16.mxu0 %v1957
      %2769 = vmatpush1.bf16.msra.mxu0 %v1956
      %2770 = vmatprep.subr.bf16.mxu0 %v1963
      %2771 = vmatpush1.bf16.msra.mxu0 %v1962
      %2772 = vmatprep.subr.bf16.mxu0 %v1969
      %2773 = vmatpush1.bf16.msra.mxu0 %v1968
      %2774 = vmatprep.subr.bf16.mxu0 %v1975
      %2775 = vmatpush1.bf16.msra.mxu0 %v1974
      %2776 = vmatprep.subr.bf16.mxu0 %v1981
      %2777 = vmatpush1.bf16.msra.mxu0 %v1980
      %2778 = vmatprep.subr.bf16.mxu0 %v1987
      %2779 = vmatpush1.bf16.msra.mxu0 %v1986
      %2780 = vmatprep.subr.bf16.mxu0 %v1993
      %2781 = vmatpush1.bf16.msra.mxu0 %v1992
      %2782 = vmatprep.subr.bf16.mxu0 %v1999
      %2783 = vmatpush1.bf16.msra.mxu0 %v1998
      %2784 = vmatprep.subr.bf16.mxu0 %v2005
      %2785 = vmatpush1.bf16.msra.mxu0 %v2004
      %2786 = vmatprep.subr.bf16.mxu0 %v2011
      %2787 = vmatpush1.bf16.msra.mxu0 %v2010
      %2788 = vmatprep.subr.bf16.mxu0 %v2017
      %2789 = vmatpush1.bf16.msra.mxu0 %v2016
      %2790 = vmatprep.subr.bf16.mxu0 %v2023
      %2791 = vmatpush1.bf16.msra.mxu0 %v2022
      %2792 = vmatprep.subr.bf16.mxu0 %v2029
      %2793 = vmatpush1.bf16.msra.mxu0 %v2028
      %2794 = vmatprep.subr.bf16.mxu0 %v2035
      %2795 = vmatpush1.bf16.msra.mxu0 %v2034
      %2796 = vmatprep.subr.bf16.mxu0 %v2041
      %2797 = vmatpush1.bf16.msra.mxu0 %v2040
      %2798 = vmatprep.mubr.bf16.mxu0 %v752
      %2799 = vmatmul.mubr.bf16.gmra.mrb[0].mxu0 %v720
      %v2800 = vpop.f32.mrb[0].mxu0
      %v2801 = vadd.f32 %v2708, %v2800
      %v2802 = vpop.f32.mrb[0].mxu0
      %v2803 = vadd.f32 %v2710, %v2802
      %v2804 = vpop.f32.mrb[0].mxu0
      %v2805 = vadd.f32 %v2712, %v2804
      %v2806 = vpop.f32.mrb[0].mxu0
      %v2807 = vadd.f32 %v2714, %v2806
      %2808 = vmatprep.mubr.bf16.mxu0 %v755
      %2809 = vmatmul.mubr.bf16.gmra.mrb[0].mxu0 %v723
      %v2810 = vpop.f32.mrb[0].mxu0
      %v2811 = vadd.f32 %v2718, %v2810
      %v2812 = vpop.f32.mrb[0].mxu0
      %v2813 = vadd.f32 %v2720, %v2812
      %v2814 = vpop.f32.mrb[0].mxu0
      %v2815 = vadd.f32 %v2722, %v2814
      %v2816 = vpop.f32.mrb[0].mxu0
      %v2817 = vadd.f32 %v2724, %v2816
      %2818 = vmatprep.mubr.bf16.mxu0 %v758
      %2819 = vmatmul.mubr.bf16.gmra.mrb[0].mxu0 %v726
      %v2820 = vpop.f32.mrb[0].mxu0
      %v2821 = vadd.f32 %v2728, %v2820
      %v2822 = vpop.f32.mrb[0].mxu0
      %v2823 = vadd.f32 %v2730, %v2822
      %v2824 = vpop.f32.mrb[0].mxu0
      %v2825 = vadd.f32 %v2732, %v2824
      %v2826 = vpop.f32.mrb[0].mxu0
      %v2827 = vadd.f32 %v2734, %v2826
      %2828 = vmatprep.mubr.bf16.mxu0 %v761
      %2829 = vmatmul.mubr.bf16.gmra.mrb[0].mxu0 %v729
      %v2830 = vpop.f32.mrb[0].mxu0
      %v2831 = vadd.f32 %v2738, %v2830
      %v2832 = vpop.f32.mrb[0].mxu0
      %v2833 = vadd.f32 %v2740, %v2832
      %v2834 = vpop.f32.mrb[0].mxu0
      %v2835 = vadd.f32 %v2742, %v2834
      %v2836 = vpop.f32.mrb[0].mxu0
      %v2837 = vadd.f32 %v2744, %v2836
      %2838 = vmatprep.mubr.bf16.mxu0 %v764
      %2839 = vmatmul.mubr.bf16.gmra.mrb[0].mxu0 %v732
      %v2840 = vpop.f32.mrb[0].mxu0
      %v2841 = vadd.f32 %v2748, %v2840
      %v2842 = vpop.f32.mrb[0].mxu0
      %v2843 = vadd.f32 %v2750, %v2842
      %v2844 = vpop.f32.mrb[0].mxu0
      %v2845 = vadd.f32 %v2752, %v2844
      %v2846 = vpop.f32.mrb[0].mxu0
      %v2847 = vadd.f32 %v2754, %v2846
      %2848 = vmatprep.mubr.bf16.mxu0 %v767
      %2849 = vmatmul.mubr.bf16.gmra.mrb[0].mxu0 %v735
      %v2850 = vpop.f32.mrb[0].mxu0
      %v2851 = vadd.f32 %v2758, %v2850
      %v2852 = vpop.f32.mrb[0].mxu0
      %v2853 = vadd.f32 %v2760, %v2852
      %v2854 = vpop.f32.mrb[0].mxu0
      %v2855 = vadd.f32 %v2762, %v2854
      %v2856 = vpop.f32.mrb[0].mxu0
      %v2857 = vadd.f32 %v2764, %v2856
      %2858 = vdwg.mxu0
      %2859 = vmatprep.subr.bf16.mxu0 %v2047
      %2860 = vmatpush1.bf16.msra.mxu0 %v2046
      %2861 = vmatprep.subr.bf16.mxu0 %v2053
      %2862 = vmatpush1.bf16.msra.mxu0 %v2052
      %2863 = vmatprep.subr.bf16.mxu0 %v2059
      %2864 = vmatpush1.bf16.msra.mxu0 %v2058
      %2865 = vmatprep.subr.bf16.mxu0 %v2065
      %2866 = vmatpush1.bf16.msra.mxu0 %v2064
      %2867 = vmatprep.subr.bf16.mxu0 %v2071
      %2868 = vmatpush1.bf16.msra.mxu0 %v2070
      %2869 = vmatprep.subr.bf16.mxu0 %v2077
      %2870 = vmatpush1.bf16.msra.mxu0 %v2076
      %2871 = vmatprep.subr.bf16.mxu0 %v2083
      %2872 = vmatpush1.bf16.msra.mxu0 %v2082
      %2873 = vmatprep.subr.bf16.mxu0 %v2089
      %2874 = vmatpush1.bf16.msra.mxu0 %v2088
      %2875 = vmatprep.subr.bf16.mxu0 %v2095
      %2876 = vmatpush1.bf16.msra.mxu0 %v2094
      %2877 = vmatprep.subr.bf16.mxu0 %v2101
      %2878 = vmatpush1.bf16.msra.mxu0 %v2100
      %2879 = vmatprep.subr.bf16.mxu0 %v2386
      %2880 = vmatpush1.bf16.msra.mxu0 %v2383
      %2881 = vmatprep.subr.bf16.mxu0 0
      %2882 = vmatpush1.bf16.msra.mxu0 0
      %2883 = vmatprep.subr.bf16.mxu0 0
      %2884 = vmatpush1.bf16.msra.mxu0 0
      %2885 = vmatprep.subr.bf16.mxu0 0
      %2886 = vmatpush1.bf16.msra.mxu0 0
      %2887 = vmatprep.subr.bf16.mxu0 0
      %2888 = vmatpush1.bf16.msra.mxu0 0
      %2889 = vmatprep.subr.bf16.mxu0 0
      %2890 = vmatpush1.bf16.msra.mxu0 0
      %2891 = vmatprep.mubr.bf16.mxu0 %v2363
      %2892 = vmatmul.mubr.bf16.gmra.mrb[0].mxu0 %v771
      %v2893 = vpop.f32.mrb[0].mxu0
      %v2894 = vadd.f32 %v2801, %v2893
      %v2895 = vpop.f32.mrb[0].mxu0
      %v2896 = vadd.f32 %v2803, %v2895
      %v2897 = vpop.f32.mrb[0].mxu0
      %v2898 = vadd.f32 %v2805, %v2897
      %v2899 = vpop.f32.mrb[0].mxu0
      %v2900 = vadd.f32 %v2807, %v2899
      %2901 = vmatprep.mubr.bf16.mxu0 %v2365
      %2902 = vmatmul.mubr.bf16.gmra.mrb[0].mxu0 %v774
      %v2903 = vpop.f32.mrb[0].mxu0
      %v2904 = vadd.f32 %v2811, %v2903
      %v2905 = vpop.f32.mrb[0].mxu0
      %v2906 = vadd.f32 %v2813, %v2905
      %v2907 = vpop.f32.mrb[0].mxu0
      %v2908 = vadd.f32 %v2815, %v2907
      %v2909 = vpop.f32.mrb[0].mxu0
      %v2910 = vadd.f32 %v2817, %v2909
      %2911 = vmatprep.mubr.bf16.mxu0 %v2367
      %2912 = vmatmul.mubr.bf16.gmra.mrb[0].mxu0 %v777
      %v2913 = vpop.f32.mrb[0].mxu0
      %v2914 = vadd.f32 %v2821, %v2913
      %v2915 = vpop.f32.mrb[0].mxu0
      %v2916 = vadd.f32 %v2823, %v2915
      %v2917 = vpop.f32.mrb[0].mxu0
      %v2918 = vadd.f32 %v2825, %v2917
      %v2919 = vpop.f32.mrb[0].mxu0
      %v2920 = vadd.f32 %v2827, %v2919
      %2921 = vmatprep.mubr.bf16.mxu0 %v2369
      %2922 = vmatmul.mubr.bf16.gmra.mrb[0].mxu0 %v780
      %v2923 = vpop.f32.mrb[0].mxu0
      %v2924 = vadd.f32 %v2831, %v2923
      %v2925 = vpop.f32.mrb[0].mxu0
      %v2926 = vadd.f32 %v2833, %v2925
      %v2927 = vpop.f32.mrb[0].mxu0
      %v2928 = vadd.f32 %v2835, %v2927
      %v2929 = vpop.f32.mrb[0].mxu0
      %v2930 = vadd.f32 %v2837, %v2929
      %2931 = vmatprep.mubr.bf16.mxu0 %v2371
      %2932 = vmatmul.mubr.bf16.gmra.mrb[0].mxu0 %v783
      %v2933 = vpop.f32.mrb[0].mxu0
      %v2934 = vadd.f32 %v2841, %v2933
      %v2935 = vpop.f32.mrb[0].mxu0
      %v2936 = vadd.f32 %v2843, %v2935
      %v2937 = vpop.f32.mrb[0].mxu0
      %v2938 = vadd.f32 %v2845, %v2937
      %v2939 = vpop.f32.mrb[0].mxu0
      %v2940 = vadd.f32 %v2847, %v2939
      %2941 = vmatprep.mubr.bf16.mxu0 %v2373
      %2942 = vmatmul.mubr.bf16.gmra.mrb[0].mxu0 %v786
      %v2943 = vpop.f32.mrb[0].mxu0
      %v2944 = vadd.f32 %v2851, %v2943
      %v2945 = vpop.f32.mrb[0].mxu0
      %v2946 = vadd.f32 %v2853, %v2945
      %v2947 = vpop.f32.mrb[0].mxu0
      %v2948 = vadd.f32 %v2855, %v2947
      %v2949 = vpop.f32.mrb[0].mxu0
      %v2950 = vadd.f32 %v2857, %v2949
      %2951 = vdwg.mxu0
      %2952 = vmatprep.subr.bf16.mxu0 %v1857
      %2953 = vmatpush1.bf16.msra.mxu0 %v1856
      %2954 = vmatprep.subr.bf16.mxu0 %v1863
      %2955 = vmatpush1.bf16.msra.mxu0 %v1862
      %2956 = vmatprep.subr.bf16.mxu0 %v1869
      %2957 = vmatpush1.bf16.msra.mxu0 %v1868
      %2958 = vmatprep.subr.bf16.mxu0 %v1875
      %2959 = vmatpush1.bf16.msra.mxu0 %v1874
      %2960 = vmatprep.subr.bf16.mxu0 %v1881
      %2961 = vmatpush1.bf16.msra.mxu0 %v1880
      %2962 = vmatprep.subr.bf16.mxu0 %v1887
      %2963 = vmatpush1.bf16.msra.mxu0 %v1886
      %2964 = vmatprep.subr.bf16.mxu0 %v1893
      %2965 = vmatpush1.bf16.msra.mxu0 %v1892
      %2966 = vmatprep.subr.bf16.mxu0 %v1899
      %2967 = vmatpush1.bf16.msra.mxu0 %v1898
      %2968 = vmatprep.subr.bf16.mxu0 %v1905
      %2969 = vmatpush1.bf16.msra.mxu0 %v1904
      %2970 = vmatprep.subr.bf16.mxu0 %v1911
      %2971 = vmatpush1.bf16.msra.mxu0 %v1910
      %2972 = vmatprep.subr.bf16.mxu0 %v1917
      %2973 = vmatpush1.bf16.msra.mxu0 %v1916
      %2974 = vmatprep.subr.bf16.mxu0 %v1923
      %2975 = vmatpush1.bf16.msra.mxu0 %v1922
      %2976 = vmatprep.subr.bf16.mxu0 %v1929
      %2977 = vmatpush1.bf16.msra.mxu0 %v1928
      %2978 = vmatprep.subr.bf16.mxu0 %v1935
      %2979 = vmatpush1.bf16.msra.mxu0 %v1934
      %2980 = vmatprep.subr.bf16.mxu0 %v1941
      %2981 = vmatpush1.bf16.msra.mxu0 %v1940
      %2982 = vmatprep.subr.bf16.mxu0 %v1947
      %2983 = vmatpush1.bf16.msra.mxu0 %v1946
      %2984 = vmatprep.mubr.bf16.mxu0 %v701
      %2985 = vmatmul.mubr.bf16.gmra.mrb[0].mxu0 %v682
      %v2986 = vpop.f32.mrb[0].mxu0
      %v2987 = vadd.f32 %v1067, %v2986
      %v2988 = vpop.f32.mrb[0].mxu0
      %v2989 = vadd.f32 %v1071, %v2988
      %v2990 = vpop.f32.mrb[0].mxu0
      %v2991 = vadd.f32 %v1067, %v2990
      %v2992 = vpop.f32.mrb[0].mxu0
      %v2993 = vadd.f32 %v1071, %v2992
      %2994 = vmatprep.mubr.bf16.mxu0 %v704
      %2995 = vmatmul.mubr.bf16.gmra.mrb[0].mxu0 %v685
      %v2996 = vpop.f32.mrb[0].mxu0
      %v2997 = vadd.f32 %v1067, %v2996
      %v2998 = vpop.f32.mrb[0].mxu0
      %v2999 = vadd.f32 %v1071, %v2998
      %v3000 = vpop.f32.mrb[0].mxu0
      %v3001 = vadd.f32 %v1067, %v3000
      %v3002 = vpop.f32.mrb[0].mxu0
      %v3003 = vadd.f32 %v1071, %v3002
      %3004 = vmatprep.mubr.bf16.mxu0 %v707
      %3005 = vmatmul.mubr.bf16.gmra.mrb[0].mxu0 %v688
      %v3006 = vpop.f32.mrb[0].mxu0
      %v3007 = vadd.f32 %v1067, %v3006
      %v3008 = vpop.f32.mrb[0].mxu0
      %v3009 = vadd.f32 %v1071, %v3008
      %v3010 = vpop.f32.mrb[0].mxu0
      %v3011 = vadd.f32 %v1067, %v3010
      %v3012 = vpop.f32.mrb[0].mxu0
      %v3013 = vadd.f32 %v1071, %v3012
      %3014 = vmatprep.mubr.bf16.mxu0 %v710
      %3015 = vmatmul.mubr.bf16.gmra.mrb[0].mxu0 %v691
      %v3016 = vpop.f32.mrb[0].mxu0
      %v3017 = vadd.f32 %v1067, %v3016
      %v3018 = vpop.f32.mrb[0].mxu0
      %v3019 = vadd.f32 %v1071, %v3018
      %v3020 = vpop.f32.mrb[0].mxu0
      %v3021 = vadd.f32 %v1067, %v3020
      %v3022 = vpop.f32.mrb[0].mxu0
      %v3023 = vadd.f32 %v1071, %v3022
      %3024 = vmatprep.mubr.bf16.mxu0 %v713
      %3025 = vmatmul.mubr.bf16.gmra.mrb[0].mxu0 %v694
      %v3026 = vpop.f32.mrb[0].mxu0
      %v3027 = vadd.f32 %v1067, %v3026
      %v3028 = vpop.f32.mrb[0].mxu0
      %v3029 = vadd.f32 %v1071, %v3028
      %v3030 = vpop.f32.mrb[0].mxu0
      %v3031 = vadd.f32 %v1067, %v3030
      %v3032 = vpop.f32.mrb[0].mxu0
      %v3033 = vadd.f32 %v1071, %v3032
      %3034 = vmatprep.mubr.bf16.mxu0 %v716
      %3035 = vmatmul.mubr.bf16.gmra.mrb[0].mxu0 %v697
      %v3036 = vpop.f32.mrb[0].mxu0
      %v3037 = vadd.f32 %v1067, %v3036
      %v3038 = vpop.f32.mrb[0].mxu0
      %v3039 = vadd.f32 %v1071, %v3038
      %v3040 = vpop.f32.mrb[0].mxu0
      %v3041 = vadd.f32 %v1067, %v3040
      %v3042 = vpop.f32.mrb[0].mxu0
      %v3043 = vadd.f32 %v1071, %v3042
      %3044 = vdwg.mxu0
      %3045 = vmatprep.subr.bf16.mxu0 %v1953
      %3046 = vmatpush1.bf16.msra.mxu0 %v1952
      %3047 = vmatprep.subr.bf16.mxu0 %v1959
      %3048 = vmatpush1.bf16.msra.mxu0 %v1958
      %3049 = vmatprep.subr.bf16.mxu0 %v1965
      %3050 = vmatpush1.bf16.msra.mxu0 %v1964
      %3051 = vmatprep.subr.bf16.mxu0 %v1971
      %3052 = vmatpush1.bf16.msra.mxu0 %v1970
      %3053 = vmatprep.subr.bf16.mxu0 %v1977
      %3054 = vmatpush1.bf16.msra.mxu0 %v1976
      %3055 = vmatprep.subr.bf16.mxu0 %v1983
      %3056 = vmatpush1.bf16.msra.mxu0 %v1982
      %3057 = vmatprep.subr.bf16.mxu0 %v1989
      %3058 = vmatpush1.bf16.msra.mxu0 %v1988
      %3059 = vmatprep.subr.bf16.mxu0 %v1995
      %3060 = vmatpush1.bf16.msra.mxu0 %v1994
      %3061 = vmatprep.subr.bf16.mxu0 %v2001
      %3062 = vmatpush1.bf16.msra.mxu0 %v2000
      %3063 = vmatprep.subr.bf16.mxu0 %v2007
      %3064 = vmatpush1.bf16.msra.mxu0 %v2006
      %3065 = vmatprep.subr.bf16.mxu0 %v2013
      %3066 = vmatpush1.bf16.msra.mxu0 %v2012
      %3067 = vmatprep.subr.bf16.mxu0 %v2019
      %3068 = vmatpush1.bf16.msra.mxu0 %v2018
      %3069 = vmatprep.subr.bf16.mxu0 %v2025
      %3070 = vmatpush1.bf16.msra.mxu0 %v2024
      %3071 = vmatprep.subr.bf16.mxu0 %v2031
      %3072 = vmatpush1.bf16.msra.mxu0 %v2030
      %3073 = vmatprep.subr.bf16.mxu0 %v2037
      %3074 = vmatpush1.bf16.msra.mxu0 %v2036
      %3075 = vmatprep.subr.bf16.mxu0 %v2043
      %3076 = vmatpush1.bf16.msra.mxu0 %v2042
      %3077 = vmatprep.mubr.bf16.mxu0 %v752
      %3078 = vmatmul.mubr.bf16.gmra.mrb[0].mxu0 %v720
      %v3079 = vpop.f32.mrb[0].mxu0
      %v3080 = vadd.f32 %v2987, %v3079
      %v3081 = vpop.f32.mrb[0].mxu0
      %v3082 = vadd.f32 %v2989, %v3081
      %v3083 = vpop.f32.mrb[0].mxu0
      %v3084 = vadd.f32 %v2991, %v3083
      %v3085 = vpop.f32.mrb[0].mxu0
      %v3086 = vadd.f32 %v2993, %v3085
      %3087 = vmatprep.mubr.bf16.mxu0 %v755
      %3088 = vmatmul.mubr.bf16.gmra.mrb[0].mxu0 %v723
      %v3089 = vpop.f32.mrb[0].mxu0
      %v3090 = vadd.f32 %v2997, %v3089
      %v3091 = vpop.f32.mrb[0].mxu0
      %v3092 = vadd.f32 %v2999, %v3091
      %v3093 = vpop.f32.mrb[0].mxu0
      %v3094 = vadd.f32 %v3001, %v3093
      %v3095 = vpop.f32.mrb[0].mxu0
      %v3096 = vadd.f32 %v3003, %v3095
      %3097 = vmatprep.mubr.bf16.mxu0 %v758
      %3098 = vmatmul.mubr.bf16.gmra.mrb[0].mxu0 %v726
      %v3099 = vpop.f32.mrb[0].mxu0
      %v3100 = vadd.f32 %v3007, %v3099
      %v3101 = vpop.f32.mrb[0].mxu0
      %v3102 = vadd.f32 %v3009, %v3101
      %v3103 = vpop.f32.mrb[0].mxu0
      %v3104 = vadd.f32 %v3011, %v3103
      %v3105 = vpop.f32.mrb[0].mxu0
      %v3106 = vadd.f32 %v3013, %v3105
      %3107 = vmatprep.mubr.bf16.mxu0 %v761
      %3108 = vmatmul.mubr.bf16.gmra.mrb[0].mxu0 %v729
      %v3109 = vpop.f32.mrb[0].mxu0
      %v3110 = vadd.f32 %v3017, %v3109
      %v3111 = vpop.f32.mrb[0].mxu0
      %v3112 = vadd.f32 %v3019, %v3111
      %v3113 = vpop.f32.mrb[0].mxu0
      %v3114 = vadd.f32 %v3021, %v3113
      %v3115 = vpop.f32.mrb[0].mxu0
      %v3116 = vadd.f32 %v3023, %v3115
      %3117 = vmatprep.mubr.bf16.mxu0 %v764
      %3118 = vmatmul.mubr.bf16.gmra.mrb[0].mxu0 %v732
      %v3119 = vpop.f32.mrb[0].mxu0
      %v3120 = vadd.f32 %v3027, %v3119
      %v3121 = vpop.f32.mrb[0].mxu0
      %v3122 = vadd.f32 %v3029, %v3121
      %v3123 = vpop.f32.mrb[0].mxu0
      %v3124 = vadd.f32 %v3031, %v3123
      %v3125 = vpop.f32.mrb[0].mxu0
      %v3126 = vadd.f32 %v3033, %v3125
      %3127 = vmatprep.mubr.bf16.mxu0 %v767
      %3128 = vmatmul.mubr.bf16.gmra.mrb[0].mxu0 %v735
      %v3129 = vpop.f32.mrb[0].mxu0
      %v3130 = vadd.f32 %v3037, %v3129
      %v3131 = vpop.f32.mrb[0].mxu0
      %v3132 = vadd.f32 %v3039, %v3131
      %v3133 = vpop.f32.mrb[0].mxu0
      %v3134 = vadd.f32 %v3041, %v3133
      %v3135 = vpop.f32.mrb[0].mxu0
      %v3136 = vadd.f32 %v3043, %v3135
      %3137 = vdwg.mxu0
      %3138 = vmatprep.subr.bf16.mxu0 %v2049
      %3139 = vmatpush1.bf16.msra.mxu0 %v2048
      %3140 = vmatprep.subr.bf16.mxu0 %v2055
      %3141 = vmatpush1.bf16.msra.mxu0 %v2054
      %3142 = vmatprep.subr.bf16.mxu0 %v2061
      %3143 = vmatpush1.bf16.msra.mxu0 %v2060
      %3144 = vmatprep.subr.bf16.mxu0 %v2067
      %3145 = vmatpush1.bf16.msra.mxu0 %v2066
      %3146 = vmatprep.subr.bf16.mxu0 %v2073
      %3147 = vmatpush1.bf16.msra.mxu0 %v2072
      %3148 = vmatprep.subr.bf16.mxu0 %v2079
      %3149 = vmatpush1.bf16.msra.mxu0 %v2078
      %3150 = vmatprep.subr.bf16.mxu0 %v2085
      %3151 = vmatpush1.bf16.msra.mxu0 %v2084
      %3152 = vmatprep.subr.bf16.mxu0 %v2091
      %3153 = vmatpush1.bf16.msra.mxu0 %v2090
      %3154 = vmatprep.subr.bf16.mxu0 %v2097
      %3155 = vmatpush1.bf16.msra.mxu0 %v2096
      %3156 = vmatprep.subr.bf16.mxu0 %v2103
      %3157 = vmatpush1.bf16.msra.mxu0 %v2102
      %3158 = vmatprep.subr.bf16.mxu0 %v2392
      %3159 = vmatpush1.bf16.msra.mxu0 %v2389
      %3160 = vmatprep.subr.bf16.mxu0 0
      %3161 = vmatpush1.bf16.msra.mxu0 0
      %3162 = vmatprep.subr.bf16.mxu0 0
      %3163 = vmatpush1.bf16.msra.mxu0 0
      %3164 = vmatprep.subr.bf16.mxu0 0
      %3165 = vmatpush1.bf16.msra.mxu0 0
      %3166 = vmatprep.subr.bf16.mxu0 0
      %3167 = vmatpush1.bf16.msra.mxu0 0
      %3168 = vmatprep.subr.bf16.mxu0 0
      %3169 = vmatpush1.bf16.msra.mxu0 0
      %3170 = vmatprep.mubr.bf16.mxu0 %v2363
      %3171 = vmatmul.mubr.bf16.gmra.mrb[0].mxu0 %v771
      %v3172 = vpop.f32.mrb[0].mxu0
      %v3173 = vadd.f32 %v3080, %v3172
      %v3174 = vpop.f32.mrb[0].mxu0
      %v3175 = vadd.f32 %v3082, %v3174
      %v3176 = vpop.f32.mrb[0].mxu0
      %v3177 = vadd.f32 %v3084, %v3176
      %v3178 = vpop.f32.mrb[0].mxu0
      %v3179 = vadd.f32 %v3086, %v3178
      %3180 = vmatprep.mubr.bf16.mxu0 %v2365
      %3181 = vmatmul.mubr.bf16.gmra.mrb[0].mxu0 %v774
      %v3182 = vpop.f32.mrb[0].mxu0
      %v3183 = vadd.f32 %v3090, %v3182
      %v3184 = vpop.f32.mrb[0].mxu0
      %v3185 = vadd.f32 %v3092, %v3184
      %v3186 = vpop.f32.mrb[0].mxu0
      %v3187 = vadd.f32 %v3094, %v3186
      %v3188 = vpop.f32.mrb[0].mxu0
      %v3189 = vadd.f32 %v3096, %v3188
      %3190 = vmatprep.mubr.bf16.mxu0 %v2367
      %3191 = vmatmul.mubr.bf16.gmra.mrb[0].mxu0 %v777
      %v3192 = vpop.f32.mrb[0].mxu0
      %v3193 = vadd.f32 %v3100, %v3192
      %v3194 = vpop.f32.mrb[0].mxu0
      %v3195 = vadd.f32 %v3102, %v3194
      %v3196 = vpop.f32.mrb[0].mxu0
      %v3197 = vadd.f32 %v3104, %v3196
      %v3198 = vpop.f32.mrb[0].mxu0
      %v3199 = vadd.f32 %v3106, %v3198
      %3200 = vmatprep.mubr.bf16.mxu0 %v2369
      %3201 = vmatmul.mubr.bf16.gmra.mrb[0].mxu0 %v780
      %v3202 = vpop.f32.mrb[0].mxu0
      %v3203 = vadd.f32 %v3110, %v3202
      %v3204 = vpop.f32.mrb[0].mxu0
      %v3205 = vadd.f32 %v3112, %v3204
      %v3206 = vpop.f32.mrb[0].mxu0
      %v3207 = vadd.f32 %v3114, %v3206
      %v3208 = vpop.f32.mrb[0].mxu0
      %v3209 = vadd.f32 %v3116, %v3208
      %3210 = vmatprep.mubr.bf16.mxu0 %v2371
      %3211 = vmatmul.mubr.bf16.gmra.mrb[0].mxu0 %v783
      %v3212 = vpop.f32.mrb[0].mxu0
      %v3213 = vadd.f32 %v3120, %v3212
      %v3214 = vpop.f32.mrb[0].mxu0
      %v3215 = vadd.f32 %v3122, %v3214
      %v3216 = vpop.f32.mrb[0].mxu0
      %v3217 = vadd.f32 %v3124, %v3216
      %v3218 = vpop.f32.mrb[0].mxu0
      %v3219 = vadd.f32 %v3126, %v3218
      %3220 = vmatprep.mubr.bf16.mxu0 %v2373
      %3221 = vmatmul.mubr.bf16.gmra.mrb[0].mxu0 %v786
      %v3222 = vpop.f32.mrb[0].mxu0
      %v3223 = vadd.f32 %v3130, %v3222
      %v3224 = vpop.f32.mrb[0].mxu0
      %v3225 = vadd.f32 %v3132, %v3224
      %v3226 = vpop.f32.mrb[0].mxu0
      %v3227 = vadd.f32 %v3134, %v3226
      %v3228 = vpop.f32.mrb[0].mxu0
      %v3229 = vadd.f32 %v3136, %v3228
      %3230 = vdwg.mxu0
      %v3231 = vpack.c.bf16 %v2619, %v2615
      %v3232 = vpack.c.bf16 %v2621, %v2617
      %v3233 = vpack.c.bf16 %v2898, %v2894
      %v3234 = vpack.c.bf16 %v2900, %v2896
      %v3235 = vpack.c.bf16 %v3177, %v3173
      %v3236 = vpack.c.bf16 %v3179, %v3175
      %v3237 = vpack.c.bf16 %v2629, %v2625
      %v3238 = vpack.c.bf16 %v2631, %v2627
      %v3239 = vpack.c.bf16 %v2908, %v2904
      %v3240 = vpack.c.bf16 %v2910, %v2906
      %v3241 = vpack.c.bf16 %v3187, %v3183
      %v3242 = vpack.c.bf16 %v3189, %v3185
      %v3243 = vpack.c.bf16 %v2639, %v2635
      %v3244 = vpack.c.bf16 %v2641, %v2637
      %v3245 = vpack.c.bf16 %v2918, %v2914
      %v3246 = vpack.c.bf16 %v2920, %v2916
      %v3247 = vpack.c.bf16 %v3197, %v3193
      %v3248 = vpack.c.bf16 %v3199, %v3195
      %v3249 = vpack.c.bf16 %v2649, %v2645
      %v3250 = vpack.c.bf16 %v2651, %v2647
      %v3251 = vpack.c.bf16 %v2928, %v2924
      %v3252 = vpack.c.bf16 %v2930, %v2926
      %v3253 = vpack.c.bf16 %v3207, %v3203
      %v3254 = vpack.c.bf16 %v3209, %v3205
      %v3255 = vpack.c.bf16 %v2659, %v2655
      %v3256 = vpack.c.bf16 %v2661, %v2657
      %v3257 = vpack.c.bf16 %v2938, %v2934
      %v3258 = vpack.c.bf16 %v2940, %v2936
      %v3259 = vpack.c.bf16 %v3217, %v3213
      %v3260 = vpack.c.bf16 %v3219, %v3215
      %v3261 = vpack.c.bf16 %v2669, %v2665
      %v3262 = vpack.c.bf16 %v2671, %v2667
      %v3263 = vpack.c.bf16 %v2948, %v2944
      %v3264 = vpack.c.bf16 %v2950, %v2946
      %v3265 = vpack.c.bf16 %v3227, %v3223
      %v3266 = vpack.c.bf16 %v3229, %v3225
      %v3267 = vld [vmem:[%s3] sm:$0xf]
      %v3268 = vld [vmem:[%s3 + $0x4] sm:$0xf]
      %v3269 = vld [vmem:[%s3 + $0x8] sm:$0xf]
      %v3270 = vld [vmem:[%s3 + $0xc] sm:$0xf]
      %v3271 = vld [vmem:[%s3 + $0x10] sm:$0xf]
      %v3272 = vld [vmem:[%s3 + $0x14] sm:$0x7]
      %v3279 = vunpack.c.l.b16 %v3267
      %v3280 = vunpack.c.l.b16 %v3268
      %v3281 = vunpack.c.l.b16 %v3269
      %v3282 = vunpack.c.l.b16 %v3270
      %v3283 = vunpack.c.l.b16 %v3271
      %v3284 = vunpack.c.l.b16 %v3272
      %v3285 = vpack.c.b16 %v3280, %v3279
      %v3286 = vpack.c.b16 %v3282, %v3281
      %v3287 = vpack.c.b16 %v3284, %v3283
      %vm3288 = vcmask 752640
      %v3290 = vsel %vm3288, %v3285, 0
      %v3293 = vsel %vm3288, %v3286, 0
      %v3296 = vsel %vm3288, %v3287, 0
      %vm3298 = vcmask 1045504
      %v3300 = vsel %vm3298, %v3261, 0
      %v3303 = vsel %vm3298, %v3262, 0
      %v3306 = vsel %vm3298, %v3263, 0
      %v3309 = vsel %vm3298, %v3264, 0
      %v3312 = vsel %vm3298, %v3265, 0
      %v3315 = vsel %vm3298, %v3266, 0
      %3317 = vmatprep.subr.bf16.mxu0 %v3232
      %3318 = vmatpush1.bf16.msra.mxu0 %v3231
      %3319 = vmatprep.subr.bf16.mxu0 %v3238
      %3320 = vmatpush1.bf16.msra.mxu0 %v3237
      %3321 = vmatprep.subr.bf16.mxu0 %v3244
      %3322 = vmatpush1.bf16.msra.mxu0 %v3243
      %3323 = vmatprep.subr.bf16.mxu0 %v3250
      %3324 = vmatpush1.bf16.msra.mxu0 %v3249
      %3325 = vmatprep.subr.bf16.mxu0 %v3256
      %3326 = vmatpush1.bf16.msra.mxu0 %v3255
      %3327 = vmatprep.subr.bf16.mxu0 %v3303
      %3328 = vmatpush1.bf16.msra.mxu0 %v3300
      %3329 = vmatprep.subr.bf16.mxu0 0
      %3330 = vmatpush1.bf16.msra.mxu0 0
      %3331 = vmatprep.subr.bf16.mxu0 0
      %3332 = vmatpush1.bf16.msra.mxu0 0
      %3333 = vmatprep.subr.bf16.mxu0 0
      %3334 = vmatpush1.bf16.msra.mxu0 0
      %3335 = vmatprep.subr.bf16.mxu0 0
      %3336 = vmatpush1.bf16.msra.mxu0 0
      %3337 = vmatprep.subr.bf16.mxu0 0
      %3338 = vmatpush1.bf16.msra.mxu0 0
      %3339 = vmatprep.subr.bf16.mxu0 0
      %3340 = vmatpush1.bf16.msra.mxu0 0
      %3341 = vmatprep.subr.bf16.mxu0 0
      %3342 = vmatpush1.bf16.msra.mxu0 0
      %3343 = vmatprep.subr.bf16.mxu0 0
      %3344 = vmatpush1.bf16.msra.mxu0 0
      %3345 = vmatprep.subr.bf16.mxu0 0
      %3346 = vmatpush1.bf16.msra.mxu0 0
      %3347 = vmatprep.subr.bf16.mxu0 0
      %3348 = vmatpush1.bf16.msra.mxu0 0
      %3349 = vmatprep.mubr.bf16.mxu0 0
      %3350 = vmatmul.mubr.bf16.gmra.mrb[0].mxu0 %v3290
      %v3351 = vpop.f32.mrb[0].mxu0
      %v3352 = vadd.f32 0.0, %v3351
      %v3353 = vpop.f32.mrb[0].mxu0
      %v3354 = vadd.f32 0.0, %v3353
      %v3355 = vpop.f32.mrb[0].mxu0
      %v3356 = vadd.f32 0.0, %v3355
      %v3357 = vpop.f32.mrb[0].mxu0
      %v3358 = vadd.f32 0.0, %v3357
      %3359 = vmatprep.mubr.bf16.mxu0 0
      %3360 = vmatmul.mubr.bf16.gmra.mrb[0].mxu0 %v3293
      %v3361 = vpop.f32.mrb[0].mxu0
      %v3362 = vadd.f32 0.0, %v3361
      %v3363 = vpop.f32.mrb[0].mxu0
      %v3364 = vadd.f32 0.0, %v3363
      %v3365 = vpop.f32.mrb[0].mxu0
      %v3366 = vadd.f32 0.0, %v3365
      %v3367 = vpop.f32.mrb[0].mxu0
      %v3368 = vadd.f32 0.0, %v3367
      %3369 = vmatprep.mubr.bf16.mxu0 0
      %3370 = vmatmul.mubr.bf16.gmra.mrb[0].mxu0 %v3296
      %v3371 = vpop.f32.mrb[0].mxu0
      %v3372 = vadd.f32 0.0, %v3371
      %v3373 = vpop.f32.mrb[0].mxu0
      %v3374 = vadd.f32 0.0, %v3373
      %v3375 = vpop.f32.mrb[0].mxu0
      %v3376 = vadd.f32 0.0, %v3375
      %v3377 = vpop.f32.mrb[0].mxu0
      %v3378 = vadd.f32 0.0, %v3377
      %3379 = vdwg.mxu0
      %3380 = vmatprep.subr.bf16.mxu0 %v3234
      %3381 = vmatpush1.bf16.msra.mxu0 %v3233
      %3382 = vmatprep.subr.bf16.mxu0 %v3240
      %3383 = vmatpush1.bf16.msra.mxu0 %v3239
      %3384 = vmatprep.subr.bf16.mxu0 %v3246
      %3385 = vmatpush1.bf16.msra.mxu0 %v3245
      %3386 = vmatprep.subr.bf16.mxu0 %v3252
      %3387 = vmatpush1.bf16.msra.mxu0 %v3251
      %3388 = vmatprep.subr.bf16.mxu0 %v3258
      %3389 = vmatpush1.bf16.msra.mxu0 %v3257
      %3390 = vmatprep.subr.bf16.mxu0 %v3309
      %3391 = vmatpush1.bf16.msra.mxu0 %v3306
      %3392 = vmatprep.subr.bf16.mxu0 0
      %3393 = vmatpush1.bf16.msra.mxu0 0
      %3394 = vmatprep.subr.bf16.mxu0 0
      %3395 = vmatpush1.bf16.msra.mxu0 0
      %3396 = vmatprep.subr.bf16.mxu0 0
      %3397 = vmatpush1.bf16.msra.mxu0 0
      %3398 = vmatprep.subr.bf16.mxu0 0
      %3399 = vmatpush1.bf16.msra.mxu0 0
      %3400 = vmatprep.subr.bf16.mxu0 0
      %3401 = vmatpush1.bf16.msra.mxu0 0
      %3402 = vmatprep.subr.bf16.mxu0 0
      %3403 = vmatpush1.bf16.msra.mxu0 0
      %3404 = vmatprep.subr.bf16.mxu0 0
      %3405 = vmatpush1.bf16.msra.mxu0 0
      %3406 = vmatprep.subr.bf16.mxu0 0
      %3407 = vmatpush1.bf16.msra.mxu0 0
      %3408 = vmatprep.subr.bf16.mxu0 0
      %3409 = vmatpush1.bf16.msra.mxu0 0
      %3410 = vmatprep.subr.bf16.mxu0 0
      %3411 = vmatpush1.bf16.msra.mxu0 0
      %3412 = vmatprep.mubr.bf16.mxu0 0
      %3413 = vmatmul.mubr.bf16.gmra.mrb[0].mxu0 %v3290
      %v3414 = vpop.f32.mrb[0].mxu0
      %v3415 = vadd.f32 0.0, %v3414
      %v3416 = vpop.f32.mrb[0].mxu0
      %v3417 = vadd.f32 0.0, %v3416
      %v3418 = vpop.f32.mrb[0].mxu0
      %v3419 = vadd.f32 0.0, %v3418
      %v3420 = vpop.f32.mrb[0].mxu0
      %v3421 = vadd.f32 0.0, %v3420
      %3422 = vmatprep.mubr.bf16.mxu0 0
      %3423 = vmatmul.mubr.bf16.gmra.mrb[0].mxu0 %v3293
      %v3424 = vpop.f32.mrb[0].mxu0
      %v3425 = vadd.f32 0.0, %v3424
      %v3426 = vpop.f32.mrb[0].mxu0
      %v3427 = vadd.f32 0.0, %v3426
      %v3428 = vpop.f32.mrb[0].mxu0
      %v3429 = vadd.f32 0.0, %v3428
      %v3430 = vpop.f32.mrb[0].mxu0
      %v3431 = vadd.f32 0.0, %v3430
      %3432 = vmatprep.mubr.bf16.mxu0 0
      %3433 = vmatmul.mubr.bf16.gmra.mrb[0].mxu0 %v3296
      %v3434 = vpop.f32.mrb[0].mxu0
      %v3435 = vadd.f32 0.0, %v3434
      %v3436 = vpop.f32.mrb[0].mxu0
      %v3437 = vadd.f32 0.0, %v3436
      %v3438 = vpop.f32.mrb[0].mxu0
      %v3439 = vadd.f32 0.0, %v3438
      %v3440 = vpop.f32.mrb[0].mxu0
      %v3441 = vadd.f32 0.0, %v3440
      %3442 = vdwg.mxu0
      %3443 = vmatprep.subr.bf16.mxu0 %v3236
      %3444 = vmatpush1.bf16.msra.mxu0 %v3235
      %3445 = vmatprep.subr.bf16.mxu0 %v3242
      %3446 = vmatpush1.bf16.msra.mxu0 %v3241
      %3447 = vmatprep.subr.bf16.mxu0 %v3248
      %3448 = vmatpush1.bf16.msra.mxu0 %v3247
      %3449 = vmatprep.subr.bf16.mxu0 %v3254
      %3450 = vmatpush1.bf16.msra.mxu0 %v3253
      %3451 = vmatprep.subr.bf16.mxu0 %v3260
      %3452 = vmatpush1.bf16.msra.mxu0 %v3259
      %3453 = vmatprep.subr.bf16.mxu0 %v3315
      %3454 = vmatpush1.bf16.msra.mxu0 %v3312
      %3455 = vmatprep.subr.bf16.mxu0 0
      %3456 = vmatpush1.bf16.msra.mxu0 0
      %3457 = vmatprep.subr.bf16.mxu0 0
      %3458 = vmatpush1.bf16.msra.mxu0 0
      %3459 = vmatprep.subr.bf16.mxu0 0
      %3460 = vmatpush1.bf16.msra.mxu0 0
      %3461 = vmatprep.subr.bf16.mxu0 0
      %3462 = vmatpush1.bf16.msra.mxu0 0
      %3463 = vmatprep.subr.bf16.mxu0 0
      %3464 = vmatpush1.bf16.msra.mxu0 0
      %3465 = vmatprep.subr.bf16.mxu0 0
      %3466 = vmatpush1.bf16.msra.mxu0 0
      %3467 = vmatprep.subr.bf16.mxu0 0
      %3468 = vmatpush1.bf16.msra.mxu0 0
      %3469 = vmatprep.subr.bf16.mxu0 0
      %3470 = vmatpush1.bf16.msra.mxu0 0
      %3471 = vmatprep.subr.bf16.mxu0 0
      %3472 = vmatpush1.bf16.msra.mxu0 0
      %3473 = vmatprep.subr.bf16.mxu0 0
      %3474 = vmatpush1.bf16.msra.mxu0 0
      %3475 = vmatprep.mubr.bf16.mxu0 0
      %3476 = vmatmul.mubr.bf16.gmra.mrb[0].mxu0 %v3290
      %v3477 = vpop.f32.mrb[0].mxu0
      %v3478 = vadd.f32 0.0, %v3477
      %v3479 = vpop.f32.mrb[0].mxu0
      %v3480 = vadd.f32 0.0, %v3479
      %v3481 = vpop.f32.mrb[0].mxu0
      %v3482 = vadd.f32 0.0, %v3481
      %v3483 = vpop.f32.mrb[0].mxu0
      %v3484 = vadd.f32 0.0, %v3483
      %3485 = vmatprep.mubr.bf16.mxu0 0
      %3486 = vmatmul.mubr.bf16.gmra.mrb[0].mxu0 %v3293
      %v3487 = vpop.f32.mrb[0].mxu0
      %v3488 = vadd.f32 0.0, %v3487
      %v3489 = vpop.f32.mrb[0].mxu0
      %v3490 = vadd.f32 0.0, %v3489
      %v3491 = vpop.f32.mrb[0].mxu0
      %v3492 = vadd.f32 0.0, %v3491
      %v3493 = vpop.f32.mrb[0].mxu0
      %v3494 = vadd.f32 0.0, %v3493
      %3495 = vmatprep.mubr.bf16.mxu0 0
      %3496 = vmatmul.mubr.bf16.gmra.mrb[0].mxu0 %v3296
      %v3497 = vpop.f32.mrb[0].mxu0
      %v3498 = vadd.f32 0.0, %v3497
      %v3499 = vpop.f32.mrb[0].mxu0
      %v3500 = vadd.f32 0.0, %v3499
      %v3501 = vpop.f32.mrb[0].mxu0
      %v3502 = vadd.f32 0.0, %v3501
      %v3503 = vpop.f32.mrb[0].mxu0
      %v3504 = vadd.f32 0.0, %v3503
      %3505 = vdwg.mxu0
      %v3506 = vld [vmem:[%s4] sm:$0xf]
      %v3507 = vld [vmem:[%s4 + $0x4] sm:$0xf]
      %v3508 = vld [vmem:[%s4 + $0x8] sm:$0xf]
      %v3509 = vld [vmem:[%s4 + $0xc] sm:$0xf]
      %v3510 = vld [vmem:[%s4 + $0x10] sm:$0xf]
      %v3511 = vld [vmem:[%s4 + $0x14] sm:$0x7]
      %v3518 = vunpack.c.l.b16 %v3506
      %v3519 = vunpack.c.l.b16 %v3507
      %v3520 = vunpack.c.l.b16 %v3508
      %v3521 = vunpack.c.l.b16 %v3509
      %v3522 = vunpack.c.l.b16 %v3510
      %v3523 = vunpack.c.l.b16 %v3511
      %v3524 = vpack.c.b16 %v3519, %v3518
      %v3525 = vpack.c.b16 %v3521, %v3520
      %v3526 = vpack.c.b16 %v3523, %v3522
      %v3528 = vsel %vm3288, %v3524, 0
      %v3531 = vsel %vm3288, %v3525, 0
      %v3534 = vsel %vm3288, %v3526, 0
      %3536 = vmatprep.subr.bf16.mxu0 %v3232
      %3537 = vmatpush1.bf16.msra.mxu0 %v3231
      %3538 = vmatprep.subr.bf16.mxu0 %v3238
      %3539 = vmatpush1.bf16.msra.mxu0 %v3237
      %3540 = vmatprep.subr.bf16.mxu0 %v3244
      %3541 = vmatpush1.bf16.msra.mxu0 %v3243
      %3542 = vmatprep.subr.bf16.mxu0 %v3250
      %3543 = vmatpush1.bf16.msra.mxu0 %v3249
      %3544 = vmatprep.subr.bf16.mxu0 %v3256
      %3545 = vmatpush1.bf16.msra.mxu0 %v3255
      %3546 = vmatprep.subr.bf16.mxu0 %v3303
      %3547 = vmatpush1.bf16.msra.mxu0 %v3300
      %3548 = vmatprep.subr.bf16.mxu0 0
      %3549 = vmatpush1.bf16.msra.mxu0 0
      %3550 = vmatprep.subr.bf16.mxu0 0
      %3551 = vmatpush1.bf16.msra.mxu0 0
      %3552 = vmatprep.subr.bf16.mxu0 0
      %3553 = vmatpush1.bf16.msra.mxu0 0
      %3554 = vmatprep.subr.bf16.mxu0 0
      %3555 = vmatpush1.bf16.msra.mxu0 0
      %3556 = vmatprep.subr.bf16.mxu0 0
      %3557 = vmatpush1.bf16.msra.mxu0 0
      %3558 = vmatprep.subr.bf16.mxu0 0
      %3559 = vmatpush1.bf16.msra.mxu0 0
      %3560 = vmatprep.subr.bf16.mxu0 0
      %3561 = vmatpush1.bf16.msra.mxu0 0
      %3562 = vmatprep.subr.bf16.mxu0 0
      %3563 = vmatpush1.bf16.msra.mxu0 0
      %3564 = vmatprep.subr.bf16.mxu0 0
      %3565 = vmatpush1.bf16.msra.mxu0 0
      %3566 = vmatprep.subr.bf16.mxu0 0
      %3567 = vmatpush1.bf16.msra.mxu0 0
      %3568 = vmatprep.mubr.bf16.mxu0 0
      %3569 = vmatmul.mubr.bf16.gmra.mrb[0].mxu0 %v3528
      %v3570 = vpop.f32.mrb[0].mxu0
      %v3571 = vadd.f32 0.0, %v3570
      %v3572 = vpop.f32.mrb[0].mxu0
      %v3573 = vadd.f32 0.0, %v3572
      %v3574 = vpop.f32.mrb[0].mxu0
      %v3575 = vadd.f32 0.0, %v3574
      %v3576 = vpop.f32.mrb[0].mxu0
      %v3577 = vadd.f32 0.0, %v3576
      %3578 = vmatprep.mubr.bf16.mxu0 0
      %3579 = vmatmul.mubr.bf16.gmra.mrb[0].mxu0 %v3531
      %v3580 = vpop.f32.mrb[0].mxu0
      %v3581 = vadd.f32 0.0, %v3580
      %v3582 = vpop.f32.mrb[0].mxu0
      %v3583 = vadd.f32 0.0, %v3582
      %v3584 = vpop.f32.mrb[0].mxu0
      %v3585 = vadd.f32 0.0, %v3584
      %v3586 = vpop.f32.mrb[0].mxu0
      %v3587 = vadd.f32 0.0, %v3586
      %3588 = vmatprep.mubr.bf16.mxu0 0
      %3589 = vmatmul.mubr.bf16.gmra.mrb[0].mxu0 %v3534
      %v3590 = vpop.f32.mrb[0].mxu0
      %v3591 = vadd.f32 0.0, %v3590
      %v3592 = vpop.f32.mrb[0].mxu0
      %v3593 = vadd.f32 0.0, %v3592
      %v3594 = vpop.f32.mrb[0].mxu0
      %v3595 = vadd.f32 0.0, %v3594
      %v3596 = vpop.f32.mrb[0].mxu0
      %v3597 = vadd.f32 0.0, %v3596
      %3598 = vdwg.mxu0
      %3599 = vmatprep.subr.bf16.mxu0 %v3234
      %3600 = vmatpush1.bf16.msra.mxu0 %v3233
      %3601 = vmatprep.subr.bf16.mxu0 %v3240
      %3602 = vmatpush1.bf16.msra.mxu0 %v3239
      %3603 = vmatprep.subr.bf16.mxu0 %v3246
      %3604 = vmatpush1.bf16.msra.mxu0 %v3245
      %3605 = vmatprep.subr.bf16.mxu0 %v3252
      %3606 = vmatpush1.bf16.msra.mxu0 %v3251
      %3607 = vmatprep.subr.bf16.mxu0 %v3258
      %3608 = vmatpush1.bf16.msra.mxu0 %v3257
      %3609 = vmatprep.subr.bf16.mxu0 %v3309
      %3610 = vmatpush1.bf16.msra.mxu0 %v3306
      %3611 = vmatprep.subr.bf16.mxu0 0
      %3612 = vmatpush1.bf16.msra.mxu0 0
      %3613 = vmatprep.subr.bf16.mxu0 0
      %3614 = vmatpush1.bf16.msra.mxu0 0
      %3615 = vmatprep.subr.bf16.mxu0 0
      %3616 = vmatpush1.bf16.msra.mxu0 0
      %3617 = vmatprep.subr.bf16.mxu0 0
      %3618 = vmatpush1.bf16.msra.mxu0 0
      %3619 = vmatprep.subr.bf16.mxu0 0
      %3620 = vmatpush1.bf16.msra.mxu0 0
      %3621 = vmatprep.subr.bf16.mxu0 0
      %3622 = vmatpush1.bf16.msra.mxu0 0
      %3623 = vmatprep.subr.bf16.mxu0 0
      %3624 = vmatpush1.bf16.msra.mxu0 0
      %3625 = vmatprep.subr.bf16.mxu0 0
      %3626 = vmatpush1.bf16.msra.mxu0 0
      %3627 = vmatprep.subr.bf16.mxu0 0
      %3628 = vmatpush1.bf16.msra.mxu0 0
      %3629 = vmatprep.subr.bf16.mxu0 0
      %3630 = vmatpush1.bf16.msra.mxu0 0
      %3631 = vmatprep.mubr.bf16.mxu0 0
      %3632 = vmatmul.mubr.bf16.gmra.mrb[0].mxu0 %v3528
      %v3633 = vpop.f32.mrb[0].mxu0
      %v3634 = vadd.f32 0.0, %v3633
      %v3635 = vpop.f32.mrb[0].mxu0
      %v3636 = vadd.f32 0.0, %v3635
      %v3637 = vpop.f32.mrb[0].mxu0
      %v3638 = vadd.f32 0.0, %v3637
      %v3639 = vpop.f32.mrb[0].mxu0
      %v3640 = vadd.f32 0.0, %v3639
      %3641 = vmatprep.mubr.bf16.mxu0 0
      %3642 = vmatmul.mubr.bf16.gmra.mrb[0].mxu0 %v3531
      %v3643 = vpop.f32.mrb[0].mxu0
      %v3644 = vadd.f32 0.0, %v3643
      %v3645 = vpop.f32.mrb[0].mxu0
      %v3646 = vadd.f32 0.0, %v3645
      %v3647 = vpop.f32.mrb[0].mxu0
      %v3648 = vadd.f32 0.0, %v3647
      %v3649 = vpop.f32.mrb[0].mxu0
      %v3650 = vadd.f32 0.0, %v3649
      %3651 = vmatprep.mubr.bf16.mxu0 0
      %3652 = vmatmul.mubr.bf16.gmra.mrb[0].mxu0 %v3534
      %v3653 = vpop.f32.mrb[0].mxu0
      %v3654 = vadd.f32 0.0, %v3653
      %v3655 = vpop.f32.mrb[0].mxu0
      %v3656 = vadd.f32 0.0, %v3655
      %v3657 = vpop.f32.mrb[0].mxu0
      %v3658 = vadd.f32 0.0, %v3657
      %v3659 = vpop.f32.mrb[0].mxu0
      %v3660 = vadd.f32 0.0, %v3659
      %3661 = vdwg.mxu0
      %3662 = vmatprep.subr.bf16.mxu0 %v3236
      %3663 = vmatpush1.bf16.msra.mxu0 %v3235
      %3664 = vmatprep.subr.bf16.mxu0 %v3242
      %3665 = vmatpush1.bf16.msra.mxu0 %v3241
      %3666 = vmatprep.subr.bf16.mxu0 %v3248
      %3667 = vmatpush1.bf16.msra.mxu0 %v3247
      %3668 = vmatprep.subr.bf16.mxu0 %v3254
      %3669 = vmatpush1.bf16.msra.mxu0 %v3253
      %3670 = vmatprep.subr.bf16.mxu0 %v3260
      %3671 = vmatpush1.bf16.msra.mxu0 %v3259
      %3672 = vmatprep.subr.bf16.mxu0 %v3315
      %3673 = vmatpush1.bf16.msra.mxu0 %v3312
      %3674 = vmatprep.subr.bf16.mxu0 0
      %3675 = vmatpush1.bf16.msra.mxu0 0
      %3676 = vmatprep.subr.bf16.mxu0 0
      %3677 = vmatpush1.bf16.msra.mxu0 0
      %3678 = vmatprep.subr.bf16.mxu0 0
      %3679 = vmatpush1.bf16.msra.mxu0 0
      %3680 = vmatprep.subr.bf16.mxu0 0
      %3681 = vmatpush1.bf16.msra.mxu0 0
      %3682 = vmatprep.subr.bf16.mxu0 0
      %3683 = vmatpush1.bf16.msra.mxu0 0
      %3684 = vmatprep.subr.bf16.mxu0 0
      %3685 = vmatpush1.bf16.msra.mxu0 0
      %3686 = vmatprep.subr.bf16.mxu0 0
      %3687 = vmatpush1.bf16.msra.mxu0 0
      %3688 = vmatprep.subr.bf16.mxu0 0
      %3689 = vmatpush1.bf16.msra.mxu0 0
      %3690 = vmatprep.subr.bf16.mxu0 0
      %3691 = vmatpush1.bf16.msra.mxu0 0
      %3692 = vmatprep.subr.bf16.mxu0 0
      %3693 = vmatpush1.bf16.msra.mxu0 0
      %3694 = vmatprep.mubr.bf16.mxu0 0
      %3695 = vmatmul.mubr.bf16.gmra.mrb[0].mxu0 %v3528
      %v3696 = vpop.f32.mrb[0].mxu0
      %v3697 = vadd.f32 0.0, %v3696
      %v3698 = vpop.f32.mrb[0].mxu0
      %v3699 = vadd.f32 0.0, %v3698
      %v3700 = vpop.f32.mrb[0].mxu0
      %v3701 = vadd.f32 0.0, %v3700
      %v3702 = vpop.f32.mrb[0].mxu0
      %v3703 = vadd.f32 0.0, %v3702
      %3704 = vmatprep.mubr.bf16.mxu0 0
      %3705 = vmatmul.mubr.bf16.gmra.mrb[0].mxu0 %v3531
      %v3706 = vpop.f32.mrb[0].mxu0
      %v3707 = vadd.f32 0.0, %v3706
      %v3708 = vpop.f32.mrb[0].mxu0
      %v3709 = vadd.f32 0.0, %v3708
      %v3710 = vpop.f32.mrb[0].mxu0
      %v3711 = vadd.f32 0.0, %v3710
      %v3712 = vpop.f32.mrb[0].mxu0
      %v3713 = vadd.f32 0.0, %v3712
      %3714 = vmatprep.mubr.bf16.mxu0 0
      %3715 = vmatmul.mubr.bf16.gmra.mrb[0].mxu0 %v3534
      %v3716 = vpop.f32.mrb[0].mxu0
      %v3717 = vadd.f32 0.0, %v3716
      %v3718 = vpop.f32.mrb[0].mxu0
      %v3719 = vadd.f32 0.0, %v3718
      %v3720 = vpop.f32.mrb[0].mxu0
      %v3721 = vadd.f32 0.0, %v3720
      %v3722 = vpop.f32.mrb[0].mxu0
      %v3723 = vadd.f32 0.0, %v3722
      %3724 = vdwg.mxu0
      %v3725 = vmax.f32 %v3352, %v3571
      %v3726 = vmax.f32 %v3354, %v3573
      %v3727 = vmax.f32 %v3415, %v3634
      %v3728 = vmax.f32 %v3417, %v3636
      %v3729 = vmax.f32 %v3478, %v3697
      %v3730 = vmax.f32 %v3480, %v3699
      %v3731 = vmax.f32 %v3356, %v3575
      %v3732 = vmax.f32 %v3358, %v3577
      %v3733 = vmax.f32 %v3419, %v3638
      %v3734 = vmax.f32 %v3421, %v3640
      %v3735 = vmax.f32 %v3482, %v3701
      %v3736 = vmax.f32 %v3484, %v3703
      %v3737 = vmax.f32 %v3362, %v3581
      %v3738 = vmax.f32 %v3364, %v3583
      %v3739 = vmax.f32 %v3425, %v3644
      %v3740 = vmax.f32 %v3427, %v3646
      %v3741 = vmax.f32 %v3488, %v3707
      %v3742 = vmax.f32 %v3490, %v3709
      %v3743 = vmax.f32 %v3366, %v3585
      %v3744 = vmax.f32 %v3368, %v3587
      %v3745 = vmax.f32 %v3429, %v3648
      %v3746 = vmax.f32 %v3431, %v3650
      %v3747 = vmax.f32 %v3492, %v3711
      %v3748 = vmax.f32 %v3494, %v3713
      %v3749 = vmax.f32 %v3372, %v3591
      %v3750 = vmax.f32 %v3374, %v3593
      %v3751 = vmax.f32 %v3435, %v3654
      %v3752 = vmax.f32 %v3437, %v3656
      %v3753 = vmax.f32 %v3498, %v3717
      %v3754 = vmax.f32 %v3500, %v3719
      %v3755 = vmax.f32 %v3376, %v3595
      %v3756 = vmax.f32 %v3378, %v3597
      %v3757 = vmax.f32 %v3439, %v3658
      %v3758 = vmax.f32 %v3441, %v3660
      %v3759 = vmax.f32 %v3502, %v3721
      %v3760 = vmax.f32 %v3504, %v3723
      %v3761 = vpack.c.bf16 %v3731, %v3725
      %v3762 = vpack.c.bf16 %v3732, %v3726
      %v3763 = vpack.c.bf16 %v3733, %v3727
      %v3764 = vpack.c.bf16 %v3734, %v3728
      %v3765 = vpack.c.bf16 %v3735, %v3729
      %v3766 = vpack.c.bf16 %v3736, %v3730
      %v3767 = vpack.c.bf16 %v3743, %v3737
      %v3768 = vpack.c.bf16 %v3744, %v3738
      %v3769 = vpack.c.bf16 %v3745, %v3739
      %v3770 = vpack.c.bf16 %v3746, %v3740
      %v3771 = vpack.c.bf16 %v3747, %v3741
      %v3772 = vpack.c.bf16 %v3748, %v3742
      %v3773 = vpack.c.bf16 %v3755, %v3749
      %v3774 = vpack.c.bf16 %v3756, %v3750
      %v3775 = vpack.c.bf16 %v3757, %v3751
      %v3776 = vpack.c.bf16 %v3758, %v3752
      %v3777 = vpack.c.bf16 %v3759, %v3753
      %v3778 = vpack.c.bf16 %v3760, %v3754
      %v3779 = vld [vmem:[%s5] sm:$0xff]
      %v3780 = vld [vmem:[%s5 + $0x8] sm:$0xf]
      %v3781 = vld [vmem:[%s5 + $0xc] sm:$0xff]
      %v3782 = vld [vmem:[%s5 + $0x14] sm:$0xf]
      %v3783 = vld [vmem:[%s5 + $0x18] sm:$0xff]
      %v3784 = vld [vmem:[%s5 + $0x20] sm:$0xf]
      %v3785 = vld [vmem:[%s5 + $0x24] sm:$0xff]
      %v3786 = vld [vmem:[%s5 + $0x2c] sm:$0xf]
      %v3787 = vld [vmem:[%s5 + $0x30] sm:$0xff]
      %v3788 = vld [vmem:[%s5 + $0x38] sm:$0xf]
      %v3789 = vld [vmem:[%s5 + $0x3c] sm:$0xff]
      %v3790 = vld [vmem:[%s5 + $0x44] sm:$0xf]
      %v3791 = vld [vmem:[%s5 + $0x48] sm:$0xff]
      %v3792 = vld [vmem:[%s5 + $0x50] sm:$0xf]
      %v3793 = vld [vmem:[%s5 + $0x54] sm:$0xff]
      %v3794 = vld [vmem:[%s5 + $0x5c] sm:$0xf]
      %v3795 = vld [vmem:[%s5 + $0x60] sm:$0xff]
      %v3796 = vld [vmem:[%s5 + $0x68] sm:$0xf]
      %v3797 = vld [vmem:[%s5 + $0x6c] sm:$0xff]
      %v3798 = vld [vmem:[%s5 + $0x74] sm:$0xf]
      %v3799 = vld [vmem:[%s5 + $0x78] sm:$0xff]
      %v3800 = vld [vmem:[%s5 + $0x80] sm:$0xf]
      %v3801 = vld [vmem:[%s5 + $0x84] sm:$0xff]
      %v3802 = vld [vmem:[%s5 + $0x8c] sm:$0xf]
      %v3803 = vld [vmem:[%s5 + $0x90] sm:$0xff]
      %v3804 = vld [vmem:[%s5 + $0x98] sm:$0xf]
      %v3805 = vld [vmem:[%s5 + $0x9c] sm:$0xff]
      %v3806 = vld [vmem:[%s5 + $0xa4] sm:$0xf]
      %v3807 = vld [vmem:[%s5 + $0xa8] sm:$0xff]
      %v3808 = vld [vmem:[%s5 + $0xb0] sm:$0xf]
      %v3809 = vld [vmem:[%s5 + $0xb4] sm:$0xff]
      %v3810 = vld [vmem:[%s5 + $0xbc] sm:$0xf]
      %v3811 = vld [vmem:[%s5 + $0xc0] sm:$0xff]
      %v3812 = vld [vmem:[%s5 + $0xc8] sm:$0xf]
      %v3813 = vld [vmem:[%s5 + $0xcc] sm:$0xff]
      %v3814 = vld [vmem:[%s5 + $0xd4] sm:$0xf]
      %v3815 = vld [vmem:[%s5 + $0xd8] sm:$0xff]
      %v3816 = vld [vmem:[%s5 + $0xe0] sm:$0xf]
      %v3817 = vld [vmem:[%s5 + $0xe4] sm:$0xff]
      %v3818 = vld [vmem:[%s5 + $0xec] sm:$0xf]
      %v3819 = vld [vmem:[%s5 + $0xf0] sm:$0xff]
      %v3820 = vld [vmem:[%s5 + $0xf8] sm:$0xf]
      %v3821 = vld [vmem:[%s5 + $0xfc] sm:$0xff]
      %v3822 = vld [vmem:[%s5 + $0x104] sm:$0xf]
      %v3823 = vld [vmem:[%s5 + $0x108] sm:$0xff]
      %v3824 = vld [vmem:[%s5 + $0x110] sm:$0xf]
      %v3825 = vld [vmem:[%s5 + $0x114] sm:$0xff]
      %v3826 = vld [vmem:[%s5 + $0x11c] sm:$0xf]
      %v3827 = vld [vmem:[%s5 + $0x120] sm:$0xff]
      %v3828 = vld [vmem:[%s5 + $0x128] sm:$0xf]
      %v3829 = vld [vmem:[%s5 + $0x12c] sm:$0xff]
      %v3830 = vld [vmem:[%s5 + $0x134] sm:$0xf]
      %v3831 = vld [vmem:[%s5 + $0x138] sm:$0xff]
      %v3832 = vld [vmem:[%s5 + $0x140] sm:$0xf]
      %v3833 = vld [vmem:[%s5 + $0x144] sm:$0xff]
      %v3834 = vld [vmem:[%s5 + $0x14c] sm:$0xf]
      %v3835 = vld [vmem:[%s5 + $0x150] sm:$0xff]
      %v3836 = vld [vmem:[%s5 + $0x158] sm:$0xf]
      %v3837 = vld [vmem:[%s5 + $0x15c] sm:$0xff]
      %v3838 = vld [vmem:[%s5 + $0x164] sm:$0xf]
      %v3839 = vld [vmem:[%s5 + $0x168] sm:$0xff]
      %v3840 = vld [vmem:[%s5 + $0x170] sm:$0xf]
      %v3841 = vld [vmem:[%s5 + $0x174] sm:$0xff]
      %v3842 = vld [vmem:[%s5 + $0x17c] sm:$0xf]
      %v3843 = vld [vmem:[%s5 + $0x180] sm:$0xff]
      %v3844 = vld [vmem:[%s5 + $0x188] sm:$0xf]
      %v3845 = vld [vmem:[%s5 + $0x18c] sm:$0xff]
      %v3846 = vld [vmem:[%s5 + $0x194] sm:$0xf]
      %v3847 = vld [vmem:[%s5 + $0x198] sm:$0xff]
      %v3848 = vld [vmem:[%s5 + $0x1a0] sm:$0xf]
      %v3849 = vld [vmem:[%s5 + $0x1a4] sm:$0xff]
      %v3850 = vld [vmem:[%s5 + $0x1ac] sm:$0xf]
      %v3851 = vld [vmem:[%s5 + $0x1b0] sm:$0xff]
      %v3852 = vld [vmem:[%s5 + $0x1b8] sm:$0xf]
      %v3853 = vld [vmem:[%s5 + $0x1bc] sm:$0xff]
      %v3854 = vld [vmem:[%s5 + $0x1c4] sm:$0xf]
      %v3855 = vld [vmem:[%s5 + $0x1c8] sm:$0xff]
      %v3856 = vld [vmem:[%s5 + $0x1d0] sm:$0xf]
      %v3857 = vld [vmem:[%s5 + $0x1d4] sm:$0xff]
      %v3858 = vld [vmem:[%s5 + $0x1dc] sm:$0xf]
      %v3859 = vld [vmem:[%s5 + $0x1e0] sm:$0xff]
      %v3860 = vld [vmem:[%s5 + $0x1e8] sm:$0xf]
      %v3861 = vld [vmem:[%s5 + $0x1ec] sm:$0xff]
      %v3862 = vld [vmem:[%s5 + $0x1f4] sm:$0xf]
      %v3863 = vld [vmem:[%s5 + $0x1f8] sm:$0xff]
      %v3864 = vld [vmem:[%s5 + $0x200] sm:$0xf]
      %v3865 = vld [vmem:[%s5 + $0x204] sm:$0xff]
      %v3866 = vld [vmem:[%s5 + $0x20c] sm:$0xf]
      %v3867 = vld [vmem:[%s5 + $0x210] sm:$0xff]
      %v3868 = vld [vmem:[%s5 + $0x218] sm:$0xf]
      %v3869 = vld [vmem:[%s5 + $0x21c] sm:$0xff]
      %v3870 = vld [vmem:[%s5 + $0x224] sm:$0xf]
      %v3871 = vld [vmem:[%s5 + $0x228] sm:$0xff]
      %v3872 = vld [vmem:[%s5 + $0x230] sm:$0xf]
      %v3873 = vld [vmem:[%s5 + $0x234] sm:$0xff]
      %v3874 = vld [vmem:[%s5 + $0x23c] sm:$0xf]
      %v3875 = vld [vmem:[%s5 + $0x240] sm:$0xff]
      %v3876 = vld [vmem:[%s5 + $0x248] sm:$0xf]
      %v3877 = vld [vmem:[%s5 + $0x24c] sm:$0xff]
      %v3878 = vld [vmem:[%s5 + $0x254] sm:$0xf]
      %v3879 = vld [vmem:[%s5 + $0x258] sm:$0xff]
      %v3880 = vld [vmem:[%s5 + $0x260] sm:$0xf]
      %v3881 = vld [vmem:[%s5 + $0x264] sm:$0xff]
      %v3882 = vld [vmem:[%s5 + $0x26c] sm:$0xf]
      %v3883 = vld [vmem:[%s5 + $0x270] sm:$0xff]
      %v3884 = vld [vmem:[%s5 + $0x278] sm:$0xf]
      %v3885 = vld [vmem:[%s5 + $0x27c] sm:$0xff]
      %v3886 = vld [vmem:[%s5 + $0x284] sm:$0xf]
      %v3887 = vld [vmem:[%s5 + $0x288] sm:$0xff]
      %v3888 = vld [vmem:[%s5 + $0x290] sm:$0xf]
      %v3889 = vld [vmem:[%s5 + $0x294] sm:$0xff]
      %v3890 = vld [vmem:[%s5 + $0x29c] sm:$0xf]
      %v3891 = vld [vmem:[%s5 + $0x2a0] sm:$0xff]
      %v3892 = vld [vmem:[%s5 + $0x2a8] sm:$0xf]
      %v3893 = vld [vmem:[%s5 + $0x2ac] sm:$0xff]
      %v3894 = vld [vmem:[%s5 + $0x2b4] sm:$0xf]
      %v3895 = vld [vmem:[%s5 + $0x2b8] sm:$0xff]
      %v3896 = vld [vmem:[%s5 + $0x2c0] sm:$0xf]
      %v3897 = vld [vmem:[%s5 + $0x2c4] sm:$0xff]
      %v3898 = vld [vmem:[%s5 + $0x2cc] sm:$0xf]
      %v3899 = vld [vmem:[%s5 + $0x2d0] sm:$0xff]
      %v3900 = vld [vmem:[%s5 + $0x2d8] sm:$0xf]
      %v3901 = vld [vmem:[%s5 + $0x2dc] sm:$0xff]
      %v3902 = vld [vmem:[%s5 + $0x2e4] sm:$0xf]
      %v3903 = vld [vmem:[%s5 + $0x2e8] sm:$0xff]
      %v3904 = vld [vmem:[%s5 + $0x2f0] sm:$0xf]
      %v3905 = vld [vmem:[%s5 + $0x2f4] sm:$0xff]
      %v3906 = vld [vmem:[%s5 + $0x2fc] sm:$0xf]
      %v3907 = vld [vmem:[%s5 + $0x300] sm:$0xff]
      %v3908 = vld [vmem:[%s5 + $0x308] sm:$0xf]
      %v3909 = vld [vmem:[%s5 + $0x30c] sm:$0xff]
      %v3910 = vld [vmem:[%s5 + $0x314] sm:$0xf]
      %v3911 = vld [vmem:[%s5 + $0x318] sm:$0xff]
      %v3912 = vld [vmem:[%s5 + $0x320] sm:$0xf]
      %v3913 = vld [vmem:[%s5 + $0x324] sm:$0xff]
      %v3914 = vld [vmem:[%s5 + $0x32c] sm:$0xf]
      %v3915 = vld [vmem:[%s5 + $0x330] sm:$0xff]
      %v3916 = vld [vmem:[%s5 + $0x338] sm:$0xf]
      %v3917 = vld [vmem:[%s5 + $0x33c] sm:$0xff]
      %v3918 = vld [vmem:[%s5 + $0x344] sm:$0xf]
      %v3919 = vld [vmem:[%s5 + $0x348] sm:$0xff]
      %v3920 = vld [vmem:[%s5 + $0x350] sm:$0xf]
      %v3921 = vld [vmem:[%s5 + $0x354] sm:$0xff]
      %v3922 = vld [vmem:[%s5 + $0x35c] sm:$0xf]
      %v3923 = vld [vmem:[%s5 + $0x360] sm:$0xff]
      %v3924 = vld [vmem:[%s5 + $0x368] sm:$0xf]
      %v3925 = vld [vmem:[%s5 + $0x36c] sm:$0xff]
      %v3926 = vld [vmem:[%s5 + $0x374] sm:$0xf]
      %v3927 = vld [vmem:[%s5 + $0x378] sm:$0xff]
      %v3928 = vld [vmem:[%s5 + $0x380] sm:$0xf]
      %v3929 = vld [vmem:[%s5 + $0x384] sm:$0xff]
      %v3930 = vld [vmem:[%s5 + $0x38c] sm:$0xf]
      %v3931 = vld [vmem:[%s5 + $0x390] sm:$0xff]
      %v3932 = vld [vmem:[%s5 + $0x398] sm:$0xf]
      %v3933 = vld [vmem:[%s5 + $0x39c] sm:$0xff]
      %v3934 = vld [vmem:[%s5 + $0x3a4] sm:$0xf]
      %v3935 = vld [vmem:[%s5 + $0x3a8] sm:$0xff]
      %v3936 = vld [vmem:[%s5 + $0x3b0] sm:$0xf]
      %v3937 = vld [vmem:[%s5 + $0x3b4] sm:$0xff]
      %v3938 = vld [vmem:[%s5 + $0x3bc] sm:$0xf]
      %v3939 = vld [vmem:[%s5 + $0x3c0] sm:$0xff]
      %v3940 = vld [vmem:[%s5 + $0x3c8] sm:$0xf]
      %v3941 = vld [vmem:[%s5 + $0x3cc] sm:$0xff]
      %v3942 = vld [vmem:[%s5 + $0x3d4] sm:$0xf]
      %v3943 = vld [vmem:[%s5 + $0x3d8] sm:$0xff]
      %v3944 = vld [vmem:[%s5 + $0x3e0] sm:$0xf]
      %v3945 = vld [vmem:[%s5 + $0x3e4] sm:$0xff]
      %v3946 = vld [vmem:[%s5 + $0x3ec] sm:$0xf]
      %v3947 = vld [vmem:[%s5 + $0x3f0] sm:$0xff]
      %v3948 = vld [vmem:[%s5 + $0x3f8] sm:$0xf]
      %v3949 = vld [vmem:[%s5 + $0x3fc] sm:$0xff]
      %v3950 = vld [vmem:[%s5 + $0x404] sm:$0xf]
      %v3951 = vld [vmem:[%s5 + $0x408] sm:$0xff]
      %v3952 = vld [vmem:[%s5 + $0x410] sm:$0xf]
      %v3953 = vld [vmem:[%s5 + $0x414] sm:$0xff]
      %v3954 = vld [vmem:[%s5 + $0x41c] sm:$0xf]
      %v3955 = vld [vmem:[%s5 + $0x420] sm:$0xff]
      %v3956 = vld [vmem:[%s5 + $0x428] sm:$0xf]
      %v3957 = vld [vmem:[%s5 + $0x42c] sm:$0xff]
      %v3958 = vld [vmem:[%s5 + $0x434] sm:$0xf]
      %v3959 = vld [vmem:[%s5 + $0x438] sm:$0xff]
      %v3960 = vld [vmem:[%s5 + $0x440] sm:$0xf]
      %v3961 = vld [vmem:[%s5 + $0x444] sm:$0xff]
      %v3962 = vld [vmem:[%s5 + $0x44c] sm:$0xf]
      %v4147 = vunpack.c.l.b16 %v3779
      %v4148 = vunpack.c.h.b16 %v3779
      %v4149 = vunpack.c.l.b16 %v3780
      %v4150 = vunpack.c.l.b16 %v3781
      %v4151 = vunpack.c.h.b16 %v3781
      %v4152 = vunpack.c.l.b16 %v3782
      %v4153 = vunpack.c.l.b16 %v3783
      %v4154 = vunpack.c.h.b16 %v3783
      %v4155 = vunpack.c.l.b16 %v3784
      %v4156 = vunpack.c.l.b16 %v3785
      %v4157 = vunpack.c.h.b16 %v3785
      %v4158 = vunpack.c.l.b16 %v3786
      %v4159 = vunpack.c.l.b16 %v3787
      %v4160 = vunpack.c.h.b16 %v3787
      %v4161 = vunpack.c.l.b16 %v3788
      %v4162 = vunpack.c.l.b16 %v3789
      %v4163 = vunpack.c.h.b16 %v3789
      %v4164 = vunpack.c.l.b16 %v3790
      %v4165 = vunpack.c.l.b16 %v3791
      %v4166 = vunpack.c.h.b16 %v3791
      %v4167 = vunpack.c.l.b16 %v3792
      %v4168 = vunpack.c.l.b16 %v3793
      %v4169 = vunpack.c.h.b16 %v3793
      %v4170 = vunpack.c.l.b16 %v3794
      %v4171 = vunpack.c.l.b16 %v3795
      %v4172 = vunpack.c.h.b16 %v3795
      %v4173 = vunpack.c.l.b16 %v3796
      %v4174 = vunpack.c.l.b16 %v3797
      %v4175 = vunpack.c.h.b16 %v3797
      %v4176 = vunpack.c.l.b16 %v3798
      %v4177 = vunpack.c.l.b16 %v3799
      %v4178 = vunpack.c.h.b16 %v3799
      %v4179 = vunpack.c.l.b16 %v3800
      %v4180 = vunpack.c.l.b16 %v3801
      %v4181 = vunpack.c.h.b16 %v3801
      %v4182 = vunpack.c.l.b16 %v3802
      %v4183 = vunpack.c.l.b16 %v3803
      %v4184 = vunpack.c.h.b16 %v3803
      %v4185 = vunpack.c.l.b16 %v3804
      %v4186 = vunpack.c.l.b16 %v3805
      %v4187 = vunpack.c.h.b16 %v3805
      %v4188 = vunpack.c.l.b16 %v3806
      %v4189 = vunpack.c.l.b16 %v3807
      %v4190 = vunpack.c.h.b16 %v3807
      %v4191 = vunpack.c.l.b16 %v3808
      %v4192 = vunpack.c.l.b16 %v3809
      %v4193 = vunpack.c.h.b16 %v3809
      %v4194 = vunpack.c.l.b16 %v3810
      %v4195 = vunpack.c.l.b16 %v3811
      %v4196 = vunpack.c.h.b16 %v3811
      %v4197 = vunpack.c.l.b16 %v3812
      %v4198 = vunpack.c.l.b16 %v3813
      %v4199 = vunpack.c.h.b16 %v3813
      %v4200 = vunpack.c.l.b16 %v3814
      %v4201 = vunpack.c.l.b16 %v3815
      %v4202 = vunpack.c.h.b16 %v3815
      %v4203 = vunpack.c.l.b16 %v3816
      %v4204 = vunpack.c.l.b16 %v3817
      %v4205 = vunpack.c.h.b16 %v3817
      %v4206 = vunpack.c.l.b16 %v3818
      %v4207 = vunpack.c.l.b16 %v3819
      %v4208 = vunpack.c.h.b16 %v3819
      %v4209 = vunpack.c.l.b16 %v3820
      %v4210 = vunpack.c.l.b16 %v3821
      %v4211 = vunpack.c.h.b16 %v3821
      %v4212 = vunpack.c.l.b16 %v3822
      %v4213 = vunpack.c.l.b16 %v3823
      %v4214 = vunpack.c.h.b16 %v3823
      %v4215 = vunpack.c.l.b16 %v3824
      %v4216 = vunpack.c.l.b16 %v3825
      %v4217 = vunpack.c.h.b16 %v3825
      %v4218 = vunpack.c.l.b16 %v3826
      %v4219 = vunpack.c.l.b16 %v3827
      %v4220 = vunpack.c.h.b16 %v3827
      %v4221 = vunpack.c.l.b16 %v3828
      %v4222 = vunpack.c.l.b16 %v3829
      %v4223 = vunpack.c.h.b16 %v3829
      %v4224 = vunpack.c.l.b16 %v3830
      %v4225 = vunpack.c.l.b16 %v3831
      %v4226 = vunpack.c.h.b16 %v3831
      %v4227 = vunpack.c.l.b16 %v3832
      %v4228 = vunpack.c.l.b16 %v3833
      %v4229 = vunpack.c.h.b16 %v3833
      %v4230 = vunpack.c.l.b16 %v3834
      %v4231 = vunpack.c.l.b16 %v3835
      %v4232 = vunpack.c.h.b16 %v3835
      %v4233 = vunpack.c.l.b16 %v3836
      %v4234 = vunpack.c.l.b16 %v3837
      %v4235 = vunpack.c.h.b16 %v3837
      %v4236 = vunpack.c.l.b16 %v3838
      %v4237 = vunpack.c.l.b16 %v3839
      %v4238 = vunpack.c.h.b16 %v3839
      %v4239 = vunpack.c.l.b16 %v3840
      %v4240 = vunpack.c.l.b16 %v3841
      %v4241 = vunpack.c.h.b16 %v3841
      %v4242 = vunpack.c.l.b16 %v3842
      %v4243 = vunpack.c.l.b16 %v3843
      %v4244 = vunpack.c.h.b16 %v3843
      %v4245 = vunpack.c.l.b16 %v3844
      %v4246 = vunpack.c.l.b16 %v3845
      %v4247 = vunpack.c.h.b16 %v3845
      %v4248 = vunpack.c.l.b16 %v3846
      %v4249 = vunpack.c.l.b16 %v3847
      %v4250 = vunpack.c.h.b16 %v3847
      %v4251 = vunpack.c.l.b16 %v3848
      %v4252 = vunpack.c.l.b16 %v3849
      %v4253 = vunpack.c.h.b16 %v3849
      %v4254 = vunpack.c.l.b16 %v3850
      %v4255 = vunpack.c.l.b16 %v3851
      %v4256 = vunpack.c.h.b16 %v3851
      %v4257 = vunpack.c.l.b16 %v3852
      %v4258 = vunpack.c.l.b16 %v3853
      %v4259 = vunpack.c.h.b16 %v3853
      %v4260 = vunpack.c.l.b16 %v3854
      %v4261 = vunpack.c.l.b16 %v3855
      %v4262 = vunpack.c.h.b16 %v3855
      %v4263 = vunpack.c.l.b16 %v3856
      %v4264 = vunpack.c.l.b16 %v3857
      %v4265 = vunpack.c.h.b16 %v3857
      %v4266 = vunpack.c.l.b16 %v3858
      %v4267 = vunpack.c.l.b16 %v3859
      %v4268 = vunpack.c.h.b16 %v3859
      %v4269 = vunpack.c.l.b16 %v3860
      %v4270 = vunpack.c.l.b16 %v3861
      %v4271 = vunpack.c.h.b16 %v3861
      %v4272 = vunpack.c.l.b16 %v3862
      %v4273 = vunpack.c.l.b16 %v3863
      %v4274 = vunpack.c.h.b16 %v3863
      %v4275 = vunpack.c.l.b16 %v3864
      %v4276 = vunpack.c.l.b16 %v3865
      %v4277 = vunpack.c.h.b16 %v3865
      %v4278 = vunpack.c.l.b16 %v3866
      %v4279 = vunpack.c.l.b16 %v3867
      %v4280 = vunpack.c.h.b16 %v3867
      %v4281 = vunpack.c.l.b16 %v3868
      %v4282 = vunpack.c.l.b16 %v3869
      %v4283 = vunpack.c.h.b16 %v3869
      %v4284 = vunpack.c.l.b16 %v3870
      %v4285 = vunpack.c.l.b16 %v3871
      %v4286 = vunpack.c.h.b16 %v3871
      %v4287 = vunpack.c.l.b16 %v3872
      %v4288 = vunpack.c.l.b16 %v3873
      %v4289 = vunpack.c.h.b16 %v3873
      %v4290 = vunpack.c.l.b16 %v3874
      %v4291 = vunpack.c.l.b16 %v3875
      %v4292 = vunpack.c.h.b16 %v3875
      %v4293 = vunpack.c.l.b16 %v3876
      %v4294 = vunpack.c.l.b16 %v3877
      %v4295 = vunpack.c.h.b16 %v3877
      %v4296 = vunpack.c.l.b16 %v3878
      %v4297 = vunpack.c.l.b16 %v3879
      %v4298 = vunpack.c.h.b16 %v3879
      %v4299 = vunpack.c.l.b16 %v3880
      %v4300 = vunpack.c.l.b16 %v3881
      %v4301 = vunpack.c.h.b16 %v3881
      %v4302 = vunpack.c.l.b16 %v3882
      %v4303 = vunpack.c.l.b16 %v3883
      %v4304 = vunpack.c.h.b16 %v3883
      %v4305 = vunpack.c.l.b16 %v3884
      %v4306 = vunpack.c.l.b16 %v3885
      %v4307 = vunpack.c.h.b16 %v3885
      %v4308 = vunpack.c.l.b16 %v3886
      %v4309 = vunpack.c.l.b16 %v3887
      %v4310 = vunpack.c.h.b16 %v3887
      %v4311 = vunpack.c.l.b16 %v3888
      %v4312 = vunpack.c.l.b16 %v3889
      %v4313 = vunpack.c.h.b16 %v3889
      %v4314 = vunpack.c.l.b16 %v3890
      %v4315 = vunpack.c.l.b16 %v3891
      %v4316 = vunpack.c.h.b16 %v3891
      %v4317 = vunpack.c.l.b16 %v3892
      %v4318 = vunpack.c.l.b16 %v3893
      %v4319 = vunpack.c.h.b16 %v3893
      %v4320 = vunpack.c.l.b16 %v3894
      %v4321 = vunpack.c.l.b16 %v3895
      %v4322 = vunpack.c.h.b16 %v3895
      %v4323 = vunpack.c.l.b16 %v3896
      %v4324 = vunpack.c.l.b16 %v3897
      %v4325 = vunpack.c.h.b16 %v3897
      %v4326 = vunpack.c.l.b16 %v3898
      %v4327 = vunpack.c.l.b16 %v3899
      %v4328 = vunpack.c.h.b16 %v3899
      %v4329 = vunpack.c.l.b16 %v3900
      %v4330 = vunpack.c.l.b16 %v3901
      %v4331 = vunpack.c.h.b16 %v3901
      %v4332 = vunpack.c.l.b16 %v3902
      %v4333 = vunpack.c.l.b16 %v3903
      %v4334 = vunpack.c.h.b16 %v3903
      %v4335 = vunpack.c.l.b16 %v3904
      %v4336 = vunpack.c.l.b16 %v3905
      %v4337 = vunpack.c.h.b16 %v3905
      %v4338 = vunpack.c.l.b16 %v3906
      %v4339 = vunpack.c.l.b16 %v3907
      %v4340 = vunpack.c.h.b16 %v3907
      %v4341 = vunpack.c.l.b16 %v3908
      %v4342 = vunpack.c.l.b16 %v3909
      %v4343 = vunpack.c.h.b16 %v3909
      %v4344 = vunpack.c.l.b16 %v3910
      %v4345 = vunpack.c.l.b16 %v3911
      %v4346 = vunpack.c.h.b16 %v3911
      %v4347 = vunpack.c.l.b16 %v3912
      %v4348 = vunpack.c.l.b16 %v3913
      %v4349 = vunpack.c.h.b16 %v3913
      %v4350 = vunpack.c.l.b16 %v3914
      %v4351 = vunpack.c.l.b16 %v3915
      %v4352 = vunpack.c.h.b16 %v3915
      %v4353 = vunpack.c.l.b16 %v3916
      %v4354 = vunpack.c.l.b16 %v3917
      %v4355 = vunpack.c.h.b16 %v3917
      %v4356 = vunpack.c.l.b16 %v3918
      %v4357 = vunpack.c.l.b16 %v3919
      %v4358 = vunpack.c.h.b16 %v3919
      %v4359 = vunpack.c.l.b16 %v3920
      %v4360 = vunpack.c.l.b16 %v3921
      %v4361 = vunpack.c.h.b16 %v3921
      %v4362 = vunpack.c.l.b16 %v3922
      %v4363 = vunpack.c.l.b16 %v3923
      %v4364 = vunpack.c.h.b16 %v3923
      %v4365 = vunpack.c.l.b16 %v3924
      %v4366 = vunpack.c.l.b16 %v3925
      %v4367 = vunpack.c.h.b16 %v3925
      %v4368 = vunpack.c.l.b16 %v3926
      %v4369 = vunpack.c.l.b16 %v3927
      %v4370 = vunpack.c.h.b16 %v3927
      %v4371 = vunpack.c.l.b16 %v3928
      %v4372 = vunpack.c.l.b16 %v3929
      %v4373 = vunpack.c.h.b16 %v3929
      %v4374 = vunpack.c.l.b16 %v3930
      %v4375 = vunpack.c.l.b16 %v3931
      %v4376 = vunpack.c.h.b16 %v3931
      %v4377 = vunpack.c.l.b16 %v3932
      %v4378 = vunpack.c.l.b16 %v3933
      %v4379 = vunpack.c.h.b16 %v3933
      %v4380 = vunpack.c.l.b16 %v3934
      %v4381 = vunpack.c.l.b16 %v3935
      %v4382 = vunpack.c.h.b16 %v3935
      %v4383 = vunpack.c.l.b16 %v3936
      %v4384 = vunpack.c.l.b16 %v3937
      %v4385 = vunpack.c.h.b16 %v3937
      %v4386 = vunpack.c.l.b16 %v3938
      %v4387 = vunpack.c.l.b16 %v3939
      %v4388 = vunpack.c.h.b16 %v3939
      %v4389 = vunpack.c.l.b16 %v3940
      %v4390 = vunpack.c.l.b16 %v3941
      %v4391 = vunpack.c.h.b16 %v3941
      %v4392 = vunpack.c.l.b16 %v3942
      %v4393 = vunpack.c.l.b16 %v3943
      %v4394 = vunpack.c.h.b16 %v3943
      %v4395 = vunpack.c.l.b16 %v3944
      %v4396 = vunpack.c.l.b16 %v3945
      %v4397 = vunpack.c.h.b16 %v3945
      %v4398 = vunpack.c.l.b16 %v3946
      %v4399 = vunpack.c.l.b16 %v3947
      %v4400 = vunpack.c.h.b16 %v3947
      %v4401 = vunpack.c.l.b16 %v3948
      %v4402 = vunpack.c.l.b16 %v3949
      %v4403 = vunpack.c.h.b16 %v3949
      %v4404 = vunpack.c.l.b16 %v3950
      %v4405 = vunpack.c.l.b16 %v3951
      %v4406 = vunpack.c.h.b16 %v3951
      %v4407 = vunpack.c.l.b16 %v3952
      %v4408 = vunpack.c.l.b16 %v3953
      %v4409 = vunpack.c.h.b16 %v3953
      %v4410 = vunpack.c.l.b16 %v3954
      %v4411 = vunpack.c.l.b16 %v3955
      %v4412 = vunpack.c.h.b16 %v3955
      %v4413 = vunpack.c.l.b16 %v3956
      %v4414 = vunpack.c.l.b16 %v3957
      %v4415 = vunpack.c.h.b16 %v3957
      %v4416 = vunpack.c.l.b16 %v3958
      %v4417 = vunpack.c.l.b16 %v3959
      %v4418 = vunpack.c.h.b16 %v3959
      %v4419 = vunpack.c.l.b16 %v3960
      %v4420 = vunpack.c.l.b16 %v3961
      %v4421 = vunpack.c.h.b16 %v3961
      %v4422 = vunpack.c.l.b16 %v3962
      %v4423 = vpack.c.b16 %v4150, %v4147
      %v4424 = vpack.c.b16 %v4151, %v4148
      %v4425 = vpack.c.b16 %v4152, %v4149
      %v4426 = vpack.c.b16 %v4156, %v4153
      %v4427 = vpack.c.b16 %v4157, %v4154
      %v4428 = vpack.c.b16 %v4158, %v4155
      %v4429 = vpack.c.b16 %v4162, %v4159
      %v4430 = vpack.c.b16 %v4163, %v4160
      %v4431 = vpack.c.b16 %v4164, %v4161
      %v4432 = vpack.c.b16 %v4168, %v4165
      %v4433 = vpack.c.b16 %v4169, %v4166
      %v4434 = vpack.c.b16 %v4170, %v4167
      %v4435 = vpack.c.b16 %v4174, %v4171
      %v4436 = vpack.c.b16 %v4175, %v4172
      %v4437 = vpack.c.b16 %v4176, %v4173
      %v4438 = vpack.c.b16 %v4180, %v4177
      %v4439 = vpack.c.b16 %v4181, %v4178
      %v4440 = vpack.c.b16 %v4182, %v4179
      %v4441 = vpack.c.b16 %v4186, %v4183
      %v4442 = vpack.c.b16 %v4187, %v4184
      %v4443 = vpack.c.b16 %v4188, %v4185
      %v4444 = vpack.c.b16 %v4192, %v4189
      %v4445 = vpack.c.b16 %v4193, %v4190
      %v4446 = vpack.c.b16 %v4194, %v4191
      %v4447 = vpack.c.b16 %v4198, %v4195
      %v4448 = vpack.c.b16 %v4199, %v4196
      %v4449 = vpack.c.b16 %v4200, %v4197
      %v4450 = vpack.c.b16 %v4204, %v4201
      %v4451 = vpack.c.b16 %v4205, %v4202
      %v4452 = vpack.c.b16 %v4206, %v4203
      %v4453 = vpack.c.b16 %v4210, %v4207
      %v4454 = vpack.c.b16 %v4211, %v4208
      %v4455 = vpack.c.b16 %v4212, %v4209
      %v4456 = vpack.c.b16 %v4216, %v4213
      %v4457 = vpack.c.b16 %v4217, %v4214
      %v4458 = vpack.c.b16 %v4218, %v4215
      %v4459 = vpack.c.b16 %v4222, %v4219
      %v4460 = vpack.c.b16 %v4223, %v4220
      %v4461 = vpack.c.b16 %v4224, %v4221
      %v4462 = vpack.c.b16 %v4228, %v4225
      %v4463 = vpack.c.b16 %v4229, %v4226
      %v4464 = vpack.c.b16 %v4230, %v4227
      %v4465 = vpack.c.b16 %v4234, %v4231
      %v4466 = vpack.c.b16 %v4235, %v4232
      %v4467 = vpack.c.b16 %v4236, %v4233
      %v4468 = vpack.c.b16 %v4240, %v4237
      %v4469 = vpack.c.b16 %v4241, %v4238
      %v4470 = vpack.c.b16 %v4242, %v4239
      %v4471 = vpack.c.b16 %v4246, %v4243
      %v4472 = vpack.c.b16 %v4247, %v4244
      %v4473 = vpack.c.b16 %v4248, %v4245
      %v4474 = vpack.c.b16 %v4252, %v4249
      %v4475 = vpack.c.b16 %v4253, %v4250
      %v4476 = vpack.c.b16 %v4254, %v4251
      %v4477 = vpack.c.b16 %v4258, %v4255
      %v4478 = vpack.c.b16 %v4259, %v4256
      %v4479 = vpack.c.b16 %v4260, %v4257
      %v4480 = vpack.c.b16 %v4264, %v4261
      %v4481 = vpack.c.b16 %v4265, %v4262
      %v4482 = vpack.c.b16 %v4266, %v4263
      %v4483 = vpack.c.b16 %v4270, %v4267
      %v4484 = vpack.c.b16 %v4271, %v4268
      %v4485 = vpack.c.b16 %v4272, %v4269
      %v4486 = vpack.c.b16 %v4276, %v4273
      %v4487 = vpack.c.b16 %v4277, %v4274
      %v4488 = vpack.c.b16 %v4278, %v4275
      %v4489 = vpack.c.b16 %v4282, %v4279
      %v4490 = vpack.c.b16 %v4283, %v4280
      %v4491 = vpack.c.b16 %v4284, %v4281
      %v4492 = vpack.c.b16 %v4288, %v4285
      %v4493 = vpack.c.b16 %v4289, %v4286
      %v4494 = vpack.c.b16 %v4290, %v4287
      %v4495 = vpack.c.b16 %v4294, %v4291
      %v4496 = vpack.c.b16 %v4295, %v4292
      %v4497 = vpack.c.b16 %v4296, %v4293
      %v4498 = vpack.c.b16 %v4300, %v4297
      %v4499 = vpack.c.b16 %v4301, %v4298
      %v4500 = vpack.c.b16 %v4302, %v4299
      %v4501 = vpack.c.b16 %v4306, %v4303
      %v4502 = vpack.c.b16 %v4307, %v4304
      %v4503 = vpack.c.b16 %v4308, %v4305
      %v4504 = vpack.c.b16 %v4312, %v4309
      %v4505 = vpack.c.b16 %v4313, %v4310
      %v4506 = vpack.c.b16 %v4314, %v4311
      %v4507 = vpack.c.b16 %v4318, %v4315
      %v4508 = vpack.c.b16 %v4319, %v4316
      %v4509 = vpack.c.b16 %v4320, %v4317
      %v4510 = vpack.c.b16 %v4324, %v4321
      %v4511 = vpack.c.b16 %v4325, %v4322
      %v4512 = vpack.c.b16 %v4326, %v4323
      %v4513 = vpack.c.b16 %v4330, %v4327
      %v4514 = vpack.c.b16 %v4331, %v4328
      %v4515 = vpack.c.b16 %v4332, %v4329
      %v4516 = vpack.c.b16 %v4336, %v4333
      %v4517 = vpack.c.b16 %v4337, %v4334
      %v4518 = vpack.c.b16 %v4338, %v4335
      %v4519 = vpack.c.b16 %v4342, %v4339
      %v4520 = vpack.c.b16 %v4343, %v4340
      %v4521 = vpack.c.b16 %v4344, %v4341
      %v4522 = vpack.c.b16 %v4348, %v4345
      %v4523 = vpack.c.b16 %v4349, %v4346
      %v4524 = vpack.c.b16 %v4350, %v4347
      %v4525 = vpack.c.b16 %v4354, %v4351
      %v4526 = vpack.c.b16 %v4355, %v4352
      %v4527 = vpack.c.b16 %v4356, %v4353
      %v4528 = vpack.c.b16 %v4360, %v4357
      %v4529 = vpack.c.b16 %v4361, %v4358
      %v4530 = vpack.c.b16 %v4362, %v4359
      %v4531 = vpack.c.b16 %v4366, %v4363
      %v4532 = vpack.c.b16 %v4367, %v4364
      %v4533 = vpack.c.b16 %v4368, %v4365
      %v4534 = vpack.c.b16 %v4372, %v4369
      %v4535 = vpack.c.b16 %v4373, %v4370
      %v4536 = vpack.c.b16 %v4374, %v4371
      %v4537 = vpack.c.b16 %v4378, %v4375
      %v4538 = vpack.c.b16 %v4379, %v4376
      %v4539 = vpack.c.b16 %v4380, %v4377
      %v4540 = vpack.c.b16 %v4384, %v4381
      %v4541 = vpack.c.b16 %v4385, %v4382
      %v4542 = vpack.c.b16 %v4386, %v4383
      %v4543 = vpack.c.b16 %v4390, %v4387
      %v4544 = vpack.c.b16 %v4391, %v4388
      %v4545 = vpack.c.b16 %v4392, %v4389
      %v4546 = vpack.c.b16 %v4396, %v4393
      %v4547 = vpack.c.b16 %v4397, %v4394
      %v4548 = vpack.c.b16 %v4398, %v4395
      %v4549 = vpack.c.b16 %v4402, %v4399
      %v4550 = vpack.c.b16 %v4403, %v4400
      %v4551 = vpack.c.b16 %v4404, %v4401
      %v4552 = vpack.c.b16 %v4408, %v4405
      %v4553 = vpack.c.b16 %v4409, %v4406
      %v4554 = vpack.c.b16 %v4410, %v4407
      %v4555 = vpack.c.b16 %v4414, %v4411
      %v4556 = vpack.c.b16 %v4415, %v4412
      %v4557 = vpack.c.b16 %v4416, %v4413
      %v4558 = vpack.c.b16 %v4420, %v4417
      %v4559 = vpack.c.b16 %v4421, %v4418
      %v4560 = vpack.c.b16 %v4422, %v4419
      %vm4699 = vcmask 785408
      %v4701 = vsel %vm4699, %v3766, 0
      %v4704 = vsel %vm4699, %v3772, 0
      %v4707 = vsel %vm4699, %v3778, 0
      %4709 = vmatprep.subr.bf16.mxu0 %v4424
      %4710 = vmatpush1.bf16.msra.mxu0 %v4423
      %4711 = vmatprep.subr.bf16.mxu0 %v4427
      %4712 = vmatpush1.bf16.msra.mxu0 %v4426
      %4713 = vmatprep.subr.bf16.mxu0 %v4430
      %4714 = vmatpush1.bf16.msra.mxu0 %v4429
      %4715 = vmatprep.subr.bf16.mxu0 %v4433
      %4716 = vmatpush1.bf16.msra.mxu0 %v4432
      %4717 = vmatprep.subr.bf16.mxu0 %v4436
      %4718 = vmatpush1.bf16.msra.mxu0 %v4435
      %4719 = vmatprep.subr.bf16.mxu0 %v4439
      %4720 = vmatpush1.bf16.msra.mxu0 %v4438
      %4721 = vmatprep.subr.bf16.mxu0 %v4442
      %4722 = vmatpush1.bf16.msra.mxu0 %v4441
      %4723 = vmatprep.subr.bf16.mxu0 %v4445
      %4724 = vmatpush1.bf16.msra.mxu0 %v4444
      %4725 = vmatprep.subr.bf16.mxu0 %v4448
      %4726 = vmatpush1.bf16.msra.mxu0 %v4447
      %4727 = vmatprep.subr.bf16.mxu0 %v4451
      %4728 = vmatpush1.bf16.msra.mxu0 %v4450
      %4729 = vmatprep.subr.bf16.mxu0 %v4454
      %4730 = vmatpush1.bf16.msra.mxu0 %v4453
      %4731 = vmatprep.subr.bf16.mxu0 %v4457
      %4732 = vmatpush1.bf16.msra.mxu0 %v4456
      %4733 = vmatprep.subr.bf16.mxu0 %v4460
      %4734 = vmatpush1.bf16.msra.mxu0 %v4459
      %4735 = vmatprep.subr.bf16.mxu0 %v4463
      %4736 = vmatpush1.bf16.msra.mxu0 %v4462
      %4737 = vmatprep.subr.bf16.mxu0 %v4466
      %4738 = vmatpush1.bf16.msra.mxu0 %v4465
      %4739 = vmatprep.subr.bf16.mxu0 %v4469
      %4740 = vmatpush1.bf16.msra.mxu0 %v4468
      %4741 = vmatprep.mubr.bf16.mxu0 %v3762
      %4742 = vmatmul.mubr.bf16.gmra.mrb[0].mxu0 %v3761
      %v4743 = vpop.f32.mrb[0].mxu0
      %v4744 = vadd.f32 0.0, %v4743
      %v4745 = vpop.f32.mrb[0].mxu0
      %v4746 = vadd.f32 0.0, %v4745
      %v4747 = vpop.f32.mrb[0].mxu0
      %v4748 = vadd.f32 0.0, %v4747
      %v4749 = vpop.f32.mrb[0].mxu0
      %v4750 = vadd.f32 0.0, %v4749
      %4751 = vmatprep.mubr.bf16.mxu0 %v3768
      %4752 = vmatmul.mubr.bf16.gmra.mrb[0].mxu0 %v3767
      %v4753 = vpop.f32.mrb[0].mxu0
      %v4754 = vadd.f32 0.0, %v4753
      %v4755 = vpop.f32.mrb[0].mxu0
      %v4756 = vadd.f32 0.0, %v4755
      %v4757 = vpop.f32.mrb[0].mxu0
      %v4758 = vadd.f32 0.0, %v4757
      %v4759 = vpop.f32.mrb[0].mxu0
      %v4760 = vadd.f32 0.0, %v4759
      %4761 = vmatprep.mubr.bf16.mxu0 %v3774
      %4762 = vmatmul.mubr.bf16.gmra.mrb[0].mxu0 %v3773
      %v4763 = vpop.f32.mrb[0].mxu0
      %v4764 = vadd.f32 0.0, %v4763
      %v4765 = vpop.f32.mrb[0].mxu0
      %v4766 = vadd.f32 0.0, %v4765
      %v4767 = vpop.f32.mrb[0].mxu0
      %v4768 = vadd.f32 0.0, %v4767
      %v4769 = vpop.f32.mrb[0].mxu0
      %v4770 = vadd.f32 0.0, %v4769
      %4771 = vdwg.mxu0
      %4772 = vmatprep.subr.bf16.mxu0 %v4472
      %4773 = vmatpush1.bf16.msra.mxu0 %v4471
      %4774 = vmatprep.subr.bf16.mxu0 %v4475
      %4775 = vmatpush1.bf16.msra.mxu0 %v4474
      %4776 = vmatprep.subr.bf16.mxu0 %v4478
      %4777 = vmatpush1.bf16.msra.mxu0 %v4477
      %4778 = vmatprep.subr.bf16.mxu0 %v4481
      %4779 = vmatpush1.bf16.msra.mxu0 %v4480
      %4780 = vmatprep.subr.bf16.mxu0 %v4484
      %4781 = vmatpush1.bf16.msra.mxu0 %v4483
      %4782 = vmatprep.subr.bf16.mxu0 %v4487
      %4783 = vmatpush1.bf16.msra.mxu0 %v4486
      %4784 = vmatprep.subr.bf16.mxu0 %v4490
      %4785 = vmatpush1.bf16.msra.mxu0 %v4489
      %4786 = vmatprep.subr.bf16.mxu0 %v4493
      %4787 = vmatpush1.bf16.msra.mxu0 %v4492
      %4788 = vmatprep.subr.bf16.mxu0 %v4496
      %4789 = vmatpush1.bf16.msra.mxu0 %v4495
      %4790 = vmatprep.subr.bf16.mxu0 %v4499
      %4791 = vmatpush1.bf16.msra.mxu0 %v4498
      %4792 = vmatprep.subr.bf16.mxu0 %v4502
      %4793 = vmatpush1.bf16.msra.mxu0 %v4501
      %4794 = vmatprep.subr.bf16.mxu0 %v4505
      %4795 = vmatpush1.bf16.msra.mxu0 %v4504
      %4796 = vmatprep.subr.bf16.mxu0 %v4508
      %4797 = vmatpush1.bf16.msra.mxu0 %v4507
      %4798 = vmatprep.subr.bf16.mxu0 %v4511
      %4799 = vmatpush1.bf16.msra.mxu0 %v4510
      %4800 = vmatprep.subr.bf16.mxu0 %v4514
      %4801 = vmatpush1.bf16.msra.mxu0 %v4513
      %4802 = vmatprep.subr.bf16.mxu0 %v4517
      %4803 = vmatpush1.bf16.msra.mxu0 %v4516
      %4804 = vmatprep.mubr.bf16.mxu0 %v3764
      %4805 = vmatmul.mubr.bf16.gmra.mrb[0].mxu0 %v3763
      %v4806 = vpop.f32.mrb[0].mxu0
      %v4807 = vadd.f32 %v4744, %v4806
      %v4808 = vpop.f32.mrb[0].mxu0
      %v4809 = vadd.f32 %v4746, %v4808
      %v4810 = vpop.f32.mrb[0].mxu0
      %v4811 = vadd.f32 %v4748, %v4810
      %v4812 = vpop.f32.mrb[0].mxu0
      %v4813 = vadd.f32 %v4750, %v4812
      %4814 = vmatprep.mubr.bf16.mxu0 %v3770
      %4815 = vmatmul.mubr.bf16.gmra.mrb[0].mxu0 %v3769
      %v4816 = vpop.f32.mrb[0].mxu0
      %v4817 = vadd.f32 %v4754, %v4816
      %v4818 = vpop.f32.mrb[0].mxu0
      %v4819 = vadd.f32 %v4756, %v4818
      %v4820 = vpop.f32.mrb[0].mxu0
      %v4821 = vadd.f32 %v4758, %v4820
      %v4822 = vpop.f32.mrb[0].mxu0
      %v4823 = vadd.f32 %v4760, %v4822
      %4824 = vmatprep.mubr.bf16.mxu0 %v3776
      %4825 = vmatmul.mubr.bf16.gmra.mrb[0].mxu0 %v3775
      %v4826 = vpop.f32.mrb[0].mxu0
      %v4827 = vadd.f32 %v4764, %v4826
      %v4828 = vpop.f32.mrb[0].mxu0
      %v4829 = vadd.f32 %v4766, %v4828
      %v4830 = vpop.f32.mrb[0].mxu0
      %v4831 = vadd.f32 %v4768, %v4830
      %v4832 = vpop.f32.mrb[0].mxu0
      %v4833 = vadd.f32 %v4770, %v4832
      %4834 = vdwg.mxu0
      %4835 = vmatprep.subr.bf16.mxu0 %v4520
      %4836 = vmatpush1.bf16.msra.mxu0 %v4519
      %4837 = vmatprep.subr.bf16.mxu0 %v4523
      %4838 = vmatpush1.bf16.msra.mxu0 %v4522
      %4839 = vmatprep.subr.bf16.mxu0 %v4526
      %4840 = vmatpush1.bf16.msra.mxu0 %v4525
      %4841 = vmatprep.subr.bf16.mxu0 %v4529
      %4842 = vmatpush1.bf16.msra.mxu0 %v4528
      %4843 = vmatprep.subr.bf16.mxu0 %v4532
      %4844 = vmatpush1.bf16.msra.mxu0 %v4531
      %4845 = vmatprep.subr.bf16.mxu0 %v4535
      %4846 = vmatpush1.bf16.msra.mxu0 %v4534
      %4847 = vmatprep.subr.bf16.mxu0 %v4538
      %4848 = vmatpush1.bf16.msra.mxu0 %v4537
      %4849 = vmatprep.subr.bf16.mxu0 %v4541
      %4850 = vmatpush1.bf16.msra.mxu0 %v4540
      %4851 = vmatprep.subr.bf16.mxu0 %v4544
      %4852 = vmatpush1.bf16.msra.mxu0 %v4543
      %4853 = vmatprep.subr.bf16.mxu0 %v4547
      %4854 = vmatpush1.bf16.msra.mxu0 %v4546
      %4855 = vmatprep.subr.bf16.mxu0 %v4550
      %4856 = vmatpush1.bf16.msra.mxu0 %v4549
      %4857 = vmatprep.subr.bf16.mxu0 %v4553
      %4858 = vmatpush1.bf16.msra.mxu0 %v4552
      %4859 = vmatprep.subr.bf16.mxu0 %v4556
      %4860 = vmatpush1.bf16.msra.mxu0 %v4555
      %4861 = vmatprep.subr.bf16.mxu0 %v4559
      %4862 = vmatpush1.bf16.msra.mxu0 %v4558
      %4863 = vmatprep.subr.bf16.mxu0 0
      %4864 = vmatpush1.bf16.msra.mxu0 0
      %4865 = vmatprep.subr.bf16.mxu0 0
      %4866 = vmatpush1.bf16.msra.mxu0 0
      %4867 = vmatprep.mubr.bf16.mxu0 %v4701
      %4868 = vmatmul.mubr.bf16.gmra.mrb[0].mxu0 %v3765
      %v4869 = vpop.f32.mrb[0].mxu0
      %v4870 = vadd.f32 %v4807, %v4869
      %v4871 = vpop.f32.mrb[0].mxu0
      %v4872 = vadd.f32 %v4809, %v4871
      %v4873 = vpop.f32.mrb[0].mxu0
      %v4874 = vadd.f32 %v4811, %v4873
      %v4875 = vpop.f32.mrb[0].mxu0
      %v4876 = vadd.f32 %v4813, %v4875
      %4877 = vmatprep.mubr.bf16.mxu0 %v4704
      %4878 = vmatmul.mubr.bf16.gmra.mrb[0].mxu0 %v3771
      %v4879 = vpop.f32.mrb[0].mxu0
      %v4880 = vadd.f32 %v4817, %v4879
      %v4881 = vpop.f32.mrb[0].mxu0
      %v4882 = vadd.f32 %v4819, %v4881
      %v4883 = vpop.f32.mrb[0].mxu0
      %v4884 = vadd.f32 %v4821, %v4883
      %v4885 = vpop.f32.mrb[0].mxu0
      %v4886 = vadd.f32 %v4823, %v4885
      %4887 = vmatprep.mubr.bf16.mxu0 %v4707
      %4888 = vmatmul.mubr.bf16.gmra.mrb[0].mxu0 %v3777
      %v4889 = vpop.f32.mrb[0].mxu0
      %v4890 = vadd.f32 %v4827, %v4889
      %v4891 = vpop.f32.mrb[0].mxu0
      %v4892 = vadd.f32 %v4829, %v4891
      %v4893 = vpop.f32.mrb[0].mxu0
      %v4894 = vadd.f32 %v4831, %v4893
      %v4895 = vpop.f32.mrb[0].mxu0
      %v4896 = vadd.f32 %v4833, %v4895
      %4897 = vdwg.mxu0
      %4898 = vmatprep.subr.bf16.mxu0 0
      %4899 = vmatpush1.bf16.msra.mxu0 %v4425
      %4900 = vmatprep.subr.bf16.mxu0 0
      %4901 = vmatpush1.bf16.msra.mxu0 %v4428
      %4902 = vmatprep.subr.bf16.mxu0 0
      %4903 = vmatpush1.bf16.msra.mxu0 %v4431
      %4904 = vmatprep.subr.bf16.mxu0 0
      %4905 = vmatpush1.bf16.msra.mxu0 %v4434
      %4906 = vmatprep.subr.bf16.mxu0 0
      %4907 = vmatpush1.bf16.msra.mxu0 %v4437
      %4908 = vmatprep.subr.bf16.mxu0 0
      %4909 = vmatpush1.bf16.msra.mxu0 %v4440
      %4910 = vmatprep.subr.bf16.mxu0 0
      %4911 = vmatpush1.bf16.msra.mxu0 %v4443
      %4912 = vmatprep.subr.bf16.mxu0 0
      %4913 = vmatpush1.bf16.msra.mxu0 %v4446
      %4914 = vmatprep.subr.bf16.mxu0 0
      %4915 = vmatpush1.bf16.msra.mxu0 %v4449
      %4916 = vmatprep.subr.bf16.mxu0 0
      %4917 = vmatpush1.bf16.msra.mxu0 %v4452
      %4918 = vmatprep.subr.bf16.mxu0 0
      %4919 = vmatpush1.bf16.msra.mxu0 %v4455
      %4920 = vmatprep.subr.bf16.mxu0 0
      %4921 = vmatpush1.bf16.msra.mxu0 %v4458
      %4922 = vmatprep.subr.bf16.mxu0 0
      %4923 = vmatpush1.bf16.msra.mxu0 %v4461
      %4924 = vmatprep.subr.bf16.mxu0 0
      %4925 = vmatpush1.bf16.msra.mxu0 %v4464
      %4926 = vmatprep.subr.bf16.mxu0 0
      %4927 = vmatpush1.bf16.msra.mxu0 %v4467
      %4928 = vmatprep.subr.bf16.mxu0 0
      %4929 = vmatpush1.bf16.msra.mxu0 %v4470
      %4930 = vmatprep.mubr.bf16.mxu0 %v3762
      %4931 = vmatmul.mubr.bf16.gmra.mrb[0].mxu0 %v3761
      %v4932 = vpop.f32.mrb[0].mxu0
      %v4933 = vadd.f32 0.0, %v4932
      %v4934 = vpop.f32.mrb[0].mxu0
      %v4935 = vpop.f32.mrb[0].mxu0
      %v4936 = vadd.f32 0.0, %v4935
      %v4937 = vpop.f32.mrb[0].mxu0
      %4938 = vmatprep.mubr.bf16.mxu0 %v3768
      %4939 = vmatmul.mubr.bf16.gmra.mrb[0].mxu0 %v3767
      %v4940 = vpop.f32.mrb[0].mxu0
      %v4941 = vadd.f32 0.0, %v4940
      %v4942 = vpop.f32.mrb[0].mxu0
      %v4943 = vpop.f32.mrb[0].mxu0
      %v4944 = vadd.f32 0.0, %v4943
      %v4945 = vpop.f32.mrb[0].mxu0
      %4946 = vmatprep.mubr.bf16.mxu0 %v3774
      %4947 = vmatmul.mubr.bf16.gmra.mrb[0].mxu0 %v3773
      %v4948 = vpop.f32.mrb[0].mxu0
      %v4949 = vadd.f32 0.0, %v4948
      %v4950 = vpop.f32.mrb[0].mxu0
      %v4951 = vpop.f32.mrb[0].mxu0
      %v4952 = vadd.f32 0.0, %v4951
      %v4953 = vpop.f32.mrb[0].mxu0
      %4954 = vdwg.mxu0
      %4955 = vmatprep.subr.bf16.mxu0 0
      %4956 = vmatpush1.bf16.msra.mxu0 %v4473
      %4957 = vmatprep.subr.bf16.mxu0 0
      %4958 = vmatpush1.bf16.msra.mxu0 %v4476
      %4959 = vmatprep.subr.bf16.mxu0 0
      %4960 = vmatpush1.bf16.msra.mxu0 %v4479
      %4961 = vmatprep.subr.bf16.mxu0 0
      %4962 = vmatpush1.bf16.msra.mxu0 %v4482
      %4963 = vmatprep.subr.bf16.mxu0 0
      %4964 = vmatpush1.bf16.msra.mxu0 %v4485
      %4965 = vmatprep.subr.bf16.mxu0 0
      %4966 = vmatpush1.bf16.msra.mxu0 %v4488
      %4967 = vmatprep.subr.bf16.mxu0 0
      %4968 = vmatpush1.bf16.msra.mxu0 %v4491
      %4969 = vmatprep.subr.bf16.mxu0 0
      %4970 = vmatpush1.bf16.msra.mxu0 %v4494
      %4971 = vmatprep.subr.bf16.mxu0 0
      %4972 = vmatpush1.bf16.msra.mxu0 %v4497
      %4973 = vmatprep.subr.bf16.mxu0 0
      %4974 = vmatpush1.bf16.msra.mxu0 %v4500
      %4975 = vmatprep.subr.bf16.mxu0 0
      %4976 = vmatpush1.bf16.msra.mxu0 %v4503
      %4977 = vmatprep.subr.bf16.mxu0 0
      %4978 = vmatpush1.bf16.msra.mxu0 %v4506
      %4979 = vmatprep.subr.bf16.mxu0 0
      %4980 = vmatpush1.bf16.msra.mxu0 %v4509
      %4981 = vmatprep.subr.bf16.mxu0 0
      %4982 = vmatpush1.bf16.msra.mxu0 %v4512
      %4983 = vmatprep.subr.bf16.mxu0 0
      %4984 = vmatpush1.bf16.msra.mxu0 %v4515
      %4985 = vmatprep.subr.bf16.mxu0 0
      %4986 = vmatpush1.bf16.msra.mxu0 %v4518
      %4987 = vmatprep.mubr.bf16.mxu0 %v3764
      %4988 = vmatmul.mubr.bf16.gmra.mrb[0].mxu0 %v3763
      %v4989 = vpop.f32.mrb[0].mxu0
      %v4990 = vadd.f32 %v4933, %v4989
      %v4991 = vpop.f32.mrb[0].mxu0
      %v4992 = vpop.f32.mrb[0].mxu0
      %v4993 = vadd.f32 %v4936, %v4992
      %v4994 = vpop.f32.mrb[0].mxu0
      %4995 = vmatprep.mubr.bf16.mxu0 %v3770
      %4996 = vmatmul.mubr.bf16.gmra.mrb[0].mxu0 %v3769
      %v4997 = vpop.f32.mrb[0].mxu0
      %v4998 = vadd.f32 %v4941, %v4997
      %v4999 = vpop.f32.mrb[0].mxu0
      %v5000 = vpop.f32.mrb[0].mxu0
      %v5001 = vadd.f32 %v4944, %v5000
      %v5002 = vpop.f32.mrb[0].mxu0
      %5003 = vmatprep.mubr.bf16.mxu0 %v3776
      %5004 = vmatmul.mubr.bf16.gmra.mrb[0].mxu0 %v3775
      %v5005 = vpop.f32.mrb[0].mxu0
      %v5006 = vadd.f32 %v4949, %v5005
      %v5007 = vpop.f32.mrb[0].mxu0
      %v5008 = vpop.f32.mrb[0].mxu0
      %v5009 = vadd.f32 %v4952, %v5008
      %v5010 = vpop.f32.mrb[0].mxu0
      %5011 = vdwg.mxu0
      %5012 = vmatprep.subr.bf16.mxu0 0
      %5013 = vmatpush1.bf16.msra.mxu0 %v4521
      %5014 = vmatprep.subr.bf16.mxu0 0
      %5015 = vmatpush1.bf16.msra.mxu0 %v4524
      %5016 = vmatprep.subr.bf16.mxu0 0
      %5017 = vmatpush1.bf16.msra.mxu0 %v4527
      %5018 = vmatprep.subr.bf16.mxu0 0
      %5019 = vmatpush1.bf16.msra.mxu0 %v4530
      %5020 = vmatprep.subr.bf16.mxu0 0
      %5021 = vmatpush1.bf16.msra.mxu0 %v4533
      %5022 = vmatprep.subr.bf16.mxu0 0
      %5023 = vmatpush1.bf16.msra.mxu0 %v4536
      %5024 = vmatprep.subr.bf16.mxu0 0
      %5025 = vmatpush1.bf16.msra.mxu0 %v4539
      %5026 = vmatprep.subr.bf16.mxu0 0
      %5027 = vmatpush1.bf16.msra.mxu0 %v4542
      %5028 = vmatprep.subr.bf16.mxu0 0
      %5029 = vmatpush1.bf16.msra.mxu0 %v4545
      %5030 = vmatprep.subr.bf16.mxu0 0
      %5031 = vmatpush1.bf16.msra.mxu0 %v4548
      %5032 = vmatprep.subr.bf16.mxu0 0
      %5033 = vmatpush1.bf16.msra.mxu0 %v4551
      %5034 = vmatprep.subr.bf16.mxu0 0
      %5035 = vmatpush1.bf16.msra.mxu0 %v4554
      %5036 = vmatprep.subr.bf16.mxu0 0
      %5037 = vmatpush1.bf16.msra.mxu0 %v4557
      %5038 = vmatprep.subr.bf16.mxu0 0
      %5039 = vmatpush1.bf16.msra.mxu0 %v4560
      %5040 = vmatprep.subr.bf16.mxu0 0
      %5041 = vmatpush1.bf16.msra.mxu0 0
      %5042 = vmatprep.subr.bf16.mxu0 0
      %5043 = vmatpush1.bf16.msra.mxu0 0
      %5044 = vmatprep.mubr.bf16.mxu0 %v4701
      %5045 = vmatmul.mubr.bf16.gmra.mrb[0].mxu0 %v3765
      %v5046 = vpop.f32.mrb[0].mxu0
      %v5047 = vadd.f32 %v4990, %v5046
      %v5048 = vpop.f32.mrb[0].mxu0
      %v5049 = vpop.f32.mrb[0].mxu0
      %v5050 = vadd.f32 %v4993, %v5049
      %v5051 = vpop.f32.mrb[0].mxu0
      %5052 = vmatprep.mubr.bf16.mxu0 %v4704
      %5053 = vmatmul.mubr.bf16.gmra.mrb[0].mxu0 %v3771
      %v5054 = vpop.f32.mrb[0].mxu0
      %v5055 = vadd.f32 %v4998, %v5054
      %v5056 = vpop.f32.mrb[0].mxu0
      %v5057 = vpop.f32.mrb[0].mxu0
      %v5058 = vadd.f32 %v5001, %v5057
      %v5059 = vpop.f32.mrb[0].mxu0
      %5060 = vmatprep.mubr.bf16.mxu0 %v4707
      %5061 = vmatmul.mubr.bf16.gmra.mrb[0].mxu0 %v3777
      %v5062 = vpop.f32.mrb[0].mxu0
      %v5063 = vadd.f32 %v5006, %v5062
      %v5064 = vpop.f32.mrb[0].mxu0
      %v5065 = vpop.f32.mrb[0].mxu0
      %v5066 = vadd.f32 %v5009, %v5065
      %v5067 = vpop.f32.mrb[0].mxu0
      %5068 = vdwg.mxu0
      %v5069 = vld [vmem:[%s6] sm:$0xff]
      %v5070 = vld [vmem:[%s6 + $0x8] sm:$0xf]
      %v5071 = vld [vmem:[%s6 + $0xc] sm:$0xff]
      %v5072 = vld [vmem:[%s6 + $0x14] sm:$0xf]
      %v5073 = vld [vmem:[%s6 + $0x18] sm:$0xff]
      %v5074 = vld [vmem:[%s6 + $0x20] sm:$0xf]
      %v5075 = vld [vmem:[%s6 + $0x24] sm:$0xff]
      %v5076 = vld [vmem:[%s6 + $0x2c] sm:$0xf]
      %v5077 = vld [vmem:[%s6 + $0x30] sm:$0xff]
      %v5078 = vld [vmem:[%s6 + $0x38] sm:$0xf]
      %v5079 = vld [vmem:[%s6 + $0x3c] sm:$0xff]
      %v5080 = vld [vmem:[%s6 + $0x44] sm:$0xf]
      %v5081 = vld [vmem:[%s6 + $0x48] sm:$0xff]
      %v5082 = vld [vmem:[%s6 + $0x50] sm:$0xf]
      %v5083 = vld [vmem:[%s6 + $0x54] sm:$0xff]
      %v5084 = vld [vmem:[%s6 + $0x5c] sm:$0xf]
      %v5085 = vld [vmem:[%s6 + $0x60] sm:$0xff]
      %v5086 = vld [vmem:[%s6 + $0x68] sm:$0xf]
      %v5087 = vld [vmem:[%s6 + $0x6c] sm:$0xff]
      %v5088 = vld [vmem:[%s6 + $0x74] sm:$0xf]
      %v5089 = vld [vmem:[%s6 + $0x78] sm:$0xff]
      %v5090 = vld [vmem:[%s6 + $0x80] sm:$0xf]
      %v5091 = vld [vmem:[%s6 + $0x84] sm:$0xff]
      %v5092 = vld [vmem:[%s6 + $0x8c] sm:$0xf]
      %v5093 = vld [vmem:[%s6 + $0x90] sm:$0xff]
      %v5094 = vld [vmem:[%s6 + $0x98] sm:$0xf]
      %v5095 = vld [vmem:[%s6 + $0x9c] sm:$0xff]
      %v5096 = vld [vmem:[%s6 + $0xa4] sm:$0xf]
      %v5097 = vld [vmem:[%s6 + $0xa8] sm:$0xff]
      %v5098 = vld [vmem:[%s6 + $0xb0] sm:$0xf]
      %v5099 = vld [vmem:[%s6 + $0xb4] sm:$0xff]
      %v5100 = vld [vmem:[%s6 + $0xbc] sm:$0xf]
      %v5101 = vld [vmem:[%s6 + $0xc0] sm:$0xff]
      %v5102 = vld [vmem:[%s6 + $0xc8] sm:$0xf]
      %v5103 = vld [vmem:[%s6 + $0xcc] sm:$0xff]
      %v5104 = vld [vmem:[%s6 + $0xd4] sm:$0xf]
      %v5105 = vld [vmem:[%s6 + $0xd8] sm:$0xff]
      %v5106 = vld [vmem:[%s6 + $0xe0] sm:$0xf]
      %v5107 = vld [vmem:[%s6 + $0xe4] sm:$0xff]
      %v5108 = vld [vmem:[%s6 + $0xec] sm:$0xf]
      %v5109 = vld [vmem:[%s6 + $0xf0] sm:$0xff]
      %v5110 = vld [vmem:[%s6 + $0xf8] sm:$0xf]
      %v5111 = vld [vmem:[%s6 + $0xfc] sm:$0xff]
      %v5112 = vld [vmem:[%s6 + $0x104] sm:$0xf]
      %v5113 = vld [vmem:[%s6 + $0x108] sm:$0xff]
      %v5114 = vld [vmem:[%s6 + $0x110] sm:$0xf]
      %v5115 = vld [vmem:[%s6 + $0x114] sm:$0xff]
      %v5116 = vld [vmem:[%s6 + $0x11c] sm:$0xf]
      %v5117 = vld [vmem:[%s6 + $0x120] sm:$0xff]
      %v5118 = vld [vmem:[%s6 + $0x128] sm:$0xf]
      %v5119 = vld [vmem:[%s6 + $0x12c] sm:$0xff]
      %v5120 = vld [vmem:[%s6 + $0x134] sm:$0xf]
      %v5121 = vld [vmem:[%s6 + $0x138] sm:$0xff]
      %v5122 = vld [vmem:[%s6 + $0x140] sm:$0xf]
      %v5123 = vld [vmem:[%s6 + $0x144] sm:$0xff]
      %v5124 = vld [vmem:[%s6 + $0x14c] sm:$0xf]
      %v5125 = vld [vmem:[%s6 + $0x150] sm:$0xff]
      %v5126 = vld [vmem:[%s6 + $0x158] sm:$0xf]
      %v5127 = vld [vmem:[%s6 + $0x15c] sm:$0xff]
      %v5128 = vld [vmem:[%s6 + $0x164] sm:$0xf]
      %v5129 = vld [vmem:[%s6 + $0x168] sm:$0xff]
      %v5130 = vld [vmem:[%s6 + $0x170] sm:$0xf]
      %v5131 = vld [vmem:[%s6 + $0x174] sm:$0xff]
      %v5132 = vld [vmem:[%s6 + $0x17c] sm:$0xf]
      %v5133 = vld [vmem:[%s6 + $0x180] sm:$0xff]
      %v5134 = vld [vmem:[%s6 + $0x188] sm:$0xf]
      %v5135 = vld [vmem:[%s6 + $0x18c] sm:$0xff]
      %v5136 = vld [vmem:[%s6 + $0x194] sm:$0xf]
      %v5137 = vld [vmem:[%s6 + $0x198] sm:$0xff]
      %v5138 = vld [vmem:[%s6 + $0x1a0] sm:$0xf]
      %v5139 = vld [vmem:[%s6 + $0x1a4] sm:$0xff]
      %v5140 = vld [vmem:[%s6 + $0x1ac] sm:$0xf]
      %v5141 = vld [vmem:[%s6 + $0x1b0] sm:$0xff]
      %v5142 = vld [vmem:[%s6 + $0x1b8] sm:$0xf]
      %v5143 = vld [vmem:[%s6 + $0x1bc] sm:$0xff]
      %v5144 = vld [vmem:[%s6 + $0x1c4] sm:$0xf]
      %v5145 = vld [vmem:[%s6 + $0x1c8] sm:$0xff]
      %v5146 = vld [vmem:[%s6 + $0x1d0] sm:$0xf]
      %v5147 = vld [vmem:[%s6 + $0x1d4] sm:$0xff]
      %v5148 = vld [vmem:[%s6 + $0x1dc] sm:$0xf]
      %v5149 = vld [vmem:[%s6 + $0x1e0] sm:$0xff]
      %v5150 = vld [vmem:[%s6 + $0x1e8] sm:$0xf]
      %v5151 = vld [vmem:[%s6 + $0x1ec] sm:$0xff]
      %v5152 = vld [vmem:[%s6 + $0x1f4] sm:$0xf]
      %v5153 = vld [vmem:[%s6 + $0x1f8] sm:$0xff]
      %v5154 = vld [vmem:[%s6 + $0x200] sm:$0xf]
      %v5155 = vld [vmem:[%s6 + $0x204] sm:$0xff]
      %v5156 = vld [vmem:[%s6 + $0x20c] sm:$0xf]
      %v5157 = vld [vmem:[%s6 + $0x210] sm:$0xff]
      %v5158 = vld [vmem:[%s6 + $0x218] sm:$0xf]
      %v5159 = vld [vmem:[%s6 + $0x21c] sm:$0xff]
      %v5160 = vld [vmem:[%s6 + $0x224] sm:$0xf]
      %v5161 = vld [vmem:[%s6 + $0x228] sm:$0xff]
      %v5162 = vld [vmem:[%s6 + $0x230] sm:$0xf]
      %v5163 = vld [vmem:[%s6 + $0x234] sm:$0xff]
      %v5164 = vld [vmem:[%s6 + $0x23c] sm:$0xf]
      %v5165 = vld [vmem:[%s6 + $0x240] sm:$0xff]
      %v5166 = vld [vmem:[%s6 + $0x248] sm:$0xf]
      %v5167 = vld [vmem:[%s6 + $0x24c] sm:$0xff]
      %v5168 = vld [vmem:[%s6 + $0x254] sm:$0xf]
      %v5169 = vld [vmem:[%s6 + $0x258] sm:$0xff]
      %v5170 = vld [vmem:[%s6 + $0x260] sm:$0xf]
      %v5171 = vld [vmem:[%s6 + $0x264] sm:$0xff]
      %v5172 = vld [vmem:[%s6 + $0x26c] sm:$0xf]
      %v5173 = vld [vmem:[%s6 + $0x270] sm:$0xff]
      %v5174 = vld [vmem:[%s6 + $0x278] sm:$0xf]
      %v5175 = vld [vmem:[%s6 + $0x27c] sm:$0xff]
      %v5176 = vld [vmem:[%s6 + $0x284] sm:$0xf]
      %v5177 = vld [vmem:[%s6 + $0x288] sm:$0xff]
      %v5178 = vld [vmem:[%s6 + $0x290] sm:$0xf]
      %v5179 = vld [vmem:[%s6 + $0x294] sm:$0xff]
      %v5180 = vld [vmem:[%s6 + $0x29c] sm:$0xf]
      %v5181 = vld [vmem:[%s6 + $0x2a0] sm:$0xff]
      %v5182 = vld [vmem:[%s6 + $0x2a8] sm:$0xf]
      %v5183 = vld [vmem:[%s6 + $0x2ac] sm:$0xff]
      %v5184 = vld [vmem:[%s6 + $0x2b4] sm:$0xf]
      %v5185 = vld [vmem:[%s6 + $0x2b8] sm:$0xff]
      %v5186 = vld [vmem:[%s6 + $0x2c0] sm:$0xf]
      %v5187 = vld [vmem:[%s6 + $0x2c4] sm:$0xff]
      %v5188 = vld [vmem:[%s6 + $0x2cc] sm:$0xf]
      %v5189 = vld [vmem:[%s6 + $0x2d0] sm:$0xff]
      %v5190 = vld [vmem:[%s6 + $0x2d8] sm:$0xf]
      %v5191 = vld [vmem:[%s6 + $0x2dc] sm:$0xff]
      %v5192 = vld [vmem:[%s6 + $0x2e4] sm:$0xf]
      %v5193 = vld [vmem:[%s6 + $0x2e8] sm:$0xff]
      %v5194 = vld [vmem:[%s6 + $0x2f0] sm:$0xf]
      %v5195 = vld [vmem:[%s6 + $0x2f4] sm:$0xff]
      %v5196 = vld [vmem:[%s6 + $0x2fc] sm:$0xf]
      %v5197 = vld [vmem:[%s6 + $0x300] sm:$0xff]
      %v5198 = vld [vmem:[%s6 + $0x308] sm:$0xf]
      %v5199 = vld [vmem:[%s6 + $0x30c] sm:$0xff]
      %v5200 = vld [vmem:[%s6 + $0x314] sm:$0xf]
      %v5201 = vld [vmem:[%s6 + $0x318] sm:$0xff]
      %v5202 = vld [vmem:[%s6 + $0x320] sm:$0xf]
      %v5203 = vld [vmem:[%s6 + $0x324] sm:$0xff]
      %v5204 = vld [vmem:[%s6 + $0x32c] sm:$0xf]
      %v5205 = vld [vmem:[%s6 + $0x330] sm:$0xff]
      %v5206 = vld [vmem:[%s6 + $0x338] sm:$0xf]
      %v5207 = vld [vmem:[%s6 + $0x33c] sm:$0xff]
      %v5208 = vld [vmem:[%s6 + $0x344] sm:$0xf]
      %v5209 = vld [vmem:[%s6 + $0x348] sm:$0xff]
      %v5210 = vld [vmem:[%s6 + $0x350] sm:$0xf]
      %v5211 = vld [vmem:[%s6 + $0x354] sm:$0xff]
      %v5212 = vld [vmem:[%s6 + $0x35c] sm:$0xf]
      %v5213 = vld [vmem:[%s6 + $0x360] sm:$0xff]
      %v5214 = vld [vmem:[%s6 + $0x368] sm:$0xf]
      %v5215 = vld [vmem:[%s6 + $0x36c] sm:$0xff]
      %v5216 = vld [vmem:[%s6 + $0x374] sm:$0xf]
      %v5217 = vld [vmem:[%s6 + $0x378] sm:$0xff]
      %v5218 = vld [vmem:[%s6 + $0x380] sm:$0xf]
      %v5219 = vld [vmem:[%s6 + $0x384] sm:$0xff]
      %v5220 = vld [vmem:[%s6 + $0x38c] sm:$0xf]
      %v5221 = vld [vmem:[%s6 + $0x390] sm:$0xff]
      %v5222 = vld [vmem:[%s6 + $0x398] sm:$0xf]
      %v5223 = vld [vmem:[%s6 + $0x39c] sm:$0xff]
      %v5224 = vld [vmem:[%s6 + $0x3a4] sm:$0xf]
      %v5225 = vld [vmem:[%s6 + $0x3a8] sm:$0xff]
      %v5226 = vld [vmem:[%s6 + $0x3b0] sm:$0xf]
      %v5227 = vld [vmem:[%s6 + $0x3b4] sm:$0xff]
      %v5228 = vld [vmem:[%s6 + $0x3bc] sm:$0xf]
      %v5229 = vld [vmem:[%s6 + $0x3c0] sm:$0xff]
      %v5230 = vld [vmem:[%s6 + $0x3c8] sm:$0xf]
      %v5231 = vld [vmem:[%s6 + $0x3cc] sm:$0xff]
      %v5232 = vld [vmem:[%s6 + $0x3d4] sm:$0xf]
      %v5233 = vld [vmem:[%s6 + $0x3d8] sm:$0xff]
      %v5234 = vld [vmem:[%s6 + $0x3e0] sm:$0xf]
      %v5235 = vld [vmem:[%s6 + $0x3e4] sm:$0xff]
      %v5236 = vld [vmem:[%s6 + $0x3ec] sm:$0xf]
      %v5237 = vld [vmem:[%s6 + $0x3f0] sm:$0xff]
      %v5238 = vld [vmem:[%s6 + $0x3f8] sm:$0xf]
      %v5239 = vld [vmem:[%s6 + $0x3fc] sm:$0xff]
      %v5240 = vld [vmem:[%s6 + $0x404] sm:$0xf]
      %v5241 = vld [vmem:[%s6 + $0x408] sm:$0xff]
      %v5242 = vld [vmem:[%s6 + $0x410] sm:$0xf]
      %v5243 = vld [vmem:[%s6 + $0x414] sm:$0xff]
      %v5244 = vld [vmem:[%s6 + $0x41c] sm:$0xf]
      %v5245 = vld [vmem:[%s6 + $0x420] sm:$0xff]
      %v5246 = vld [vmem:[%s6 + $0x428] sm:$0xf]
      %v5247 = vld [vmem:[%s6 + $0x42c] sm:$0xff]
      %v5248 = vld [vmem:[%s6 + $0x434] sm:$0xf]
      %v5249 = vld [vmem:[%s6 + $0x438] sm:$0xff]
      %v5250 = vld [vmem:[%s6 + $0x440] sm:$0xf]
      %v5251 = vld [vmem:[%s6 + $0x444] sm:$0xff]
      %v5252 = vld [vmem:[%s6 + $0x44c] sm:$0xf]
      %v5437 = vunpack.c.l.b16 %v5069
      %v5438 = vunpack.c.h.b16 %v5069
      %v5439 = vunpack.c.l.b16 %v5070
      %v5440 = vunpack.c.l.b16 %v5071
      %v5441 = vunpack.c.h.b16 %v5071
      %v5442 = vunpack.c.l.b16 %v5072
      %v5443 = vunpack.c.l.b16 %v5073
      %v5444 = vunpack.c.h.b16 %v5073
      %v5445 = vunpack.c.l.b16 %v5074
      %v5446 = vunpack.c.l.b16 %v5075
      %v5447 = vunpack.c.h.b16 %v5075
      %v5448 = vunpack.c.l.b16 %v5076
      %v5449 = vunpack.c.l.b16 %v5077
      %v5450 = vunpack.c.h.b16 %v5077
      %v5451 = vunpack.c.l.b16 %v5078
      %v5452 = vunpack.c.l.b16 %v5079
      %v5453 = vunpack.c.h.b16 %v5079
      %v5454 = vunpack.c.l.b16 %v5080
      %v5455 = vunpack.c.l.b16 %v5081
      %v5456 = vunpack.c.h.b16 %v5081
      %v5457 = vunpack.c.l.b16 %v5082
      %v5458 = vunpack.c.l.b16 %v5083
      %v5459 = vunpack.c.h.b16 %v5083
      %v5460 = vunpack.c.l.b16 %v5084
      %v5461 = vunpack.c.l.b16 %v5085
      %v5462 = vunpack.c.h.b16 %v5085
      %v5463 = vunpack.c.l.b16 %v5086
      %v5464 = vunpack.c.l.b16 %v5087
      %v5465 = vunpack.c.h.b16 %v5087
      %v5466 = vunpack.c.l.b16 %v5088
      %v5467 = vunpack.c.l.b16 %v5089
      %v5468 = vunpack.c.h.b16 %v5089
      %v5469 = vunpack.c.l.b16 %v5090
      %v5470 = vunpack.c.l.b16 %v5091
      %v5471 = vunpack.c.h.b16 %v5091
      %v5472 = vunpack.c.l.b16 %v5092
      %v5473 = vunpack.c.l.b16 %v5093
      %v5474 = vunpack.c.h.b16 %v5093
      %v5475 = vunpack.c.l.b16 %v5094
      %v5476 = vunpack.c.l.b16 %v5095
      %v5477 = vunpack.c.h.b16 %v5095
      %v5478 = vunpack.c.l.b16 %v5096
      %v5479 = vunpack.c.l.b16 %v5097
      %v5480 = vunpack.c.h.b16 %v5097
      %v5481 = vunpack.c.l.b16 %v5098
      %v5482 = vunpack.c.l.b16 %v5099
      %v5483 = vunpack.c.h.b16 %v5099
      %v5484 = vunpack.c.l.b16 %v5100
      %v5485 = vunpack.c.l.b16 %v5101
      %v5486 = vunpack.c.h.b16 %v5101
      %v5487 = vunpack.c.l.b16 %v5102
      %v5488 = vunpack.c.l.b16 %v5103
      %v5489 = vunpack.c.h.b16 %v5103
      %v5490 = vunpack.c.l.b16 %v5104
      %v5491 = vunpack.c.l.b16 %v5105
      %v5492 = vunpack.c.h.b16 %v5105
      %v5493 = vunpack.c.l.b16 %v5106
      %v5494 = vunpack.c.l.b16 %v5107
      %v5495 = vunpack.c.h.b16 %v5107
      %v5496 = vunpack.c.l.b16 %v5108
      %v5497 = vunpack.c.l.b16 %v5109
      %v5498 = vunpack.c.h.b16 %v5109
      %v5499 = vunpack.c.l.b16 %v5110
      %v5500 = vunpack.c.l.b16 %v5111
      %v5501 = vunpack.c.h.b16 %v5111
      %v5502 = vunpack.c.l.b16 %v5112
      %v5503 = vunpack.c.l.b16 %v5113
      %v5504 = vunpack.c.h.b16 %v5113
      %v5505 = vunpack.c.l.b16 %v5114
      %v5506 = vunpack.c.l.b16 %v5115
      %v5507 = vunpack.c.h.b16 %v5115
      %v5508 = vunpack.c.l.b16 %v5116
      %v5509 = vunpack.c.l.b16 %v5117
      %v5510 = vunpack.c.h.b16 %v5117
      %v5511 = vunpack.c.l.b16 %v5118
      %v5512 = vunpack.c.l.b16 %v5119
      %v5513 = vunpack.c.h.b16 %v5119
      %v5514 = vunpack.c.l.b16 %v5120
      %v5515 = vunpack.c.l.b16 %v5121
      %v5516 = vunpack.c.h.b16 %v5121
      %v5517 = vunpack.c.l.b16 %v5122
      %v5518 = vunpack.c.l.b16 %v5123
      %v5519 = vunpack.c.h.b16 %v5123
      %v5520 = vunpack.c.l.b16 %v5124
      %v5521 = vunpack.c.l.b16 %v5125
      %v5522 = vunpack.c.h.b16 %v5125
      %v5523 = vunpack.c.l.b16 %v5126
      %v5524 = vunpack.c.l.b16 %v5127
      %v5525 = vunpack.c.h.b16 %v5127
      %v5526 = vunpack.c.l.b16 %v5128
      %v5527 = vunpack.c.l.b16 %v5129
      %v5528 = vunpack.c.h.b16 %v5129
      %v5529 = vunpack.c.l.b16 %v5130
      %v5530 = vunpack.c.l.b16 %v5131
      %v5531 = vunpack.c.h.b16 %v5131
      %v5532 = vunpack.c.l.b16 %v5132
      %v5533 = vunpack.c.l.b16 %v5133
      %v5534 = vunpack.c.h.b16 %v5133
      %v5535 = vunpack.c.l.b16 %v5134
      %v5536 = vunpack.c.l.b16 %v5135
      %v5537 = vunpack.c.h.b16 %v5135
      %v5538 = vunpack.c.l.b16 %v5136
      %v5539 = vunpack.c.l.b16 %v5137
      %v5540 = vunpack.c.h.b16 %v5137
      %v5541 = vunpack.c.l.b16 %v5138
      %v5542 = vunpack.c.l.b16 %v5139
      %v5543 = vunpack.c.h.b16 %v5139
      %v5544 = vunpack.c.l.b16 %v5140
      %v5545 = vunpack.c.l.b16 %v5141
      %v5546 = vunpack.c.h.b16 %v5141
      %v5547 = vunpack.c.l.b16 %v5142
      %v5548 = vunpack.c.l.b16 %v5143
      %v5549 = vunpack.c.h.b16 %v5143
      %v5550 = vunpack.c.l.b16 %v5144
      %v5551 = vunpack.c.l.b16 %v5145
      %v5552 = vunpack.c.h.b16 %v5145
      %v5553 = vunpack.c.l.b16 %v5146
      %v5554 = vunpack.c.l.b16 %v5147
      %v5555 = vunpack.c.h.b16 %v5147
      %v5556 = vunpack.c.l.b16 %v5148
      %v5557 = vunpack.c.l.b16 %v5149
      %v5558 = vunpack.c.h.b16 %v5149
      %v5559 = vunpack.c.l.b16 %v5150
      %v5560 = vunpack.c.l.b16 %v5151
      %v5561 = vunpack.c.h.b16 %v5151
      %v5562 = vunpack.c.l.b16 %v5152
      %v5563 = vunpack.c.l.b16 %v5153
      %v5564 = vunpack.c.h.b16 %v5153
      %v5565 = vunpack.c.l.b16 %v5154
      %v5566 = vunpack.c.l.b16 %v5155
      %v5567 = vunpack.c.h.b16 %v5155
      %v5568 = vunpack.c.l.b16 %v5156
      %v5569 = vunpack.c.l.b16 %v5157
      %v5570 = vunpack.c.h.b16 %v5157
      %v5571 = vunpack.c.l.b16 %v5158
      %v5572 = vunpack.c.l.b16 %v5159
      %v5573 = vunpack.c.h.b16 %v5159
      %v5574 = vunpack.c.l.b16 %v5160
      %v5575 = vunpack.c.l.b16 %v5161
      %v5576 = vunpack.c.h.b16 %v5161
      %v5577 = vunpack.c.l.b16 %v5162
      %v5578 = vunpack.c.l.b16 %v5163
      %v5579 = vunpack.c.h.b16 %v5163
      %v5580 = vunpack.c.l.b16 %v5164
      %v5581 = vunpack.c.l.b16 %v5165
      %v5582 = vunpack.c.h.b16 %v5165
      %v5583 = vunpack.c.l.b16 %v5166
      %v5584 = vunpack.c.l.b16 %v5167
      %v5585 = vunpack.c.h.b16 %v5167
      %v5586 = vunpack.c.l.b16 %v5168
      %v5587 = vunpack.c.l.b16 %v5169
      %v5588 = vunpack.c.h.b16 %v5169
      %v5589 = vunpack.c.l.b16 %v5170
      %v5590 = vunpack.c.l.b16 %v5171
      %v5591 = vunpack.c.h.b16 %v5171
      %v5592 = vunpack.c.l.b16 %v5172
      %v5593 = vunpack.c.l.b16 %v5173
      %v5594 = vunpack.c.h.b16 %v5173
      %v5595 = vunpack.c.l.b16 %v5174
      %v5596 = vunpack.c.l.b16 %v5175
      %v5597 = vunpack.c.h.b16 %v5175
      %v5598 = vunpack.c.l.b16 %v5176
      %v5599 = vunpack.c.l.b16 %v5177
      %v5600 = vunpack.c.h.b16 %v5177
      %v5601 = vunpack.c.l.b16 %v5178
      %v5602 = vunpack.c.l.b16 %v5179
      %v5603 = vunpack.c.h.b16 %v5179
      %v5604 = vunpack.c.l.b16 %v5180
      %v5605 = vunpack.c.l.b16 %v5181
      %v5606 = vunpack.c.h.b16 %v5181
      %v5607 = vunpack.c.l.b16 %v5182
      %v5608 = vunpack.c.l.b16 %v5183
      %v5609 = vunpack.c.h.b16 %v5183
      %v5610 = vunpack.c.l.b16 %v5184
      %v5611 = vunpack.c.l.b16 %v5185
      %v5612 = vunpack.c.h.b16 %v5185
      %v5613 = vunpack.c.l.b16 %v5186
      %v5614 = vunpack.c.l.b16 %v5187
      %v5615 = vunpack.c.h.b16 %v5187
      %v5616 = vunpack.c.l.b16 %v5188
      %v5617 = vunpack.c.l.b16 %v5189
      %v5618 = vunpack.c.h.b16 %v5189
      %v5619 = vunpack.c.l.b16 %v5190
      %v5620 = vunpack.c.l.b16 %v5191
      %v5621 = vunpack.c.h.b16 %v5191
      %v5622 = vunpack.c.l.b16 %v5192
      %v5623 = vunpack.c.l.b16 %v5193
      %v5624 = vunpack.c.h.b16 %v5193
      %v5625 = vunpack.c.l.b16 %v5194
      %v5626 = vunpack.c.l.b16 %v5195
      %v5627 = vunpack.c.h.b16 %v5195
      %v5628 = vunpack.c.l.b16 %v5196
      %v5629 = vunpack.c.l.b16 %v5197
      %v5630 = vunpack.c.h.b16 %v5197
      %v5631 = vunpack.c.l.b16 %v5198
      %v5632 = vunpack.c.l.b16 %v5199
      %v5633 = vunpack.c.h.b16 %v5199
      %v5634 = vunpack.c.l.b16 %v5200
      %v5635 = vunpack.c.l.b16 %v5201
      %v5636 = vunpack.c.h.b16 %v5201
      %v5637 = vunpack.c.l.b16 %v5202
      %v5638 = vunpack.c.l.b16 %v5203
      %v5639 = vunpack.c.h.b16 %v5203
      %v5640 = vunpack.c.l.b16 %v5204
      %v5641 = vunpack.c.l.b16 %v5205
      %v5642 = vunpack.c.h.b16 %v5205
      %v5643 = vunpack.c.l.b16 %v5206
      %v5644 = vunpack.c.l.b16 %v5207
      %v5645 = vunpack.c.h.b16 %v5207
      %v5646 = vunpack.c.l.b16 %v5208
      %v5647 = vunpack.c.l.b16 %v5209
      %v5648 = vunpack.c.h.b16 %v5209
      %v5649 = vunpack.c.l.b16 %v5210
      %v5650 = vunpack.c.l.b16 %v5211
      %v5651 = vunpack.c.h.b16 %v5211
      %v5652 = vunpack.c.l.b16 %v5212
      %v5653 = vunpack.c.l.b16 %v5213
      %v5654 = vunpack.c.h.b16 %v5213
      %v5655 = vunpack.c.l.b16 %v5214
      %v5656 = vunpack.c.l.b16 %v5215
      %v5657 = vunpack.c.h.b16 %v5215
      %v5658 = vunpack.c.l.b16 %v5216
      %v5659 = vunpack.c.l.b16 %v5217
      %v5660 = vunpack.c.h.b16 %v5217
      %v5661 = vunpack.c.l.b16 %v5218
      %v5662 = vunpack.c.l.b16 %v5219
      %v5663 = vunpack.c.h.b16 %v5219
      %v5664 = vunpack.c.l.b16 %v5220
      %v5665 = vunpack.c.l.b16 %v5221
      %v5666 = vunpack.c.h.b16 %v5221
      %v5667 = vunpack.c.l.b16 %v5222
      %v5668 = vunpack.c.l.b16 %v5223
      %v5669 = vunpack.c.h.b16 %v5223
      %v5670 = vunpack.c.l.b16 %v5224
      %v5671 = vunpack.c.l.b16 %v5225
      %v5672 = vunpack.c.h.b16 %v5225
      %v5673 = vunpack.c.l.b16 %v5226
      %v5674 = vunpack.c.l.b16 %v5227
      %v5675 = vunpack.c.h.b16 %v5227
      %v5676 = vunpack.c.l.b16 %v5228
      %v5677 = vunpack.c.l.b16 %v5229
      %v5678 = vunpack.c.h.b16 %v5229
      %v5679 = vunpack.c.l.b16 %v5230
      %v5680 = vunpack.c.l.b16 %v5231
      %v5681 = vunpack.c.h.b16 %v5231
      %v5682 = vunpack.c.l.b16 %v5232
      %v5683 = vunpack.c.l.b16 %v5233
      %v5684 = vunpack.c.h.b16 %v5233
      %v5685 = vunpack.c.l.b16 %v5234
      %v5686 = vunpack.c.l.b16 %v5235
      %v5687 = vunpack.c.h.b16 %v5235
      %v5688 = vunpack.c.l.b16 %v5236
      %v5689 = vunpack.c.l.b16 %v5237
      %v5690 = vunpack.c.h.b16 %v5237
      %v5691 = vunpack.c.l.b16 %v5238
      %v5692 = vunpack.c.l.b16 %v5239
      %v5693 = vunpack.c.h.b16 %v5239
      %v5694 = vunpack.c.l.b16 %v5240
      %v5695 = vunpack.c.l.b16 %v5241
      %v5696 = vunpack.c.h.b16 %v5241
      %v5697 = vunpack.c.l.b16 %v5242
      %v5698 = vunpack.c.l.b16 %v5243
      %v5699 = vunpack.c.h.b16 %v5243
      %v5700 = vunpack.c.l.b16 %v5244
      %v5701 = vunpack.c.l.b16 %v5245
      %v5702 = vunpack.c.h.b16 %v5245
      %v5703 = vunpack.c.l.b16 %v5246
      %v5704 = vunpack.c.l.b16 %v5247
      %v5705 = vunpack.c.h.b16 %v5247
      %v5706 = vunpack.c.l.b16 %v5248
      %v5707 = vunpack.c.l.b16 %v5249
      %v5708 = vunpack.c.h.b16 %v5249
      %v5709 = vunpack.c.l.b16 %v5250
      %v5710 = vunpack.c.l.b16 %v5251
      %v5711 = vunpack.c.h.b16 %v5251
      %v5712 = vunpack.c.l.b16 %v5252
      %v5713 = vpack.c.b16 %v5440, %v5437
      %v5714 = vpack.c.b16 %v5441, %v5438
      %v5715 = vpack.c.b16 %v5442, %v5439
      %v5716 = vpack.c.b16 %v5446, %v5443
      %v5717 = vpack.c.b16 %v5447, %v5444
      %v5718 = vpack.c.b16 %v5448, %v5445
      %v5719 = vpack.c.b16 %v5452, %v5449
      %v5720 = vpack.c.b16 %v5453, %v5450
      %v5721 = vpack.c.b16 %v5454, %v5451
      %v5722 = vpack.c.b16 %v5458, %v5455
      %v5723 = vpack.c.b16 %v5459, %v5456
      %v5724 = vpack.c.b16 %v5460, %v5457
      %v5725 = vpack.c.b16 %v5464, %v5461
      %v5726 = vpack.c.b16 %v5465, %v5462
      %v5727 = vpack.c.b16 %v5466, %v5463
      %v5728 = vpack.c.b16 %v5470, %v5467
      %v5729 = vpack.c.b16 %v5471, %v5468
      %v5730 = vpack.c.b16 %v5472, %v5469
      %v5731 = vpack.c.b16 %v5476, %v5473
      %v5732 = vpack.c.b16 %v5477, %v5474
      %v5733 = vpack.c.b16 %v5478, %v5475
      %v5734 = vpack.c.b16 %v5482, %v5479
      %v5735 = vpack.c.b16 %v5483, %v5480
      %v5736 = vpack.c.b16 %v5484, %v5481
      %v5737 = vpack.c.b16 %v5488, %v5485
      %v5738 = vpack.c.b16 %v5489, %v5486
      %v5739 = vpack.c.b16 %v5490, %v5487
      %v5740 = vpack.c.b16 %v5494, %v5491
      %v5741 = vpack.c.b16 %v5495, %v5492
      %v5742 = vpack.c.b16 %v5496, %v5493
      %v5743 = vpack.c.b16 %v5500, %v5497
      %v5744 = vpack.c.b16 %v5501, %v5498
      %v5745 = vpack.c.b16 %v5502, %v5499
      %v5746 = vpack.c.b16 %v5506, %v5503
      %v5747 = vpack.c.b16 %v5507, %v5504
      %v5748 = vpack.c.b16 %v5508, %v5505
      %v5749 = vpack.c.b16 %v5512, %v5509
      %v5750 = vpack.c.b16 %v5513, %v5510
      %v5751 = vpack.c.b16 %v5514, %v5511
      %v5752 = vpack.c.b16 %v5518, %v5515
      %v5753 = vpack.c.b16 %v5519, %v5516
      %v5754 = vpack.c.b16 %v5520, %v5517
      %v5755 = vpack.c.b16 %v5524, %v5521
      %v5756 = vpack.c.b16 %v5525, %v5522
      %v5757 = vpack.c.b16 %v5526, %v5523
      %v5758 = vpack.c.b16 %v5530, %v5527
      %v5759 = vpack.c.b16 %v5531, %v5528
      %v5760 = vpack.c.b16 %v5532, %v5529
      %v5761 = vpack.c.b16 %v5536, %v5533
      %v5762 = vpack.c.b16 %v5537, %v5534
      %v5763 = vpack.c.b16 %v5538, %v5535
      %v5764 = vpack.c.b16 %v5542, %v5539
      %v5765 = vpack.c.b16 %v5543, %v5540
      %v5766 = vpack.c.b16 %v5544, %v5541
      %v5767 = vpack.c.b16 %v5548, %v5545
      %v5768 = vpack.c.b16 %v5549, %v5546
      %v5769 = vpack.c.b16 %v5550, %v5547
      %v5770 = vpack.c.b16 %v5554, %v5551
      %v5771 = vpack.c.b16 %v5555, %v5552
      %v5772 = vpack.c.b16 %v5556, %v5553
      %v5773 = vpack.c.b16 %v5560, %v5557
      %v5774 = vpack.c.b16 %v5561, %v5558
      %v5775 = vpack.c.b16 %v5562, %v5559
      %v5776 = vpack.c.b16 %v5566, %v5563
      %v5777 = vpack.c.b16 %v5567, %v5564
      %v5778 = vpack.c.b16 %v5568, %v5565
      %v5779 = vpack.c.b16 %v5572, %v5569
      %v5780 = vpack.c.b16 %v5573, %v5570
      %v5781 = vpack.c.b16 %v5574, %v5571
      %v5782 = vpack.c.b16 %v5578, %v5575
      %v5783 = vpack.c.b16 %v5579, %v5576
      %v5784 = vpack.c.b16 %v5580, %v5577
      %v5785 = vpack.c.b16 %v5584, %v5581
      %v5786 = vpack.c.b16 %v5585, %v5582
      %v5787 = vpack.c.b16 %v5586, %v5583
      %v5788 = vpack.c.b16 %v5590, %v5587
      %v5789 = vpack.c.b16 %v5591, %v5588
      %v5790 = vpack.c.b16 %v5592, %v5589
      %v5791 = vpack.c.b16 %v5596, %v5593
      %v5792 = vpack.c.b16 %v5597, %v5594
      %v5793 = vpack.c.b16 %v5598, %v5595
      %v5794 = vpack.c.b16 %v5602, %v5599
      %v5795 = vpack.c.b16 %v5603, %v5600
      %v5796 = vpack.c.b16 %v5604, %v5601
      %v5797 = vpack.c.b16 %v5608, %v5605
      %v5798 = vpack.c.b16 %v5609, %v5606
      %v5799 = vpack.c.b16 %v5610, %v5607
      %v5800 = vpack.c.b16 %v5614, %v5611
      %v5801 = vpack.c.b16 %v5615, %v5612
      %v5802 = vpack.c.b16 %v5616, %v5613
      %v5803 = vpack.c.b16 %v5620, %v5617
      %v5804 = vpack.c.b16 %v5621, %v5618
      %v5805 = vpack.c.b16 %v5622, %v5619
      %v5806 = vpack.c.b16 %v5626, %v5623
      %v5807 = vpack.c.b16 %v5627, %v5624
      %v5808 = vpack.c.b16 %v5628, %v5625
      %v5809 = vpack.c.b16 %v5632, %v5629
      %v5810 = vpack.c.b16 %v5633, %v5630
      %v5811 = vpack.c.b16 %v5634, %v5631
      %v5812 = vpack.c.b16 %v5638, %v5635
      %v5813 = vpack.c.b16 %v5639, %v5636
      %v5814 = vpack.c.b16 %v5640, %v5637
      %v5815 = vpack.c.b16 %v5644, %v5641
      %v5816 = vpack.c.b16 %v5645, %v5642
      %v5817 = vpack.c.b16 %v5646, %v5643
      %v5818 = vpack.c.b16 %v5650, %v5647
      %v5819 = vpack.c.b16 %v5651, %v5648
      %v5820 = vpack.c.b16 %v5652, %v5649
      %v5821 = vpack.c.b16 %v5656, %v5653
      %v5822 = vpack.c.b16 %v5657, %v5654
      %v5823 = vpack.c.b16 %v5658, %v5655
      %v5824 = vpack.c.b16 %v5662, %v5659
      %v5825 = vpack.c.b16 %v5663, %v5660
      %v5826 = vpack.c.b16 %v5664, %v5661
      %v5827 = vpack.c.b16 %v5668, %v5665
      %v5828 = vpack.c.b16 %v5669, %v5666
      %v5829 = vpack.c.b16 %v5670, %v5667
      %v5830 = vpack.c.b16 %v5674, %v5671
      %v5831 = vpack.c.b16 %v5675, %v5672
      %v5832 = vpack.c.b16 %v5676, %v5673
      %v5833 = vpack.c.b16 %v5680, %v5677
      %v5834 = vpack.c.b16 %v5681, %v5678
      %v5835 = vpack.c.b16 %v5682, %v5679
      %v5836 = vpack.c.b16 %v5686, %v5683
      %v5837 = vpack.c.b16 %v5687, %v5684
      %v5838 = vpack.c.b16 %v5688, %v5685
      %v5839 = vpack.c.b16 %v5692, %v5689
      %v5840 = vpack.c.b16 %v5693, %v5690
      %v5841 = vpack.c.b16 %v5694, %v5691
      %v5842 = vpack.c.b16 %v5698, %v5695
      %v5843 = vpack.c.b16 %v5699, %v5696
      %v5844 = vpack.c.b16 %v5700, %v5697
      %v5845 = vpack.c.b16 %v5704, %v5701
      %v5846 = vpack.c.b16 %v5705, %v5702
      %v5847 = vpack.c.b16 %v5706, %v5703
      %v5848 = vpack.c.b16 %v5710, %v5707
      %v5849 = vpack.c.b16 %v5711, %v5708
      %v5850 = vpack.c.b16 %v5712, %v5709
      %5989 = vmatprep.subr.bf16.mxu0 %v5714
      %5990 = vmatpush1.bf16.msra.mxu0 %v5713
      %5991 = vmatprep.subr.bf16.mxu0 %v5717
      %5992 = vmatpush1.bf16.msra.mxu0 %v5716
      %5993 = vmatprep.subr.bf16.mxu0 %v5720
      %5994 = vmatpush1.bf16.msra.mxu0 %v5719
      %5995 = vmatprep.subr.bf16.mxu0 %v5723
      %5996 = vmatpush1.bf16.msra.mxu0 %v5722
      %5997 = vmatprep.subr.bf16.mxu0 %v5726
      %5998 = vmatpush1.bf16.msra.mxu0 %v5725
      %5999 = vmatprep.subr.bf16.mxu0 %v5729
      %6000 = vmatpush1.bf16.msra.mxu0 %v5728
      %6001 = vmatprep.subr.bf16.mxu0 %v5732
      %6002 = vmatpush1.bf16.msra.mxu0 %v5731
      %6003 = vmatprep.subr.bf16.mxu0 %v5735
      %6004 = vmatpush1.bf16.msra.mxu0 %v5734
      %6005 = vmatprep.subr.bf16.mxu0 %v5738
      %6006 = vmatpush1.bf16.msra.mxu0 %v5737
      %6007 = vmatprep.subr.bf16.mxu0 %v5741
      %6008 = vmatpush1.bf16.msra.mxu0 %v5740
      %6009 = vmatprep.subr.bf16.mxu0 %v5744
      %6010 = vmatpush1.bf16.msra.mxu0 %v5743
      %6011 = vmatprep.subr.bf16.mxu0 %v5747
      %6012 = vmatpush1.bf16.msra.mxu0 %v5746
      %6013 = vmatprep.subr.bf16.mxu0 %v5750
      %6014 = vmatpush1.bf16.msra.mxu0 %v5749
      %6015 = vmatprep.subr.bf16.mxu0 %v5753
      %6016 = vmatpush1.bf16.msra.mxu0 %v5752
      %6017 = vmatprep.subr.bf16.mxu0 %v5756
      %6018 = vmatpush1.bf16.msra.mxu0 %v5755
      %6019 = vmatprep.subr.bf16.mxu0 %v5759
      %6020 = vmatpush1.bf16.msra.mxu0 %v5758
      %6021 = vmatprep.mubr.bf16.mxu0 %v3762
      %6022 = vmatmul.mubr.bf16.gmra.mrb[0].mxu0 %v3761
      %v6023 = vpop.f32.mrb[0].mxu0
      %v6024 = vadd.f32 0.0, %v6023
      %v6025 = vpop.f32.mrb[0].mxu0
      %v6026 = vadd.f32 0.0, %v6025
      %v6027 = vpop.f32.mrb[0].mxu0
      %v6028 = vadd.f32 0.0, %v6027
      %v6029 = vpop.f32.mrb[0].mxu0
      %v6030 = vadd.f32 0.0, %v6029
      %6031 = vmatprep.mubr.bf16.mxu0 %v3768
      %6032 = vmatmul.mubr.bf16.gmra.mrb[0].mxu0 %v3767
      %v6033 = vpop.f32.mrb[0].mxu0
      %v6034 = vadd.f32 0.0, %v6033
      %v6035 = vpop.f32.mrb[0].mxu0
      %v6036 = vadd.f32 0.0, %v6035
      %v6037 = vpop.f32.mrb[0].mxu0
      %v6038 = vadd.f32 0.0, %v6037
      %v6039 = vpop.f32.mrb[0].mxu0
      %v6040 = vadd.f32 0.0, %v6039
      %6041 = vmatprep.mubr.bf16.mxu0 %v3774
      %6042 = vmatmul.mubr.bf16.gmra.mrb[0].mxu0 %v3773
      %v6043 = vpop.f32.mrb[0].mxu0
      %v6044 = vadd.f32 0.0, %v6043
      %v6045 = vpop.f32.mrb[0].mxu0
      %v6046 = vadd.f32 0.0, %v6045
      %v6047 = vpop.f32.mrb[0].mxu0
      %v6048 = vadd.f32 0.0, %v6047
      %v6049 = vpop.f32.mrb[0].mxu0
      %v6050 = vadd.f32 0.0, %v6049
      %6051 = vdwg.mxu0
      %6052 = vmatprep.subr.bf16.mxu0 %v5762
      %6053 = vmatpush1.bf16.msra.mxu0 %v5761
      %6054 = vmatprep.subr.bf16.mxu0 %v5765
      %6055 = vmatpush1.bf16.msra.mxu0 %v5764
      %6056 = vmatprep.subr.bf16.mxu0 %v5768
      %6057 = vmatpush1.bf16.msra.mxu0 %v5767
      %6058 = vmatprep.subr.bf16.mxu0 %v5771
      %6059 = vmatpush1.bf16.msra.mxu0 %v5770
      %6060 = vmatprep.subr.bf16.mxu0 %v5774
      %6061 = vmatpush1.bf16.msra.mxu0 %v5773
      %6062 = vmatprep.subr.bf16.mxu0 %v5777
      %6063 = vmatpush1.bf16.msra.mxu0 %v5776
      %6064 = vmatprep.subr.bf16.mxu0 %v5780
      %6065 = vmatpush1.bf16.msra.mxu0 %v5779
      %6066 = vmatprep.subr.bf16.mxu0 %v5783
      %6067 = vmatpush1.bf16.msra.mxu0 %v5782
      %6068 = vmatprep.subr.bf16.mxu0 %v5786
      %6069 = vmatpush1.bf16.msra.mxu0 %v5785
      %6070 = vmatprep.subr.bf16.mxu0 %v5789
      %6071 = vmatpush1.bf16.msra.mxu0 %v5788
      %6072 = vmatprep.subr.bf16.mxu0 %v5792
      %6073 = vmatpush1.bf16.msra.mxu0 %v5791
      %6074 = vmatprep.subr.bf16.mxu0 %v5795
      %6075 = vmatpush1.bf16.msra.mxu0 %v5794
      %6076 = vmatprep.subr.bf16.mxu0 %v5798
      %6077 = vmatpush1.bf16.msra.mxu0 %v5797
      %6078 = vmatprep.subr.bf16.mxu0 %v5801
      %6079 = vmatpush1.bf16.msra.mxu0 %v5800
      %6080 = vmatprep.subr.bf16.mxu0 %v5804
      %6081 = vmatpush1.bf16.msra.mxu0 %v5803
      %6082 = vmatprep.subr.bf16.mxu0 %v5807
      %6083 = vmatpush1.bf16.msra.mxu0 %v5806
      %6084 = vmatprep.mubr.bf16.mxu0 %v3764
      %6085 = vmatmul.mubr.bf16.gmra.mrb[0].mxu0 %v3763
      %v6086 = vpop.f32.mrb[0].mxu0
      %v6087 = vadd.f32 %v6024, %v6086
      %v6088 = vpop.f32.mrb[0].mxu0
      %v6089 = vadd.f32 %v6026, %v6088
      %v6090 = vpop.f32.mrb[0].mxu0
      %v6091 = vadd.f32 %v6028, %v6090
      %v6092 = vpop.f32.mrb[0].mxu0
      %v6093 = vadd.f32 %v6030, %v6092
      %6094 = vmatprep.mubr.bf16.mxu0 %v3770
      %6095 = vmatmul.mubr.bf16.gmra.mrb[0].mxu0 %v3769
      %v6096 = vpop.f32.mrb[0].mxu0
      %v6097 = vadd.f32 %v6034, %v6096
      %v6098 = vpop.f32.mrb[0].mxu0
      %v6099 = vadd.f32 %v6036, %v6098
      %v6100 = vpop.f32.mrb[0].mxu0
      %v6101 = vadd.f32 %v6038, %v6100
      %v6102 = vpop.f32.mrb[0].mxu0
      %v6103 = vadd.f32 %v6040, %v6102
      %6104 = vmatprep.mubr.bf16.mxu0 %v3776
      %6105 = vmatmul.mubr.bf16.gmra.mrb[0].mxu0 %v3775
      %v6106 = vpop.f32.mrb[0].mxu0
      %v6107 = vadd.f32 %v6044, %v6106
      %v6108 = vpop.f32.mrb[0].mxu0
      %v6109 = vadd.f32 %v6046, %v6108
      %v6110 = vpop.f32.mrb[0].mxu0
      %v6111 = vadd.f32 %v6048, %v6110
      %v6112 = vpop.f32.mrb[0].mxu0
      %v6113 = vadd.f32 %v6050, %v6112
      %6114 = vdwg.mxu0
      %6115 = vmatprep.subr.bf16.mxu0 %v5810
      %6116 = vmatpush1.bf16.msra.mxu0 %v5809
      %6117 = vmatprep.subr.bf16.mxu0 %v5813
      %6118 = vmatpush1.bf16.msra.mxu0 %v5812
      %6119 = vmatprep.subr.bf16.mxu0 %v5816
      %6120 = vmatpush1.bf16.msra.mxu0 %v5815
      %6121 = vmatprep.subr.bf16.mxu0 %v5819
      %6122 = vmatpush1.bf16.msra.mxu0 %v5818
      %6123 = vmatprep.subr.bf16.mxu0 %v5822
      %6124 = vmatpush1.bf16.msra.mxu0 %v5821
      %6125 = vmatprep.subr.bf16.mxu0 %v5825
      %6126 = vmatpush1.bf16.msra.mxu0 %v5824
      %6127 = vmatprep.subr.bf16.mxu0 %v5828
      %6128 = vmatpush1.bf16.msra.mxu0 %v5827
      %6129 = vmatprep.subr.bf16.mxu0 %v5831
      %6130 = vmatpush1.bf16.msra.mxu0 %v5830
      %6131 = vmatprep.subr.bf16.mxu0 %v5834
      %6132 = vmatpush1.bf16.msra.mxu0 %v5833
      %6133 = vmatprep.subr.bf16.mxu0 %v5837
      %6134 = vmatpush1.bf16.msra.mxu0 %v5836
      %6135 = vmatprep.subr.bf16.mxu0 %v5840
      %6136 = vmatpush1.bf16.msra.mxu0 %v5839
      %6137 = vmatprep.subr.bf16.mxu0 %v5843
      %6138 = vmatpush1.bf16.msra.mxu0 %v5842
      %6139 = vmatprep.subr.bf16.mxu0 %v5846
      %6140 = vmatpush1.bf16.msra.mxu0 %v5845
      %6141 = vmatprep.subr.bf16.mxu0 %v5849
      %6142 = vmatpush1.bf16.msra.mxu0 %v5848
      %6143 = vmatprep.subr.bf16.mxu0 0
      %6144 = vmatpush1.bf16.msra.mxu0 0
      %6145 = vmatprep.subr.bf16.mxu0 0
      %6146 = vmatpush1.bf16.msra.mxu0 0
      %6147 = vmatprep.mubr.bf16.mxu0 %v4701
      %6148 = vmatmul.mubr.bf16.gmra.mrb[0].mxu0 %v3765
      %v6149 = vpop.f32.mrb[0].mxu0
      %v6150 = vadd.f32 %v6087, %v6149
      %v6151 = vpop.f32.mrb[0].mxu0
      %v6152 = vadd.f32 %v6089, %v6151
      %v6153 = vpop.f32.mrb[0].mxu0
      %v6154 = vadd.f32 %v6091, %v6153
      %v6155 = vpop.f32.mrb[0].mxu0
      %v6156 = vadd.f32 %v6093, %v6155
      %6157 = vmatprep.mubr.bf16.mxu0 %v4704
      %6158 = vmatmul.mubr.bf16.gmra.mrb[0].mxu0 %v3771
      %v6159 = vpop.f32.mrb[0].mxu0
      %v6160 = vadd.f32 %v6097, %v6159
      %v6161 = vpop.f32.mrb[0].mxu0
      %v6162 = vadd.f32 %v6099, %v6161
      %v6163 = vpop.f32.mrb[0].mxu0
      %v6164 = vadd.f32 %v6101, %v6163
      %v6165 = vpop.f32.mrb[0].mxu0
      %v6166 = vadd.f32 %v6103, %v6165
      %6167 = vmatprep.mubr.bf16.mxu0 %v4707
      %6168 = vmatmul.mubr.bf16.gmra.mrb[0].mxu0 %v3777
      %v6169 = vpop.f32.mrb[0].mxu0
      %v6170 = vadd.f32 %v6107, %v6169
      %v6171 = vpop.f32.mrb[0].mxu0
      %v6172 = vadd.f32 %v6109, %v6171
      %v6173 = vpop.f32.mrb[0].mxu0
      %v6174 = vadd.f32 %v6111, %v6173
      %v6175 = vpop.f32.mrb[0].mxu0
      %v6176 = vadd.f32 %v6113, %v6175
      %6177 = vdwg.mxu0
      %6178 = vmatprep.subr.bf16.mxu0 0
      %6179 = vmatpush1.bf16.msra.mxu0 %v5715
      %6180 = vmatprep.subr.bf16.mxu0 0
      %6181 = vmatpush1.bf16.msra.mxu0 %v5718
      %6182 = vmatprep.subr.bf16.mxu0 0
      %6183 = vmatpush1.bf16.msra.mxu0 %v5721
      %6184 = vmatprep.subr.bf16.mxu0 0
      %6185 = vmatpush1.bf16.msra.mxu0 %v5724
      %6186 = vmatprep.subr.bf16.mxu0 0
      %6187 = vmatpush1.bf16.msra.mxu0 %v5727
      %6188 = vmatprep.subr.bf16.mxu0 0
      %6189 = vmatpush1.bf16.msra.mxu0 %v5730
      %6190 = vmatprep.subr.bf16.mxu0 0
      %6191 = vmatpush1.bf16.msra.mxu0 %v5733
      %6192 = vmatprep.subr.bf16.mxu0 0
      %6193 = vmatpush1.bf16.msra.mxu0 %v5736
      %6194 = vmatprep.subr.bf16.mxu0 0
      %6195 = vmatpush1.bf16.msra.mxu0 %v5739
      %6196 = vmatprep.subr.bf16.mxu0 0
      %6197 = vmatpush1.bf16.msra.mxu0 %v5742
      %6198 = vmatprep.subr.bf16.mxu0 0
      %6199 = vmatpush1.bf16.msra.mxu0 %v5745
      %6200 = vmatprep.subr.bf16.mxu0 0
      %6201 = vmatpush1.bf16.msra.mxu0 %v5748
      %6202 = vmatprep.subr.bf16.mxu0 0
      %6203 = vmatpush1.bf16.msra.mxu0 %v5751
      %6204 = vmatprep.subr.bf16.mxu0 0
      %6205 = vmatpush1.bf16.msra.mxu0 %v5754
      %6206 = vmatprep.subr.bf16.mxu0 0
      %6207 = vmatpush1.bf16.msra.mxu0 %v5757
      %6208 = vmatprep.subr.bf16.mxu0 0
      %6209 = vmatpush1.bf16.msra.mxu0 %v5760
      %6210 = vmatprep.mubr.bf16.mxu0 %v3762
      %6211 = vmatmul.mubr.bf16.gmra.mrb[0].mxu0 %v3761
      %v6212 = vpop.f32.mrb[0].mxu0
      %v6213 = vadd.f32 0.0, %v6212
      %v6214 = vpop.f32.mrb[0].mxu0
      %v6215 = vpop.f32.mrb[0].mxu0
      %v6216 = vadd.f32 0.0, %v6215
      %v6217 = vpop.f32.mrb[0].mxu0
      %6218 = vmatprep.mubr.bf16.mxu0 %v3768
      %6219 = vmatmul.mubr.bf16.gmra.mrb[0].mxu0 %v3767
      %v6220 = vpop.f32.mrb[0].mxu0
      %v6221 = vadd.f32 0.0, %v6220
      %v6222 = vpop.f32.mrb[0].mxu0
      %v6223 = vpop.f32.mrb[0].mxu0
      %v6224 = vadd.f32 0.0, %v6223
      %v6225 = vpop.f32.mrb[0].mxu0
      %6226 = vmatprep.mubr.bf16.mxu0 %v3774
      %6227 = vmatmul.mubr.bf16.gmra.mrb[0].mxu0 %v3773
      %v6228 = vpop.f32.mrb[0].mxu0
      %v6229 = vadd.f32 0.0, %v6228
      %v6230 = vpop.f32.mrb[0].mxu0
      %v6231 = vpop.f32.mrb[0].mxu0
      %v6232 = vadd.f32 0.0, %v6231
      %v6233 = vpop.f32.mrb[0].mxu0
      %6234 = vdwg.mxu0
      %6235 = vmatprep.subr.bf16.mxu0 0
      %6236 = vmatpush1.bf16.msra.mxu0 %v5763
      %6237 = vmatprep.subr.bf16.mxu0 0
      %6238 = vmatpush1.bf16.msra.mxu0 %v5766
      %6239 = vmatprep.subr.bf16.mxu0 0
      %6240 = vmatpush1.bf16.msra.mxu0 %v5769
      %6241 = vmatprep.subr.bf16.mxu0 0
      %6242 = vmatpush1.bf16.msra.mxu0 %v5772
      %6243 = vmatprep.subr.bf16.mxu0 0
      %6244 = vmatpush1.bf16.msra.mxu0 %v5775
      %6245 = vmatprep.subr.bf16.mxu0 0
      %6246 = vmatpush1.bf16.msra.mxu0 %v5778
      %6247 = vmatprep.subr.bf16.mxu0 0
      %6248 = vmatpush1.bf16.msra.mxu0 %v5781
      %6249 = vmatprep.subr.bf16.mxu0 0
      %6250 = vmatpush1.bf16.msra.mxu0 %v5784
      %6251 = vmatprep.subr.bf16.mxu0 0
      %6252 = vmatpush1.bf16.msra.mxu0 %v5787
      %6253 = vmatprep.subr.bf16.mxu0 0
      %6254 = vmatpush1.bf16.msra.mxu0 %v5790
      %6255 = vmatprep.subr.bf16.mxu0 0
      %6256 = vmatpush1.bf16.msra.mxu0 %v5793
      %6257 = vmatprep.subr.bf16.mxu0 0
      %6258 = vmatpush1.bf16.msra.mxu0 %v5796
      %6259 = vmatprep.subr.bf16.mxu0 0
      %6260 = vmatpush1.bf16.msra.mxu0 %v5799
      %6261 = vmatprep.subr.bf16.mxu0 0
      %6262 = vmatpush1.bf16.msra.mxu0 %v5802
      %6263 = vmatprep.subr.bf16.mxu0 0
      %6264 = vmatpush1.bf16.msra.mxu0 %v5805
      %6265 = vmatprep.subr.bf16.mxu0 0
      %6266 = vmatpush1.bf16.msra.mxu0 %v5808
      %6267 = vmatprep.mubr.bf16.mxu0 %v3764
      %6268 = vmatmul.mubr.bf16.gmra.mrb[0].mxu0 %v3763
      %v6269 = vpop.f32.mrb[0].mxu0
      %v6270 = vadd.f32 %v6213, %v6269
      %v6271 = vpop.f32.mrb[0].mxu0
      %v6272 = vpop.f32.mrb[0].mxu0
      %v6273 = vadd.f32 %v6216, %v6272
      %v6274 = vpop.f32.mrb[0].mxu0
      %6275 = vmatprep.mubr.bf16.mxu0 %v3770
      %6276 = vmatmul.mubr.bf16.gmra.mrb[0].mxu0 %v3769
      %v6277 = vpop.f32.mrb[0].mxu0
      %v6278 = vadd.f32 %v6221, %v6277
      %v6279 = vpop.f32.mrb[0].mxu0
      %v6280 = vpop.f32.mrb[0].mxu0
      %v6281 = vadd.f32 %v6224, %v6280
      %v6282 = vpop.f32.mrb[0].mxu0
      %6283 = vmatprep.mubr.bf16.mxu0 %v3776
      %6284 = vmatmul.mubr.bf16.gmra.mrb[0].mxu0 %v3775
      %v6285 = vpop.f32.mrb[0].mxu0
      %v6286 = vadd.f32 %v6229, %v6285
      %v6287 = vpop.f32.mrb[0].mxu0
      %v6288 = vpop.f32.mrb[0].mxu0
      %v6289 = vadd.f32 %v6232, %v6288
      %v6290 = vpop.f32.mrb[0].mxu0
      %6291 = vdwg.mxu0
      %6292 = vmatprep.subr.bf16.mxu0 0
      %6293 = vmatpush1.bf16.msra.mxu0 %v5811
      %6294 = vmatprep.subr.bf16.mxu0 0
      %6295 = vmatpush1.bf16.msra.mxu0 %v5814
      %6296 = vmatprep.subr.bf16.mxu0 0
      %6297 = vmatpush1.bf16.msra.mxu0 %v5817
      %6298 = vmatprep.subr.bf16.mxu0 0
      %6299 = vmatpush1.bf16.msra.mxu0 %v5820
      %6300 = vmatprep.subr.bf16.mxu0 0
      %6301 = vmatpush1.bf16.msra.mxu0 %v5823
      %6302 = vmatprep.subr.bf16.mxu0 0
      %6303 = vmatpush1.bf16.msra.mxu0 %v5826
      %6304 = vmatprep.subr.bf16.mxu0 0
      %6305 = vmatpush1.bf16.msra.mxu0 %v5829
      %6306 = vmatprep.subr.bf16.mxu0 0
      %6307 = vmatpush1.bf16.msra.mxu0 %v5832
      %6308 = vmatprep.subr.bf16.mxu0 0
      %6309 = vmatpush1.bf16.msra.mxu0 %v5835
      %6310 = vmatprep.subr.bf16.mxu0 0
      %6311 = vmatpush1.bf16.msra.mxu0 %v5838
      %6312 = vmatprep.subr.bf16.mxu0 0
      %6313 = vmatpush1.bf16.msra.mxu0 %v5841
      %6314 = vmatprep.subr.bf16.mxu0 0
      %6315 = vmatpush1.bf16.msra.mxu0 %v5844
      %6316 = vmatprep.subr.bf16.mxu0 0
      %6317 = vmatpush1.bf16.msra.mxu0 %v5847
      %6318 = vmatprep.subr.bf16.mxu0 0
      %6319 = vmatpush1.bf16.msra.mxu0 %v5850
      %6320 = vmatprep.subr.bf16.mxu0 0
      %6321 = vmatpush1.bf16.msra.mxu0 0
      %6322 = vmatprep.subr.bf16.mxu0 0
      %6323 = vmatpush1.bf16.msra.mxu0 0
      %6324 = vmatprep.mubr.bf16.mxu0 %v4701
      %6325 = vmatmul.mubr.bf16.gmra.mrb[0].mxu0 %v3765
      %v6326 = vpop.f32.mrb[0].mxu0
      %v6327 = vadd.f32 %v6270, %v6326
      %v6328 = vpop.f32.mrb[0].mxu0
      %v6329 = vpop.f32.mrb[0].mxu0
      %v6330 = vadd.f32 %v6273, %v6329
      %v6331 = vpop.f32.mrb[0].mxu0
      %6332 = vmatprep.mubr.bf16.mxu0 %v4704
      %6333 = vmatmul.mubr.bf16.gmra.mrb[0].mxu0 %v3771
      %v6334 = vpop.f32.mrb[0].mxu0
      %v6335 = vadd.f32 %v6278, %v6334
      %v6336 = vpop.f32.mrb[0].mxu0
      %v6337 = vpop.f32.mrb[0].mxu0
      %v6338 = vadd.f32 %v6281, %v6337
      %v6339 = vpop.f32.mrb[0].mxu0
      %6340 = vmatprep.mubr.bf16.mxu0 %v4707
      %6341 = vmatmul.mubr.bf16.gmra.mrb[0].mxu0 %v3777
      %v6342 = vpop.f32.mrb[0].mxu0
      %v6343 = vadd.f32 %v6286, %v6342
      %v6344 = vpop.f32.mrb[0].mxu0
      %v6345 = vpop.f32.mrb[0].mxu0
      %v6346 = vadd.f32 %v6289, %v6345
      %v6347 = vpop.f32.mrb[0].mxu0
      %6348 = vdwg.mxu0
      %v6349 = vmax.f32 %v4870, %v6150
      %v6350 = vmax.f32 %v4872, %v6152
      %v6351 = vmax.f32 %v5047, %v6327
      %v6352 = vmax.f32 %v4874, %v6154
      %v6353 = vmax.f32 %v4876, %v6156
      %v6354 = vmax.f32 %v5050, %v6330
      %v6355 = vmax.f32 %v4880, %v6160
      %v6356 = vmax.f32 %v4882, %v6162
      %v6357 = vmax.f32 %v5055, %v6335
      %v6358 = vmax.f32 %v4884, %v6164
      %v6359 = vmax.f32 %v4886, %v6166
      %v6360 = vmax.f32 %v5058, %v6338
      %v6361 = vmax.f32 %v4890, %v6170
      %v6362 = vmax.f32 %v4892, %v6172
      %v6363 = vmax.f32 %v5063, %v6343
      %v6364 = vmax.f32 %v4894, %v6174
      %v6365 = vmax.f32 %v4896, %v6176
      %v6366 = vmax.f32 %v5066, %v6346
      %v6367 = vmax.f32 %v6349, 0.0
      %v6368 = vmax.f32 %v6350, 0.0
      %v6369 = vmax.f32 %v6351, 0.0
      %v6370 = vmax.f32 %v6352, 0.0
      %v6371 = vmax.f32 %v6353, 0.0
      %v6372 = vmax.f32 %v6354, 0.0
      %v6373 = vmax.f32 %v6355, 0.0
      %v6374 = vmax.f32 %v6356, 0.0
      %v6375 = vmax.f32 %v6357, 0.0
      %v6376 = vmax.f32 %v6358, 0.0
      %v6377 = vmax.f32 %v6359, 0.0
      %v6378 = vmax.f32 %v6360, 0.0
      %v6379 = vmax.f32 %v6361, 0.0
      %v6380 = vmax.f32 %v6362, 0.0
      %v6381 = vmax.f32 %v6363, 0.0
      %v6382 = vmax.f32 %v6364, 0.0
      %v6383 = vmax.f32 %v6365, 0.0
      %v6384 = vmax.f32 %v6366, 0.0
      %v6385 = vpack.c.bf16 %v6370, %v6367
      %v6386 = vpack.c.bf16 %v6371, %v6368
      %v6387 = vpack.c.bf16 %v6372, %v6369
      %v6388 = vpack.c.bf16 %v6376, %v6373
      %v6389 = vpack.c.bf16 %v6377, %v6374
      %v6390 = vpack.c.bf16 %v6378, %v6375
      %v6391 = vpack.c.bf16 %v6382, %v6379
      %v6392 = vpack.c.bf16 %v6383, %v6380
      %v6393 = vpack.c.bf16 %v6384, %v6381
      %v6395 = vshrl.u32 %v6385, 16
      %v6397 = vshll.u32 %v6385, 16
      %v6399 = vrot.slane %v6397, 1
      %v6400 = vor.u32 %v6395, %v6399
      %v6402 = vshll.u32 %v6388, 16
      %v6404 = vrot.slane %v6402, 1
      %v6405 = vsel %vm462, %v6400, %v6404
      %v6407 = vshrl.u32 %v6386, 16
      %v6409 = vshll.u32 %v6386, 16
      %v6411 = vrot.slane %v6409, 1
      %v6412 = vor.u32 %v6407, %v6411
      %v6414 = vshll.u32 %v6389, 16
      %v6416 = vrot.slane %v6414, 1
      %v6417 = vsel %vm462, %v6412, %v6416
      %v6419 = vshrl.u32 %v6387, 16
      %v6421 = vshll.u32 %v6387, 16
      %v6423 = vrot.slane %v6421, 1
      %v6424 = vor.u32 %v6419, %v6423
      %v6426 = vshll.u32 %v6390, 16
      %v6428 = vrot.slane %v6426, 1
      %v6429 = vsel %vm462, %v6424, %v6428
      %v6430 = vshrl.u32 %v6388, 16
      %v6432 = vor.u32 %v6430, %v6404
      %v6434 = vshll.u32 %v6391, 16
      %v6436 = vrot.slane %v6434, 1
      %v6437 = vsel %vm462, %v6432, %v6436
      %v6438 = vshrl.u32 %v6389, 16
      %v6440 = vor.u32 %v6438, %v6416
      %v6442 = vshll.u32 %v6392, 16
      %v6444 = vrot.slane %v6442, 1
      %v6445 = vsel %vm462, %v6440, %v6444
      %v6446 = vshrl.u32 %v6390, 16
      %v6448 = vor.u32 %v6446, %v6428
      %v6450 = vshll.u32 %v6393, 16
      %v6452 = vrot.slane %v6450, 1
      %v6453 = vsel %vm462, %v6448, %v6452
      %v6454 = vshrl.u32 %v6391, 16
      %v6456 = vor.u32 %v6454, %v6436
      %v6457 = vshrl.u32 %v6392, 16
      %v6459 = vor.u32 %v6457, %v6444
      %v6460 = vshrl.u32 %v6393, 16
      %v6462 = vor.u32 %v6460, %v6452
      %6463 = vrot.lane.b32.xlu0 %v6405, 112
      %v6464 = vpop.permute.xlu0 %6463
      %6465 = vrot.lane.b32.xlu0 %v6417, 112
      %v6466 = vpop.permute.xlu0 %6465
      %6467 = vrot.lane.b32.xlu0 %v6429, 112
      %v6468 = vpop.permute.xlu0 %6467
      %6469 = vrot.lane.b32.xlu0 %v6437, 112
      %v6470 = vpop.permute.xlu0 %6469
      %6471 = vrot.lane.b32.xlu0 %v6445, 112
      %v6472 = vpop.permute.xlu0 %6471
      %6473 = vrot.lane.b32.xlu0 %v6453, 112
      %v6474 = vpop.permute.xlu0 %6473
      %6475 = vrot.lane.b32.xlu0 %v6456, 112
      %v6476 = vpop.permute.xlu0 %6475
      %6477 = vrot.lane.b32.xlu0 %v6459, 112
      %v6478 = vpop.permute.xlu0 %6477
      %6479 = vrot.lane.b32.xlu0 %v6462, 112
      %v6480 = vpop.permute.xlu0 %6479
      %vm6481 = vcmask 916480
      %v6482 = vsel %vm6481, %v6464, %v6466
      %v6483 = vsel %vm6481, %v6466, %v6468
      %v6484 = vsel %vm6481, %v6470, %v6472
      %v6485 = vsel %vm6481, %v6472, %v6474
      %v6486 = vsel %vm6481, %v6476, %v6478
      %v6487 = vsel %vm6481, %v6478, %v6480
      %v6503 = vrot.slane %v6385, 1
      %v6504 = vrot.slane %v6388, 1
      %v6505 = vsel %vm528, %v6503, %v6504
      %v6506 = vrot.slane %v6386, 1
      %v6507 = vrot.slane %v6389, 1
      %v6508 = vsel %vm528, %v6506, %v6507
      %v6509 = vrot.slane %v6387, 1
      %v6510 = vrot.slane %v6390, 1
      %v6511 = vsel %vm528, %v6509, %v6510
      %v6512 = vrot.slane %v6391, 1
      %v6513 = vsel %vm528, %v6504, %v6512
      %v6514 = vrot.slane %v6392, 1
      %v6515 = vsel %vm528, %v6507, %v6514
      %v6516 = vrot.slane %v6393, 1
      %v6517 = vsel %vm528, %v6510, %v6516
      %6518 = vrot.lane.b32.xlu0 %v6505, 96
      %v6519 = vpop.permute.xlu0 %6518
      %6520 = vrot.lane.b32.xlu0 %v6508, 96
      %v6521 = vpop.permute.xlu0 %6520
      %6522 = vrot.lane.b32.xlu0 %v6511, 96
      %v6523 = vpop.permute.xlu0 %6522
      %6524 = vrot.lane.b32.xlu0 %v6513, 96
      %v6525 = vpop.permute.xlu0 %6524
      %6526 = vrot.lane.b32.xlu0 %v6515, 96
      %v6527 = vpop.permute.xlu0 %6526
      %6528 = vrot.lane.b32.xlu0 %v6517, 96
      %v6529 = vpop.permute.xlu0 %6528
      %6530 = vrot.lane.b32.xlu0 %v6512, 96
      %v6531 = vpop.permute.xlu0 %6530
      %6532 = vrot.lane.b32.xlu0 %v6514, 96
      %v6533 = vpop.permute.xlu0 %6532
      %6534 = vrot.lane.b32.xlu0 %v6516, 96
      %v6535 = vpop.permute.xlu0 %6534
      %vm6536 = vcmask 785408
      %v6537 = vsel %vm6536, %v6519, %v6521
      %v6538 = vsel %vm6536, %v6521, %v6523
      %v6539 = vsel %vm6536, %v6525, %v6527
      %v6540 = vsel %vm6536, %v6527, %v6529
      %v6541 = vsel %vm6536, %v6531, %v6533
      %v6542 = vsel %vm6536, %v6533, %v6535
      %v6549 = vrot.slane %v6395, 1
      %v6550 = vrot.slane %v6397, 2
      %v6551 = vor.u32 %v6549, %v6550
      %v6552 = vrot.slane %v6430, 1
      %v6553 = vrot.slane %v6402, 2
      %v6554 = vor.u32 %v6552, %v6553
      %v6555 = vsel %vm552, %v6551, %v6554
      %v6556 = vrot.slane %v6407, 1
      %v6557 = vrot.slane %v6409, 2
      %v6558 = vor.u32 %v6556, %v6557
      %v6559 = vrot.slane %v6438, 1
      %v6560 = vrot.slane %v6414, 2
      %v6561 = vor.u32 %v6559, %v6560
      %v6562 = vsel %vm552, %v6558, %v6561
      %v6563 = vrot.slane %v6419, 1
      %v6564 = vrot.slane %v6421, 2
      %v6565 = vor.u32 %v6563, %v6564
      %v6566 = vrot.slane %v6446, 1
      %v6567 = vrot.slane %v6426, 2
      %v6568 = vor.u32 %v6566, %v6567
      %v6569 = vsel %vm552, %v6565, %v6568
      %v6570 = vrot.slane %v6454, 1
      %v6571 = vrot.slane %v6434, 2
      %v6572 = vor.u32 %v6570, %v6571
      %v6573 = vsel %vm552, %v6554, %v6572
      %v6574 = vrot.slane %v6457, 1
      %v6575 = vrot.slane %v6442, 2
      %v6576 = vor.u32 %v6574, %v6575
      %v6577 = vsel %vm552, %v6561, %v6576
      %v6578 = vrot.slane %v6460, 1
      %v6579 = vrot.slane %v6450, 2
      %v6580 = vor.u32 %v6578, %v6579
      %v6581 = vsel %vm552, %v6568, %v6580
      %6582 = vrot.lane.b32.xlu0 %v6555, 80
      %v6583 = vpop.permute.xlu0 %6582
      %6584 = vrot.lane.b32.xlu0 %v6562, 80
      %v6585 = vpop.permute.xlu0 %6584
      %6586 = vrot.lane.b32.xlu0 %v6569, 80
      %v6587 = vpop.permute.xlu0 %6586
      %6588 = vrot.lane.b32.xlu0 %v6573, 80
      %v6589 = vpop.permute.xlu0 %6588
      %6590 = vrot.lane.b32.xlu0 %v6577, 80
      %v6591 = vpop.permute.xlu0 %6590
      %6592 = vrot.lane.b32.xlu0 %v6581, 80
      %v6593 = vpop.permute.xlu0 %6592
      %6594 = vrot.lane.b32.xlu0 %v6572, 80
      %v6595 = vpop.permute.xlu0 %6594
      %6596 = vrot.lane.b32.xlu0 %v6576, 80
      %v6597 = vpop.permute.xlu0 %6596
      %6598 = vrot.lane.b32.xlu0 %v6580, 80
      %v6599 = vpop.permute.xlu0 %6598
      %vm6600 = vcmask 654336
      %v6601 = vsel %vm6600, %v6583, %v6585
      %v6602 = vsel %vm6600, %v6585, %v6587
      %v6603 = vsel %vm6600, %v6589, %v6591
      %v6604 = vsel %vm6600, %v6591, %v6593
      %v6605 = vsel %vm6600, %v6595, %v6597
      %v6606 = vsel %vm6600, %v6597, %v6599
      %v6613 = vrot.slane %v6385, 2
      %v6614 = vrot.slane %v6388, 2
      %v6615 = vsel %vm588, %v6613, %v6614
      %v6616 = vrot.slane %v6386, 2
      %v6617 = vrot.slane %v6389, 2
      %v6618 = vsel %vm588, %v6616, %v6617
      %v6619 = vrot.slane %v6387, 2
      %v6620 = vrot.slane %v6390, 2
      %v6621 = vsel %vm588, %v6619, %v6620
      %v6622 = vrot.slane %v6391, 2
      %v6623 = vsel %vm588, %v6614, %v6622
      %v6624 = vrot.slane %v6392, 2
      %v6625 = vsel %vm588, %v6617, %v6624
      %v6626 = vrot.slane %v6393, 2
      %v6627 = vsel %vm588, %v6620, %v6626
      %6628 = vrot.lane.b32.xlu0 %v6615, 64
      %v6629 = vpop.permute.xlu0 %6628
      %6630 = vrot.lane.b32.xlu0 %v6618, 64
      %v6631 = vpop.permute.xlu0 %6630
      %6632 = vrot.lane.b32.xlu0 %v6621, 64
      %v6633 = vpop.permute.xlu0 %6632
      %6634 = vrot.lane.b32.xlu0 %v6623, 64
      %v6635 = vpop.permute.xlu0 %6634
      %6636 = vrot.lane.b32.xlu0 %v6625, 64
      %v6637 = vpop.permute.xlu0 %6636
      %6638 = vrot.lane.b32.xlu0 %v6627, 64
      %v6639 = vpop.permute.xlu0 %6638
      %6640 = vrot.lane.b32.xlu0 %v6622, 64
      %v6641 = vpop.permute.xlu0 %6640
      %6642 = vrot.lane.b32.xlu0 %v6624, 64
      %v6643 = vpop.permute.xlu0 %6642
      %6644 = vrot.lane.b32.xlu0 %v6626, 64
      %v6645 = vpop.permute.xlu0 %6644
      %vm6646 = vcmask 523264
      %v6647 = vsel %vm6646, %v6629, %v6631
      %v6648 = vsel %vm6646, %v6631, %v6633
      %v6649 = vsel %vm6646, %v6635, %v6637
      %v6650 = vsel %vm6646, %v6637, %v6639
      %v6651 = vsel %vm6646, %v6641, %v6643
      %v6652 = vsel %vm6646, %v6643, %v6645
      %vm6659 = vcmask 916480
      %v6661 = vsel %vm6659, %v6387, %v6464
      %v6664 = vsel %vm6659, %v6390, %v6470
      %v6667 = vsel %vm6659, %v6393, %v6476
      %v6671 = vsel %vm4699, %v6468, %v6519
      %v6675 = vsel %vm4699, %v6474, %v6525
      %v6679 = vsel %vm4699, %v6480, %v6531
      %vm6681 = vcmask 654336
      %v6684 = vsel %vm6681, %v6523, %v6583
      %v6688 = vsel %vm6681, %v6529, %v6589
      %v6692 = vsel %vm6681, %v6535, %v6595
      %vm6694 = vcmask 523264
      %v6697 = vsel %vm6694, %v6587, %v6629
      %v6701 = vsel %vm6694, %v6593, %v6635
      %v6705 = vsel %vm6694, %v6599, %v6641
      %v6707 = vld [vmem:[%s7] sm:$0xff]
      %v6708 = vld [vmem:[%s7 + $0x8] sm:$0xff]
      %v6709 = vld [vmem:[%s7 + $0x10] sm:$0xff]
      %v6710 = vld [vmem:[%s7 + $0x18] sm:$0xff]
      %v6711 = vld [vmem:[%s7 + $0x20] sm:$0xff]
      %v6712 = vld [vmem:[%s7 + $0x28] sm:$0xff]
      %v6713 = vld [vmem:[%s7 + $0x30] sm:$0xff]
      %v6714 = vld [vmem:[%s7 + $0x38] sm:$0xff]
      %v6715 = vld [vmem:[%s7 + $0x40] sm:$0xff]
      %v6716 = vld [vmem:[%s7 + $0x48] sm:$0xff]
      %v6717 = vld [vmem:[%s7 + $0x50] sm:$0xff]
      %v6718 = vld [vmem:[%s7 + $0x58] sm:$0xff]
      %v6719 = vld [vmem:[%s7 + $0x60] sm:$0xff]
      %v6720 = vld [vmem:[%s7 + $0x68] sm:$0xff]
      %v6721 = vld [vmem:[%s7 + $0x70] sm:$0xff]
      %v6722 = vld [vmem:[%s7 + $0x78] sm:$0xff]
      %v6723 = vld [vmem:[%s7 + $0x80] sm:$0xff]
      %v6724 = vld [vmem:[%s7 + $0x88] sm:$0xff]
      %v6725 = vld [vmem:[%s7 + $0x90] sm:$0xff]
      %v6726 = vld [vmem:[%s7 + $0x98] sm:$0xff]
      %v6727 = vld [vmem:[%s7 + $0xa0] sm:$0xff]
      %v6728 = vld [vmem:[%s7 + $0xa8] sm:$0xff]
      %v6729 = vld [vmem:[%s7 + $0xb0] sm:$0xff]
      %v6730 = vld [vmem:[%s7 + $0xb8] sm:$0xff]
      %v6731 = vld [vmem:[%s7 + $0xc0] sm:$0xff]
      %v6732 = vld [vmem:[%s7 + $0xc8] sm:$0xff]
      %v6733 = vld [vmem:[%s7 + $0xd0] sm:$0xff]
      %v6734 = vld [vmem:[%s7 + $0xd8] sm:$0xff]
      %v6735 = vld [vmem:[%s7 + $0xe0] sm:$0xff]
      %v6736 = vld [vmem:[%s7 + $0xe8] sm:$0xff]
      %v6737 = vld [vmem:[%s7 + $0xf0] sm:$0xff]
      %v6738 = vld [vmem:[%s7 + $0xf8] sm:$0xff]
      %v6739 = vld [vmem:[%s7 + $0x100] sm:$0xff]
      %v6740 = vld [vmem:[%s7 + $0x108] sm:$0xff]
      %v6741 = vld [vmem:[%s7 + $0x110] sm:$0xff]
      %v6742 = vld [vmem:[%s7 + $0x118] sm:$0xff]
      %v6743 = vld [vmem:[%s7 + $0x120] sm:$0xff]
      %v6744 = vld [vmem:[%s7 + $0x128] sm:$0xff]
      %v6745 = vld [vmem:[%s7 + $0x130] sm:$0xff]
      %v6746 = vld [vmem:[%s7 + $0x138] sm:$0xff]
      %v6747 = vld [vmem:[%s7 + $0x140] sm:$0xff]
      %v6748 = vld [vmem:[%s7 + $0x148] sm:$0xff]
      %v6749 = vld [vmem:[%s7 + $0x150] sm:$0xff]
      %v6750 = vld [vmem:[%s7 + $0x158] sm:$0xff]
      %v6751 = vld [vmem:[%s7 + $0x160] sm:$0xff]
      %v6752 = vld [vmem:[%s7 + $0x168] sm:$0xff]
      %v6753 = vld [vmem:[%s7 + $0x170] sm:$0xff]
      %v6754 = vld [vmem:[%s7 + $0x178] sm:$0xff]
      %v6755 = vld [vmem:[%s7 + $0x180] sm:$0xff]
      %v6756 = vld [vmem:[%s7 + $0x188] sm:$0xff]
      %v6757 = vld [vmem:[%s7 + $0x190] sm:$0xff]
      %v6758 = vld [vmem:[%s7 + $0x198] sm:$0xff]
      %v6759 = vld [vmem:[%s7 + $0x1a0] sm:$0xff]
      %v6760 = vld [vmem:[%s7 + $0x1a8] sm:$0xff]
      %v6761 = vld [vmem:[%s7 + $0x1b0] sm:$0xff]
      %v6762 = vld [vmem:[%s7 + $0x1b8] sm:$0xff]
      %v6763 = vld [vmem:[%s7 + $0x1c0] sm:$0xff]
      %v6764 = vld [vmem:[%s7 + $0x1c8] sm:$0xff]
      %v6765 = vld [vmem:[%s7 + $0x1d0] sm:$0xff]
      %v6766 = vld [vmem:[%s7 + $0x1d8] sm:$0xff]
      %v6767 = vld [vmem:[%s7 + $0x1e0] sm:$0xff]
      %v6768 = vld [vmem:[%s7 + $0x1e8] sm:$0xff]
      %v6769 = vld [vmem:[%s7 + $0x1f0] sm:$0xff]
      %v6770 = vld [vmem:[%s7 + $0x1f8] sm:$0xff]
      %v6771 = vld [vmem:[%s7 + $0x200] sm:$0xff]
      %v6772 = vld [vmem:[%s7 + $0x208] sm:$0xff]
      %v6773 = vld [vmem:[%s7 + $0x210] sm:$0xff]
      %v6774 = vld [vmem:[%s7 + $0x218] sm:$0xff]
      %v6775 = vld [vmem:[%s7 + $0x220] sm:$0xff]
      %v6776 = vld [vmem:[%s7 + $0x228] sm:$0xff]
      %v6777 = vld [vmem:[%s7 + $0x230] sm:$0xff]
      %v6778 = vld [vmem:[%s7 + $0x238] sm:$0xff]
      %v6779 = vld [vmem:[%s7 + $0x240] sm:$0xff]
      %v6780 = vld [vmem:[%s7 + $0x248] sm:$0xff]
      %v6781 = vld [vmem:[%s7 + $0x250] sm:$0xff]
      %v6782 = vld [vmem:[%s7 + $0x258] sm:$0xff]
      %v6783 = vld [vmem:[%s7 + $0x260] sm:$0xff]
      %v6784 = vld [vmem:[%s7 + $0x268] sm:$0xff]
      %v6785 = vld [vmem:[%s7 + $0x270] sm:$0xff]
      %v6786 = vld [vmem:[%s7 + $0x278] sm:$0xff]
      %v6787 = vld [vmem:[%s7 + $0x280] sm:$0xff]
      %v6788 = vld [vmem:[%s7 + $0x288] sm:$0xff]
      %v6789 = vld [vmem:[%s7 + $0x290] sm:$0xff]
      %v6790 = vld [vmem:[%s7 + $0x298] sm:$0xff]
      %v6791 = vld [vmem:[%s7 + $0x2a0] sm:$0xff]
      %v6792 = vld [vmem:[%s7 + $0x2a8] sm:$0xff]
      %v6793 = vld [vmem:[%s7 + $0x2b0] sm:$0xff]
      %v6794 = vld [vmem:[%s7 + $0x2b8] sm:$0xff]
      %v6795 = vld [vmem:[%s7 + $0x2c0] sm:$0xff]
      %v6796 = vld [vmem:[%s7 + $0x2c8] sm:$0xff]
      %v6797 = vld [vmem:[%s7 + $0x2d0] sm:$0xff]
      %v6798 = vld [vmem:[%s7 + $0x2d8] sm:$0xff]
      %v6799 = vld [vmem:[%s7 + $0x2e0] sm:$0xff]
      %v6800 = vld [vmem:[%s7 + $0x2e8] sm:$0xff]
      %v6801 = vld [vmem:[%s7 + $0x2f0] sm:$0xff]
      %v6802 = vld [vmem:[%s7 + $0x2f8] sm:$0xff]
      %v6803 = vld [vmem:[%s7 + $0x300] sm:$0xff]
      %v6804 = vld [vmem:[%s7 + $0x308] sm:$0xff]
      %v6805 = vld [vmem:[%s7 + $0x310] sm:$0xff]
      %v6806 = vld [vmem:[%s7 + $0x318] sm:$0xff]
      %v6807 = vld [vmem:[%s7 + $0x320] sm:$0xff]
      %v6808 = vld [vmem:[%s7 + $0x328] sm:$0xff]
      %v6809 = vld [vmem:[%s7 + $0x330] sm:$0xff]
      %v6810 = vld [vmem:[%s7 + $0x338] sm:$0xff]
      %v6811 = vld [vmem:[%s7 + $0x340] sm:$0xff]
      %v6812 = vld [vmem:[%s7 + $0x348] sm:$0xff]
      %v6813 = vld [vmem:[%s7 + $0x350] sm:$0xff]
      %v6814 = vld [vmem:[%s7 + $0x358] sm:$0xff]
      %v6815 = vld [vmem:[%s7 + $0x360] sm:$0xff]
      %v6816 = vld [vmem:[%s7 + $0x368] sm:$0xff]
      %v6817 = vld [vmem:[%s7 + $0x370] sm:$0xff]
      %v6818 = vld [vmem:[%s7 + $0x378] sm:$0xff]
      %v6819 = vld [vmem:[%s7 + $0x380] sm:$0xff]
      %v6820 = vld [vmem:[%s7 + $0x388] sm:$0xff]
      %v6821 = vld [vmem:[%s7 + $0x390] sm:$0xff]
      %v6822 = vld [vmem:[%s7 + $0x398] sm:$0xff]
      %v6823 = vld [vmem:[%s7 + $0x3a0] sm:$0xff]
      %v6824 = vld [vmem:[%s7 + $0x3a8] sm:$0xff]
      %v6825 = vld [vmem:[%s7 + $0x3b0] sm:$0xff]
      %v6826 = vld [vmem:[%s7 + $0x3b8] sm:$0xff]
      %v6827 = vld [vmem:[%s7 + $0x3c0] sm:$0xff]
      %v6828 = vld [vmem:[%s7 + $0x3c8] sm:$0xff]
      %v6829 = vld [vmem:[%s7 + $0x3d0] sm:$0xff]
      %v6830 = vld [vmem:[%s7 + $0x3d8] sm:$0xff]
      %v6831 = vld [vmem:[%s7 + $0x3e0] sm:$0xff]
      %v6832 = vld [vmem:[%s7 + $0x3e8] sm:$0xff]
      %v6833 = vld [vmem:[%s7 + $0x3f0] sm:$0xff]
      %v6834 = vld [vmem:[%s7 + $0x3f8] sm:$0xff]
      %v6835 = vld [vmem:[%s7 + $0x400] sm:$0xff]
      %v6836 = vld [vmem:[%s7 + $0x408] sm:$0xff]
      %v6837 = vld [vmem:[%s7 + $0x410] sm:$0xff]
      %v6838 = vld [vmem:[%s7 + $0x418] sm:$0xff]
      %v6839 = vld [vmem:[%s7 + $0x420] sm:$0xff]
      %v6840 = vld [vmem:[%s7 + $0x428] sm:$0xff]
      %v6841 = vld [vmem:[%s7 + $0x430] sm:$0xff]
      %v6842 = vld [vmem:[%s7 + $0x438] sm:$0xff]
      %v6843 = vld [vmem:[%s7 + $0x440] sm:$0xff]
      %v6844 = vld [vmem:[%s7 + $0x448] sm:$0xff]
      %v6845 = vld [vmem:[%s7 + $0x450] sm:$0xff]
      %v6846 = vld [vmem:[%s7 + $0x458] sm:$0xff]
      %v6847 = vld [vmem:[%s7 + $0x460] sm:$0xff]
      %v6848 = vld [vmem:[%s7 + $0x468] sm:$0xff]
      %v6849 = vld [vmem:[%s7 + $0x470] sm:$0xff]
      %v6850 = vld [vmem:[%s7 + $0x478] sm:$0xff]
      %v6851 = vld [vmem:[%s7 + $0x480] sm:$0xff]
      %v6852 = vld [vmem:[%s7 + $0x488] sm:$0xff]
      %v6853 = vld [vmem:[%s7 + $0x490] sm:$0xff]
      %v6854 = vld [vmem:[%s7 + $0x498] sm:$0xff]
      %v6855 = vld [vmem:[%s7 + $0x4a0] sm:$0xff]
      %v6856 = vld [vmem:[%s7 + $0x4a8] sm:$0xff]
      %v6857 = vld [vmem:[%s7 + $0x4b0] sm:$0xff]
      %v6858 = vld [vmem:[%s7 + $0x4b8] sm:$0xff]
      %v6859 = vld [vmem:[%s7 + $0x4c0] sm:$0xff]
      %v6860 = vld [vmem:[%s7 + $0x4c8] sm:$0xff]
      %v6861 = vld [vmem:[%s7 + $0x4d0] sm:$0xff]
      %v6862 = vld [vmem:[%s7 + $0x4d8] sm:$0xff]
      %v6863 = vld [vmem:[%s7 + $0x4e0] sm:$0xff]
      %v6864 = vld [vmem:[%s7 + $0x4e8] sm:$0xff]
      %v6865 = vld [vmem:[%s7 + $0x4f0] sm:$0xff]
      %v6866 = vld [vmem:[%s7 + $0x4f8] sm:$0xff]
      %v6867 = vld [vmem:[%s7 + $0x500] sm:$0xff]
      %v6868 = vld [vmem:[%s7 + $0x508] sm:$0xff]
      %v6869 = vld [vmem:[%s7 + $0x510] sm:$0xff]
      %v6870 = vld [vmem:[%s7 + $0x518] sm:$0xff]
      %v6871 = vld [vmem:[%s7 + $0x520] sm:$0xff]
      %v6872 = vld [vmem:[%s7 + $0x528] sm:$0xff]
      %v6873 = vld [vmem:[%s7 + $0x530] sm:$0xff]
      %v6874 = vld [vmem:[%s7 + $0x538] sm:$0xff]
      %v6875 = vld [vmem:[%s7 + $0x540] sm:$0xff]
      %v6876 = vld [vmem:[%s7 + $0x548] sm:$0xff]
      %v6877 = vld [vmem:[%s7 + $0x550] sm:$0xff]
      %v6878 = vld [vmem:[%s7 + $0x558] sm:$0xff]
      %v6879 = vld [vmem:[%s7 + $0x560] sm:$0xff]
      %v6880 = vld [vmem:[%s7 + $0x568] sm:$0xff]
      %v6881 = vld [vmem:[%s7 + $0x570] sm:$0xff]
      %v6882 = vld [vmem:[%s7 + $0x578] sm:$0xff]
      %v6883 = vld [vmem:[%s7 + $0x580] sm:$0xff]
      %v6884 = vld [vmem:[%s7 + $0x588] sm:$0xff]
      %v6885 = vld [vmem:[%s7 + $0x590] sm:$0xff]
      %v6886 = vld [vmem:[%s7 + $0x598] sm:$0xff]
      %v6887 = vld [vmem:[%s7 + $0x5a0] sm:$0xff]
      %v6888 = vld [vmem:[%s7 + $0x5a8] sm:$0xff]
      %v6889 = vld [vmem:[%s7 + $0x5b0] sm:$0xff]
      %v6890 = vld [vmem:[%s7 + $0x5b8] sm:$0xff]
      %v6891 = vld [vmem:[%s7 + $0x5c0] sm:$0xff]
      %v6892 = vld [vmem:[%s7 + $0x5c8] sm:$0xff]
      %v6893 = vld [vmem:[%s7 + $0x5d0] sm:$0xff]
      %v6894 = vld [vmem:[%s7 + $0x5d8] sm:$0xff]
      %v6895 = vld [vmem:[%s7 + $0x5e0] sm:$0xff]
      %v6896 = vld [vmem:[%s7 + $0x5e8] sm:$0xff]
      %v6897 = vld [vmem:[%s7 + $0x5f0] sm:$0xff]
      %v6898 = vld [vmem:[%s7 + $0x5f8] sm:$0xff]
      %v6899 = vld [vmem:[%s7 + $0x600] sm:$0xff]
      %v6900 = vld [vmem:[%s7 + $0x608] sm:$0xff]
      %v6901 = vld [vmem:[%s7 + $0x610] sm:$0xff]
      %v6902 = vld [vmem:[%s7 + $0x618] sm:$0xff]
      %v6903 = vld [vmem:[%s7 + $0x620] sm:$0xff]
      %v6904 = vld [vmem:[%s7 + $0x628] sm:$0xff]
      %v6905 = vld [vmem:[%s7 + $0x630] sm:$0xff]
      %v6906 = vld [vmem:[%s7 + $0x638] sm:$0xff]
      %v6907 = vld [vmem:[%s7 + $0x640] sm:$0xff]
      %v6908 = vld [vmem:[%s7 + $0x648] sm:$0xff]
      %v6909 = vld [vmem:[%s7 + $0x650] sm:$0xff]
      %v6910 = vld [vmem:[%s7 + $0x658] sm:$0xff]
      %v6911 = vld [vmem:[%s7 + $0x660] sm:$0xff]
      %v6912 = vld [vmem:[%s7 + $0x668] sm:$0xff]
      %v6913 = vld [vmem:[%s7 + $0x670] sm:$0xff]
      %v6914 = vld [vmem:[%s7 + $0x678] sm:$0xff]
      %v6915 = vld [vmem:[%s7 + $0x680] sm:$0xff]
      %v6916 = vld [vmem:[%s7 + $0x688] sm:$0xff]
      %v6917 = vld [vmem:[%s7 + $0x690] sm:$0xff]
      %v6918 = vld [vmem:[%s7 + $0x698] sm:$0xff]
      %v6919 = vld [vmem:[%s7 + $0x6a0] sm:$0xff]
      %v6920 = vld [vmem:[%s7 + $0x6a8] sm:$0xff]
      %v6921 = vld [vmem:[%s7 + $0x6b0] sm:$0xff]
      %v6922 = vld [vmem:[%s7 + $0x6b8] sm:$0xff]
      %v6923 = vld [vmem:[%s7 + $0x6c0] sm:$0xff]
      %v6924 = vld [vmem:[%s7 + $0x6c8] sm:$0xff]
      %v6925 = vld [vmem:[%s7 + $0x6d0] sm:$0xff]
      %v6926 = vld [vmem:[%s7 + $0x6d8] sm:$0xff]
      %v6927 = vld [vmem:[%s7 + $0x6e0] sm:$0xff]
      %v6928 = vld [vmem:[%s7 + $0x6e8] sm:$0xff]
      %v6929 = vld [vmem:[%s7 + $0x6f0] sm:$0xff]
      %v6930 = vld [vmem:[%s7 + $0x6f8] sm:$0xff]
      %v6931 = vld [vmem:[%s7 + $0x700] sm:$0xff]
      %v6932 = vld [vmem:[%s7 + $0x708] sm:$0xff]
      %v6933 = vld [vmem:[%s7 + $0x710] sm:$0xff]
      %v6934 = vld [vmem:[%s7 + $0x718] sm:$0xff]
      %v6935 = vld [vmem:[%s7 + $0x720] sm:$0xff]
      %v6936 = vld [vmem:[%s7 + $0x728] sm:$0xff]
      %v6937 = vld [vmem:[%s7 + $0x730] sm:$0xff]
      %v6938 = vld [vmem:[%s7 + $0x738] sm:$0xff]
      %v6939 = vld [vmem:[%s7 + $0x740] sm:$0xff]
      %v6940 = vld [vmem:[%s7 + $0x748] sm:$0xff]
      %v6941 = vld [vmem:[%s7 + $0x750] sm:$0xff]
      %v6942 = vld [vmem:[%s7 + $0x758] sm:$0xff]
      %v6943 = vld [vmem:[%s7 + $0x760] sm:$0xff]
      %v6944 = vld [vmem:[%s7 + $0x768] sm:$0xff]
      %v6945 = vld [vmem:[%s7 + $0x770] sm:$0xff]
      %v6946 = vld [vmem:[%s7 + $0x778] sm:$0xff]
      %v6947 = vld [vmem:[%s7 + $0x780] sm:$0xff]
      %v6948 = vld [vmem:[%s7 + $0x788] sm:$0xff]
      %v6949 = vld [vmem:[%s7 + $0x790] sm:$0xff]
      %v6950 = vld [vmem:[%s7 + $0x798] sm:$0xff]
      %v6951 = vld [vmem:[%s7 + $0x7a0] sm:$0xff]
      %v6952 = vld [vmem:[%s7 + $0x7a8] sm:$0xff]
      %v6953 = vld [vmem:[%s7 + $0x7b0] sm:$0xff]
      %v6954 = vld [vmem:[%s7 + $0x7b8] sm:$0xff]
      %v6955 = vld [vmem:[%s7 + $0x7c0] sm:$0xff]
      %v6956 = vld [vmem:[%s7 + $0x7c8] sm:$0xff]
      %v6957 = vld [vmem:[%s7 + $0x7d0] sm:$0xff]
      %v6958 = vld [vmem:[%s7 + $0x7d8] sm:$0xff]
      %v6959 = vld [vmem:[%s7 + $0x7e0] sm:$0xff]
      %v6960 = vld [vmem:[%s7 + $0x7e8] sm:$0xff]
      %v6961 = vld [vmem:[%s7 + $0x7f0] sm:$0xff]
      %v6962 = vld [vmem:[%s7 + $0x7f8] sm:$0xff]
      %v6963 = vld [vmem:[%s7 + $0x800] sm:$0xff]
      %v6964 = vld [vmem:[%s7 + $0x808] sm:$0xff]
      %v6965 = vld [vmem:[%s7 + $0x810] sm:$0xff]
      %v6966 = vld [vmem:[%s7 + $0x818] sm:$0xff]
      %v6967 = vld [vmem:[%s7 + $0x820] sm:$0xff]
      %v6968 = vld [vmem:[%s7 + $0x828] sm:$0xff]
      %v6969 = vld [vmem:[%s7 + $0x830] sm:$0xff]
      %v6970 = vld [vmem:[%s7 + $0x838] sm:$0xff]
      %v6971 = vld [vmem:[%s7 + $0x840] sm:$0xff]
      %v6972 = vld [vmem:[%s7 + $0x848] sm:$0xff]
      %v6973 = vld [vmem:[%s7 + $0x850] sm:$0xff]
      %v6974 = vld [vmem:[%s7 + $0x858] sm:$0xff]
      %v6975 = vld [vmem:[%s7 + $0x860] sm:$0xff]
      %v6976 = vld [vmem:[%s7 + $0x868] sm:$0xff]
      %v6977 = vld [vmem:[%s7 + $0x870] sm:$0xff]
      %v6978 = vld [vmem:[%s7 + $0x878] sm:$0xff]
      %v6979 = vld [vmem:[%s7 + $0x880] sm:$0xff]
      %v6980 = vld [vmem:[%s7 + $0x888] sm:$0xff]
      %v6981 = vld [vmem:[%s7 + $0x890] sm:$0xff]
      %v6982 = vld [vmem:[%s7 + $0x898] sm:$0xff]
      %v6983 = vld [vmem:[%s7 + $0x8a0] sm:$0xff]
      %v6984 = vld [vmem:[%s7 + $0x8a8] sm:$0xff]
      %v6985 = vld [vmem:[%s7 + $0x8b0] sm:$0xff]
      %v6986 = vld [vmem:[%s7 + $0x8b8] sm:$0xff]
      %v6987 = vld [vmem:[%s7 + $0x8c0] sm:$0xff]
      %v6988 = vld [vmem:[%s7 + $0x8c8] sm:$0xff]
      %v6989 = vld [vmem:[%s7 + $0x8d0] sm:$0xff]
      %v6990 = vld [vmem:[%s7 + $0x8d8] sm:$0xff]
      %v6991 = vld [vmem:[%s7 + $0x8e0] sm:$0xff]
      %v6992 = vld [vmem:[%s7 + $0x8e8] sm:$0xff]
      %v6993 = vld [vmem:[%s7 + $0x8f0] sm:$0xff]
      %v6994 = vld [vmem:[%s7 + $0x8f8] sm:$0xff]
      %v6995 = vld [vmem:[%s7 + $0x900] sm:$0xff]
      %v6996 = vld [vmem:[%s7 + $0x908] sm:$0xff]
      %v6997 = vld [vmem:[%s7 + $0x910] sm:$0xff]
      %v6998 = vld [vmem:[%s7 + $0x918] sm:$0xff]
      %v6999 = vld [vmem:[%s7 + $0x920] sm:$0xff]
      %v7000 = vld [vmem:[%s7 + $0x928] sm:$0xff]
      %v7001 = vld [vmem:[%s7 + $0x930] sm:$0xff]
      %v7002 = vld [vmem:[%s7 + $0x938] sm:$0xff]
      %v7003 = vld [vmem:[%s7 + $0x940] sm:$0xff]
      %v7004 = vld [vmem:[%s7 + $0x948] sm:$0xff]
      %v7005 = vld [vmem:[%s7 + $0x950] sm:$0xff]
      %v7006 = vld [vmem:[%s7 + $0x958] sm:$0xff]
      %v7007 = vld [vmem:[%s7 + $0x960] sm:$0xff]
      %v7008 = vld [vmem:[%s7 + $0x968] sm:$0xff]
      %v7009 = vld [vmem:[%s7 + $0x970] sm:$0xff]
      %v7010 = vld [vmem:[%s7 + $0x978] sm:$0xff]
      %v7011 = vld [vmem:[%s7 + $0x980] sm:$0xff]
      %v7012 = vld [vmem:[%s7 + $0x988] sm:$0xff]
      %v7013 = vld [vmem:[%s7 + $0x990] sm:$0xff]
      %v7014 = vld [vmem:[%s7 + $0x998] sm:$0xff]
      %v7015 = vld [vmem:[%s7 + $0x9a0] sm:$0xff]
      %v7016 = vld [vmem:[%s7 + $0x9a8] sm:$0xff]
      %v7017 = vld [vmem:[%s7 + $0x9b0] sm:$0xff]
      %v7018 = vld [vmem:[%s7 + $0x9b8] sm:$0xff]
      %v7019 = vld [vmem:[%s7 + $0x9c0] sm:$0xff]
      %v7020 = vld [vmem:[%s7 + $0x9c8] sm:$0xff]
      %v7021 = vld [vmem:[%s7 + $0x9d0] sm:$0xff]
      %v7022 = vld [vmem:[%s7 + $0x9d8] sm:$0xff]
      %v7023 = vld [vmem:[%s7 + $0x9e0] sm:$0xff]
      %v7024 = vld [vmem:[%s7 + $0x9e8] sm:$0xff]
      %v7025 = vld [vmem:[%s7 + $0x9f0] sm:$0xff]
      %v7026 = vld [vmem:[%s7 + $0x9f8] sm:$0xff]
      %v7027 = vld [vmem:[%s7 + $0xa00] sm:$0xff]
      %v7028 = vld [vmem:[%s7 + $0xa08] sm:$0xff]
      %v7029 = vld [vmem:[%s7 + $0xa10] sm:$0xff]
      %v7030 = vld [vmem:[%s7 + $0xa18] sm:$0xff]
      %v7031 = vld [vmem:[%s7 + $0xa20] sm:$0xff]
      %v7032 = vld [vmem:[%s7 + $0xa28] sm:$0xff]
      %v7033 = vld [vmem:[%s7 + $0xa30] sm:$0xff]
      %v7034 = vld [vmem:[%s7 + $0xa38] sm:$0xff]
      %v7035 = vld [vmem:[%s7 + $0xa40] sm:$0xff]
      %v7036 = vld [vmem:[%s7 + $0xa48] sm:$0xff]
      %v7037 = vld [vmem:[%s7 + $0xa50] sm:$0xff]
      %v7038 = vld [vmem:[%s7 + $0xa58] sm:$0xff]
      %v7039 = vld [vmem:[%s7 + $0xa60] sm:$0xff]
      %v7040 = vld [vmem:[%s7 + $0xa68] sm:$0xff]
      %v7041 = vld [vmem:[%s7 + $0xa70] sm:$0xff]
      %v7042 = vld [vmem:[%s7 + $0xa78] sm:$0xff]
      %v7043 = vld [vmem:[%s7 + $0xa80] sm:$0xff]
      %v7044 = vld [vmem:[%s7 + $0xa88] sm:$0xff]
      %v7045 = vld [vmem:[%s7 + $0xa90] sm:$0xff]
      %v7046 = vld [vmem:[%s7 + $0xa98] sm:$0xff]
      %v7047 = vld [vmem:[%s7 + $0xaa0] sm:$0xff]
      %v7048 = vld [vmem:[%s7 + $0xaa8] sm:$0xff]
      %v7049 = vld [vmem:[%s7 + $0xab0] sm:$0xff]
      %v7050 = vld [vmem:[%s7 + $0xab8] sm:$0xff]
      %v7051 = vld [vmem:[%s7 + $0xac0] sm:$0xff]
      %v7052 = vld [vmem:[%s7 + $0xac8] sm:$0xff]
      %v7053 = vld [vmem:[%s7 + $0xad0] sm:$0xff]
      %v7054 = vld [vmem:[%s7 + $0xad8] sm:$0xff]
      %v7055 = vld [vmem:[%s7 + $0xae0] sm:$0xff]
      %v7056 = vld [vmem:[%s7 + $0xae8] sm:$0xff]
      %v7057 = vld [vmem:[%s7 + $0xaf0] sm:$0xff]
      %v7058 = vld [vmem:[%s7 + $0xaf8] sm:$0xff]
      %v7059 = vld [vmem:[%s7 + $0xb00] sm:$0xff]
      %v7060 = vld [vmem:[%s7 + $0xb08] sm:$0xff]
      %v7061 = vld [vmem:[%s7 + $0xb10] sm:$0xff]
      %v7062 = vld [vmem:[%s7 + $0xb18] sm:$0xff]
      %v7063 = vld [vmem:[%s7 + $0xb20] sm:$0xff]
      %v7064 = vld [vmem:[%s7 + $0xb28] sm:$0xff]
      %v7065 = vld [vmem:[%s7 + $0xb30] sm:$0xff]
      %v7066 = vld [vmem:[%s7 + $0xb38] sm:$0xff]
      %v7067 = vld [vmem:[%s7 + $0xb40] sm:$0xff]
      %v7068 = vld [vmem:[%s7 + $0xb48] sm:$0xff]
      %v7069 = vld [vmem:[%s7 + $0xb50] sm:$0xff]
      %v7070 = vld [vmem:[%s7 + $0xb58] sm:$0xff]
      %v7071 = vld [vmem:[%s7 + $0xb60] sm:$0xff]
      %v7072 = vld [vmem:[%s7 + $0xb68] sm:$0xff]
      %v7073 = vld [vmem:[%s7 + $0xb70] sm:$0xff]
      %v7074 = vld [vmem:[%s7 + $0xb78] sm:$0xff]
      %v7075 = vld [vmem:[%s7 + $0xb80] sm:$0xff]
      %v7076 = vld [vmem:[%s7 + $0xb88] sm:$0xff]
      %v7077 = vld [vmem:[%s7 + $0xb90] sm:$0xff]
      %v7078 = vld [vmem:[%s7 + $0xb98] sm:$0xff]
      %v7079 = vld [vmem:[%s7 + $0xba0] sm:$0xff]
      %v7080 = vld [vmem:[%s7 + $0xba8] sm:$0xff]
      %v7081 = vld [vmem:[%s7 + $0xbb0] sm:$0xff]
      %v7082 = vld [vmem:[%s7 + $0xbb8] sm:$0xff]
      %v7083 = vld [vmem:[%s7 + $0xbc0] sm:$0xff]
      %v7084 = vld [vmem:[%s7 + $0xbc8] sm:$0xff]
      %v7085 = vld [vmem:[%s7 + $0xbd0] sm:$0xff]
      %v7086 = vld [vmem:[%s7 + $0xbd8] sm:$0xff]
      %v7087 = vld [vmem:[%s7 + $0xbe0] sm:$0xff]
      %v7088 = vld [vmem:[%s7 + $0xbe8] sm:$0xff]
      %v7089 = vld [vmem:[%s7 + $0xbf0] sm:$0xff]
      %v7090 = vld [vmem:[%s7 + $0xbf8] sm:$0xff]
      %v7091 = vld [vmem:[%s7 + $0xc00] sm:$0xff]
      %v7092 = vld [vmem:[%s7 + $0xc08] sm:$0xff]
      %v7093 = vld [vmem:[%s7 + $0xc10] sm:$0xff]
      %v7094 = vld [vmem:[%s7 + $0xc18] sm:$0xff]
      %v7095 = vld [vmem:[%s7 + $0xc20] sm:$0xff]
      %v7096 = vld [vmem:[%s7 + $0xc28] sm:$0xff]
      %v7097 = vld [vmem:[%s7 + $0xc30] sm:$0xff]
      %v7098 = vld [vmem:[%s7 + $0xc38] sm:$0xff]
      %v7099 = vld [vmem:[%s7 + $0xc40] sm:$0xff]
      %v7100 = vld [vmem:[%s7 + $0xc48] sm:$0xff]
      %v7101 = vld [vmem:[%s7 + $0xc50] sm:$0xff]
      %v7102 = vld [vmem:[%s7 + $0xc58] sm:$0xff]
      %v7103 = vld [vmem:[%s7 + $0xc60] sm:$0xff]
      %v7104 = vld [vmem:[%s7 + $0xc68] sm:$0xff]
      %v7105 = vld [vmem:[%s7 + $0xc70] sm:$0xff]
      %v7106 = vld [vmem:[%s7 + $0xc78] sm:$0xff]
      %v7107 = vld [vmem:[%s7 + $0xc80] sm:$0xff]
      %v7108 = vld [vmem:[%s7 + $0xc88] sm:$0xff]
      %v7109 = vld [vmem:[%s7 + $0xc90] sm:$0xff]
      %v7110 = vld [vmem:[%s7 + $0xc98] sm:$0xff]
      %v7111 = vld [vmem:[%s7 + $0xca0] sm:$0xff]
      %v7112 = vld [vmem:[%s7 + $0xca8] sm:$0xff]
      %v7113 = vld [vmem:[%s7 + $0xcb0] sm:$0xff]
      %v7114 = vld [vmem:[%s7 + $0xcb8] sm:$0xff]
      %v7115 = vld [vmem:[%s7 + $0xcc0] sm:$0xff]
      %v7116 = vld [vmem:[%s7 + $0xcc8] sm:$0xff]
      %v7117 = vld [vmem:[%s7 + $0xcd0] sm:$0xff]
      %v7118 = vld [vmem:[%s7 + $0xcd8] sm:$0xff]
      %v7119 = vld [vmem:[%s7 + $0xce0] sm:$0xff]
      %v7120 = vld [vmem:[%s7 + $0xce8] sm:$0xff]
      %v7121 = vld [vmem:[%s7 + $0xcf0] sm:$0xff]
      %v7122 = vld [vmem:[%s7 + $0xcf8] sm:$0xff]
      %v7123 = vld [vmem:[%s7 + $0xd00] sm:$0xff]
      %v7124 = vld [vmem:[%s7 + $0xd08] sm:$0xff]
      %v7125 = vld [vmem:[%s7 + $0xd10] sm:$0xff]
      %v7126 = vld [vmem:[%s7 + $0xd18] sm:$0xff]
      %v7127 = vld [vmem:[%s7 + $0xd20] sm:$0xff]
      %v7128 = vld [vmem:[%s7 + $0xd28] sm:$0xff]
      %v7129 = vld [vmem:[%s7 + $0xd30] sm:$0xff]
      %v7130 = vld [vmem:[%s7 + $0xd38] sm:$0xff]
      %v7131 = vld [vmem:[%s7 + $0xd40] sm:$0xff]
      %v7132 = vld [vmem:[%s7 + $0xd48] sm:$0xff]
      %v7133 = vld [vmem:[%s7 + $0xd50] sm:$0xff]
      %v7134 = vld [vmem:[%s7 + $0xd58] sm:$0xff]
      %v7135 = vld [vmem:[%s7 + $0xd60] sm:$0xff]
      %v7136 = vld [vmem:[%s7 + $0xd68] sm:$0xff]
      %v7137 = vld [vmem:[%s7 + $0xd70] sm:$0xff]
      %v7138 = vld [vmem:[%s7 + $0xd78] sm:$0xff]
      %v7139 = vld [vmem:[%s7 + $0xd80] sm:$0xff]
      %v7140 = vld [vmem:[%s7 + $0xd88] sm:$0xff]
      %v7141 = vld [vmem:[%s7 + $0xd90] sm:$0xff]
      %v7142 = vld [vmem:[%s7 + $0xd98] sm:$0xff]
      %v7143 = vld [vmem:[%s7 + $0xda0] sm:$0xff]
      %v7144 = vld [vmem:[%s7 + $0xda8] sm:$0xff]
      %v7145 = vld [vmem:[%s7 + $0xdb0] sm:$0xff]
      %v7146 = vld [vmem:[%s7 + $0xdb8] sm:$0xff]
      %v7147 = vld [vmem:[%s7 + $0xdc0] sm:$0xff]
      %v7148 = vld [vmem:[%s7 + $0xdc8] sm:$0xff]
      %v7149 = vld [vmem:[%s7 + $0xdd0] sm:$0xff]
      %v7150 = vld [vmem:[%s7 + $0xdd8] sm:$0xff]
      %v7151 = vld [vmem:[%s7 + $0xde0] sm:$0xff]
      %v7152 = vld [vmem:[%s7 + $0xde8] sm:$0xff]
      %v7153 = vld [vmem:[%s7 + $0xdf0] sm:$0xff]
      %v7154 = vld [vmem:[%s7 + $0xdf8] sm:$0xff]
      %v7155 = vld [vmem:[%s7 + $0xe00] sm:$0xff]
      %v7156 = vld [vmem:[%s7 + $0xe08] sm:$0xff]
      %v7157 = vld [vmem:[%s7 + $0xe10] sm:$0xff]
      %v7158 = vld [vmem:[%s7 + $0xe18] sm:$0xff]
      %v7159 = vld [vmem:[%s7 + $0xe20] sm:$0xff]
      %v7160 = vld [vmem:[%s7 + $0xe28] sm:$0xff]
      %v7161 = vld [vmem:[%s7 + $0xe30] sm:$0xff]
      %v7162 = vld [vmem:[%s7 + $0xe38] sm:$0xff]
      %v7163 = vld [vmem:[%s7 + $0xe40] sm:$0xff]
      %v7164 = vld [vmem:[%s7 + $0xe48] sm:$0xff]
      %v7165 = vld [vmem:[%s7 + $0xe50] sm:$0xff]
      %v7166 = vld [vmem:[%s7 + $0xe58] sm:$0xff]
      %v7167 = vld [vmem:[%s8] sm:$0xf]
      %v7169 = vlaneseq
      %v7170 = vshrl.u32 %v7169, 7
      %v7171 = vsub.s32 0, %v7170
      %v7172 = vrot.slane %v7167, %v7171
      %v7173 = vlaneseq
      %v7174 = vshrl.u32 %v7173, 7
      %v7175 = vsub.s32 1, %v7174
      %v7176 = vrot.slane %v7167, %v7175
      %v7177 = vlaneseq
      %v7178 = vshrl.u32 %v7177, 7
      %v7179 = vsub.s32 2, %v7178
      %v7180 = vrot.slane %v7167, %v7179
      %v7181 = vlaneseq
      %v7182 = vshrl.u32 %v7181, 7
      %v7183 = vsub.s32 3, %v7182
      %v7184 = vrot.slane %v7167, %v7183
      %v7649 = vunpack.c.l.b16 %v6707
      %v7650 = vunpack.c.h.b16 %v6707
      %v7651 = vunpack.c.l.b16 %v6708
      %v7652 = vunpack.c.h.b16 %v6708
      %v7653 = vunpack.c.l.b16 %v6709
      %v7654 = vunpack.c.h.b16 %v6709
      %v7655 = vunpack.c.l.b16 %v6710
      %v7656 = vunpack.c.h.b16 %v6710
      %v7657 = vunpack.c.l.b16 %v6711
      %v7658 = vunpack.c.h.b16 %v6711
      %v7659 = vunpack.c.l.b16 %v6712
      %v7660 = vunpack.c.h.b16 %v6712
      %v7661 = vunpack.c.l.b16 %v6713
      %v7662 = vunpack.c.h.b16 %v6713
      %v7663 = vunpack.c.l.b16 %v6714
      %v7664 = vunpack.c.h.b16 %v6714
      %v7665 = vunpack.c.l.b16 %v6715
      %v7666 = vunpack.c.h.b16 %v6715
      %v7667 = vunpack.c.l.b16 %v6716
      %v7668 = vunpack.c.h.b16 %v6716
      %v7669 = vunpack.c.l.b16 %v6717
      %v7670 = vunpack.c.h.b16 %v6717
      %v7671 = vunpack.c.l.b16 %v6718
      %v7672 = vunpack.c.h.b16 %v6718
      %v7673 = vunpack.c.l.b16 %v6719
      %v7674 = vunpack.c.h.b16 %v6719
      %v7675 = vunpack.c.l.b16 %v6720
      %v7676 = vunpack.c.h.b16 %v6720
      %v7677 = vunpack.c.l.b16 %v6721
      %v7678 = vunpack.c.h.b16 %v6721
      %v7679 = vunpack.c.l.b16 %v6722
      %v7680 = vunpack.c.h.b16 %v6722
      %v7681 = vunpack.c.l.b16 %v6723
      %v7682 = vunpack.c.h.b16 %v6723
      %v7683 = vunpack.c.l.b16 %v6724
      %v7684 = vunpack.c.h.b16 %v6724
      %v7685 = vunpack.c.l.b16 %v6725
      %v7686 = vunpack.c.h.b16 %v6725
      %v7687 = vunpack.c.l.b16 %v6726
      %v7688 = vunpack.c.h.b16 %v6726
      %v7689 = vunpack.c.l.b16 %v6727
      %v7690 = vunpack.c.h.b16 %v6727
      %v7691 = vunpack.c.l.b16 %v6728
      %v7692 = vunpack.c.h.b16 %v6728
      %v7693 = vunpack.c.l.b16 %v6729
      %v7694 = vunpack.c.h.b16 %v6729
      %v7695 = vunpack.c.l.b16 %v6730
      %v7696 = vunpack.c.h.b16 %v6730
      %v7697 = vunpack.c.l.b16 %v6731
      %v7698 = vunpack.c.h.b16 %v6731
      %v7699 = vunpack.c.l.b16 %v6732
      %v7700 = vunpack.c.h.b16 %v6732
      %v7701 = vunpack.c.l.b16 %v6733
      %v7702 = vunpack.c.h.b16 %v6733
      %v7703 = vunpack.c.l.b16 %v6734
      %v7704 = vunpack.c.h.b16 %v6734
      %v7705 = vunpack.c.l.b16 %v6735
      %v7706 = vunpack.c.h.b16 %v6735
      %v7707 = vunpack.c.l.b16 %v6736
      %v7708 = vunpack.c.h.b16 %v6736
      %v7709 = vunpack.c.l.b16 %v6737
      %v7710 = vunpack.c.h.b16 %v6737
      %v7711 = vunpack.c.l.b16 %v6738
      %v7712 = vunpack.c.h.b16 %v6738
      %v7713 = vunpack.c.l.b16 %v6739
      %v7714 = vunpack.c.h.b16 %v6739
      %v7715 = vunpack.c.l.b16 %v6740
      %v7716 = vunpack.c.h.b16 %v6740
      %v7717 = vunpack.c.l.b16 %v6741
      %v7718 = vunpack.c.h.b16 %v6741
      %v7719 = vunpack.c.l.b16 %v6742
      %v7720 = vunpack.c.h.b16 %v6742
      %v7721 = vunpack.c.l.b16 %v6743
      %v7722 = vunpack.c.h.b16 %v6743
      %v7723 = vunpack.c.l.b16 %v6744
      %v7724 = vunpack.c.h.b16 %v6744
      %v7725 = vunpack.c.l.b16 %v6745
      %v7726 = vunpack.c.h.b16 %v6745
      %v7727 = vunpack.c.l.b16 %v6746
      %v7728 = vunpack.c.h.b16 %v6746
      %v7729 = vunpack.c.l.b16 %v6747
      %v7730 = vunpack.c.h.b16 %v6747
      %v7731 = vunpack.c.l.b16 %v6748
      %v7732 = vunpack.c.h.b16 %v6748
      %v7733 = vunpack.c.l.b16 %v6749
      %v7734 = vunpack.c.h.b16 %v6749
      %v7735 = vunpack.c.l.b16 %v6750
      %v7736 = vunpack.c.h.b16 %v6750
      %v7737 = vunpack.c.l.b16 %v6751
      %v7738 = vunpack.c.h.b16 %v6751
      %v7739 = vunpack.c.l.b16 %v6752
      %v7740 = vunpack.c.h.b16 %v6752
      %v7741 = vunpack.c.l.b16 %v6753
      %v7742 = vunpack.c.h.b16 %v6753
      %v7743 = vunpack.c.l.b16 %v6754
      %v7744 = vunpack.c.h.b16 %v6754
      %v7745 = vunpack.c.l.b16 %v6755
      %v7746 = vunpack.c.h.b16 %v6755
      %v7747 = vunpack.c.l.b16 %v6756
      %v7748 = vunpack.c.h.b16 %v6756
      %v7749 = vunpack.c.l.b16 %v6757
      %v7750 = vunpack.c.h.b16 %v6757
      %v7751 = vunpack.c.l.b16 %v6758
      %v7752 = vunpack.c.h.b16 %v6758
      %v7753 = vunpack.c.l.b16 %v6759
      %v7754 = vunpack.c.h.b16 %v6759
      %v7755 = vunpack.c.l.b16 %v6760
      %v7756 = vunpack.c.h.b16 %v6760
      %v7757 = vunpack.c.l.b16 %v6761
      %v7758 = vunpack.c.h.b16 %v6761
      %v7759 = vunpack.c.l.b16 %v6762
      %v7760 = vunpack.c.h.b16 %v6762
      %v7761 = vunpack.c.l.b16 %v6763
      %v7762 = vunpack.c.h.b16 %v6763
      %v7763 = vunpack.c.l.b16 %v6764
      %v7764 = vunpack.c.h.b16 %v6764
      %v7765 = vunpack.c.l.b16 %v6765
      %v7766 = vunpack.c.h.b16 %v6765
      %v7767 = vunpack.c.l.b16 %v6766
      %v7768 = vunpack.c.h.b16 %v6766
      %v7769 = vunpack.c.l.b16 %v6767
      %v7770 = vunpack.c.h.b16 %v6767
      %v7771 = vunpack.c.l.b16 %v6768
      %v7772 = vunpack.c.h.b16 %v6768
      %v7773 = vunpack.c.l.b16 %v6769
      %v7774 = vunpack.c.h.b16 %v6769
      %v7775 = vunpack.c.l.b16 %v6770
      %v7776 = vunpack.c.h.b16 %v6770
      %v7777 = vunpack.c.l.b16 %v6771
      %v7778 = vunpack.c.h.b16 %v6771
      %v7779 = vunpack.c.l.b16 %v6772
      %v7780 = vunpack.c.h.b16 %v6772
      %v7781 = vunpack.c.l.b16 %v6773
      %v7782 = vunpack.c.h.b16 %v6773
      %v7783 = vunpack.c.l.b16 %v6774
      %v7784 = vunpack.c.h.b16 %v6774
      %v7785 = vunpack.c.l.b16 %v6775
      %v7786 = vunpack.c.h.b16 %v6775
      %v7787 = vunpack.c.l.b16 %v6776
      %v7788 = vunpack.c.h.b16 %v6776
      %v7789 = vunpack.c.l.b16 %v6777
      %v7790 = vunpack.c.h.b16 %v6777
      %v7791 = vunpack.c.l.b16 %v6778
      %v7792 = vunpack.c.h.b16 %v6778
      %v7793 = vunpack.c.l.b16 %v6779
      %v7794 = vunpack.c.h.b16 %v6779
      %v7795 = vunpack.c.l.b16 %v6780
      %v7796 = vunpack.c.h.b16 %v6780
      %v7797 = vunpack.c.l.b16 %v6781
      %v7798 = vunpack.c.h.b16 %v6781
      %v7799 = vunpack.c.l.b16 %v6782
      %v7800 = vunpack.c.h.b16 %v6782
      %v7801 = vunpack.c.l.b16 %v6783
      %v7802 = vunpack.c.h.b16 %v6783
      %v7803 = vunpack.c.l.b16 %v6784
      %v7804 = vunpack.c.h.b16 %v6784
      %v7805 = vunpack.c.l.b16 %v6785
      %v7806 = vunpack.c.h.b16 %v6785
      %v7807 = vunpack.c.l.b16 %v6786
      %v7808 = vunpack.c.h.b16 %v6786
      %v7809 = vunpack.c.l.b16 %v6787
      %v7810 = vunpack.c.h.b16 %v6787
      %v7811 = vunpack.c.l.b16 %v6788
      %v7812 = vunpack.c.h.b16 %v6788
      %v7813 = vunpack.c.l.b16 %v6789
      %v7814 = vunpack.c.h.b16 %v6789
      %v7815 = vunpack.c.l.b16 %v6790
      %v7816 = vunpack.c.h.b16 %v6790
      %v7817 = vunpack.c.l.b16 %v6791
      %v7818 = vunpack.c.h.b16 %v6791
      %v7819 = vunpack.c.l.b16 %v6792
      %v7820 = vunpack.c.h.b16 %v6792
      %v7821 = vunpack.c.l.b16 %v6793
      %v7822 = vunpack.c.h.b16 %v6793
      %v7823 = vunpack.c.l.b16 %v6794
      %v7824 = vunpack.c.h.b16 %v6794
      %v7825 = vunpack.c.l.b16 %v6795
      %v7826 = vunpack.c.h.b16 %v6795
      %v7827 = vunpack.c.l.b16 %v6796
      %v7828 = vunpack.c.h.b16 %v6796
      %v7829 = vunpack.c.l.b16 %v6797
      %v7830 = vunpack.c.h.b16 %v6797
      %v7831 = vunpack.c.l.b16 %v6798
      %v7832 = vunpack.c.h.b16 %v6798
      %v7833 = vunpack.c.l.b16 %v6799
      %v7834 = vunpack.c.h.b16 %v6799
      %v7835 = vunpack.c.l.b16 %v6800
      %v7836 = vunpack.c.h.b16 %v6800
      %v7837 = vunpack.c.l.b16 %v6801
      %v7838 = vunpack.c.h.b16 %v6801
      %v7839 = vunpack.c.l.b16 %v6802
      %v7840 = vunpack.c.h.b16 %v6802
      %v7841 = vunpack.c.l.b16 %v6803
      %v7842 = vunpack.c.h.b16 %v6803
      %v7843 = vunpack.c.l.b16 %v6804
      %v7844 = vunpack.c.h.b16 %v6804
      %v7845 = vunpack.c.l.b16 %v6805
      %v7846 = vunpack.c.h.b16 %v6805
      %v7847 = vunpack.c.l.b16 %v6806
      %v7848 = vunpack.c.h.b16 %v6806
      %v7849 = vunpack.c.l.b16 %v6807
      %v7850 = vunpack.c.h.b16 %v6807
      %v7851 = vunpack.c.l.b16 %v6808
      %v7852 = vunpack.c.h.b16 %v6808
      %v7853 = vunpack.c.l.b16 %v6809
      %v7854 = vunpack.c.h.b16 %v6809
      %v7855 = vunpack.c.l.b16 %v6810
      %v7856 = vunpack.c.h.b16 %v6810
      %v7857 = vunpack.c.l.b16 %v6811
      %v7858 = vunpack.c.h.b16 %v6811
      %v7859 = vunpack.c.l.b16 %v6812
      %v7860 = vunpack.c.h.b16 %v6812
      %v7861 = vunpack.c.l.b16 %v6813
      %v7862 = vunpack.c.h.b16 %v6813
      %v7863 = vunpack.c.l.b16 %v6814
      %v7864 = vunpack.c.h.b16 %v6814
      %v7865 = vunpack.c.l.b16 %v6815
      %v7866 = vunpack.c.h.b16 %v6815
      %v7867 = vunpack.c.l.b16 %v6816
      %v7868 = vunpack.c.h.b16 %v6816
      %v7869 = vunpack.c.l.b16 %v6817
      %v7870 = vunpack.c.h.b16 %v6817
      %v7871 = vunpack.c.l.b16 %v6818
      %v7872 = vunpack.c.h.b16 %v6818
      %v7873 = vunpack.c.l.b16 %v6819
      %v7874 = vunpack.c.h.b16 %v6819
      %v7875 = vunpack.c.l.b16 %v6820
      %v7876 = vunpack.c.h.b16 %v6820
      %v7877 = vunpack.c.l.b16 %v6821
      %v7878 = vunpack.c.h.b16 %v6821
      %v7879 = vunpack.c.l.b16 %v6822
      %v7880 = vunpack.c.h.b16 %v6822
      %v7881 = vunpack.c.l.b16 %v6823
      %v7882 = vunpack.c.h.b16 %v6823
      %v7883 = vunpack.c.l.b16 %v6824
      %v7884 = vunpack.c.h.b16 %v6824
      %v7885 = vunpack.c.l.b16 %v6825
      %v7886 = vunpack.c.h.b16 %v6825
      %v7887 = vunpack.c.l.b16 %v6826
      %v7888 = vunpack.c.h.b16 %v6826
      %v7889 = vunpack.c.l.b16 %v6827
      %v7890 = vunpack.c.h.b16 %v6827
      %v7891 = vunpack.c.l.b16 %v6828
      %v7892 = vunpack.c.h.b16 %v6828
      %v7893 = vunpack.c.l.b16 %v6829
      %v7894 = vunpack.c.h.b16 %v6829
      %v7895 = vunpack.c.l.b16 %v6830
      %v7896 = vunpack.c.h.b16 %v6830
      %v7897 = vunpack.c.l.b16 %v6831
      %v7898 = vunpack.c.h.b16 %v6831
      %v7899 = vunpack.c.l.b16 %v6832
      %v7900 = vunpack.c.h.b16 %v6832
      %v7901 = vunpack.c.l.b16 %v6833
      %v7902 = vunpack.c.h.b16 %v6833
      %v7903 = vunpack.c.l.b16 %v6834
      %v7904 = vunpack.c.h.b16 %v6834
      %v7905 = vunpack.c.l.b16 %v6835
      %v7906 = vunpack.c.h.b16 %v6835
      %v7907 = vunpack.c.l.b16 %v6836
      %v7908 = vunpack.c.h.b16 %v6836
      %v7909 = vunpack.c.l.b16 %v6837
      %v7910 = vunpack.c.h.b16 %v6837
      %v7911 = vunpack.c.l.b16 %v6838
      %v7912 = vunpack.c.h.b16 %v6838
      %v7913 = vunpack.c.l.b16 %v6839
      %v7914 = vunpack.c.h.b16 %v6839
      %v7915 = vunpack.c.l.b16 %v6840
      %v7916 = vunpack.c.h.b16 %v6840
      %v7917 = vunpack.c.l.b16 %v6841
      %v7918 = vunpack.c.h.b16 %v6841
      %v7919 = vunpack.c.l.b16 %v6842
      %v7920 = vunpack.c.h.b16 %v6842
      %v7921 = vunpack.c.l.b16 %v6843
      %v7922 = vunpack.c.h.b16 %v6843
      %v7923 = vunpack.c.l.b16 %v6844
      %v7924 = vunpack.c.h.b16 %v6844
      %v7925 = vunpack.c.l.b16 %v6845
      %v7926 = vunpack.c.h.b16 %v6845
      %v7927 = vunpack.c.l.b16 %v6846
      %v7928 = vunpack.c.h.b16 %v6846
      %v7929 = vunpack.c.l.b16 %v6847
      %v7930 = vunpack.c.h.b16 %v6847
      %v7931 = vunpack.c.l.b16 %v6848
      %v7932 = vunpack.c.h.b16 %v6848
      %v7933 = vunpack.c.l.b16 %v6849
      %v7934 = vunpack.c.h.b16 %v6849
      %v7935 = vunpack.c.l.b16 %v6850
      %v7936 = vunpack.c.h.b16 %v6850
      %v7937 = vunpack.c.l.b16 %v6851
      %v7938 = vunpack.c.h.b16 %v6851
      %v7939 = vunpack.c.l.b16 %v6852
      %v7940 = vunpack.c.h.b16 %v6852
      %v7941 = vunpack.c.l.b16 %v6853
      %v7942 = vunpack.c.h.b16 %v6853
      %v7943 = vunpack.c.l.b16 %v6854
      %v7944 = vunpack.c.h.b16 %v6854
      %v7945 = vunpack.c.l.b16 %v6855
      %v7946 = vunpack.c.h.b16 %v6855
      %v7947 = vunpack.c.l.b16 %v6856
      %v7948 = vunpack.c.h.b16 %v6856
      %v7949 = vunpack.c.l.b16 %v6857
      %v7950 = vunpack.c.h.b16 %v6857
      %v7951 = vunpack.c.l.b16 %v6858
      %v7952 = vunpack.c.h.b16 %v6858
      %v7953 = vunpack.c.l.b16 %v6859
      %v7954 = vunpack.c.h.b16 %v6859
      %v7955 = vunpack.c.l.b16 %v6860
      %v7956 = vunpack.c.h.b16 %v6860
      %v7957 = vunpack.c.l.b16 %v6861
      %v7958 = vunpack.c.h.b16 %v6861
      %v7959 = vunpack.c.l.b16 %v6862
      %v7960 = vunpack.c.h.b16 %v6862
      %v7961 = vunpack.c.l.b16 %v6863
      %v7962 = vunpack.c.h.b16 %v6863
      %v7963 = vunpack.c.l.b16 %v6864
      %v7964 = vunpack.c.h.b16 %v6864
      %v7965 = vunpack.c.l.b16 %v6865
      %v7966 = vunpack.c.h.b16 %v6865
      %v7967 = vunpack.c.l.b16 %v6866
      %v7968 = vunpack.c.h.b16 %v6866
      %v7969 = vunpack.c.l.b16 %v6867
      %v7970 = vunpack.c.h.b16 %v6867
      %v7971 = vunpack.c.l.b16 %v6868
      %v7972 = vunpack.c.h.b16 %v6868
      %v7973 = vunpack.c.l.b16 %v6869
      %v7974 = vunpack.c.h.b16 %v6869
      %v7975 = vunpack.c.l.b16 %v6870
      %v7976 = vunpack.c.h.b16 %v6870
      %v7977 = vunpack.c.l.b16 %v6871
      %v7978 = vunpack.c.h.b16 %v6871
      %v7979 = vunpack.c.l.b16 %v6872
      %v7980 = vunpack.c.h.b16 %v6872
      %v7981 = vunpack.c.l.b16 %v6873
      %v7982 = vunpack.c.h.b16 %v6873
      %v7983 = vunpack.c.l.b16 %v6874
      %v7984 = vunpack.c.h.b16 %v6874
      %v7985 = vunpack.c.l.b16 %v6875
      %v7986 = vunpack.c.h.b16 %v6875
      %v7987 = vunpack.c.l.b16 %v6876
      %v7988 = vunpack.c.h.b16 %v6876
      %v7989 = vunpack.c.l.b16 %v6877
      %v7990 = vunpack.c.h.b16 %v6877
      %v7991 = vunpack.c.l.b16 %v6878
      %v7992 = vunpack.c.h.b16 %v6878
      %v7993 = vunpack.c.l.b16 %v6879
      %v7994 = vunpack.c.h.b16 %v6879
      %v7995 = vunpack.c.l.b16 %v6880
      %v7996 = vunpack.c.h.b16 %v6880
      %v7997 = vunpack.c.l.b16 %v6881
      %v7998 = vunpack.c.h.b16 %v6881
      %v7999 = vunpack.c.l.b16 %v6882
      %v8000 = vunpack.c.h.b16 %v6882
      %v8001 = vunpack.c.l.b16 %v6883
      %v8002 = vunpack.c.h.b16 %v6883
      %v8003 = vunpack.c.l.b16 %v6884
      %v8004 = vunpack.c.h.b16 %v6884
      %v8005 = vunpack.c.l.b16 %v6885
      %v8006 = vunpack.c.h.b16 %v6885
      %v8007 = vunpack.c.l.b16 %v6886
      %v8008 = vunpack.c.h.b16 %v6886
      %v8009 = vunpack.c.l.b16 %v6887
      %v8010 = vunpack.c.h.b16 %v6887
      %v8011 = vunpack.c.l.b16 %v6888
      %v8012 = vunpack.c.h.b16 %v6888
      %v8013 = vunpack.c.l.b16 %v6889
      %v8014 = vunpack.c.h.b16 %v6889
      %v8015 = vunpack.c.l.b16 %v6890
      %v8016 = vunpack.c.h.b16 %v6890
      %v8017 = vunpack.c.l.b16 %v6891
      %v8018 = vunpack.c.h.b16 %v6891
      %v8019 = vunpack.c.l.b16 %v6892
      %v8020 = vunpack.c.h.b16 %v6892
      %v8021 = vunpack.c.l.b16 %v6893
      %v8022 = vunpack.c.h.b16 %v6893
      %v8023 = vunpack.c.l.b16 %v6894
      %v8024 = vunpack.c.h.b16 %v6894
      %v8025 = vunpack.c.l.b16 %v6895
      %v8026 = vunpack.c.h.b16 %v6895
      %v8027 = vunpack.c.l.b16 %v6896
      %v8028 = vunpack.c.h.b16 %v6896
      %v8029 = vunpack.c.l.b16 %v6897
      %v8030 = vunpack.c.h.b16 %v6897
      %v8031 = vunpack.c.l.b16 %v6898
      %v8032 = vunpack.c.h.b16 %v6898
      %v8033 = vunpack.c.l.b16 %v6899
      %v8034 = vunpack.c.h.b16 %v6899
      %v8035 = vunpack.c.l.b16 %v6900
      %v8036 = vunpack.c.h.b16 %v6900
      %v8037 = vunpack.c.l.b16 %v6901
      %v8038 = vunpack.c.h.b16 %v6901
      %v8039 = vunpack.c.l.b16 %v6902
      %v8040 = vunpack.c.h.b16 %v6902
      %v8041 = vunpack.c.l.b16 %v6903
      %v8042 = vunpack.c.h.b16 %v6903
      %v8043 = vunpack.c.l.b16 %v6904
      %v8044 = vunpack.c.h.b16 %v6904
      %v8045 = vunpack.c.l.b16 %v6905
      %v8046 = vunpack.c.h.b16 %v6905
      %v8047 = vunpack.c.l.b16 %v6906
      %v8048 = vunpack.c.h.b16 %v6906
      %v8049 = vunpack.c.l.b16 %v6907
      %v8050 = vunpack.c.h.b16 %v6907
      %v8051 = vunpack.c.l.b16 %v6908
      %v8052 = vunpack.c.h.b16 %v6908
      %v8053 = vunpack.c.l.b16 %v6909
      %v8054 = vunpack.c.h.b16 %v6909
      %v8055 = vunpack.c.l.b16 %v6910
      %v8056 = vunpack.c.h.b16 %v6910
      %v8057 = vunpack.c.l.b16 %v6911
      %v8058 = vunpack.c.h.b16 %v6911
      %v8059 = vunpack.c.l.b16 %v6912
      %v8060 = vunpack.c.h.b16 %v6912
      %v8061 = vunpack.c.l.b16 %v6913
      %v8062 = vunpack.c.h.b16 %v6913
      %v8063 = vunpack.c.l.b16 %v6914
      %v8064 = vunpack.c.h.b16 %v6914
      %v8065 = vunpack.c.l.b16 %v6915
      %v8066 = vunpack.c.h.b16 %v6915
      %v8067 = vunpack.c.l.b16 %v6916
      %v8068 = vunpack.c.h.b16 %v6916
      %v8069 = vunpack.c.l.b16 %v6917
      %v8070 = vunpack.c.h.b16 %v6917
      %v8071 = vunpack.c.l.b16 %v6918
      %v8072 = vunpack.c.h.b16 %v6918
      %v8073 = vunpack.c.l.b16 %v6919
      %v8074 = vunpack.c.h.b16 %v6919
      %v8075 = vunpack.c.l.b16 %v6920
      %v8076 = vunpack.c.h.b16 %v6920
      %v8077 = vunpack.c.l.b16 %v6921
      %v8078 = vunpack.c.h.b16 %v6921
      %v8079 = vunpack.c.l.b16 %v6922
      %v8080 = vunpack.c.h.b16 %v6922
      %v8081 = vunpack.c.l.b16 %v6923
      %v8082 = vunpack.c.h.b16 %v6923
      %v8083 = vunpack.c.l.b16 %v6924
      %v8084 = vunpack.c.h.b16 %v6924
      %v8085 = vunpack.c.l.b16 %v6925
      %v8086 = vunpack.c.h.b16 %v6925
      %v8087 = vunpack.c.l.b16 %v6926
      %v8088 = vunpack.c.h.b16 %v6926
      %v8089 = vunpack.c.l.b16 %v6927
      %v8090 = vunpack.c.h.b16 %v6927
      %v8091 = vunpack.c.l.b16 %v6928
      %v8092 = vunpack.c.h.b16 %v6928
      %v8093 = vunpack.c.l.b16 %v6929
      %v8094 = vunpack.c.h.b16 %v6929
      %v8095 = vunpack.c.l.b16 %v6930
      %v8096 = vunpack.c.h.b16 %v6930
      %v8097 = vunpack.c.l.b16 %v6931
      %v8098 = vunpack.c.h.b16 %v6931
      %v8099 = vunpack.c.l.b16 %v6932
      %v8100 = vunpack.c.h.b16 %v6932
      %v8101 = vunpack.c.l.b16 %v6933
      %v8102 = vunpack.c.h.b16 %v6933
      %v8103 = vunpack.c.l.b16 %v6934
      %v8104 = vunpack.c.h.b16 %v6934
      %v8105 = vunpack.c.l.b16 %v6935
      %v8106 = vunpack.c.h.b16 %v6935
      %v8107 = vunpack.c.l.b16 %v6936
      %v8108 = vunpack.c.h.b16 %v6936
      %v8109 = vunpack.c.l.b16 %v6937
      %v8110 = vunpack.c.h.b16 %v6937
      %v8111 = vunpack.c.l.b16 %v6938
      %v8112 = vunpack.c.h.b16 %v6938
      %v8113 = vunpack.c.l.b16 %v6939
      %v8114 = vunpack.c.h.b16 %v6939
      %v8115 = vunpack.c.l.b16 %v6940
      %v8116 = vunpack.c.h.b16 %v6940
      %v8117 = vunpack.c.l.b16 %v6941
      %v8118 = vunpack.c.h.b16 %v6941
      %v8119 = vunpack.c.l.b16 %v6942
      %v8120 = vunpack.c.h.b16 %v6942
      %v8121 = vunpack.c.l.b16 %v6943
      %v8122 = vunpack.c.h.b16 %v6943
      %v8123 = vunpack.c.l.b16 %v6944
      %v8124 = vunpack.c.h.b16 %v6944
      %v8125 = vunpack.c.l.b16 %v6945
      %v8126 = vunpack.c.h.b16 %v6945
      %v8127 = vunpack.c.l.b16 %v6946
      %v8128 = vunpack.c.h.b16 %v6946
      %v8129 = vunpack.c.l.b16 %v6947
      %v8130 = vunpack.c.h.b16 %v6947
      %v8131 = vunpack.c.l.b16 %v6948
      %v8132 = vunpack.c.h.b16 %v6948
      %v8133 = vunpack.c.l.b16 %v6949
      %v8134 = vunpack.c.h.b16 %v6949
      %v8135 = vunpack.c.l.b16 %v6950
      %v8136 = vunpack.c.h.b16 %v6950
      %v8137 = vunpack.c.l.b16 %v6951
      %v8138 = vunpack.c.h.b16 %v6951
      %v8139 = vunpack.c.l.b16 %v6952
      %v8140 = vunpack.c.h.b16 %v6952
      %v8141 = vunpack.c.l.b16 %v6953
      %v8142 = vunpack.c.h.b16 %v6953
      %v8143 = vunpack.c.l.b16 %v6954
      %v8144 = vunpack.c.h.b16 %v6954
      %v8145 = vunpack.c.l.b16 %v6955
      %v8146 = vunpack.c.h.b16 %v6955
      %v8147 = vunpack.c.l.b16 %v6956
      %v8148 = vunpack.c.h.b16 %v6956
      %v8149 = vunpack.c.l.b16 %v6957
      %v8150 = vunpack.c.h.b16 %v6957
      %v8151 = vunpack.c.l.b16 %v6958
      %v8152 = vunpack.c.h.b16 %v6958
      %v8153 = vunpack.c.l.b16 %v6959
      %v8154 = vunpack.c.h.b16 %v6959
      %v8155 = vunpack.c.l.b16 %v6960
      %v8156 = vunpack.c.h.b16 %v6960
      %v8157 = vunpack.c.l.b16 %v6961
      %v8158 = vunpack.c.h.b16 %v6961
      %v8159 = vunpack.c.l.b16 %v6962
      %v8160 = vunpack.c.h.b16 %v6962
      %v8161 = vunpack.c.l.b16 %v6963
      %v8162 = vunpack.c.h.b16 %v6963
      %v8163 = vunpack.c.l.b16 %v6964
      %v8164 = vunpack.c.h.b16 %v6964
      %v8165 = vunpack.c.l.b16 %v6965
      %v8166 = vunpack.c.h.b16 %v6965
      %v8167 = vunpack.c.l.b16 %v6966
      %v8168 = vunpack.c.h.b16 %v6966
      %v8169 = vunpack.c.l.b16 %v6967
      %v8170 = vunpack.c.h.b16 %v6967
      %v8171 = vunpack.c.l.b16 %v6968
      %v8172 = vunpack.c.h.b16 %v6968
      %v8173 = vunpack.c.l.b16 %v6969
      %v8174 = vunpack.c.h.b16 %v6969
      %v8175 = vunpack.c.l.b16 %v6970
      %v8176 = vunpack.c.h.b16 %v6970
      %v8177 = vunpack.c.l.b16 %v6971
      %v8178 = vunpack.c.h.b16 %v6971
      %v8179 = vunpack.c.l.b16 %v6972
      %v8180 = vunpack.c.h.b16 %v6972
      %v8181 = vunpack.c.l.b16 %v6973
      %v8182 = vunpack.c.h.b16 %v6973
      %v8183 = vunpack.c.l.b16 %v6974
      %v8184 = vunpack.c.h.b16 %v6974
      %v8185 = vunpack.c.l.b16 %v6975
      %v8186 = vunpack.c.h.b16 %v6975
      %v8187 = vunpack.c.l.b16 %v6976
      %v8188 = vunpack.c.h.b16 %v6976
      %v8189 = vunpack.c.l.b16 %v6977
      %v8190 = vunpack.c.h.b16 %v6977
      %v8191 = vunpack.c.l.b16 %v6978
      %v8192 = vunpack.c.h.b16 %v6978
      %v8193 = vunpack.c.l.b16 %v6979
      %v8194 = vunpack.c.h.b16 %v6979
      %v8195 = vunpack.c.l.b16 %v6980
      %v8196 = vunpack.c.h.b16 %v6980
      %v8197 = vunpack.c.l.b16 %v6981
      %v8198 = vunpack.c.h.b16 %v6981
      %v8199 = vunpack.c.l.b16 %v6982
      %v8200 = vunpack.c.h.b16 %v6982
      %v8201 = vunpack.c.l.b16 %v6983
      %v8202 = vunpack.c.h.b16 %v6983
      %v8203 = vunpack.c.l.b16 %v6984
      %v8204 = vunpack.c.h.b16 %v6984
      %v8205 = vunpack.c.l.b16 %v6985
      %v8206 = vunpack.c.h.b16 %v6985
      %v8207 = vunpack.c.l.b16 %v6986
      %v8208 = vunpack.c.h.b16 %v6986
      %v8209 = vunpack.c.l.b16 %v6987
      %v8210 = vunpack.c.h.b16 %v6987
      %v8211 = vunpack.c.l.b16 %v6988
      %v8212 = vunpack.c.h.b16 %v6988
      %v8213 = vunpack.c.l.b16 %v6989
      %v8214 = vunpack.c.h.b16 %v6989
      %v8215 = vunpack.c.l.b16 %v6990
      %v8216 = vunpack.c.h.b16 %v6990
      %v8217 = vunpack.c.l.b16 %v6991
      %v8218 = vunpack.c.h.b16 %v6991
      %v8219 = vunpack.c.l.b16 %v6992
      %v8220 = vunpack.c.h.b16 %v6992
      %v8221 = vunpack.c.l.b16 %v6993
      %v8222 = vunpack.c.h.b16 %v6993
      %v8223 = vunpack.c.l.b16 %v6994
      %v8224 = vunpack.c.h.b16 %v6994
      %v8225 = vunpack.c.l.b16 %v6995
      %v8226 = vunpack.c.h.b16 %v6995
      %v8227 = vunpack.c.l.b16 %v6996
      %v8228 = vunpack.c.h.b16 %v6996
      %v8229 = vunpack.c.l.b16 %v6997
      %v8230 = vunpack.c.h.b16 %v6997
      %v8231 = vunpack.c.l.b16 %v6998
      %v8232 = vunpack.c.h.b16 %v6998
      %v8233 = vunpack.c.l.b16 %v6999
      %v8234 = vunpack.c.h.b16 %v6999
      %v8235 = vunpack.c.l.b16 %v7000
      %v8236 = vunpack.c.h.b16 %v7000
      %v8237 = vunpack.c.l.b16 %v7001
      %v8238 = vunpack.c.h.b16 %v7001
      %v8239 = vunpack.c.l.b16 %v7002
      %v8240 = vunpack.c.h.b16 %v7002
      %v8241 = vunpack.c.l.b16 %v7003
      %v8242 = vunpack.c.h.b16 %v7003
      %v8243 = vunpack.c.l.b16 %v7004
      %v8244 = vunpack.c.h.b16 %v7004
      %v8245 = vunpack.c.l.b16 %v7005
      %v8246 = vunpack.c.h.b16 %v7005
      %v8247 = vunpack.c.l.b16 %v7006
      %v8248 = vunpack.c.h.b16 %v7006
      %v8249 = vunpack.c.l.b16 %v7007
      %v8250 = vunpack.c.h.b16 %v7007
      %v8251 = vunpack.c.l.b16 %v7008
      %v8252 = vunpack.c.h.b16 %v7008
      %v8253 = vunpack.c.l.b16 %v7009
      %v8254 = vunpack.c.h.b16 %v7009
      %v8255 = vunpack.c.l.b16 %v7010
      %v8256 = vunpack.c.h.b16 %v7010
      %v8257 = vunpack.c.l.b16 %v7011
      %v8258 = vunpack.c.h.b16 %v7011
      %v8259 = vunpack.c.l.b16 %v7012
      %v8260 = vunpack.c.h.b16 %v7012
      %v8261 = vunpack.c.l.b16 %v7013
      %v8262 = vunpack.c.h.b16 %v7013
      %v8263 = vunpack.c.l.b16 %v7014
      %v8264 = vunpack.c.h.b16 %v7014
      %v8265 = vunpack.c.l.b16 %v7015
      %v8266 = vunpack.c.h.b16 %v7015
      %v8267 = vunpack.c.l.b16 %v7016
      %v8268 = vunpack.c.h.b16 %v7016
      %v8269 = vunpack.c.l.b16 %v7017
      %v8270 = vunpack.c.h.b16 %v7017
      %v8271 = vunpack.c.l.b16 %v7018
      %v8272 = vunpack.c.h.b16 %v7018
      %v8273 = vunpack.c.l.b16 %v7019
      %v8274 = vunpack.c.h.b16 %v7019
      %v8275 = vunpack.c.l.b16 %v7020
      %v8276 = vunpack.c.h.b16 %v7020
      %v8277 = vunpack.c.l.b16 %v7021
      %v8278 = vunpack.c.h.b16 %v7021
      %v8279 = vunpack.c.l.b16 %v7022
      %v8280 = vunpack.c.h.b16 %v7022
      %v8281 = vunpack.c.l.b16 %v7023
      %v8282 = vunpack.c.h.b16 %v7023
      %v8283 = vunpack.c.l.b16 %v7024
      %v8284 = vunpack.c.h.b16 %v7024
      %v8285 = vunpack.c.l.b16 %v7025
      %v8286 = vunpack.c.h.b16 %v7025
      %v8287 = vunpack.c.l.b16 %v7026
      %v8288 = vunpack.c.h.b16 %v7026
      %v8289 = vunpack.c.l.b16 %v7027
      %v8290 = vunpack.c.h.b16 %v7027
      %v8291 = vunpack.c.l.b16 %v7028
      %v8292 = vunpack.c.h.b16 %v7028
      %v8293 = vunpack.c.l.b16 %v7029
      %v8294 = vunpack.c.h.b16 %v7029
      %v8295 = vunpack.c.l.b16 %v7030
      %v8296 = vunpack.c.h.b16 %v7030
      %v8297 = vunpack.c.l.b16 %v7031
      %v8298 = vunpack.c.h.b16 %v7031
      %v8299 = vunpack.c.l.b16 %v7032
      %v8300 = vunpack.c.h.b16 %v7032
      %v8301 = vunpack.c.l.b16 %v7033
      %v8302 = vunpack.c.h.b16 %v7033
      %v8303 = vunpack.c.l.b16 %v7034
      %v8304 = vunpack.c.h.b16 %v7034
      %v8305 = vunpack.c.l.b16 %v7035
      %v8306 = vunpack.c.h.b16 %v7035
      %v8307 = vunpack.c.l.b16 %v7036
      %v8308 = vunpack.c.h.b16 %v7036
      %v8309 = vunpack.c.l.b16 %v7037
      %v8310 = vunpack.c.h.b16 %v7037
      %v8311 = vunpack.c.l.b16 %v7038
      %v8312 = vunpack.c.h.b16 %v7038
      %v8313 = vunpack.c.l.b16 %v7039
      %v8314 = vunpack.c.h.b16 %v7039
      %v8315 = vunpack.c.l.b16 %v7040
      %v8316 = vunpack.c.h.b16 %v7040
      %v8317 = vunpack.c.l.b16 %v7041
      %v8318 = vunpack.c.h.b16 %v7041
      %v8319 = vunpack.c.l.b16 %v7042
      %v8320 = vunpack.c.h.b16 %v7042
      %v8321 = vunpack.c.l.b16 %v7043
      %v8322 = vunpack.c.h.b16 %v7043
      %v8323 = vunpack.c.l.b16 %v7044
      %v8324 = vunpack.c.h.b16 %v7044
      %v8325 = vunpack.c.l.b16 %v7045
      %v8326 = vunpack.c.h.b16 %v7045
      %v8327 = vunpack.c.l.b16 %v7046
      %v8328 = vunpack.c.h.b16 %v7046
      %v8329 = vunpack.c.l.b16 %v7047
      %v8330 = vunpack.c.h.b16 %v7047
      %v8331 = vunpack.c.l.b16 %v7048
      %v8332 = vunpack.c.h.b16 %v7048
      %v8333 = vunpack.c.l.b16 %v7049
      %v8334 = vunpack.c.h.b16 %v7049
      %v8335 = vunpack.c.l.b16 %v7050
      %v8336 = vunpack.c.h.b16 %v7050
      %v8337 = vunpack.c.l.b16 %v7051
      %v8338 = vunpack.c.h.b16 %v7051
      %v8339 = vunpack.c.l.b16 %v7052
      %v8340 = vunpack.c.h.b16 %v7052
      %v8341 = vunpack.c.l.b16 %v7053
      %v8342 = vunpack.c.h.b16 %v7053
      %v8343 = vunpack.c.l.b16 %v7054
      %v8344 = vunpack.c.h.b16 %v7054
      %v8345 = vunpack.c.l.b16 %v7055
      %v8346 = vunpack.c.h.b16 %v7055
      %v8347 = vunpack.c.l.b16 %v7056
      %v8348 = vunpack.c.h.b16 %v7056
      %v8349 = vunpack.c.l.b16 %v7057
      %v8350 = vunpack.c.h.b16 %v7057
      %v8351 = vunpack.c.l.b16 %v7058
      %v8352 = vunpack.c.h.b16 %v7058
      %v8353 = vunpack.c.l.b16 %v7059
      %v8354 = vunpack.c.h.b16 %v7059
      %v8355 = vunpack.c.l.b16 %v7060
      %v8356 = vunpack.c.h.b16 %v7060
      %v8357 = vunpack.c.l.b16 %v7061
      %v8358 = vunpack.c.h.b16 %v7061
      %v8359 = vunpack.c.l.b16 %v7062
      %v8360 = vunpack.c.h.b16 %v7062
      %v8361 = vunpack.c.l.b16 %v7063
      %v8362 = vunpack.c.h.b16 %v7063
      %v8363 = vunpack.c.l.b16 %v7064
      %v8364 = vunpack.c.h.b16 %v7064
      %v8365 = vunpack.c.l.b16 %v7065
      %v8366 = vunpack.c.h.b16 %v7065
      %v8367 = vunpack.c.l.b16 %v7066
      %v8368 = vunpack.c.h.b16 %v7066
      %v8369 = vunpack.c.l.b16 %v7067
      %v8370 = vunpack.c.h.b16 %v7067
      %v8371 = vunpack.c.l.b16 %v7068
      %v8372 = vunpack.c.h.b16 %v7068
      %v8373 = vunpack.c.l.b16 %v7069
      %v8374 = vunpack.c.h.b16 %v7069
      %v8375 = vunpack.c.l.b16 %v7070
      %v8376 = vunpack.c.h.b16 %v7070
      %v8377 = vunpack.c.l.b16 %v7071
      %v8378 = vunpack.c.h.b16 %v7071
      %v8379 = vunpack.c.l.b16 %v7072
      %v8380 = vunpack.c.h.b16 %v7072
      %v8381 = vunpack.c.l.b16 %v7073
      %v8382 = vunpack.c.h.b16 %v7073
      %v8383 = vunpack.c.l.b16 %v7074
      %v8384 = vunpack.c.h.b16 %v7074
      %v8385 = vunpack.c.l.b16 %v7075
      %v8386 = vunpack.c.h.b16 %v7075
      %v8387 = vunpack.c.l.b16 %v7076
      %v8388 = vunpack.c.h.b16 %v7076
      %v8389 = vunpack.c.l.b16 %v7077
      %v8390 = vunpack.c.h.b16 %v7077
      %v8391 = vunpack.c.l.b16 %v7078
      %v8392 = vunpack.c.h.b16 %v7078
      %v8393 = vunpack.c.l.b16 %v7079
      %v8394 = vunpack.c.h.b16 %v7079
      %v8395 = vunpack.c.l.b16 %v7080
      %v8396 = vunpack.c.h.b16 %v7080
      %v8397 = vunpack.c.l.b16 %v7081
      %v8398 = vunpack.c.h.b16 %v7081
      %v8399 = vunpack.c.l.b16 %v7082
      %v8400 = vunpack.c.h.b16 %v7082
      %v8401 = vunpack.c.l.b16 %v7083
      %v8402 = vunpack.c.h.b16 %v7083
      %v8403 = vunpack.c.l.b16 %v7084
      %v8404 = vunpack.c.h.b16 %v7084
      %v8405 = vunpack.c.l.b16 %v7085
      %v8406 = vunpack.c.h.b16 %v7085
      %v8407 = vunpack.c.l.b16 %v7086
      %v8408 = vunpack.c.h.b16 %v7086
      %v8409 = vunpack.c.l.b16 %v7087
      %v8410 = vunpack.c.h.b16 %v7087
      %v8411 = vunpack.c.l.b16 %v7088
      %v8412 = vunpack.c.h.b16 %v7088
      %v8413 = vunpack.c.l.b16 %v7089
      %v8414 = vunpack.c.h.b16 %v7089
      %v8415 = vunpack.c.l.b16 %v7090
      %v8416 = vunpack.c.h.b16 %v7090
      %v8417 = vunpack.c.l.b16 %v7091
      %v8418 = vunpack.c.h.b16 %v7091
      %v8419 = vunpack.c.l.b16 %v7092
      %v8420 = vunpack.c.h.b16 %v7092
      %v8421 = vunpack.c.l.b16 %v7093
      %v8422 = vunpack.c.h.b16 %v7093
      %v8423 = vunpack.c.l.b16 %v7094
      %v8424 = vunpack.c.h.b16 %v7094
      %v8425 = vunpack.c.l.b16 %v7095
      %v8426 = vunpack.c.h.b16 %v7095
      %v8427 = vunpack.c.l.b16 %v7096
      %v8428 = vunpack.c.h.b16 %v7096
      %v8429 = vunpack.c.l.b16 %v7097
      %v8430 = vunpack.c.h.b16 %v7097
      %v8431 = vunpack.c.l.b16 %v7098
      %v8432 = vunpack.c.h.b16 %v7098
      %v8433 = vunpack.c.l.b16 %v7099
      %v8434 = vunpack.c.h.b16 %v7099
      %v8435 = vunpack.c.l.b16 %v7100
      %v8436 = vunpack.c.h.b16 %v7100
      %v8437 = vunpack.c.l.b16 %v7101
      %v8438 = vunpack.c.h.b16 %v7101
      %v8439 = vunpack.c.l.b16 %v7102
      %v8440 = vunpack.c.h.b16 %v7102
      %v8441 = vunpack.c.l.b16 %v7103
      %v8442 = vunpack.c.h.b16 %v7103
      %v8443 = vunpack.c.l.b16 %v7104
      %v8444 = vunpack.c.h.b16 %v7104
      %v8445 = vunpack.c.l.b16 %v7105
      %v8446 = vunpack.c.h.b16 %v7105
      %v8447 = vunpack.c.l.b16 %v7106
      %v8448 = vunpack.c.h.b16 %v7106
      %v8449 = vunpack.c.l.b16 %v7107
      %v8450 = vunpack.c.h.b16 %v7107
      %v8451 = vunpack.c.l.b16 %v7108
      %v8452 = vunpack.c.h.b16 %v7108
      %v8453 = vunpack.c.l.b16 %v7109
      %v8454 = vunpack.c.h.b16 %v7109
      %v8455 = vunpack.c.l.b16 %v7110
      %v8456 = vunpack.c.h.b16 %v7110
      %v8457 = vunpack.c.l.b16 %v7111
      %v8458 = vunpack.c.h.b16 %v7111
      %v8459 = vunpack.c.l.b16 %v7112
      %v8460 = vunpack.c.h.b16 %v7112
      %v8461 = vunpack.c.l.b16 %v7113
      %v8462 = vunpack.c.h.b16 %v7113
      %v8463 = vunpack.c.l.b16 %v7114
      %v8464 = vunpack.c.h.b16 %v7114
      %v8465 = vunpack.c.l.b16 %v7115
      %v8466 = vunpack.c.h.b16 %v7115
      %v8467 = vunpack.c.l.b16 %v7116
      %v8468 = vunpack.c.h.b16 %v7116
      %v8469 = vunpack.c.l.b16 %v7117
      %v8470 = vunpack.c.h.b16 %v7117
      %v8471 = vunpack.c.l.b16 %v7118
      %v8472 = vunpack.c.h.b16 %v7118
      %v8473 = vunpack.c.l.b16 %v7119
      %v8474 = vunpack.c.h.b16 %v7119
      %v8475 = vunpack.c.l.b16 %v7120
      %v8476 = vunpack.c.h.b16 %v7120
      %v8477 = vunpack.c.l.b16 %v7121
      %v8478 = vunpack.c.h.b16 %v7121
      %v8479 = vunpack.c.l.b16 %v7122
      %v8480 = vunpack.c.h.b16 %v7122
      %v8481 = vunpack.c.l.b16 %v7123
      %v8482 = vunpack.c.h.b16 %v7123
      %v8483 = vunpack.c.l.b16 %v7124
      %v8484 = vunpack.c.h.b16 %v7124
      %v8485 = vunpack.c.l.b16 %v7125
      %v8486 = vunpack.c.h.b16 %v7125
      %v8487 = vunpack.c.l.b16 %v7126
      %v8488 = vunpack.c.h.b16 %v7126
      %v8489 = vunpack.c.l.b16 %v7127
      %v8490 = vunpack.c.h.b16 %v7127
      %v8491 = vunpack.c.l.b16 %v7128
      %v8492 = vunpack.c.h.b16 %v7128
      %v8493 = vunpack.c.l.b16 %v7129
      %v8494 = vunpack.c.h.b16 %v7129
      %v8495 = vunpack.c.l.b16 %v7130
      %v8496 = vunpack.c.h.b16 %v7130
      %v8497 = vunpack.c.l.b16 %v7131
      %v8498 = vunpack.c.h.b16 %v7131
      %v8499 = vunpack.c.l.b16 %v7132
      %v8500 = vunpack.c.h.b16 %v7132
      %v8501 = vunpack.c.l.b16 %v7133
      %v8502 = vunpack.c.h.b16 %v7133
      %v8503 = vunpack.c.l.b16 %v7134
      %v8504 = vunpack.c.h.b16 %v7134
      %v8505 = vunpack.c.l.b16 %v7135
      %v8506 = vunpack.c.h.b16 %v7135
      %v8507 = vunpack.c.l.b16 %v7136
      %v8508 = vunpack.c.h.b16 %v7136
      %v8509 = vunpack.c.l.b16 %v7137
      %v8510 = vunpack.c.h.b16 %v7137
      %v8511 = vunpack.c.l.b16 %v7138
      %v8512 = vunpack.c.h.b16 %v7138
      %v8513 = vunpack.c.l.b16 %v7139
      %v8514 = vunpack.c.h.b16 %v7139
      %v8515 = vunpack.c.l.b16 %v7140
      %v8516 = vunpack.c.h.b16 %v7140
      %v8517 = vunpack.c.l.b16 %v7141
      %v8518 = vunpack.c.h.b16 %v7141
      %v8519 = vunpack.c.l.b16 %v7142
      %v8520 = vunpack.c.h.b16 %v7142
      %v8521 = vunpack.c.l.b16 %v7143
      %v8522 = vunpack.c.h.b16 %v7143
      %v8523 = vunpack.c.l.b16 %v7144
      %v8524 = vunpack.c.h.b16 %v7144
      %v8525 = vunpack.c.l.b16 %v7145
      %v8526 = vunpack.c.h.b16 %v7145
      %v8527 = vunpack.c.l.b16 %v7146
      %v8528 = vunpack.c.h.b16 %v7146
      %v8529 = vunpack.c.l.b16 %v7147
      %v8530 = vunpack.c.h.b16 %v7147
      %v8531 = vunpack.c.l.b16 %v7148
      %v8532 = vunpack.c.h.b16 %v7148
      %v8533 = vunpack.c.l.b16 %v7149
      %v8534 = vunpack.c.h.b16 %v7149
      %v8535 = vunpack.c.l.b16 %v7150
      %v8536 = vunpack.c.h.b16 %v7150
      %v8537 = vunpack.c.l.b16 %v7151
      %v8538 = vunpack.c.h.b16 %v7151
      %v8539 = vunpack.c.l.b16 %v7152
      %v8540 = vunpack.c.h.b16 %v7152
      %v8541 = vunpack.c.l.b16 %v7153
      %v8542 = vunpack.c.h.b16 %v7153
      %v8543 = vunpack.c.l.b16 %v7154
      %v8544 = vunpack.c.h.b16 %v7154
      %v8545 = vunpack.c.l.b16 %v7155
      %v8546 = vunpack.c.h.b16 %v7155
      %v8547 = vunpack.c.l.b16 %v7156
      %v8548 = vunpack.c.h.b16 %v7156
      %v8549 = vunpack.c.l.b16 %v7157
      %v8550 = vunpack.c.h.b16 %v7157
      %v8551 = vunpack.c.l.b16 %v7158
      %v8552 = vunpack.c.h.b16 %v7158
      %v8553 = vunpack.c.l.b16 %v7159
      %v8554 = vunpack.c.h.b16 %v7159
      %v8555 = vunpack.c.l.b16 %v7160
      %v8556 = vunpack.c.h.b16 %v7160
      %v8557 = vunpack.c.l.b16 %v7161
      %v8558 = vunpack.c.h.b16 %v7161
      %v8559 = vunpack.c.l.b16 %v7162
      %v8560 = vunpack.c.h.b16 %v7162
      %v8561 = vunpack.c.l.b16 %v7163
      %v8562 = vunpack.c.h.b16 %v7163
      %v8563 = vunpack.c.l.b16 %v7164
      %v8564 = vunpack.c.h.b16 %v7164
      %v8565 = vunpack.c.l.b16 %v7165
      %v8566 = vunpack.c.h.b16 %v7165
      %v8567 = vunpack.c.l.b16 %v7166
      %v8568 = vunpack.c.h.b16 %v7166
      %v8569 = vpack.c.b16 %v7653, %v7649
      %v8570 = vpack.c.b16 %v7654, %v7650
      %v8571 = vpack.c.b16 %v7655, %v7651
      %v8572 = vpack.c.b16 %v7656, %v7652
      %v8573 = vpack.c.b16 %v7661, %v7657
      %v8574 = vpack.c.b16 %v7662, %v7658
      %v8575 = vpack.c.b16 %v7663, %v7659
      %v8576 = vpack.c.b16 %v7664, %v7660
      %v8577 = vpack.c.b16 %v7669, %v7665
      %v8578 = vpack.c.b16 %v7670, %v7666
      %v8579 = vpack.c.b16 %v7671, %v7667
      %v8580 = vpack.c.b16 %v7672, %v7668
      %v8581 = vpack.c.b16 %v7677, %v7673
      %v8582 = vpack.c.b16 %v7678, %v7674
      %v8583 = vpack.c.b16 %v7679, %v7675
      %v8584 = vpack.c.b16 %v7680, %v7676
      %v8585 = vpack.c.b16 %v7685, %v7681
      %v8586 = vpack.c.b16 %v7686, %v7682
      %v8587 = vpack.c.b16 %v7687, %v7683
      %v8588 = vpack.c.b16 %v7688, %v7684
      %v8589 = vpack.c.b16 %v7693, %v7689
      %v8590 = vpack.c.b16 %v7694, %v7690
      %v8591 = vpack.c.b16 %v7695, %v7691
      %v8592 = vpack.c.b16 %v7696, %v7692
      %v8593 = vpack.c.b16 %v7701, %v7697
      %v8594 = vpack.c.b16 %v7702, %v7698
      %v8595 = vpack.c.b16 %v7703, %v7699
      %v8596 = vpack.c.b16 %v7704, %v7700
      %v8597 = vpack.c.b16 %v7709, %v7705
      %v8598 = vpack.c.b16 %v7710, %v7706
      %v8599 = vpack.c.b16 %v7711, %v7707
      %v8600 = vpack.c.b16 %v7712, %v7708
      %v8601 = vpack.c.b16 %v7717, %v7713
      %v8602 = vpack.c.b16 %v7718, %v7714
      %v8603 = vpack.c.b16 %v7719, %v7715
      %v8604 = vpack.c.b16 %v7720, %v7716
      %v8605 = vpack.c.b16 %v7725, %v7721
      %v8606 = vpack.c.b16 %v7726, %v7722
      %v8607 = vpack.c.b16 %v7727, %v7723
      %v8608 = vpack.c.b16 %v7728, %v7724
      %v8609 = vpack.c.b16 %v7733, %v7729
      %v8610 = vpack.c.b16 %v7734, %v7730
      %v8611 = vpack.c.b16 %v7735, %v7731
      %v8612 = vpack.c.b16 %v7736, %v7732
      %v8613 = vpack.c.b16 %v7741, %v7737
      %v8614 = vpack.c.b16 %v7742, %v7738
      %v8615 = vpack.c.b16 %v7743, %v7739
      %v8616 = vpack.c.b16 %v7744, %v7740
      %v8617 = vpack.c.b16 %v7749, %v7745
      %v8618 = vpack.c.b16 %v7750, %v7746
      %v8619 = vpack.c.b16 %v7751, %v7747
      %v8620 = vpack.c.b16 %v7752, %v7748
      %v8621 = vpack.c.b16 %v7757, %v7753
      %v8622 = vpack.c.b16 %v7758, %v7754
      %v8623 = vpack.c.b16 %v7759, %v7755
      %v8624 = vpack.c.b16 %v7760, %v7756
      %v8625 = vpack.c.b16 %v7765, %v7761
      %v8626 = vpack.c.b16 %v7766, %v7762
      %v8627 = vpack.c.b16 %v7767, %v7763
      %v8628 = vpack.c.b16 %v7768, %v7764
      %v8629 = vpack.c.b16 %v7773, %v7769
      %v8630 = vpack.c.b16 %v7774, %v7770
      %v8631 = vpack.c.b16 %v7775, %v7771
      %v8632 = vpack.c.b16 %v7776, %v7772
      %v8633 = vpack.c.b16 %v7781, %v7777
      %v8634 = vpack.c.b16 %v7782, %v7778
      %v8635 = vpack.c.b16 %v7783, %v7779
      %v8636 = vpack.c.b16 %v7784, %v7780
      %v8637 = vpack.c.b16 %v7789, %v7785
      %v8638 = vpack.c.b16 %v7790, %v7786
      %v8639 = vpack.c.b16 %v7791, %v7787
      %v8640 = vpack.c.b16 %v7792, %v7788
      %v8641 = vpack.c.b16 %v7797, %v7793
      %v8642 = vpack.c.b16 %v7798, %v7794
      %v8643 = vpack.c.b16 %v7799, %v7795
      %v8644 = vpack.c.b16 %v7800, %v7796
      %v8645 = vpack.c.b16 %v7805, %v7801
      %v8646 = vpack.c.b16 %v7806, %v7802
      %v8647 = vpack.c.b16 %v7807, %v7803
      %v8648 = vpack.c.b16 %v7808, %v7804
      %v8649 = vpack.c.b16 %v7813, %v7809
      %v8650 = vpack.c.b16 %v7814, %v7810
      %v8651 = vpack.c.b16 %v7815, %v7811
      %v8652 = vpack.c.b16 %v7816, %v7812
      %v8653 = vpack.c.b16 %v7821, %v7817
      %v8654 = vpack.c.b16 %v7822, %v7818
      %v8655 = vpack.c.b16 %v7823, %v7819
      %v8656 = vpack.c.b16 %v7824, %v7820
      %v8657 = vpack.c.b16 %v7829, %v7825
      %v8658 = vpack.c.b16 %v7830, %v7826
      %v8659 = vpack.c.b16 %v7831, %v7827
      %v8660 = vpack.c.b16 %v7832, %v7828
      %v8661 = vpack.c.b16 %v7837, %v7833
      %v8662 = vpack.c.b16 %v7838, %v7834
      %v8663 = vpack.c.b16 %v7839, %v7835
      %v8664 = vpack.c.b16 %v7840, %v7836
      %v8665 = vpack.c.b16 %v7845, %v7841
      %v8666 = vpack.c.b16 %v7846, %v7842
      %v8667 = vpack.c.b16 %v7847, %v7843
      %v8668 = vpack.c.b16 %v7848, %v7844
      %v8669 = vpack.c.b16 %v7853, %v7849
      %v8670 = vpack.c.b16 %v7854, %v7850
      %v8671 = vpack.c.b16 %v7855, %v7851
      %v8672 = vpack.c.b16 %v7856, %v7852
      %v8673 = vpack.c.b16 %v7861, %v7857
      %v8674 = vpack.c.b16 %v7862, %v7858
      %v8675 = vpack.c.b16 %v7863, %v7859
      %v8676 = vpack.c.b16 %v7864, %v7860
      %v8677 = vpack.c.b16 %v7869, %v7865
      %v8678 = vpack.c.b16 %v7870, %v7866
      %v8679 = vpack.c.b16 %v7871, %v7867
      %v8680 = vpack.c.b16 %v7872, %v7868
      %v8681 = vpack.c.b16 %v7877, %v7873
      %v8682 = vpack.c.b16 %v7878, %v7874
      %v8683 = vpack.c.b16 %v7879, %v7875
      %v8684 = vpack.c.b16 %v7880, %v7876
      %v8685 = vpack.c.b16 %v7885, %v7881
      %v8686 = vpack.c.b16 %v7886, %v7882
      %v8687 = vpack.c.b16 %v7887, %v7883
      %v8688 = vpack.c.b16 %v7888, %v7884
      %v8689 = vpack.c.b16 %v7893, %v7889
      %v8690 = vpack.c.b16 %v7894, %v7890
      %v8691 = vpack.c.b16 %v7895, %v7891
      %v8692 = vpack.c.b16 %v7896, %v7892
      %v8693 = vpack.c.b16 %v7901, %v7897
      %v8694 = vpack.c.b16 %v7902, %v7898
      %v8695 = vpack.c.b16 %v7903, %v7899
      %v8696 = vpack.c.b16 %v7904, %v7900
      %v8697 = vpack.c.b16 %v7909, %v7905
      %v8698 = vpack.c.b16 %v7910, %v7906
      %v8699 = vpack.c.b16 %v7911, %v7907
      %v8700 = vpack.c.b16 %v7912, %v7908
      %v8701 = vpack.c.b16 %v7917, %v7913
      %v8702 = vpack.c.b16 %v7918, %v7914
      %v8703 = vpack.c.b16 %v7919, %v7915
      %v8704 = vpack.c.b16 %v7920, %v7916
      %v8705 = vpack.c.b16 %v7925, %v7921
      %v8706 = vpack.c.b16 %v7926, %v7922
      %v8707 = vpack.c.b16 %v7927, %v7923
      %v8708 = vpack.c.b16 %v7928, %v7924
      %v8709 = vpack.c.b16 %v7933, %v7929
      %v8710 = vpack.c.b16 %v7934, %v7930
      %v8711 = vpack.c.b16 %v7935, %v7931
      %v8712 = vpack.c.b16 %v7936, %v7932
      %v8713 = vpack.c.b16 %v7941, %v7937
      %v8714 = vpack.c.b16 %v7942, %v7938
      %v8715 = vpack.c.b16 %v7943, %v7939
      %v8716 = vpack.c.b16 %v7944, %v7940
      %v8717 = vpack.c.b16 %v7949, %v7945
      %v8718 = vpack.c.b16 %v7950, %v7946
      %v8719 = vpack.c.b16 %v7951, %v7947
      %v8720 = vpack.c.b16 %v7952, %v7948
      %v8721 = vpack.c.b16 %v7957, %v7953
      %v8722 = vpack.c.b16 %v7958, %v7954
      %v8723 = vpack.c.b16 %v7959, %v7955
      %v8724 = vpack.c.b16 %v7960, %v7956
      %v8725 = vpack.c.b16 %v7965, %v7961
      %v8726 = vpack.c.b16 %v7966, %v7962
      %v8727 = vpack.c.b16 %v7967, %v7963
      %v8728 = vpack.c.b16 %v7968, %v7964
      %v8729 = vpack.c.b16 %v7973, %v7969
      %v8730 = vpack.c.b16 %v7974, %v7970
      %v8731 = vpack.c.b16 %v7975, %v7971
      %v8732 = vpack.c.b16 %v7976, %v7972
      %v8733 = vpack.c.b16 %v7981, %v7977
      %v8734 = vpack.c.b16 %v7982, %v7978
      %v8735 = vpack.c.b16 %v7983, %v7979
      %v8736 = vpack.c.b16 %v7984, %v7980
      %v8737 = vpack.c.b16 %v7989, %v7985
      %v8738 = vpack.c.b16 %v7990, %v7986
      %v8739 = vpack.c.b16 %v7991, %v7987
      %v8740 = vpack.c.b16 %v7992, %v7988
      %v8741 = vpack.c.b16 %v7997, %v7993
      %v8742 = vpack.c.b16 %v7998, %v7994
      %v8743 = vpack.c.b16 %v7999, %v7995
      %v8744 = vpack.c.b16 %v8000, %v7996
      %v8745 = vpack.c.b16 %v8005, %v8001
      %v8746 = vpack.c.b16 %v8006, %v8002
      %v8747 = vpack.c.b16 %v8007, %v8003
      %v8748 = vpack.c.b16 %v8008, %v8004
      %v8749 = vpack.c.b16 %v8013, %v8009
      %v8750 = vpack.c.b16 %v8014, %v8010
      %v8751 = vpack.c.b16 %v8015, %v8011
      %v8752 = vpack.c.b16 %v8016, %v8012
      %v8753 = vpack.c.b16 %v8021, %v8017
      %v8754 = vpack.c.b16 %v8022, %v8018
      %v8755 = vpack.c.b16 %v8023, %v8019
      %v8756 = vpack.c.b16 %v8024, %v8020
      %v8757 = vpack.c.b16 %v8029, %v8025
      %v8758 = vpack.c.b16 %v8030, %v8026
      %v8759 = vpack.c.b16 %v8031, %v8027
      %v8760 = vpack.c.b16 %v8032, %v8028
      %v8761 = vpack.c.b16 %v8037, %v8033
      %v8762 = vpack.c.b16 %v8038, %v8034
      %v8763 = vpack.c.b16 %v8039, %v8035
      %v8764 = vpack.c.b16 %v8040, %v8036
      %v8765 = vpack.c.b16 %v8045, %v8041
      %v8766 = vpack.c.b16 %v8046, %v8042
      %v8767 = vpack.c.b16 %v8047, %v8043
      %v8768 = vpack.c.b16 %v8048, %v8044
      %v8769 = vpack.c.b16 %v8053, %v8049
      %v8770 = vpack.c.b16 %v8054, %v8050
      %v8771 = vpack.c.b16 %v8055, %v8051
      %v8772 = vpack.c.b16 %v8056, %v8052
      %v8773 = vpack.c.b16 %v8061, %v8057
      %v8774 = vpack.c.b16 %v8062, %v8058
      %v8775 = vpack.c.b16 %v8063, %v8059
      %v8776 = vpack.c.b16 %v8064, %v8060
      %v8777 = vpack.c.b16 %v8069, %v8065
      %v8778 = vpack.c.b16 %v8070, %v8066
      %v8779 = vpack.c.b16 %v8071, %v8067
      %v8780 = vpack.c.b16 %v8072, %v8068
      %v8781 = vpack.c.b16 %v8077, %v8073
      %v8782 = vpack.c.b16 %v8078, %v8074
      %v8783 = vpack.c.b16 %v8079, %v8075
      %v8784 = vpack.c.b16 %v8080, %v8076
      %v8785 = vpack.c.b16 %v8085, %v8081
      %v8786 = vpack.c.b16 %v8086, %v8082
      %v8787 = vpack.c.b16 %v8087, %v8083
      %v8788 = vpack.c.b16 %v8088, %v8084
      %v8789 = vpack.c.b16 %v8093, %v8089
      %v8790 = vpack.c.b16 %v8094, %v8090
      %v8791 = vpack.c.b16 %v8095, %v8091
      %v8792 = vpack.c.b16 %v8096, %v8092
      %v8793 = vpack.c.b16 %v8101, %v8097
      %v8794 = vpack.c.b16 %v8102, %v8098
      %v8795 = vpack.c.b16 %v8103, %v8099
      %v8796 = vpack.c.b16 %v8104, %v8100
      %v8797 = vpack.c.b16 %v8109, %v8105
      %v8798 = vpack.c.b16 %v8110, %v8106
      %v8799 = vpack.c.b16 %v8111, %v8107
      %v8800 = vpack.c.b16 %v8112, %v8108
      %v8801 = vpack.c.b16 %v8117, %v8113
      %v8802 = vpack.c.b16 %v8118, %v8114
      %v8803 = vpack.c.b16 %v8119, %v8115
      %v8804 = vpack.c.b16 %v8120, %v8116
      %v8805 = vpack.c.b16 %v8125, %v8121
      %v8806 = vpack.c.b16 %v8126, %v8122
      %v8807 = vpack.c.b16 %v8127, %v8123
      %v8808 = vpack.c.b16 %v8128, %v8124
      %v8809 = vpack.c.b16 %v8133, %v8129
      %v8810 = vpack.c.b16 %v8134, %v8130
      %v8811 = vpack.c.b16 %v8135, %v8131
      %v8812 = vpack.c.b16 %v8136, %v8132
      %v8813 = vpack.c.b16 %v8141, %v8137
      %v8814 = vpack.c.b16 %v8142, %v8138
      %v8815 = vpack.c.b16 %v8143, %v8139
      %v8816 = vpack.c.b16 %v8144, %v8140
      %v8817 = vpack.c.b16 %v8149, %v8145
      %v8818 = vpack.c.b16 %v8150, %v8146
      %v8819 = vpack.c.b16 %v8151, %v8147
      %v8820 = vpack.c.b16 %v8152, %v8148
      %v8821 = vpack.c.b16 %v8157, %v8153
      %v8822 = vpack.c.b16 %v8158, %v8154
      %v8823 = vpack.c.b16 %v8159, %v8155
      %v8824 = vpack.c.b16 %v8160, %v8156
      %v8825 = vpack.c.b16 %v8165, %v8161
      %v8826 = vpack.c.b16 %v8166, %v8162
      %v8827 = vpack.c.b16 %v8167, %v8163
      %v8828 = vpack.c.b16 %v8168, %v8164
      %v8829 = vpack.c.b16 %v8173, %v8169
      %v8830 = vpack.c.b16 %v8174, %v8170
      %v8831 = vpack.c.b16 %v8175, %v8171
      %v8832 = vpack.c.b16 %v8176, %v8172
      %v8833 = vpack.c.b16 %v8181, %v8177
      %v8834 = vpack.c.b16 %v8182, %v8178
      %v8835 = vpack.c.b16 %v8183, %v8179
      %v8836 = vpack.c.b16 %v8184, %v8180
      %v8837 = vpack.c.b16 %v8189, %v8185
      %v8838 = vpack.c.b16 %v8190, %v8186
      %v8839 = vpack.c.b16 %v8191, %v8187
      %v8840 = vpack.c.b16 %v8192, %v8188
      %v8841 = vpack.c.b16 %v8197, %v8193
      %v8842 = vpack.c.b16 %v8198, %v8194
      %v8843 = vpack.c.b16 %v8199, %v8195
      %v8844 = vpack.c.b16 %v8200, %v8196
      %v8845 = vpack.c.b16 %v8205, %v8201
      %v8846 = vpack.c.b16 %v8206, %v8202
      %v8847 = vpack.c.b16 %v8207, %v8203
      %v8848 = vpack.c.b16 %v8208, %v8204
      %v8849 = vpack.c.b16 %v8213, %v8209
      %v8850 = vpack.c.b16 %v8214, %v8210
      %v8851 = vpack.c.b16 %v8215, %v8211
      %v8852 = vpack.c.b16 %v8216, %v8212
      %v8853 = vpack.c.b16 %v8221, %v8217
      %v8854 = vpack.c.b16 %v8222, %v8218
      %v8855 = vpack.c.b16 %v8223, %v8219
      %v8856 = vpack.c.b16 %v8224, %v8220
      %v8857 = vpack.c.b16 %v8229, %v8225
      %v8858 = vpack.c.b16 %v8230, %v8226
      %v8859 = vpack.c.b16 %v8231, %v8227
      %v8860 = vpack.c.b16 %v8232, %v8228
      %v8861 = vpack.c.b16 %v8237, %v8233
      %v8862 = vpack.c.b16 %v8238, %v8234
      %v8863 = vpack.c.b16 %v8239, %v8235
      %v8864 = vpack.c.b16 %v8240, %v8236
      %v8865 = vpack.c.b16 %v8245, %v8241
      %v8866 = vpack.c.b16 %v8246, %v8242
      %v8867 = vpack.c.b16 %v8247, %v8243
      %v8868 = vpack.c.b16 %v8248, %v8244
      %v8869 = vpack.c.b16 %v8253, %v8249
      %v8870 = vpack.c.b16 %v8254, %v8250
      %v8871 = vpack.c.b16 %v8255, %v8251
      %v8872 = vpack.c.b16 %v8256, %v8252
      %v8873 = vpack.c.b16 %v8261, %v8257
      %v8874 = vpack.c.b16 %v8262, %v8258
      %v8875 = vpack.c.b16 %v8263, %v8259
      %v8876 = vpack.c.b16 %v8264, %v8260
      %v8877 = vpack.c.b16 %v8269, %v8265
      %v8878 = vpack.c.b16 %v8270, %v8266
      %v8879 = vpack.c.b16 %v8271, %v8267
      %v8880 = vpack.c.b16 %v8272, %v8268
      %v8881 = vpack.c.b16 %v8277, %v8273
      %v8882 = vpack.c.b16 %v8278, %v8274
      %v8883 = vpack.c.b16 %v8279, %v8275
      %v8884 = vpack.c.b16 %v8280, %v8276
      %v8885 = vpack.c.b16 %v8285, %v8281
      %v8886 = vpack.c.b16 %v8286, %v8282
      %v8887 = vpack.c.b16 %v8287, %v8283
      %v8888 = vpack.c.b16 %v8288, %v8284
      %v8889 = vpack.c.b16 %v8293, %v8289
      %v8890 = vpack.c.b16 %v8294, %v8290
      %v8891 = vpack.c.b16 %v8295, %v8291
      %v8892 = vpack.c.b16 %v8296, %v8292
      %v8893 = vpack.c.b16 %v8301, %v8297
      %v8894 = vpack.c.b16 %v8302, %v8298
      %v8895 = vpack.c.b16 %v8303, %v8299
      %v8896 = vpack.c.b16 %v8304, %v8300
      %v8897 = vpack.c.b16 %v8309, %v8305
      %v8898 = vpack.c.b16 %v8310, %v8306
      %v8899 = vpack.c.b16 %v8311, %v8307
      %v8900 = vpack.c.b16 %v8312, %v8308
      %v8901 = vpack.c.b16 %v8317, %v8313
      %v8902 = vpack.c.b16 %v8318, %v8314
      %v8903 = vpack.c.b16 %v8319, %v8315
      %v8904 = vpack.c.b16 %v8320, %v8316
      %v8905 = vpack.c.b16 %v8325, %v8321
      %v8906 = vpack.c.b16 %v8326, %v8322
      %v8907 = vpack.c.b16 %v8327, %v8323
      %v8908 = vpack.c.b16 %v8328, %v8324
      %v8909 = vpack.c.b16 %v8333, %v8329
      %v8910 = vpack.c.b16 %v8334, %v8330
      %v8911 = vpack.c.b16 %v8335, %v8331
      %v8912 = vpack.c.b16 %v8336, %v8332
      %v8913 = vpack.c.b16 %v8341, %v8337
      %v8914 = vpack.c.b16 %v8342, %v8338
      %v8915 = vpack.c.b16 %v8343, %v8339
      %v8916 = vpack.c.b16 %v8344, %v8340
      %v8917 = vpack.c.b16 %v8349, %v8345
      %v8918 = vpack.c.b16 %v8350, %v8346
      %v8919 = vpack.c.b16 %v8351, %v8347
      %v8920 = vpack.c.b16 %v8352, %v8348
      %v8921 = vpack.c.b16 %v8357, %v8353
      %v8922 = vpack.c.b16 %v8358, %v8354
      %v8923 = vpack.c.b16 %v8359, %v8355
      %v8924 = vpack.c.b16 %v8360, %v8356
      %v8925 = vpack.c.b16 %v8365, %v8361
      %v8926 = vpack.c.b16 %v8366, %v8362
      %v8927 = vpack.c.b16 %v8367, %v8363
      %v8928 = vpack.c.b16 %v8368, %v8364
      %v8929 = vpack.c.b16 %v8373, %v8369
      %v8930 = vpack.c.b16 %v8374, %v8370
      %v8931 = vpack.c.b16 %v8375, %v8371
      %v8932 = vpack.c.b16 %v8376, %v8372
      %v8933 = vpack.c.b16 %v8381, %v8377
      %v8934 = vpack.c.b16 %v8382, %v8378
      %v8935 = vpack.c.b16 %v8383, %v8379
      %v8936 = vpack.c.b16 %v8384, %v8380
      %v8937 = vpack.c.b16 %v8389, %v8385
      %v8938 = vpack.c.b16 %v8390, %v8386
      %v8939 = vpack.c.b16 %v8391, %v8387
      %v8940 = vpack.c.b16 %v8392, %v8388
      %v8941 = vpack.c.b16 %v8397, %v8393
      %v8942 = vpack.c.b16 %v8398, %v8394
      %v8943 = vpack.c.b16 %v8399, %v8395
      %v8944 = vpack.c.b16 %v8400, %v8396
      %v8945 = vpack.c.b16 %v8405, %v8401
      %v8946 = vpack.c.b16 %v8406, %v8402
      %v8947 = vpack.c.b16 %v8407, %v8403
      %v8948 = vpack.c.b16 %v8408, %v8404
      %v8949 = vpack.c.b16 %v8413, %v8409
      %v8950 = vpack.c.b16 %v8414, %v8410
      %v8951 = vpack.c.b16 %v8415, %v8411
      %v8952 = vpack.c.b16 %v8416, %v8412
      %v8953 = vpack.c.b16 %v8421, %v8417
      %v8954 = vpack.c.b16 %v8422, %v8418
      %v8955 = vpack.c.b16 %v8423, %v8419
      %v8956 = vpack.c.b16 %v8424, %v8420
      %v8957 = vpack.c.b16 %v8429, %v8425
      %v8958 = vpack.c.b16 %v8430, %v8426
      %v8959 = vpack.c.b16 %v8431, %v8427
      %v8960 = vpack.c.b16 %v8432, %v8428
      %v8961 = vpack.c.b16 %v8437, %v8433
      %v8962 = vpack.c.b16 %v8438, %v8434
      %v8963 = vpack.c.b16 %v8439, %v8435
      %v8964 = vpack.c.b16 %v8440, %v8436
      %v8965 = vpack.c.b16 %v8445, %v8441
      %v8966 = vpack.c.b16 %v8446, %v8442
      %v8967 = vpack.c.b16 %v8447, %v8443
      %v8968 = vpack.c.b16 %v8448, %v8444
      %v8969 = vpack.c.b16 %v8453, %v8449
      %v8970 = vpack.c.b16 %v8454, %v8450
      %v8971 = vpack.c.b16 %v8455, %v8451
      %v8972 = vpack.c.b16 %v8456, %v8452
      %v8973 = vpack.c.b16 %v8461, %v8457
      %v8974 = vpack.c.b16 %v8462, %v8458
      %v8975 = vpack.c.b16 %v8463, %v8459
      %v8976 = vpack.c.b16 %v8464, %v8460
      %v8977 = vpack.c.b16 %v8469, %v8465
      %v8978 = vpack.c.b16 %v8470, %v8466
      %v8979 = vpack.c.b16 %v8471, %v8467
      %v8980 = vpack.c.b16 %v8472, %v8468
      %v8981 = vpack.c.b16 %v8477, %v8473
      %v8982 = vpack.c.b16 %v8478, %v8474
      %v8983 = vpack.c.b16 %v8479, %v8475
      %v8984 = vpack.c.b16 %v8480, %v8476
      %v8985 = vpack.c.b16 %v8485, %v8481
      %v8986 = vpack.c.b16 %v8486, %v8482
      %v8987 = vpack.c.b16 %v8487, %v8483
      %v8988 = vpack.c.b16 %v8488, %v8484
      %v8989 = vpack.c.b16 %v8493, %v8489
      %v8990 = vpack.c.b16 %v8494, %v8490
      %v8991 = vpack.c.b16 %v8495, %v8491
      %v8992 = vpack.c.b16 %v8496, %v8492
      %v8993 = vpack.c.b16 %v8501, %v8497
      %v8994 = vpack.c.b16 %v8502, %v8498
      %v8995 = vpack.c.b16 %v8503, %v8499
      %v8996 = vpack.c.b16 %v8504, %v8500
      %v8997 = vpack.c.b16 %v8509, %v8505
      %v8998 = vpack.c.b16 %v8510, %v8506
      %v8999 = vpack.c.b16 %v8511, %v8507
      %v9000 = vpack.c.b16 %v8512, %v8508
      %v9001 = vpack.c.b16 %v8517, %v8513
      %v9002 = vpack.c.b16 %v8518, %v8514
      %v9003 = vpack.c.b16 %v8519, %v8515
      %v9004 = vpack.c.b16 %v8520, %v8516
      %v9005 = vpack.c.b16 %v8525, %v8521
      %v9006 = vpack.c.b16 %v8526, %v8522
      %v9007 = vpack.c.b16 %v8527, %v8523
      %v9008 = vpack.c.b16 %v8528, %v8524
      %v9009 = vpack.c.b16 %v8533, %v8529
      %v9010 = vpack.c.b16 %v8534, %v8530
      %v9011 = vpack.c.b16 %v8535, %v8531
      %v9012 = vpack.c.b16 %v8536, %v8532
      %v9013 = vpack.c.b16 %v8541, %v8537
      %v9014 = vpack.c.b16 %v8542, %v8538
      %v9015 = vpack.c.b16 %v8543, %v8539
      %v9016 = vpack.c.b16 %v8544, %v8540
      %v9017 = vpack.c.b16 %v8549, %v8545
      %v9018 = vpack.c.b16 %v8550, %v8546
      %v9019 = vpack.c.b16 %v8551, %v8547
      %v9020 = vpack.c.b16 %v8552, %v8548
      %v9021 = vpack.c.b16 %v8557, %v8553
      %v9022 = vpack.c.b16 %v8558, %v8554
      %v9023 = vpack.c.b16 %v8559, %v8555
      %v9024 = vpack.c.b16 %v8560, %v8556
      %v9025 = vpack.c.b16 %v8565, %v8561
      %v9026 = vpack.c.b16 %v8566, %v8562
      %v9027 = vpack.c.b16 %v8567, %v8563
      %v9028 = vpack.c.b16 %v8568, %v8564
      %vm9489 = vcmask 392192
      %v9491 = vsel %vm9489, %v6633, 0
      %v9494 = vsel %vm9489, %v6639, 0
      %v9497 = vsel %vm9489, %v6645, 0
      %9499 = vmatprep.subr.bf16.mxu0 %v8570
      %9500 = vmatpush1.bf16.msra.mxu0 %v8569
      %9501 = vmatprep.subr.bf16.mxu0 %v8574
      %9502 = vmatpush1.bf16.msra.mxu0 %v8573
      %9503 = vmatprep.subr.bf16.mxu0 %v8578
      %9504 = vmatpush1.bf16.msra.mxu0 %v8577
      %9505 = vmatprep.subr.bf16.mxu0 %v8582
      %9506 = vmatpush1.bf16.msra.mxu0 %v8581
      %9507 = vmatprep.subr.bf16.mxu0 %v8586
      %9508 = vmatpush1.bf16.msra.mxu0 %v8585
      %9509 = vmatprep.subr.bf16.mxu0 %v8590
      %9510 = vmatpush1.bf16.msra.mxu0 %v8589
      %9511 = vmatprep.subr.bf16.mxu0 %v8594
      %9512 = vmatpush1.bf16.msra.mxu0 %v8593
      %9513 = vmatprep.subr.bf16.mxu0 %v8598
      %9514 = vmatpush1.bf16.msra.mxu0 %v8597
      %9515 = vmatprep.subr.bf16.mxu0 %v8602
      %9516 = vmatpush1.bf16.msra.mxu0 %v8601
      %9517 = vmatprep.subr.bf16.mxu0 %v8606
      %9518 = vmatpush1.bf16.msra.mxu0 %v8605
      %9519 = vmatprep.subr.bf16.mxu0 %v8610
      %9520 = vmatpush1.bf16.msra.mxu0 %v8609
      %9521 = vmatprep.subr.bf16.mxu0 %v8614
      %9522 = vmatpush1.bf16.msra.mxu0 %v8613
      %9523 = vmatprep.subr.bf16.mxu0 %v8618
      %9524 = vmatpush1.bf16.msra.mxu0 %v8617
      %9525 = vmatprep.subr.bf16.mxu0 %v8622
      %9526 = vmatpush1.bf16.msra.mxu0 %v8621
      %9527 = vmatprep.subr.bf16.mxu0 %v8626
      %9528 = vmatpush1.bf16.msra.mxu0 %v8625
      %9529 = vmatprep.subr.bf16.mxu0 %v8630
      %9530 = vmatpush1.bf16.msra.mxu0 %v8629
      %9531 = vmatprep.mubr.bf16.mxu0 %v6386
      %9532 = vmatmul.mubr.bf16.gmra.mrb[0].mxu0 %v6385
      %v9533 = vpop.f32.mrb[0].mxu0
      %v9534 = vadd.f32 %v7172, %v9533
      %v9535 = vpop.f32.mrb[0].mxu0
      %v9536 = vadd.f32 %v7176, %v9535
      %v9537 = vpop.f32.mrb[0].mxu0
      %v9538 = vadd.f32 %v7172, %v9537
      %v9539 = vpop.f32.mrb[0].mxu0
      %v9540 = vadd.f32 %v7176, %v9539
      %9541 = vmatprep.mubr.bf16.mxu0 %v6389
      %9542 = vmatmul.mubr.bf16.gmra.mrb[0].mxu0 %v6388
      %v9543 = vpop.f32.mrb[0].mxu0
      %v9544 = vadd.f32 %v7172, %v9543
      %v9545 = vpop.f32.mrb[0].mxu0
      %v9546 = vadd.f32 %v7176, %v9545
      %v9547 = vpop.f32.mrb[0].mxu0
      %v9548 = vadd.f32 %v7172, %v9547
      %v9549 = vpop.f32.mrb[0].mxu0
      %v9550 = vadd.f32 %v7176, %v9549
      %9551 = vmatprep.mubr.bf16.mxu0 %v6392
      %9552 = vmatmul.mubr.bf16.gmra.mrb[0].mxu0 %v6391
      %v9553 = vpop.f32.mrb[0].mxu0
      %v9554 = vadd.f32 %v7172, %v9553
      %v9555 = vpop.f32.mrb[0].mxu0
      %v9556 = vadd.f32 %v7176, %v9555
      %v9557 = vpop.f32.mrb[0].mxu0
      %v9558 = vadd.f32 %v7172, %v9557
      %v9559 = vpop.f32.mrb[0].mxu0
      %v9560 = vadd.f32 %v7176, %v9559
      %9561 = vdwg.mxu0
      %9562 = vmatprep.subr.bf16.mxu0 %v8634
      %9563 = vmatpush1.bf16.msra.mxu0 %v8633
      %9564 = vmatprep.subr.bf16.mxu0 %v8638
      %9565 = vmatpush1.bf16.msra.mxu0 %v8637
      %9566 = vmatprep.subr.bf16.mxu0 %v8642
      %9567 = vmatpush1.bf16.msra.mxu0 %v8641
      %9568 = vmatprep.subr.bf16.mxu0 %v8646
      %9569 = vmatpush1.bf16.msra.mxu0 %v8645
      %9570 = vmatprep.subr.bf16.mxu0 %v8650
      %9571 = vmatpush1.bf16.msra.mxu0 %v8649
      %9572 = vmatprep.subr.bf16.mxu0 %v8654
      %9573 = vmatpush1.bf16.msra.mxu0 %v8653
      %9574 = vmatprep.subr.bf16.mxu0 %v8658
      %9575 = vmatpush1.bf16.msra.mxu0 %v8657
      %9576 = vmatprep.subr.bf16.mxu0 %v8662
      %9577 = vmatpush1.bf16.msra.mxu0 %v8661
      %9578 = vmatprep.subr.bf16.mxu0 %v8666
      %9579 = vmatpush1.bf16.msra.mxu0 %v8665
      %9580 = vmatprep.subr.bf16.mxu0 %v8670
      %9581 = vmatpush1.bf16.msra.mxu0 %v8669
      %9582 = vmatprep.subr.bf16.mxu0 %v8674
      %9583 = vmatpush1.bf16.msra.mxu0 %v8673
      %9584 = vmatprep.subr.bf16.mxu0 %v8678
      %9585 = vmatpush1.bf16.msra.mxu0 %v8677
      %9586 = vmatprep.subr.bf16.mxu0 %v8682
      %9587 = vmatpush1.bf16.msra.mxu0 %v8681
      %9588 = vmatprep.subr.bf16.mxu0 %v8686
      %9589 = vmatpush1.bf16.msra.mxu0 %v8685
      %9590 = vmatprep.subr.bf16.mxu0 %v8690
      %9591 = vmatpush1.bf16.msra.mxu0 %v8689
      %9592 = vmatprep.subr.bf16.mxu0 %v8694
      %9593 = vmatpush1.bf16.msra.mxu0 %v8693
      %9594 = vmatprep.mubr.bf16.mxu0 %v6482
      %9595 = vmatmul.mubr.bf16.gmra.mrb[0].mxu0 %v6661
      %v9596 = vpop.f32.mrb[0].mxu0
      %v9597 = vadd.f32 %v9534, %v9596
      %v9598 = vpop.f32.mrb[0].mxu0
      %v9599 = vadd.f32 %v9536, %v9598
      %v9600 = vpop.f32.mrb[0].mxu0
      %v9601 = vadd.f32 %v9538, %v9600
      %v9602 = vpop.f32.mrb[0].mxu0
      %v9603 = vadd.f32 %v9540, %v9602
      %9604 = vmatprep.mubr.bf16.mxu0 %v6484
      %9605 = vmatmul.mubr.bf16.gmra.mrb[0].mxu0 %v6664
      %v9606 = vpop.f32.mrb[0].mxu0
      %v9607 = vadd.f32 %v9544, %v9606
      %v9608 = vpop.f32.mrb[0].mxu0
      %v9609 = vadd.f32 %v9546, %v9608
      %v9610 = vpop.f32.mrb[0].mxu0
      %v9611 = vadd.f32 %v9548, %v9610
      %v9612 = vpop.f32.mrb[0].mxu0
      %v9613 = vadd.f32 %v9550, %v9612
      %9614 = vmatprep.mubr.bf16.mxu0 %v6486
      %9615 = vmatmul.mubr.bf16.gmra.mrb[0].mxu0 %v6667
      %v9616 = vpop.f32.mrb[0].mxu0
      %v9617 = vadd.f32 %v9554, %v9616
      %v9618 = vpop.f32.mrb[0].mxu0
      %v9619 = vadd.f32 %v9556, %v9618
      %v9620 = vpop.f32.mrb[0].mxu0
      %v9621 = vadd.f32 %v9558, %v9620
      %v9622 = vpop.f32.mrb[0].mxu0
      %v9623 = vadd.f32 %v9560, %v9622
      %9624 = vdwg.mxu0
      %9625 = vmatprep.subr.bf16.mxu0 %v8698
      %9626 = vmatpush1.bf16.msra.mxu0 %v8697
      %9627 = vmatprep.subr.bf16.mxu0 %v8702
      %9628 = vmatpush1.bf16.msra.mxu0 %v8701
      %9629 = vmatprep.subr.bf16.mxu0 %v8706
      %9630 = vmatpush1.bf16.msra.mxu0 %v8705
      %9631 = vmatprep.subr.bf16.mxu0 %v8710
      %9632 = vmatpush1.bf16.msra.mxu0 %v8709
      %9633 = vmatprep.subr.bf16.mxu0 %v8714
      %9634 = vmatpush1.bf16.msra.mxu0 %v8713
      %9635 = vmatprep.subr.bf16.mxu0 %v8718
      %9636 = vmatpush1.bf16.msra.mxu0 %v8717
      %9637 = vmatprep.subr.bf16.mxu0 %v8722
      %9638 = vmatpush1.bf16.msra.mxu0 %v8721
      %9639 = vmatprep.subr.bf16.mxu0 %v8726
      %9640 = vmatpush1.bf16.msra.mxu0 %v8725
      %9641 = vmatprep.subr.bf16.mxu0 %v8730
      %9642 = vmatpush1.bf16.msra.mxu0 %v8729
      %9643 = vmatprep.subr.bf16.mxu0 %v8734
      %9644 = vmatpush1.bf16.msra.mxu0 %v8733
      %9645 = vmatprep.subr.bf16.mxu0 %v8738
      %9646 = vmatpush1.bf16.msra.mxu0 %v8737
      %9647 = vmatprep.subr.bf16.mxu0 %v8742
      %9648 = vmatpush1.bf16.msra.mxu0 %v8741
      %9649 = vmatprep.subr.bf16.mxu0 %v8746
      %9650 = vmatpush1.bf16.msra.mxu0 %v8745
      %9651 = vmatprep.subr.bf16.mxu0 %v8750
      %9652 = vmatpush1.bf16.msra.mxu0 %v8749
      %9653 = vmatprep.subr.bf16.mxu0 %v8754
      %9654 = vmatpush1.bf16.msra.mxu0 %v8753
      %9655 = vmatprep.subr.bf16.mxu0 %v8758
      %9656 = vmatpush1.bf16.msra.mxu0 %v8757
      %9657 = vmatprep.mubr.bf16.mxu0 %v6671
      %9658 = vmatmul.mubr.bf16.gmra.mrb[0].mxu0 %v6483
      %v9659 = vpop.f32.mrb[0].mxu0
      %v9660 = vadd.f32 %v9597, %v9659
      %v9661 = vpop.f32.mrb[0].mxu0
      %v9662 = vadd.f32 %v9599, %v9661
      %v9663 = vpop.f32.mrb[0].mxu0
      %v9664 = vadd.f32 %v9601, %v9663
      %v9665 = vpop.f32.mrb[0].mxu0
      %v9666 = vadd.f32 %v9603, %v9665
      %9667 = vmatprep.mubr.bf16.mxu0 %v6675
      %9668 = vmatmul.mubr.bf16.gmra.mrb[0].mxu0 %v6485
      %v9669 = vpop.f32.mrb[0].mxu0
      %v9670 = vadd.f32 %v9607, %v9669
      %v9671 = vpop.f32.mrb[0].mxu0
      %v9672 = vadd.f32 %v9609, %v9671
      %v9673 = vpop.f32.mrb[0].mxu0
      %v9674 = vadd.f32 %v9611, %v9673
      %v9675 = vpop.f32.mrb[0].mxu0
      %v9676 = vadd.f32 %v9613, %v9675
      %9677 = vmatprep.mubr.bf16.mxu0 %v6679
      %9678 = vmatmul.mubr.bf16.gmra.mrb[0].mxu0 %v6487
      %v9679 = vpop.f32.mrb[0].mxu0
      %v9680 = vadd.f32 %v9617, %v9679
      %v9681 = vpop.f32.mrb[0].mxu0
      %v9682 = vadd.f32 %v9619, %v9681
      %v9683 = vpop.f32.mrb[0].mxu0
      %v9684 = vadd.f32 %v9621, %v9683
      %v9685 = vpop.f32.mrb[0].mxu0
      %v9686 = vadd.f32 %v9623, %v9685
      %9687 = vdwg.mxu0
      %9688 = vmatprep.subr.bf16.mxu0 %v8762
      %9689 = vmatpush1.bf16.msra.mxu0 %v8761
      %9690 = vmatprep.subr.bf16.mxu0 %v8766
      %9691 = vmatpush1.bf16.msra.mxu0 %v8765
      %9692 = vmatprep.subr.bf16.mxu0 %v8770
      %9693 = vmatpush1.bf16.msra.mxu0 %v8769
      %9694 = vmatprep.subr.bf16.mxu0 %v8774
      %9695 = vmatpush1.bf16.msra.mxu0 %v8773
      %9696 = vmatprep.subr.bf16.mxu0 %v8778
      %9697 = vmatpush1.bf16.msra.mxu0 %v8777
      %9698 = vmatprep.subr.bf16.mxu0 %v8782
      %9699 = vmatpush1.bf16.msra.mxu0 %v8781
      %9700 = vmatprep.subr.bf16.mxu0 %v8786
      %9701 = vmatpush1.bf16.msra.mxu0 %v8785
      %9702 = vmatprep.subr.bf16.mxu0 %v8790
      %9703 = vmatpush1.bf16.msra.mxu0 %v8789
      %9704 = vmatprep.subr.bf16.mxu0 %v8794
      %9705 = vmatpush1.bf16.msra.mxu0 %v8793
      %9706 = vmatprep.subr.bf16.mxu0 %v8798
      %9707 = vmatpush1.bf16.msra.mxu0 %v8797
      %9708 = vmatprep.subr.bf16.mxu0 %v8802
      %9709 = vmatpush1.bf16.msra.mxu0 %v8801
      %9710 = vmatprep.subr.bf16.mxu0 %v8806
      %9711 = vmatpush1.bf16.msra.mxu0 %v8805
      %9712 = vmatprep.subr.bf16.mxu0 %v8810
      %9713 = vmatpush1.bf16.msra.mxu0 %v8809
      %9714 = vmatprep.subr.bf16.mxu0 %v8814
      %9715 = vmatpush1.bf16.msra.mxu0 %v8813
      %9716 = vmatprep.subr.bf16.mxu0 %v8818
      %9717 = vmatpush1.bf16.msra.mxu0 %v8817
      %9718 = vmatprep.subr.bf16.mxu0 %v8822
      %9719 = vmatpush1.bf16.msra.mxu0 %v8821
      %9720 = vmatprep.mubr.bf16.mxu0 %v6538
      %9721 = vmatmul.mubr.bf16.gmra.mrb[0].mxu0 %v6537
      %v9722 = vpop.f32.mrb[0].mxu0
      %v9723 = vadd.f32 %v9660, %v9722
      %v9724 = vpop.f32.mrb[0].mxu0
      %v9725 = vadd.f32 %v9662, %v9724
      %v9726 = vpop.f32.mrb[0].mxu0
      %v9727 = vadd.f32 %v9664, %v9726
      %v9728 = vpop.f32.mrb[0].mxu0
      %v9729 = vadd.f32 %v9666, %v9728
      %9730 = vmatprep.mubr.bf16.mxu0 %v6540
      %9731 = vmatmul.mubr.bf16.gmra.mrb[0].mxu0 %v6539
      %v9732 = vpop.f32.mrb[0].mxu0
      %v9733 = vadd.f32 %v9670, %v9732
      %v9734 = vpop.f32.mrb[0].mxu0
      %v9735 = vadd.f32 %v9672, %v9734
      %v9736 = vpop.f32.mrb[0].mxu0
      %v9737 = vadd.f32 %v9674, %v9736
      %v9738 = vpop.f32.mrb[0].mxu0
      %v9739 = vadd.f32 %v9676, %v9738
      %9740 = vmatprep.mubr.bf16.mxu0 %v6542
      %9741 = vmatmul.mubr.bf16.gmra.mrb[0].mxu0 %v6541
      %v9742 = vpop.f32.mrb[0].mxu0
      %v9743 = vadd.f32 %v9680, %v9742
      %v9744 = vpop.f32.mrb[0].mxu0
      %v9745 = vadd.f32 %v9682, %v9744
      %v9746 = vpop.f32.mrb[0].mxu0
      %v9747 = vadd.f32 %v9684, %v9746
      %v9748 = vpop.f32.mrb[0].mxu0
      %v9749 = vadd.f32 %v9686, %v9748
      %9750 = vdwg.mxu0
      %9751 = vmatprep.subr.bf16.mxu0 %v8826
      %9752 = vmatpush1.bf16.msra.mxu0 %v8825
      %9753 = vmatprep.subr.bf16.mxu0 %v8830
      %9754 = vmatpush1.bf16.msra.mxu0 %v8829
      %9755 = vmatprep.subr.bf16.mxu0 %v8834
      %9756 = vmatpush1.bf16.msra.mxu0 %v8833
      %9757 = vmatprep.subr.bf16.mxu0 %v8838
      %9758 = vmatpush1.bf16.msra.mxu0 %v8837
      %9759 = vmatprep.subr.bf16.mxu0 %v8842
      %9760 = vmatpush1.bf16.msra.mxu0 %v8841
      %9761 = vmatprep.subr.bf16.mxu0 %v8846
      %9762 = vmatpush1.bf16.msra.mxu0 %v8845
      %9763 = vmatprep.subr.bf16.mxu0 %v8850
      %9764 = vmatpush1.bf16.msra.mxu0 %v8849
      %9765 = vmatprep.subr.bf16.mxu0 %v8854
      %9766 = vmatpush1.bf16.msra.mxu0 %v8853
      %9767 = vmatprep.subr.bf16.mxu0 %v8858
      %9768 = vmatpush1.bf16.msra.mxu0 %v8857
      %9769 = vmatprep.subr.bf16.mxu0 %v8862
      %9770 = vmatpush1.bf16.msra.mxu0 %v8861
      %9771 = vmatprep.subr.bf16.mxu0 %v8866
      %9772 = vmatpush1.bf16.msra.mxu0 %v8865
      %9773 = vmatprep.subr.bf16.mxu0 %v8870
      %9774 = vmatpush1.bf16.msra.mxu0 %v8869
      %9775 = vmatprep.subr.bf16.mxu0 %v8874
      %9776 = vmatpush1.bf16.msra.mxu0 %v8873
      %9777 = vmatprep.subr.bf16.mxu0 %v8878
      %9778 = vmatpush1.bf16.msra.mxu0 %v8877
      %9779 = vmatprep.subr.bf16.mxu0 %v8882
      %9780 = vmatpush1.bf16.msra.mxu0 %v8881
      %9781 = vmatprep.subr.bf16.mxu0 %v8886
      %9782 = vmatpush1.bf16.msra.mxu0 %v8885
      %9783 = vmatprep.mubr.bf16.mxu0 %v6601
      %9784 = vmatmul.mubr.bf16.gmra.mrb[0].mxu0 %v6684
      %v9785 = vpop.f32.mrb[0].mxu0
      %v9786 = vadd.f32 %v9723, %v9785
      %v9787 = vpop.f32.mrb[0].mxu0
      %v9788 = vadd.f32 %v9725, %v9787
      %v9789 = vpop.f32.mrb[0].mxu0
      %v9790 = vadd.f32 %v9727, %v9789
      %v9791 = vpop.f32.mrb[0].mxu0
      %v9792 = vadd.f32 %v9729, %v9791
      %9793 = vmatprep.mubr.bf16.mxu0 %v6603
      %9794 = vmatmul.mubr.bf16.gmra.mrb[0].mxu0 %v6688
      %v9795 = vpop.f32.mrb[0].mxu0
      %v9796 = vadd.f32 %v9733, %v9795
      %v9797 = vpop.f32.mrb[0].mxu0
      %v9798 = vadd.f32 %v9735, %v9797
      %v9799 = vpop.f32.mrb[0].mxu0
      %v9800 = vadd.f32 %v9737, %v9799
      %v9801 = vpop.f32.mrb[0].mxu0
      %v9802 = vadd.f32 %v9739, %v9801
      %9803 = vmatprep.mubr.bf16.mxu0 %v6605
      %9804 = vmatmul.mubr.bf16.gmra.mrb[0].mxu0 %v6692
      %v9805 = vpop.f32.mrb[0].mxu0
      %v9806 = vadd.f32 %v9743, %v9805
      %v9807 = vpop.f32.mrb[0].mxu0
      %v9808 = vadd.f32 %v9745, %v9807
      %v9809 = vpop.f32.mrb[0].mxu0
      %v9810 = vadd.f32 %v9747, %v9809
      %v9811 = vpop.f32.mrb[0].mxu0
      %v9812 = vadd.f32 %v9749, %v9811
      %9813 = vdwg.mxu0
      %9814 = vmatprep.subr.bf16.mxu0 %v8890
      %9815 = vmatpush1.bf16.msra.mxu0 %v8889
      %9816 = vmatprep.subr.bf16.mxu0 %v8894
      %9817 = vmatpush1.bf16.msra.mxu0 %v8893
      %9818 = vmatprep.subr.bf16.mxu0 %v8898
      %9819 = vmatpush1.bf16.msra.mxu0 %v8897
      %9820 = vmatprep.subr.bf16.mxu0 %v8902
      %9821 = vmatpush1.bf16.msra.mxu0 %v8901
      %9822 = vmatprep.subr.bf16.mxu0 %v8906
      %9823 = vmatpush1.bf16.msra.mxu0 %v8905
      %9824 = vmatprep.subr.bf16.mxu0 %v8910
      %9825 = vmatpush1.bf16.msra.mxu0 %v8909
      %9826 = vmatprep.subr.bf16.mxu0 %v8914
      %9827 = vmatpush1.bf16.msra.mxu0 %v8913
      %9828 = vmatprep.subr.bf16.mxu0 %v8918
      %9829 = vmatpush1.bf16.msra.mxu0 %v8917
      %9830 = vmatprep.subr.bf16.mxu0 %v8922
      %9831 = vmatpush1.bf16.msra.mxu0 %v8921
      %9832 = vmatprep.subr.bf16.mxu0 %v8926
      %9833 = vmatpush1.bf16.msra.mxu0 %v8925
      %9834 = vmatprep.subr.bf16.mxu0 %v8930
      %9835 = vmatpush1.bf16.msra.mxu0 %v8929
      %9836 = vmatprep.subr.bf16.mxu0 %v8934
      %9837 = vmatpush1.bf16.msra.mxu0 %v8933
      %9838 = vmatprep.subr.bf16.mxu0 %v8938
      %9839 = vmatpush1.bf16.msra.mxu0 %v8937
      %9840 = vmatprep.subr.bf16.mxu0 %v8942
      %9841 = vmatpush1.bf16.msra.mxu0 %v8941
      %9842 = vmatprep.subr.bf16.mxu0 %v8946
      %9843 = vmatpush1.bf16.msra.mxu0 %v8945
      %9844 = vmatprep.subr.bf16.mxu0 %v8950
      %9845 = vmatpush1.bf16.msra.mxu0 %v8949
      %9846 = vmatprep.mubr.bf16.mxu0 %v6697
      %9847 = vmatmul.mubr.bf16.gmra.mrb[0].mxu0 %v6602
      %v9848 = vpop.f32.mrb[0].mxu0
      %v9849 = vadd.f32 %v9786, %v9848
      %v9850 = vpop.f32.mrb[0].mxu0
      %v9851 = vadd.f32 %v9788, %v9850
      %v9852 = vpop.f32.mrb[0].mxu0
      %v9853 = vadd.f32 %v9790, %v9852
      %v9854 = vpop.f32.mrb[0].mxu0
      %v9855 = vadd.f32 %v9792, %v9854
      %9856 = vmatprep.mubr.bf16.mxu0 %v6701
      %9857 = vmatmul.mubr.bf16.gmra.mrb[0].mxu0 %v6604
      %v9858 = vpop.f32.mrb[0].mxu0
      %v9859 = vadd.f32 %v9796, %v9858
      %v9860 = vpop.f32.mrb[0].mxu0
      %v9861 = vadd.f32 %v9798, %v9860
      %v9862 = vpop.f32.mrb[0].mxu0
      %v9863 = vadd.f32 %v9800, %v9862
      %v9864 = vpop.f32.mrb[0].mxu0
      %v9865 = vadd.f32 %v9802, %v9864
      %9866 = vmatprep.mubr.bf16.mxu0 %v6705
      %9867 = vmatmul.mubr.bf16.gmra.mrb[0].mxu0 %v6606
      %v9868 = vpop.f32.mrb[0].mxu0
      %v9869 = vadd.f32 %v9806, %v9868
      %v9870 = vpop.f32.mrb[0].mxu0
      %v9871 = vadd.f32 %v9808, %v9870
      %v9872 = vpop.f32.mrb[0].mxu0
      %v9873 = vadd.f32 %v9810, %v9872
      %v9874 = vpop.f32.mrb[0].mxu0
      %v9875 = vadd.f32 %v9812, %v9874
      %9876 = vdwg.mxu0
      %9877 = vmatprep.subr.bf16.mxu0 %v8954
      %9878 = vmatpush1.bf16.msra.mxu0 %v8953
      %9879 = vmatprep.subr.bf16.mxu0 %v8958
      %9880 = vmatpush1.bf16.msra.mxu0 %v8957
      %9881 = vmatprep.subr.bf16.mxu0 %v8962
      %9882 = vmatpush1.bf16.msra.mxu0 %v8961
      %9883 = vmatprep.subr.bf16.mxu0 %v8966
      %9884 = vmatpush1.bf16.msra.mxu0 %v8965
      %9885 = vmatprep.subr.bf16.mxu0 %v8970
      %9886 = vmatpush1.bf16.msra.mxu0 %v8969
      %9887 = vmatprep.subr.bf16.mxu0 %v8974
      %9888 = vmatpush1.bf16.msra.mxu0 %v8973
      %9889 = vmatprep.subr.bf16.mxu0 %v8978
      %9890 = vmatpush1.bf16.msra.mxu0 %v8977
      %9891 = vmatprep.subr.bf16.mxu0 %v8982
      %9892 = vmatpush1.bf16.msra.mxu0 %v8981
      %9893 = vmatprep.subr.bf16.mxu0 %v8986
      %9894 = vmatpush1.bf16.msra.mxu0 %v8985
      %9895 = vmatprep.subr.bf16.mxu0 %v8990
      %9896 = vmatpush1.bf16.msra.mxu0 %v8989
      %9897 = vmatprep.subr.bf16.mxu0 %v8994
      %9898 = vmatpush1.bf16.msra.mxu0 %v8993
      %9899 = vmatprep.subr.bf16.mxu0 %v8998
      %9900 = vmatpush1.bf16.msra.mxu0 %v8997
      %9901 = vmatprep.subr.bf16.mxu0 %v9002
      %9902 = vmatpush1.bf16.msra.mxu0 %v9001
      %9903 = vmatprep.subr.bf16.mxu0 %v9006
      %9904 = vmatpush1.bf16.msra.mxu0 %v9005
      %9905 = vmatprep.subr.bf16.mxu0 %v9010
      %9906 = vmatpush1.bf16.msra.mxu0 %v9009
      %9907 = vmatprep.subr.bf16.mxu0 %v9014
      %9908 = vmatpush1.bf16.msra.mxu0 %v9013
      %9909 = vmatprep.mubr.bf16.mxu0 %v6648
      %9910 = vmatmul.mubr.bf16.gmra.mrb[0].mxu0 %v6647
      %v9911 = vpop.f32.mrb[0].mxu0
      %v9912 = vadd.f32 %v9849, %v9911
      %v9913 = vpop.f32.mrb[0].mxu0
      %v9914 = vadd.f32 %v9851, %v9913
      %v9915 = vpop.f32.mrb[0].mxu0
      %v9916 = vadd.f32 %v9853, %v9915
      %v9917 = vpop.f32.mrb[0].mxu0
      %v9918 = vadd.f32 %v9855, %v9917
      %9919 = vmatprep.mubr.bf16.mxu0 %v6650
      %9920 = vmatmul.mubr.bf16.gmra.mrb[0].mxu0 %v6649
      %v9921 = vpop.f32.mrb[0].mxu0
      %v9922 = vadd.f32 %v9859, %v9921
      %v9923 = vpop.f32.mrb[0].mxu0
      %v9924 = vadd.f32 %v9861, %v9923
      %v9925 = vpop.f32.mrb[0].mxu0
      %v9926 = vadd.f32 %v9863, %v9925
      %v9927 = vpop.f32.mrb[0].mxu0
      %v9928 = vadd.f32 %v9865, %v9927
      %9929 = vmatprep.mubr.bf16.mxu0 %v6652
      %9930 = vmatmul.mubr.bf16.gmra.mrb[0].mxu0 %v6651
      %v9931 = vpop.f32.mrb[0].mxu0
      %v9932 = vadd.f32 %v9869, %v9931
      %v9933 = vpop.f32.mrb[0].mxu0
      %v9934 = vadd.f32 %v9871, %v9933
      %v9935 = vpop.f32.mrb[0].mxu0
      %v9936 = vadd.f32 %v9873, %v9935
      %v9937 = vpop.f32.mrb[0].mxu0
      %v9938 = vadd.f32 %v9875, %v9937
      %9939 = vdwg.mxu0
      %9940 = vmatprep.subr.bf16.mxu0 %v9018
      %9941 = vmatpush1.bf16.msra.mxu0 %v9017
      %9942 = vmatprep.subr.bf16.mxu0 %v9022
      %9943 = vmatpush1.bf16.msra.mxu0 %v9021
      %9944 = vmatprep.subr.bf16.mxu0 %v9026
      %9945 = vmatpush1.bf16.msra.mxu0 %v9025
      %9946 = vmatprep.subr.bf16.mxu0 0
      %9947 = vmatpush1.bf16.msra.mxu0 0
      %9948 = vmatprep.subr.bf16.mxu0 0
      %9949 = vmatpush1.bf16.msra.mxu0 0
      %9950 = vmatprep.subr.bf16.mxu0 0
      %9951 = vmatpush1.bf16.msra.mxu0 0
      %9952 = vmatprep.subr.bf16.mxu0 0
      %9953 = vmatpush1.bf16.msra.mxu0 0
      %9954 = vmatprep.subr.bf16.mxu0 0
      %9955 = vmatpush1.bf16.msra.mxu0 0
      %9956 = vmatprep.subr.bf16.mxu0 0
      %9957 = vmatpush1.bf16.msra.mxu0 0
      %9958 = vmatprep.subr.bf16.mxu0 0
      %9959 = vmatpush1.bf16.msra.mxu0 0
      %9960 = vmatprep.subr.bf16.mxu0 0
      %9961 = vmatpush1.bf16.msra.mxu0 0
      %9962 = vmatprep.subr.bf16.mxu0 0
      %9963 = vmatpush1.bf16.msra.mxu0 0
      %9964 = vmatprep.subr.bf16.mxu0 0
      %9965 = vmatpush1.bf16.msra.mxu0 0
      %9966 = vmatprep.subr.bf16.mxu0 0
      %9967 = vmatpush1.bf16.msra.mxu0 0
      %9968 = vmatprep.subr.bf16.mxu0 0
      %9969 = vmatpush1.bf16.msra.mxu0 0
      %9970 = vmatprep.subr.bf16.mxu0 0
      %9971 = vmatpush1.bf16.msra.mxu0 0
      %9972 = vmatprep.mubr.bf16.mxu0 0
      %9973 = vmatmul.mubr.bf16.gmra.mrb[0].mxu0 %v9491
      %v9974 = vpop.f32.mrb[0].mxu0
      %v9975 = vadd.f32 %v9912, %v9974
      %v9976 = vpop.f32.mrb[0].mxu0
      %v9977 = vadd.f32 %v9914, %v9976
      %v9978 = vpop.f32.mrb[0].mxu0
      %v9979 = vadd.f32 %v9916, %v9978
      %v9980 = vpop.f32.mrb[0].mxu0
      %v9981 = vadd.f32 %v9918, %v9980
      %9982 = vmatprep.mubr.bf16.mxu0 0
      %9983 = vmatmul.mubr.bf16.gmra.mrb[0].mxu0 %v9494
      %v9984 = vpop.f32.mrb[0].mxu0
      %v9985 = vadd.f32 %v9922, %v9984
      %v9986 = vpop.f32.mrb[0].mxu0
      %v9987 = vadd.f32 %v9924, %v9986
      %v9988 = vpop.f32.mrb[0].mxu0
      %v9989 = vadd.f32 %v9926, %v9988
      %v9990 = vpop.f32.mrb[0].mxu0
      %v9991 = vadd.f32 %v9928, %v9990
      %9992 = vmatprep.mubr.bf16.mxu0 0
      %9993 = vmatmul.mubr.bf16.gmra.mrb[0].mxu0 %v9497
      %v9994 = vpop.f32.mrb[0].mxu0
      %v9995 = vadd.f32 %v9932, %v9994
      %v9996 = vpop.f32.mrb[0].mxu0
      %v9997 = vadd.f32 %v9934, %v9996
      %v9998 = vpop.f32.mrb[0].mxu0
      %v9999 = vadd.f32 %v9936, %v9998
      %v10000 = vpop.f32.mrb[0].mxu0
      %v10001 = vadd.f32 %v9938, %v10000
      %10002 = vdwg.mxu0
      %10003 = vmatprep.subr.bf16.mxu0 %v8572
      %10004 = vmatpush1.bf16.msra.mxu0 %v8571
      %10005 = vmatprep.subr.bf16.mxu0 %v8576
      %10006 = vmatpush1.bf16.msra.mxu0 %v8575
      %10007 = vmatprep.subr.bf16.mxu0 %v8580
      %10008 = vmatpush1.bf16.msra.mxu0 %v8579
      %10009 = vmatprep.subr.bf16.mxu0 %v8584
      %10010 = vmatpush1.bf16.msra.mxu0 %v8583
      %10011 = vmatprep.subr.bf16.mxu0 %v8588
      %10012 = vmatpush1.bf16.msra.mxu0 %v8587
      %10013 = vmatprep.subr.bf16.mxu0 %v8592
      %10014 = vmatpush1.bf16.msra.mxu0 %v8591
      %10015 = vmatprep.subr.bf16.mxu0 %v8596
      %10016 = vmatpush1.bf16.msra.mxu0 %v8595
      %10017 = vmatprep.subr.bf16.mxu0 %v8600
      %10018 = vmatpush1.bf16.msra.mxu0 %v8599
      %10019 = vmatprep.subr.bf16.mxu0 %v8604
      %10020 = vmatpush1.bf16.msra.mxu0 %v8603
      %10021 = vmatprep.subr.bf16.mxu0 %v8608
      %10022 = vmatpush1.bf16.msra.mxu0 %v8607
      %10023 = vmatprep.subr.bf16.mxu0 %v8612
      %10024 = vmatpush1.bf16.msra.mxu0 %v8611
      %10025 = vmatprep.subr.bf16.mxu0 %v8616
      %10026 = vmatpush1.bf16.msra.mxu0 %v8615
      %10027 = vmatprep.subr.bf16.mxu0 %v8620
      %10028 = vmatpush1.bf16.msra.mxu0 %v8619
      %10029 = vmatprep.subr.bf16.mxu0 %v8624
      %10030 = vmatpush1.bf16.msra.mxu0 %v8623
      %10031 = vmatprep.subr.bf16.mxu0 %v8628
      %10032 = vmatpush1.bf16.msra.mxu0 %v8627
      %10033 = vmatprep.subr.bf16.mxu0 %v8632
      %10034 = vmatpush1.bf16.msra.mxu0 %v8631
      %10035 = vmatprep.mubr.bf16.mxu0 %v6386
      %10036 = vmatmul.mubr.bf16.gmra.mrb[0].mxu0 %v6385
      %v10037 = vpop.f32.mrb[0].mxu0
      %v10038 = vadd.f32 %v7180, %v10037
      %v10039 = vpop.f32.mrb[0].mxu0
      %v10040 = vadd.f32 %v7184, %v10039
      %v10041 = vpop.f32.mrb[0].mxu0
      %v10042 = vadd.f32 %v7180, %v10041
      %v10043 = vpop.f32.mrb[0].mxu0
      %v10044 = vadd.f32 %v7184, %v10043
      %10045 = vmatprep.mubr.bf16.mxu0 %v6389
      %10046 = vmatmul.mubr.bf16.gmra.mrb[0].mxu0 %v6388
      %v10047 = vpop.f32.mrb[0].mxu0
      %v10048 = vadd.f32 %v7180, %v10047
      %v10049 = vpop.f32.mrb[0].mxu0
      %v10050 = vadd.f32 %v7184, %v10049
      %v10051 = vpop.f32.mrb[0].mxu0
      %v10052 = vadd.f32 %v7180, %v10051
      %v10053 = vpop.f32.mrb[0].mxu0
      %v10054 = vadd.f32 %v7184, %v10053
      %10055 = vmatprep.mubr.bf16.mxu0 %v6392
      %10056 = vmatmul.mubr.bf16.gmra.mrb[0].mxu0 %v6391
      %v10057 = vpop.f32.mrb[0].mxu0
      %v10058 = vadd.f32 %v7180, %v10057
      %v10059 = vpop.f32.mrb[0].mxu0
      %v10060 = vadd.f32 %v7184, %v10059
      %v10061 = vpop.f32.mrb[0].mxu0
      %v10062 = vadd.f32 %v7180, %v10061
      %v10063 = vpop.f32.mrb[0].mxu0
      %v10064 = vadd.f32 %v7184, %v10063
      %10065 = vdwg.mxu0
      %10066 = vmatprep.subr.bf16.mxu0 %v8636
      %10067 = vmatpush1.bf16.msra.mxu0 %v8635
      %10068 = vmatprep.subr.bf16.mxu0 %v8640
      %10069 = vmatpush1.bf16.msra.mxu0 %v8639
      %10070 = vmatprep.subr.bf16.mxu0 %v8644
      %10071 = vmatpush1.bf16.msra.mxu0 %v8643
      %10072 = vmatprep.subr.bf16.mxu0 %v8648
      %10073 = vmatpush1.bf16.msra.mxu0 %v8647
      %10074 = vmatprep.subr.bf16.mxu0 %v8652
      %10075 = vmatpush1.bf16.msra.mxu0 %v8651
      %10076 = vmatprep.subr.bf16.mxu0 %v8656
      %10077 = vmatpush1.bf16.msra.mxu0 %v8655
      %10078 = vmatprep.subr.bf16.mxu0 %v8660
      %10079 = vmatpush1.bf16.msra.mxu0 %v8659
      %10080 = vmatprep.subr.bf16.mxu0 %v8664
      %10081 = vmatpush1.bf16.msra.mxu0 %v8663
      %10082 = vmatprep.subr.bf16.mxu0 %v8668
      %10083 = vmatpush1.bf16.msra.mxu0 %v8667
      %10084 = vmatprep.subr.bf16.mxu0 %v8672
      %10085 = vmatpush1.bf16.msra.mxu0 %v8671
      %10086 = vmatprep.subr.bf16.mxu0 %v8676
      %10087 = vmatpush1.bf16.msra.mxu0 %v8675
      %10088 = vmatprep.subr.bf16.mxu0 %v8680
      %10089 = vmatpush1.bf16.msra.mxu0 %v8679
      %10090 = vmatprep.subr.bf16.mxu0 %v8684
      %10091 = vmatpush1.bf16.msra.mxu0 %v8683
      %10092 = vmatprep.subr.bf16.mxu0 %v8688
      %10093 = vmatpush1.bf16.msra.mxu0 %v8687
      %10094 = vmatprep.subr.bf16.mxu0 %v8692
      %10095 = vmatpush1.bf16.msra.mxu0 %v8691
      %10096 = vmatprep.subr.bf16.mxu0 %v8696
      %10097 = vmatpush1.bf16.msra.mxu0 %v8695
      %10098 = vmatprep.mubr.bf16.mxu0 %v6482
      %10099 = vmatmul.mubr.bf16.gmra.mrb[0].mxu0 %v6661
      %v10100 = vpop.f32.mrb[0].mxu0
      %v10101 = vadd.f32 %v10038, %v10100
      %v10102 = vpop.f32.mrb[0].mxu0
      %v10103 = vadd.f32 %v10040, %v10102
      %v10104 = vpop.f32.mrb[0].mxu0
      %v10105 = vadd.f32 %v10042, %v10104
      %v10106 = vpop.f32.mrb[0].mxu0
      %v10107 = vadd.f32 %v10044, %v10106
      %10108 = vmatprep.mubr.bf16.mxu0 %v6484
      %10109 = vmatmul.mubr.bf16.gmra.mrb[0].mxu0 %v6664
      %v10110 = vpop.f32.mrb[0].mxu0
      %v10111 = vadd.f32 %v10048, %v10110
      %v10112 = vpop.f32.mrb[0].mxu0
      %v10113 = vadd.f32 %v10050, %v10112
      %v10114 = vpop.f32.mrb[0].mxu0
      %v10115 = vadd.f32 %v10052, %v10114
      %v10116 = vpop.f32.mrb[0].mxu0
      %v10117 = vadd.f32 %v10054, %v10116
      %10118 = vmatprep.mubr.bf16.mxu0 %v6486
      %10119 = vmatmul.mubr.bf16.gmra.mrb[0].mxu0 %v6667
      %v10120 = vpop.f32.mrb[0].mxu0
      %v10121 = vadd.f32 %v10058, %v10120
      %v10122 = vpop.f32.mrb[0].mxu0
      %v10123 = vadd.f32 %v10060, %v10122
      %v10124 = vpop.f32.mrb[0].mxu0
      %v10125 = vadd.f32 %v10062, %v10124
      %v10126 = vpop.f32.mrb[0].mxu0
      %v10127 = vadd.f32 %v10064, %v10126
      %10128 = vdwg.mxu0
      %10129 = vmatprep.subr.bf16.mxu0 %v8700
      %10130 = vmatpush1.bf16.msra.mxu0 %v8699
      %10131 = vmatprep.subr.bf16.mxu0 %v8704
      %10132 = vmatpush1.bf16.msra.mxu0 %v8703
      %10133 = vmatprep.subr.bf16.mxu0 %v8708
      %10134 = vmatpush1.bf16.msra.mxu0 %v8707
      %10135 = vmatprep.subr.bf16.mxu0 %v8712
      %10136 = vmatpush1.bf16.msra.mxu0 %v8711
      %10137 = vmatprep.subr.bf16.mxu0 %v8716
      %10138 = vmatpush1.bf16.msra.mxu0 %v8715
      %10139 = vmatprep.subr.bf16.mxu0 %v8720
      %10140 = vmatpush1.bf16.msra.mxu0 %v8719
      %10141 = vmatprep.subr.bf16.mxu0 %v8724
      %10142 = vmatpush1.bf16.msra.mxu0 %v8723
      %10143 = vmatprep.subr.bf16.mxu0 %v8728
      %10144 = vmatpush1.bf16.msra.mxu0 %v8727
      %10145 = vmatprep.subr.bf16.mxu0 %v8732
      %10146 = vmatpush1.bf16.msra.mxu0 %v8731
      %10147 = vmatprep.subr.bf16.mxu0 %v8736
      %10148 = vmatpush1.bf16.msra.mxu0 %v8735
      %10149 = vmatprep.subr.bf16.mxu0 %v8740
      %10150 = vmatpush1.bf16.msra.mxu0 %v8739
      %10151 = vmatprep.subr.bf16.mxu0 %v8744
      %10152 = vmatpush1.bf16.msra.mxu0 %v8743
      %10153 = vmatprep.subr.bf16.mxu0 %v8748
      %10154 = vmatpush1.bf16.msra.mxu0 %v8747
      %10155 = vmatprep.subr.bf16.mxu0 %v8752
      %10156 = vmatpush1.bf16.msra.mxu0 %v8751
      %10157 = vmatprep.subr.bf16.mxu0 %v8756
      %10158 = vmatpush1.bf16.msra.mxu0 %v8755
      %10159 = vmatprep.subr.bf16.mxu0 %v8760
      %10160 = vmatpush1.bf16.msra.mxu0 %v8759
      %10161 = vmatprep.mubr.bf16.mxu0 %v6671
      %10162 = vmatmul.mubr.bf16.gmra.mrb[0].mxu0 %v6483
      %v10163 = vpop.f32.mrb[0].mxu0
      %v10164 = vadd.f32 %v10101, %v10163
      %v10165 = vpop.f32.mrb[0].mxu0
      %v10166 = vadd.f32 %v10103, %v10165
      %v10167 = vpop.f32.mrb[0].mxu0
      %v10168 = vadd.f32 %v10105, %v10167
      %v10169 = vpop.f32.mrb[0].mxu0
      %v10170 = vadd.f32 %v10107, %v10169
      %10171 = vmatprep.mubr.bf16.mxu0 %v6675
      %10172 = vmatmul.mubr.bf16.gmra.mrb[0].mxu0 %v6485
      %v10173 = vpop.f32.mrb[0].mxu0
      %v10174 = vadd.f32 %v10111, %v10173
      %v10175 = vpop.f32.mrb[0].mxu0
      %v10176 = vadd.f32 %v10113, %v10175
      %v10177 = vpop.f32.mrb[0].mxu0
      %v10178 = vadd.f32 %v10115, %v10177
      %v10179 = vpop.f32.mrb[0].mxu0
      %v10180 = vadd.f32 %v10117, %v10179
      %10181 = vmatprep.mubr.bf16.mxu0 %v6679
      %10182 = vmatmul.mubr.bf16.gmra.mrb[0].mxu0 %v6487
      %v10183 = vpop.f32.mrb[0].mxu0
      %v10184 = vadd.f32 %v10121, %v10183
      %v10185 = vpop.f32.mrb[0].mxu0
      %v10186 = vadd.f32 %v10123, %v10185
      %v10187 = vpop.f32.mrb[0].mxu0
      %v10188 = vadd.f32 %v10125, %v10187
      %v10189 = vpop.f32.mrb[0].mxu0
      %v10190 = vadd.f32 %v10127, %v10189
      %10191 = vdwg.mxu0
      %10192 = vmatprep.subr.bf16.mxu0 %v8764
      %10193 = vmatpush1.bf16.msra.mxu0 %v8763
      %10194 = vmatprep.subr.bf16.mxu0 %v8768
      %10195 = vmatpush1.bf16.msra.mxu0 %v8767
      %10196 = vmatprep.subr.bf16.mxu0 %v8772
      %10197 = vmatpush1.bf16.msra.mxu0 %v8771
      %10198 = vmatprep.subr.bf16.mxu0 %v8776
      %10199 = vmatpush1.bf16.msra.mxu0 %v8775
      %10200 = vmatprep.subr.bf16.mxu0 %v8780
      %10201 = vmatpush1.bf16.msra.mxu0 %v8779
      %10202 = vmatprep.subr.bf16.mxu0 %v8784
      %10203 = vmatpush1.bf16.msra.mxu0 %v8783
      %10204 = vmatprep.subr.bf16.mxu0 %v8788
      %10205 = vmatpush1.bf16.msra.mxu0 %v8787
      %10206 = vmatprep.subr.bf16.mxu0 %v8792
      %10207 = vmatpush1.bf16.msra.mxu0 %v8791
      %10208 = vmatprep.subr.bf16.mxu0 %v8796
      %10209 = vmatpush1.bf16.msra.mxu0 %v8795
      %10210 = vmatprep.subr.bf16.mxu0 %v8800
      %10211 = vmatpush1.bf16.msra.mxu0 %v8799
      %10212 = vmatprep.subr.bf16.mxu0 %v8804
      %10213 = vmatpush1.bf16.msra.mxu0 %v8803
      %10214 = vmatprep.subr.bf16.mxu0 %v8808
      %10215 = vmatpush1.bf16.msra.mxu0 %v8807
      %10216 = vmatprep.subr.bf16.mxu0 %v8812
      %10217 = vmatpush1.bf16.msra.mxu0 %v8811
      %10218 = vmatprep.subr.bf16.mxu0 %v8816
      %10219 = vmatpush1.bf16.msra.mxu0 %v8815
      %10220 = vmatprep.subr.bf16.mxu0 %v8820
      %10221 = vmatpush1.bf16.msra.mxu0 %v8819
      %10222 = vmatprep.subr.bf16.mxu0 %v8824
      %10223 = vmatpush1.bf16.msra.mxu0 %v8823
      %10224 = vmatprep.mubr.bf16.mxu0 %v6538
      %10225 = vmatmul.mubr.bf16.gmra.mrb[0].mxu0 %v6537
      %v10226 = vpop.f32.mrb[0].mxu0
      %v10227 = vadd.f32 %v10164, %v10226
      %v10228 = vpop.f32.mrb[0].mxu0
      %v10229 = vadd.f32 %v10166, %v10228
      %v10230 = vpop.f32.mrb[0].mxu0
      %v10231 = vadd.f32 %v10168, %v10230
      %v10232 = vpop.f32.mrb[0].mxu0
      %v10233 = vadd.f32 %v10170, %v10232
      %10234 = vmatprep.mubr.bf16.mxu0 %v6540
      %10235 = vmatmul.mubr.bf16.gmra.mrb[0].mxu0 %v6539
      %v10236 = vpop.f32.mrb[0].mxu0
      %v10237 = vadd.f32 %v10174, %v10236
      %v10238 = vpop.f32.mrb[0].mxu0
      %v10239 = vadd.f32 %v10176, %v10238
      %v10240 = vpop.f32.mrb[0].mxu0
      %v10241 = vadd.f32 %v10178, %v10240
      %v10242 = vpop.f32.mrb[0].mxu0
      %v10243 = vadd.f32 %v10180, %v10242
      %10244 = vmatprep.mubr.bf16.mxu0 %v6542
      %10245 = vmatmul.mubr.bf16.gmra.mrb[0].mxu0 %v6541
      %v10246 = vpop.f32.mrb[0].mxu0
      %v10247 = vadd.f32 %v10184, %v10246
      %v10248 = vpop.f32.mrb[0].mxu0
      %v10249 = vadd.f32 %v10186, %v10248
      %v10250 = vpop.f32.mrb[0].mxu0
      %v10251 = vadd.f32 %v10188, %v10250
      %v10252 = vpop.f32.mrb[0].mxu0
      %v10253 = vadd.f32 %v10190, %v10252
      %10254 = vdwg.mxu0
      %10255 = vmatprep.subr.bf16.mxu0 %v8828
      %10256 = vmatpush1.bf16.msra.mxu0 %v8827
      %10257 = vmatprep.subr.bf16.mxu0 %v8832
      %10258 = vmatpush1.bf16.msra.mxu0 %v8831
      %10259 = vmatprep.subr.bf16.mxu0 %v8836
      %10260 = vmatpush1.bf16.msra.mxu0 %v8835
      %10261 = vmatprep.subr.bf16.mxu0 %v8840
      %10262 = vmatpush1.bf16.msra.mxu0 %v8839
      %10263 = vmatprep.subr.bf16.mxu0 %v8844
      %10264 = vmatpush1.bf16.msra.mxu0 %v8843
      %10265 = vmatprep.subr.bf16.mxu0 %v8848
      %10266 = vmatpush1.bf16.msra.mxu0 %v8847
      %10267 = vmatprep.subr.bf16.mxu0 %v8852
      %10268 = vmatpush1.bf16.msra.mxu0 %v8851
      %10269 = vmatprep.subr.bf16.mxu0 %v8856
      %10270 = vmatpush1.bf16.msra.mxu0 %v8855
      %10271 = vmatprep.subr.bf16.mxu0 %v8860
      %10272 = vmatpush1.bf16.msra.mxu0 %v8859
      %10273 = vmatprep.subr.bf16.mxu0 %v8864
      %10274 = vmatpush1.bf16.msra.mxu0 %v8863
      %10275 = vmatprep.subr.bf16.mxu0 %v8868
      %10276 = vmatpush1.bf16.msra.mxu0 %v8867
      %10277 = vmatprep.subr.bf16.mxu0 %v8872
      %10278 = vmatpush1.bf16.msra.mxu0 %v8871
      %10279 = vmatprep.subr.bf16.mxu0 %v8876
      %10280 = vmatpush1.bf16.msra.mxu0 %v8875
      %10281 = vmatprep.subr.bf16.mxu0 %v8880
      %10282 = vmatpush1.bf16.msra.mxu0 %v8879
      %10283 = vmatprep.subr.bf16.mxu0 %v8884
      %10284 = vmatpush1.bf16.msra.mxu0 %v8883
      %10285 = vmatprep.subr.bf16.mxu0 %v8888
      %10286 = vmatpush1.bf16.msra.mxu0 %v8887
      %10287 = vmatprep.mubr.bf16.mxu0 %v6601
      %10288 = vmatmul.mubr.bf16.gmra.mrb[0].mxu0 %v6684
      %v10289 = vpop.f32.mrb[0].mxu0
      %v10290 = vadd.f32 %v10227, %v10289
      %v10291 = vpop.f32.mrb[0].mxu0
      %v10292 = vadd.f32 %v10229, %v10291
      %v10293 = vpop.f32.mrb[0].mxu0
      %v10294 = vadd.f32 %v10231, %v10293
      %v10295 = vpop.f32.mrb[0].mxu0
      %v10296 = vadd.f32 %v10233, %v10295
      %10297 = vmatprep.mubr.bf16.mxu0 %v6603
      %10298 = vmatmul.mubr.bf16.gmra.mrb[0].mxu0 %v6688
      %v10299 = vpop.f32.mrb[0].mxu0
      %v10300 = vadd.f32 %v10237, %v10299
      %v10301 = vpop.f32.mrb[0].mxu0
      %v10302 = vadd.f32 %v10239, %v10301
      %v10303 = vpop.f32.mrb[0].mxu0
      %v10304 = vadd.f32 %v10241, %v10303
      %v10305 = vpop.f32.mrb[0].mxu0
      %v10306 = vadd.f32 %v10243, %v10305
      %10307 = vmatprep.mubr.bf16.mxu0 %v6605
      %10308 = vmatmul.mubr.bf16.gmra.mrb[0].mxu0 %v6692
      %v10309 = vpop.f32.mrb[0].mxu0
      %v10310 = vadd.f32 %v10247, %v10309
      %v10311 = vpop.f32.mrb[0].mxu0
      %v10312 = vadd.f32 %v10249, %v10311
      %v10313 = vpop.f32.mrb[0].mxu0
      %v10314 = vadd.f32 %v10251, %v10313
      %v10315 = vpop.f32.mrb[0].mxu0
      %v10316 = vadd.f32 %v10253, %v10315
      %10317 = vdwg.mxu0
      %10318 = vmatprep.subr.bf16.mxu0 %v8892
      %10319 = vmatpush1.bf16.msra.mxu0 %v8891
      %10320 = vmatprep.subr.bf16.mxu0 %v8896
      %10321 = vmatpush1.bf16.msra.mxu0 %v8895
      %10322 = vmatprep.subr.bf16.mxu0 %v8900
      %10323 = vmatpush1.bf16.msra.mxu0 %v8899
      %10324 = vmatprep.subr.bf16.mxu0 %v8904
      %10325 = vmatpush1.bf16.msra.mxu0 %v8903
      %10326 = vmatprep.subr.bf16.mxu0 %v8908
      %10327 = vmatpush1.bf16.msra.mxu0 %v8907
      %10328 = vmatprep.subr.bf16.mxu0 %v8912
      %10329 = vmatpush1.bf16.msra.mxu0 %v8911
      %10330 = vmatprep.subr.bf16.mxu0 %v8916
      %10331 = vmatpush1.bf16.msra.mxu0 %v8915
      %10332 = vmatprep.subr.bf16.mxu0 %v8920
      %10333 = vmatpush1.bf16.msra.mxu0 %v8919
      %10334 = vmatprep.subr.bf16.mxu0 %v8924
      %10335 = vmatpush1.bf16.msra.mxu0 %v8923
      %10336 = vmatprep.subr.bf16.mxu0 %v8928
      %10337 = vmatpush1.bf16.msra.mxu0 %v8927
      %10338 = vmatprep.subr.bf16.mxu0 %v8932
      %10339 = vmatpush1.bf16.msra.mxu0 %v8931
      %10340 = vmatprep.subr.bf16.mxu0 %v8936
      %10341 = vmatpush1.bf16.msra.mxu0 %v8935
      %10342 = vmatprep.subr.bf16.mxu0 %v8940
      %10343 = vmatpush1.bf16.msra.mxu0 %v8939
      %10344 = vmatprep.subr.bf16.mxu0 %v8944
      %10345 = vmatpush1.bf16.msra.mxu0 %v8943
      %10346 = vmatprep.subr.bf16.mxu0 %v8948
      %10347 = vmatpush1.bf16.msra.mxu0 %v8947
      %10348 = vmatprep.subr.bf16.mxu0 %v8952
      %10349 = vmatpush1.bf16.msra.mxu0 %v8951
      %10350 = vmatprep.mubr.bf16.mxu0 %v6697
      %10351 = vmatmul.mubr.bf16.gmra.mrb[0].mxu0 %v6602
      %v10352 = vpop.f32.mrb[0].mxu0
      %v10353 = vadd.f32 %v10290, %v10352
      %v10354 = vpop.f32.mrb[0].mxu0
      %v10355 = vadd.f32 %v10292, %v10354
      %v10356 = vpop.f32.mrb[0].mxu0
      %v10357 = vadd.f32 %v10294, %v10356
      %v10358 = vpop.f32.mrb[0].mxu0
      %v10359 = vadd.f32 %v10296, %v10358
      %10360 = vmatprep.mubr.bf16.mxu0 %v6701
      %10361 = vmatmul.mubr.bf16.gmra.mrb[0].mxu0 %v6604
      %v10362 = vpop.f32.mrb[0].mxu0
      %v10363 = vadd.f32 %v10300, %v10362
      %v10364 = vpop.f32.mrb[0].mxu0
      %v10365 = vadd.f32 %v10302, %v10364
      %v10366 = vpop.f32.mrb[0].mxu0
      %v10367 = vadd.f32 %v10304, %v10366
      %v10368 = vpop.f32.mrb[0].mxu0
      %v10369 = vadd.f32 %v10306, %v10368
      %10370 = vmatprep.mubr.bf16.mxu0 %v6705
      %10371 = vmatmul.mubr.bf16.gmra.mrb[0].mxu0 %v6606
      %v10372 = vpop.f32.mrb[0].mxu0
      %v10373 = vadd.f32 %v10310, %v10372
      %v10374 = vpop.f32.mrb[0].mxu0
      %v10375 = vadd.f32 %v10312, %v10374
      %v10376 = vpop.f32.mrb[0].mxu0
      %v10377 = vadd.f32 %v10314, %v10376
      %v10378 = vpop.f32.mrb[0].mxu0
      %v10379 = vadd.f32 %v10316, %v10378
      %10380 = vdwg.mxu0
      %10381 = vmatprep.subr.bf16.mxu0 %v8956
      %10382 = vmatpush1.bf16.msra.mxu0 %v8955
      %10383 = vmatprep.subr.bf16.mxu0 %v8960
      %10384 = vmatpush1.bf16.msra.mxu0 %v8959
      %10385 = vmatprep.subr.bf16.mxu0 %v8964
      %10386 = vmatpush1.bf16.msra.mxu0 %v8963
      %10387 = vmatprep.subr.bf16.mxu0 %v8968
      %10388 = vmatpush1.bf16.msra.mxu0 %v8967
      %10389 = vmatprep.subr.bf16.mxu0 %v8972
      %10390 = vmatpush1.bf16.msra.mxu0 %v8971
      %10391 = vmatprep.subr.bf16.mxu0 %v8976
      %10392 = vmatpush1.bf16.msra.mxu0 %v8975
      %10393 = vmatprep.subr.bf16.mxu0 %v8980
      %10394 = vmatpush1.bf16.msra.mxu0 %v8979
      %10395 = vmatprep.subr.bf16.mxu0 %v8984
      %10396 = vmatpush1.bf16.msra.mxu0 %v8983
      %10397 = vmatprep.subr.bf16.mxu0 %v8988
      %10398 = vmatpush1.bf16.msra.mxu0 %v8987
      %10399 = vmatprep.subr.bf16.mxu0 %v8992
      %10400 = vmatpush1.bf16.msra.mxu0 %v8991
      %10401 = vmatprep.subr.bf16.mxu0 %v8996
      %10402 = vmatpush1.bf16.msra.mxu0 %v8995
      %10403 = vmatprep.subr.bf16.mxu0 %v9000
      %10404 = vmatpush1.bf16.msra.mxu0 %v8999
      %10405 = vmatprep.subr.bf16.mxu0 %v9004
      %10406 = vmatpush1.bf16.msra.mxu0 %v9003
      %10407 = vmatprep.subr.bf16.mxu0 %v9008
      %10408 = vmatpush1.bf16.msra.mxu0 %v9007
      %10409 = vmatprep.subr.bf16.mxu0 %v9012
      %10410 = vmatpush1.bf16.msra.mxu0 %v9011
      %10411 = vmatprep.subr.bf16.mxu0 %v9016
      %10412 = vmatpush1.bf16.msra.mxu0 %v9015
      %10413 = vmatprep.mubr.bf16.mxu0 %v6648
      %10414 = vmatmul.mubr.bf16.gmra.mrb[0].mxu0 %v6647
      %v10415 = vpop.f32.mrb[0].mxu0
      %v10416 = vadd.f32 %v10353, %v10415
      %v10417 = vpop.f32.mrb[0].mxu0
      %v10418 = vadd.f32 %v10355, %v10417
      %v10419 = vpop.f32.mrb[0].mxu0
      %v10420 = vadd.f32 %v10357, %v10419
      %v10421 = vpop.f32.mrb[0].mxu0
      %v10422 = vadd.f32 %v10359, %v10421
      %10423 = vmatprep.mubr.bf16.mxu0 %v6650
      %10424 = vmatmul.mubr.bf16.gmra.mrb[0].mxu0 %v6649
      %v10425 = vpop.f32.mrb[0].mxu0
      %v10426 = vadd.f32 %v10363, %v10425
      %v10427 = vpop.f32.mrb[0].mxu0
      %v10428 = vadd.f32 %v10365, %v10427
      %v10429 = vpop.f32.mrb[0].mxu0
      %v10430 = vadd.f32 %v10367, %v10429
      %v10431 = vpop.f32.mrb[0].mxu0
      %v10432 = vadd.f32 %v10369, %v10431
      %10433 = vmatprep.mubr.bf16.mxu0 %v6652
      %10434 = vmatmul.mubr.bf16.gmra.mrb[0].mxu0 %v6651
      %v10435 = vpop.f32.mrb[0].mxu0
      %v10436 = vadd.f32 %v10373, %v10435
      %v10437 = vpop.f32.mrb[0].mxu0
      %v10438 = vadd.f32 %v10375, %v10437
      %v10439 = vpop.f32.mrb[0].mxu0
      %v10440 = vadd.f32 %v10377, %v10439
      %v10441 = vpop.f32.mrb[0].mxu0
      %v10442 = vadd.f32 %v10379, %v10441
      %10443 = vdwg.mxu0
      %10444 = vmatprep.subr.bf16.mxu0 %v9020
      %10445 = vmatpush1.bf16.msra.mxu0 %v9019
      %10446 = vmatprep.subr.bf16.mxu0 %v9024
      %10447 = vmatpush1.bf16.msra.mxu0 %v9023
      %10448 = vmatprep.subr.bf16.mxu0 %v9028
      %10449 = vmatpush1.bf16.msra.mxu0 %v9027
      %10450 = vmatprep.subr.bf16.mxu0 0
      %10451 = vmatpush1.bf16.msra.mxu0 0
      %10452 = vmatprep.subr.bf16.mxu0 0
      %10453 = vmatpush1.bf16.msra.mxu0 0
      %10454 = vmatprep.subr.bf16.mxu0 0
      %10455 = vmatpush1.bf16.msra.mxu0 0
      %10456 = vmatprep.subr.bf16.mxu0 0
      %10457 = vmatpush1.bf16.msra.mxu0 0
      %10458 = vmatprep.subr.bf16.mxu0 0
      %10459 = vmatpush1.bf16.msra.mxu0 0
      %10460 = vmatprep.subr.bf16.mxu0 0
      %10461 = vmatpush1.bf16.msra.mxu0 0
      %10462 = vmatprep.subr.bf16.mxu0 0
      %10463 = vmatpush1.bf16.msra.mxu0 0
      %10464 = vmatprep.subr.bf16.mxu0 0
      %10465 = vmatpush1.bf16.msra.mxu0 0
      %10466 = vmatprep.subr.bf16.mxu0 0
      %10467 = vmatpush1.bf16.msra.mxu0 0
      %10468 = vmatprep.subr.bf16.mxu0 0
      %10469 = vmatpush1.bf16.msra.mxu0 0
      %10470 = vmatprep.subr.bf16.mxu0 0
      %10471 = vmatpush1.bf16.msra.mxu0 0
      %10472 = vmatprep.subr.bf16.mxu0 0
      %10473 = vmatpush1.bf16.msra.mxu0 0
      %10474 = vmatprep.subr.bf16.mxu0 0
      %10475 = vmatpush1.bf16.msra.mxu0 0
      %10476 = vmatprep.mubr.bf16.mxu0 0
      %10477 = vmatmul.mubr.bf16.gmra.mrb[0].mxu0 %v9491
      %v10478 = vpop.f32.mrb[0].mxu0
      %v10479 = vadd.f32 %v10416, %v10478
      %v10480 = vpop.f32.mrb[0].mxu0
      %v10481 = vadd.f32 %v10418, %v10480
      %v10482 = vpop.f32.mrb[0].mxu0
      %v10483 = vadd.f32 %v10420, %v10482
      %v10484 = vpop.f32.mrb[0].mxu0
      %v10485 = vadd.f32 %v10422, %v10484
      %10486 = vmatprep.mubr.bf16.mxu0 0
      %10487 = vmatmul.mubr.bf16.gmra.mrb[0].mxu0 %v9494
      %v10488 = vpop.f32.mrb[0].mxu0
      %v10489 = vadd.f32 %v10426, %v10488
      %v10490 = vpop.f32.mrb[0].mxu0
      %v10491 = vadd.f32 %v10428, %v10490
      %v10492 = vpop.f32.mrb[0].mxu0
      %v10493 = vadd.f32 %v10430, %v10492
      %v10494 = vpop.f32.mrb[0].mxu0
      %v10495 = vadd.f32 %v10432, %v10494
      %10496 = vmatprep.mubr.bf16.mxu0 0
      %10497 = vmatmul.mubr.bf16.gmra.mrb[0].mxu0 %v9497
      %v10498 = vpop.f32.mrb[0].mxu0
      %v10499 = vadd.f32 %v10436, %v10498
      %v10500 = vpop.f32.mrb[0].mxu0
      %v10501 = vadd.f32 %v10438, %v10500
      %v10502 = vpop.f32.mrb[0].mxu0
      %v10503 = vadd.f32 %v10440, %v10502
      %v10504 = vpop.f32.mrb[0].mxu0
      %v10505 = vadd.f32 %v10442, %v10504
      %10506 = vdwg.mxu0
      %v10507 = vpack.c.bf16 %v9979, %v9975
      %v10508 = vpack.c.bf16 %v9981, %v9977
      %v10509 = vpack.c.bf16 %v10483, %v10479
      %v10510 = vpack.c.bf16 %v10485, %v10481
      %v10511 = vpack.c.bf16 %v9989, %v9985
      %v10512 = vpack.c.bf16 %v9991, %v9987
      %v10513 = vpack.c.bf16 %v10493, %v10489
      %v10514 = vpack.c.bf16 %v10495, %v10491
      %v10515 = vpack.c.bf16 %v9999, %v9995
      %v10516 = vpack.c.bf16 %v10001, %v9997
      %v10517 = vpack.c.bf16 %v10503, %v10499
      %v10518 = vpack.c.bf16 %v10505, %v10501
      %v10519 = vld [vmem:[%s9] sm:$0xf]
      %v10520 = vld [vmem:[%s9 + $0x4] sm:$0xf]
      %v10521 = vld [vmem:[%s9 + $0x8] sm:$0x7]
      %v10525 = vunpack.c.l.b16 %v10519
      %v10526 = vunpack.c.l.b16 %v10520
      %v10527 = vunpack.c.l.b16 %v10521
      %v10528 = vpack.c.b16 %v10526, %v10525
      %v10529 = vpack.c.b16 %v10527, %v10527
      %vm10530 = vcmask 343040
      %v10532 = vsel %vm10530, %v10528, 0
      %v10535 = vsel %vm10530, %v10529, 0
      %vm10537 = vcmask 1044480
      %v10539 = vsel %vm10537, %v10515, 0
      %v10542 = vsel %vm10537, %v10516, 0
      %v10545 = vsel %vm10537, %v10517, 0
      %v10548 = vsel %vm10537, %v10518, 0
      %10550 = vmatprep.subr.bf16.mxu0 %v10508
      %10551 = vmatpush1.bf16.msra.mxu0 %v10507
      %10552 = vmatprep.subr.bf16.mxu0 %v10512
      %10553 = vmatpush1.bf16.msra.mxu0 %v10511
      %10554 = vmatprep.subr.bf16.mxu0 %v10542
      %10555 = vmatpush1.bf16.msra.mxu0 %v10539
      %10556 = vmatprep.subr.bf16.mxu0 0
      %10557 = vmatpush1.bf16.msra.mxu0 0
      %10558 = vmatprep.subr.bf16.mxu0 0
      %10559 = vmatpush1.bf16.msra.mxu0 0
      %10560 = vmatprep.subr.bf16.mxu0 0
      %10561 = vmatpush1.bf16.msra.mxu0 0
      %10562 = vmatprep.subr.bf16.mxu0 0
      %10563 = vmatpush1.bf16.msra.mxu0 0
      %10564 = vmatprep.subr.bf16.mxu0 0
      %10565 = vmatpush1.bf16.msra.mxu0 0
      %10566 = vmatprep.subr.bf16.mxu0 0
      %10567 = vmatpush1.bf16.msra.mxu0 0
      %10568 = vmatprep.subr.bf16.mxu0 0
      %10569 = vmatpush1.bf16.msra.mxu0 0
      %10570 = vmatprep.subr.bf16.mxu0 0
      %10571 = vmatpush1.bf16.msra.mxu0 0
      %10572 = vmatprep.subr.bf16.mxu0 0
      %10573 = vmatpush1.bf16.msra.mxu0 0
      %10574 = vmatprep.subr.bf16.mxu0 0
      %10575 = vmatpush1.bf16.msra.mxu0 0
      %10576 = vmatprep.subr.bf16.mxu0 0
      %10577 = vmatpush1.bf16.msra.mxu0 0
      %10578 = vmatprep.subr.bf16.mxu0 0
      %10579 = vmatpush1.bf16.msra.mxu0 0
      %10580 = vmatprep.subr.bf16.mxu0 0
      %10581 = vmatpush1.bf16.msra.mxu0 0
      %10582 = vmatprep.mubr.bf16.mxu0 0
      %10583 = vmatmul.mubr.bf16.gmra.mrb[0].mxu0 %v10532
      %v10584 = vpop.f32.mrb[0].mxu0
      %v10585 = vadd.f32 0.0, %v10584
      %v10586 = vpop.f32.mrb[0].mxu0
      %v10587 = vadd.f32 0.0, %v10586
      %v10588 = vpop.f32.mrb[0].mxu0
      %v10589 = vadd.f32 0.0, %v10588
      %v10590 = vpop.f32.mrb[0].mxu0
      %v10591 = vadd.f32 0.0, %v10590
      %10592 = vmatprep.mubr.bf16.mxu0 0
      %10593 = vmatmul.mubr.bf16.gmra.mrb[0].mxu0 %v10535
      %v10594 = vpop.f32.mrb[0].mxu0
      %v10595 = vadd.f32 0.0, %v10594
      %v10596 = vpop.f32.mrb[0].mxu0
      %v10597 = vadd.f32 0.0, %v10596
      %v10598 = vpop.f32.mrb[0].mxu0
      %v10599 = vpop.f32.mrb[0].mxu0
      %10600 = vdwg.mxu0
      %10601 = vmatprep.subr.bf16.mxu0 %v10510
      %10602 = vmatpush1.bf16.msra.mxu0 %v10509
      %10603 = vmatprep.subr.bf16.mxu0 %v10514
      %10604 = vmatpush1.bf16.msra.mxu0 %v10513
      %10605 = vmatprep.subr.bf16.mxu0 %v10548
      %10606 = vmatpush1.bf16.msra.mxu0 %v10545
      %10607 = vmatprep.subr.bf16.mxu0 0
      %10608 = vmatpush1.bf16.msra.mxu0 0
      %10609 = vmatprep.subr.bf16.mxu0 0
      %10610 = vmatpush1.bf16.msra.mxu0 0
      %10611 = vmatprep.subr.bf16.mxu0 0
      %10612 = vmatpush1.bf16.msra.mxu0 0
      %10613 = vmatprep.subr.bf16.mxu0 0
      %10614 = vmatpush1.bf16.msra.mxu0 0
      %10615 = vmatprep.subr.bf16.mxu0 0
      %10616 = vmatpush1.bf16.msra.mxu0 0
      %10617 = vmatprep.subr.bf16.mxu0 0
      %10618 = vmatpush1.bf16.msra.mxu0 0
      %10619 = vmatprep.subr.bf16.mxu0 0
      %10620 = vmatpush1.bf16.msra.mxu0 0
      %10621 = vmatprep.subr.bf16.mxu0 0
      %10622 = vmatpush1.bf16.msra.mxu0 0
      %10623 = vmatprep.subr.bf16.mxu0 0
      %10624 = vmatpush1.bf16.msra.mxu0 0
      %10625 = vmatprep.subr.bf16.mxu0 0
      %10626 = vmatpush1.bf16.msra.mxu0 0
      %10627 = vmatprep.subr.bf16.mxu0 0
      %10628 = vmatpush1.bf16.msra.mxu0 0
      %10629 = vmatprep.subr.bf16.mxu0 0
      %10630 = vmatpush1.bf16.msra.mxu0 0
      %10631 = vmatprep.subr.bf16.mxu0 0
      %10632 = vmatpush1.bf16.msra.mxu0 0
      %10633 = vmatprep.mubr.bf16.mxu0 0
      %10634 = vmatmul.mubr.bf16.gmra.mrb[0].mxu0 %v10532
      %v10635 = vpop.f32.mrb[0].mxu0
      %v10636 = vadd.f32 0.0, %v10635
      %v10637 = vpop.f32.mrb[0].mxu0
      %v10638 = vadd.f32 0.0, %v10637
      %v10639 = vpop.f32.mrb[0].mxu0
      %v10640 = vadd.f32 0.0, %v10639
      %v10641 = vpop.f32.mrb[0].mxu0
      %v10642 = vadd.f32 0.0, %v10641
      %10643 = vmatprep.mubr.bf16.mxu0 0
      %10644 = vmatmul.mubr.bf16.gmra.mrb[0].mxu0 %v10535
      %v10645 = vpop.f32.mrb[0].mxu0
      %v10646 = vadd.f32 0.0, %v10645
      %v10647 = vpop.f32.mrb[0].mxu0
      %v10648 = vadd.f32 0.0, %v10647
      %v10649 = vpop.f32.mrb[0].mxu0
      %v10650 = vpop.f32.mrb[0].mxu0
      %10651 = vdwg.mxu0
      %v10652 = vld [vmem:[%s10] sm:$0xf]
      %v10653 = vld [vmem:[%s10 + $0x4] sm:$0xf]
      %v10654 = vld [vmem:[%s10 + $0x8] sm:$0x7]
      %v10658 = vunpack.c.l.b16 %v10652
      %v10659 = vunpack.c.l.b16 %v10653
      %v10660 = vunpack.c.l.b16 %v10654
      %v10661 = vpack.c.b16 %v10659, %v10658
      %v10662 = vpack.c.b16 %v10660, %v10660
      %v10664 = vsel %vm10530, %v10661, 0
      %v10667 = vsel %vm10530, %v10662, 0
      %10669 = vmatprep.subr.bf16.mxu0 %v10508
      %10670 = vmatpush1.bf16.msra.mxu0 %v10507
      %10671 = vmatprep.subr.bf16.mxu0 %v10512
      %10672 = vmatpush1.bf16.msra.mxu0 %v10511
      %10673 = vmatprep.subr.bf16.mxu0 %v10542
      %10674 = vmatpush1.bf16.msra.mxu0 %v10539
      %10675 = vmatprep.subr.bf16.mxu0 0
      %10676 = vmatpush1.bf16.msra.mxu0 0
      %10677 = vmatprep.subr.bf16.mxu0 0
      %10678 = vmatpush1.bf16.msra.mxu0 0
      %10679 = vmatprep.subr.bf16.mxu0 0
      %10680 = vmatpush1.bf16.msra.mxu0 0
      %10681 = vmatprep.subr.bf16.mxu0 0
      %10682 = vmatpush1.bf16.msra.mxu0 0
      %10683 = vmatprep.subr.bf16.mxu0 0
      %10684 = vmatpush1.bf16.msra.mxu0 0
      %10685 = vmatprep.subr.bf16.mxu0 0
      %10686 = vmatpush1.bf16.msra.mxu0 0
      %10687 = vmatprep.subr.bf16.mxu0 0
      %10688 = vmatpush1.bf16.msra.mxu0 0
      %10689 = vmatprep.subr.bf16.mxu0 0
      %10690 = vmatpush1.bf16.msra.mxu0 0
      %10691 = vmatprep.subr.bf16.mxu0 0
      %10692 = vmatpush1.bf16.msra.mxu0 0
      %10693 = vmatprep.subr.bf16.mxu0 0
      %10694 = vmatpush1.bf16.msra.mxu0 0
      %10695 = vmatprep.subr.bf16.mxu0 0
      %10696 = vmatpush1.bf16.msra.mxu0 0
      %10697 = vmatprep.subr.bf16.mxu0 0
      %10698 = vmatpush1.bf16.msra.mxu0 0
      %10699 = vmatprep.subr.bf16.mxu0 0
      %10700 = vmatpush1.bf16.msra.mxu0 0
      %10701 = vmatprep.mubr.bf16.mxu0 0
      %10702 = vmatmul.mubr.bf16.gmra.mrb[0].mxu0 %v10664
      %v10703 = vpop.f32.mrb[0].mxu0
      %v10704 = vadd.f32 0.0, %v10703
      %v10705 = vpop.f32.mrb[0].mxu0
      %v10706 = vadd.f32 0.0, %v10705
      %v10707 = vpop.f32.mrb[0].mxu0
      %v10708 = vadd.f32 0.0, %v10707
      %v10709 = vpop.f32.mrb[0].mxu0
      %v10710 = vadd.f32 0.0, %v10709
      %10711 = vmatprep.mubr.bf16.mxu0 0
      %10712 = vmatmul.mubr.bf16.gmra.mrb[0].mxu0 %v10667
      %v10713 = vpop.f32.mrb[0].mxu0
      %v10714 = vadd.f32 0.0, %v10713
      %v10715 = vpop.f32.mrb[0].mxu0
      %v10716 = vadd.f32 0.0, %v10715
      %v10717 = vpop.f32.mrb[0].mxu0
      %v10718 = vpop.f32.mrb[0].mxu0
      %10719 = vdwg.mxu0
      %10720 = vmatprep.subr.bf16.mxu0 %v10510
      %10721 = vmatpush1.bf16.msra.mxu0 %v10509
      %10722 = vmatprep.subr.bf16.mxu0 %v10514
      %10723 = vmatpush1.bf16.msra.mxu0 %v10513
      %10724 = vmatprep.subr.bf16.mxu0 %v10548
      %10725 = vmatpush1.bf16.msra.mxu0 %v10545
      %10726 = vmatprep.subr.bf16.mxu0 0
      %10727 = vmatpush1.bf16.msra.mxu0 0
      %10728 = vmatprep.subr.bf16.mxu0 0
      %10729 = vmatpush1.bf16.msra.mxu0 0
      %10730 = vmatprep.subr.bf16.mxu0 0
      %10731 = vmatpush1.bf16.msra.mxu0 0
      %10732 = vmatprep.subr.bf16.mxu0 0
      %10733 = vmatpush1.bf16.msra.mxu0 0
      %10734 = vmatprep.subr.bf16.mxu0 0
      %10735 = vmatpush1.bf16.msra.mxu0 0
      %10736 = vmatprep.subr.bf16.mxu0 0
      %10737 = vmatpush1.bf16.msra.mxu0 0
      %10738 = vmatprep.subr.bf16.mxu0 0
      %10739 = vmatpush1.bf16.msra.mxu0 0
      %10740 = vmatprep.subr.bf16.mxu0 0
      %10741 = vmatpush1.bf16.msra.mxu0 0
      %10742 = vmatprep.subr.bf16.mxu0 0
      %10743 = vmatpush1.bf16.msra.mxu0 0
      %10744 = vmatprep.subr.bf16.mxu0 0
      %10745 = vmatpush1.bf16.msra.mxu0 0
      %10746 = vmatprep.subr.bf16.mxu0 0
      %10747 = vmatpush1.bf16.msra.mxu0 0
      %10748 = vmatprep.subr.bf16.mxu0 0
      %10749 = vmatpush1.bf16.msra.mxu0 0
      %10750 = vmatprep.subr.bf16.mxu0 0
      %10751 = vmatpush1.bf16.msra.mxu0 0
      %10752 = vmatprep.mubr.bf16.mxu0 0
      %10753 = vmatmul.mubr.bf16.gmra.mrb[0].mxu0 %v10664
      %v10754 = vpop.f32.mrb[0].mxu0
      %v10755 = vadd.f32 0.0, %v10754
      %v10756 = vpop.f32.mrb[0].mxu0
      %v10757 = vadd.f32 0.0, %v10756
      %v10758 = vpop.f32.mrb[0].mxu0
      %v10759 = vadd.f32 0.0, %v10758
      %v10760 = vpop.f32.mrb[0].mxu0
      %v10761 = vadd.f32 0.0, %v10760
      %10762 = vmatprep.mubr.bf16.mxu0 0
      %10763 = vmatmul.mubr.bf16.gmra.mrb[0].mxu0 %v10667
      %v10764 = vpop.f32.mrb[0].mxu0
      %v10765 = vadd.f32 0.0, %v10764
      %v10766 = vpop.f32.mrb[0].mxu0
      %v10767 = vadd.f32 0.0, %v10766
      %v10768 = vpop.f32.mrb[0].mxu0
      %v10769 = vpop.f32.mrb[0].mxu0
      %10770 = vdwg.mxu0
      %v10771 = vmax.f32 %v10585, %v10704
      %v10772 = vmax.f32 %v10587, %v10706
      %v10773 = vmax.f32 %v10636, %v10755
      %v10774 = vmax.f32 %v10638, %v10757
      %v10775 = vmax.f32 %v10589, %v10708
      %v10776 = vmax.f32 %v10591, %v10710
      %v10777 = vmax.f32 %v10640, %v10759
      %v10778 = vmax.f32 %v10642, %v10761
      %v10779 = vmax.f32 %v10595, %v10714
      %v10780 = vmax.f32 %v10597, %v10716
      %v10781 = vmax.f32 %v10646, %v10765
      %v10782 = vmax.f32 %v10648, %v10767
      %v10783 = vpack.c.bf16 %v10775, %v10771
      %v10784 = vpack.c.bf16 %v10776, %v10772
      %v10785 = vpack.c.bf16 %v10777, %v10773
      %v10786 = vpack.c.bf16 %v10778, %v10774
      %v10787 = vpack.c.bf16 %v10779, %v10779
      %v10788 = vpack.c.bf16 %v10780, %v10780
      %v10789 = vpack.c.bf16 %v10781, %v10781
      %v10790 = vpack.c.bf16 %v10782, %v10782
      %v10791 = vld [vmem:[%s11] sm:$0xff]
      %v10792 = vld [vmem:[%s11 + $0x8] sm:$0xff]
      %v10793 = vld [vmem:[%s11 + $0x10] sm:$0xff]
      %v10794 = vld [vmem:[%s11 + $0x18] sm:$0xff]
      %v10795 = vld [vmem:[%s11 + $0x20] sm:$0xff]
      %v10796 = vld [vmem:[%s11 + $0x28] sm:$0xff]
      %v10797 = vld [vmem:[%s11 + $0x30] sm:$0xff]
      %v10798 = vld [vmem:[%s11 + $0x38] sm:$0xff]
      %v10799 = vld [vmem:[%s11 + $0x40] sm:$0xff]
      %v10800 = vld [vmem:[%s11 + $0x48] sm:$0xff]
      %v10801 = vld [vmem:[%s11 + $0x50] sm:$0xff]
      %v10802 = vld [vmem:[%s11 + $0x58] sm:$0xff]
      %v10803 = vld [vmem:[%s11 + $0x60] sm:$0xff]
      %v10804 = vld [vmem:[%s11 + $0x68] sm:$0xff]
      %v10805 = vld [vmem:[%s11 + $0x70] sm:$0xff]
      %v10806 = vld [vmem:[%s11 + $0x78] sm:$0xff]
      %v10807 = vld [vmem:[%s11 + $0x80] sm:$0xff]
      %v10808 = vld [vmem:[%s11 + $0x88] sm:$0xff]
      %v10809 = vld [vmem:[%s11 + $0x90] sm:$0xff]
      %v10810 = vld [vmem:[%s11 + $0x98] sm:$0xff]
      %v10811 = vld [vmem:[%s11 + $0xa0] sm:$0xff]
      %v10812 = vld [vmem:[%s11 + $0xa8] sm:$0xff]
      %v10813 = vld [vmem:[%s11 + $0xb0] sm:$0xff]
      %v10814 = vld [vmem:[%s11 + $0xb8] sm:$0xff]
      %v10815 = vld [vmem:[%s11 + $0xc0] sm:$0xff]
      %v10816 = vld [vmem:[%s11 + $0xc8] sm:$0xff]
      %v10817 = vld [vmem:[%s11 + $0xd0] sm:$0xff]
      %v10818 = vld [vmem:[%s11 + $0xd8] sm:$0xff]
      %v10819 = vld [vmem:[%s11 + $0xe0] sm:$0xff]
      %v10820 = vld [vmem:[%s11 + $0xe8] sm:$0xff]
      %v10821 = vld [vmem:[%s11 + $0xf0] sm:$0xff]
      %v10822 = vld [vmem:[%s11 + $0xf8] sm:$0xff]
      %v10823 = vld [vmem:[%s11 + $0x100] sm:$0xff]
      %v10824 = vld [vmem:[%s11 + $0x108] sm:$0xff]
      %v10825 = vld [vmem:[%s11 + $0x110] sm:$0xff]
      %v10826 = vld [vmem:[%s11 + $0x118] sm:$0xff]
      %v10827 = vld [vmem:[%s11 + $0x120] sm:$0xff]
      %v10828 = vld [vmem:[%s11 + $0x128] sm:$0xff]
      %v10829 = vld [vmem:[%s11 + $0x130] sm:$0xff]
      %v10830 = vld [vmem:[%s11 + $0x138] sm:$0xff]
      %v10831 = vld [vmem:[%s11 + $0x140] sm:$0xff]
      %v10832 = vld [vmem:[%s11 + $0x148] sm:$0xff]
      %v10833 = vld [vmem:[%s11 + $0x150] sm:$0xff]
      %v10834 = vld [vmem:[%s11 + $0x158] sm:$0xff]
      %v10835 = vld [vmem:[%s11 + $0x160] sm:$0xff]
      %v10836 = vld [vmem:[%s11 + $0x168] sm:$0xff]
      %v10837 = vld [vmem:[%s11 + $0x170] sm:$0xff]
      %v10838 = vld [vmem:[%s11 + $0x178] sm:$0xff]
      %v10839 = vld [vmem:[%s11 + $0x180] sm:$0xff]
      %v10840 = vld [vmem:[%s11 + $0x188] sm:$0xff]
      %v10841 = vld [vmem:[%s11 + $0x190] sm:$0xff]
      %v10842 = vld [vmem:[%s11 + $0x198] sm:$0xff]
      %v10843 = vld [vmem:[%s11 + $0x1a0] sm:$0x33]
      %v10897 = vunpack.c.l.b16 %v10791
      %v10898 = vunpack.c.h.b16 %v10791
      %v10899 = vunpack.c.l.b16 %v10792
      %v10900 = vunpack.c.h.b16 %v10792
      %v10901 = vunpack.c.l.b16 %v10793
      %v10902 = vunpack.c.h.b16 %v10793
      %v10903 = vunpack.c.l.b16 %v10794
      %v10904 = vunpack.c.h.b16 %v10794
      %v10905 = vunpack.c.l.b16 %v10795
      %v10906 = vunpack.c.h.b16 %v10795
      %v10907 = vunpack.c.l.b16 %v10796
      %v10908 = vunpack.c.h.b16 %v10796
      %v10909 = vunpack.c.l.b16 %v10797
      %v10910 = vunpack.c.h.b16 %v10797
      %v10911 = vunpack.c.l.b16 %v10798
      %v10912 = vunpack.c.h.b16 %v10798
      %v10913 = vunpack.c.l.b16 %v10799
      %v10914 = vunpack.c.h.b16 %v10799
      %v10915 = vunpack.c.l.b16 %v10800
      %v10916 = vunpack.c.h.b16 %v10800
      %v10917 = vunpack.c.l.b16 %v10801
      %v10918 = vunpack.c.h.b16 %v10801
      %v10919 = vunpack.c.l.b16 %v10802
      %v10920 = vunpack.c.h.b16 %v10802
      %v10921 = vunpack.c.l.b16 %v10803
      %v10922 = vunpack.c.h.b16 %v10803
      %v10923 = vunpack.c.l.b16 %v10804
      %v10924 = vunpack.c.h.b16 %v10804
      %v10925 = vunpack.c.l.b16 %v10805
      %v10926 = vunpack.c.h.b16 %v10805
      %v10927 = vunpack.c.l.b16 %v10806
      %v10928 = vunpack.c.h.b16 %v10806
      %v10929 = vunpack.c.l.b16 %v10807
      %v10930 = vunpack.c.h.b16 %v10807
      %v10931 = vunpack.c.l.b16 %v10808
      %v10932 = vunpack.c.h.b16 %v10808
      %v10933 = vunpack.c.l.b16 %v10809
      %v10934 = vunpack.c.h.b16 %v10809
      %v10935 = vunpack.c.l.b16 %v10810
      %v10936 = vunpack.c.h.b16 %v10810
      %v10937 = vunpack.c.l.b16 %v10811
      %v10938 = vunpack.c.h.b16 %v10811
      %v10939 = vunpack.c.l.b16 %v10812
      %v10940 = vunpack.c.h.b16 %v10812
      %v10941 = vunpack.c.l.b16 %v10813
      %v10942 = vunpack.c.h.b16 %v10813
      %v10943 = vunpack.c.l.b16 %v10814
      %v10944 = vunpack.c.h.b16 %v10814
      %v10945 = vunpack.c.l.b16 %v10815
      %v10946 = vunpack.c.h.b16 %v10815
      %v10947 = vunpack.c.l.b16 %v10816
      %v10948 = vunpack.c.h.b16 %v10816
      %v10949 = vunpack.c.l.b16 %v10817
      %v10950 = vunpack.c.h.b16 %v10817
      %v10951 = vunpack.c.l.b16 %v10818
      %v10952 = vunpack.c.h.b16 %v10818
      %v10953 = vunpack.c.l.b16 %v10819
      %v10954 = vunpack.c.h.b16 %v10819
      %v10955 = vunpack.c.l.b16 %v10820
      %v10956 = vunpack.c.h.b16 %v10820
      %v10957 = vunpack.c.l.b16 %v10821
      %v10958 = vunpack.c.h.b16 %v10821
      %v10959 = vunpack.c.l.b16 %v10822
      %v10960 = vunpack.c.h.b16 %v10822
      %v10961 = vunpack.c.l.b16 %v10823
      %v10962 = vunpack.c.h.b16 %v10823
      %v10963 = vunpack.c.l.b16 %v10824
      %v10964 = vunpack.c.h.b16 %v10824
      %v10965 = vunpack.c.l.b16 %v10825
      %v10966 = vunpack.c.h.b16 %v10825
      %v10967 = vunpack.c.l.b16 %v10826
      %v10968 = vunpack.c.h.b16 %v10826
      %v10969 = vunpack.c.l.b16 %v10827
      %v10970 = vunpack.c.h.b16 %v10827
      %v10971 = vunpack.c.l.b16 %v10828
      %v10972 = vunpack.c.h.b16 %v10828
      %v10973 = vunpack.c.l.b16 %v10829
      %v10974 = vunpack.c.h.b16 %v10829
      %v10975 = vunpack.c.l.b16 %v10830
      %v10976 = vunpack.c.h.b16 %v10830
      %v10977 = vunpack.c.l.b16 %v10831
      %v10978 = vunpack.c.h.b16 %v10831
      %v10979 = vunpack.c.l.b16 %v10832
      %v10980 = vunpack.c.h.b16 %v10832
      %v10981 = vunpack.c.l.b16 %v10833
      %v10982 = vunpack.c.h.b16 %v10833
      %v10983 = vunpack.c.l.b16 %v10834
      %v10984 = vunpack.c.h.b16 %v10834
      %v10985 = vunpack.c.l.b16 %v10835
      %v10986 = vunpack.c.h.b16 %v10835
      %v10987 = vunpack.c.l.b16 %v10836
      %v10988 = vunpack.c.h.b16 %v10836
      %v10989 = vunpack.c.l.b16 %v10837
      %v10990 = vunpack.c.h.b16 %v10837
      %v10991 = vunpack.c.l.b16 %v10838
      %v10992 = vunpack.c.h.b16 %v10838
      %v10993 = vunpack.c.l.b16 %v10839
      %v10994 = vunpack.c.h.b16 %v10839
      %v10995 = vunpack.c.l.b16 %v10840
      %v10996 = vunpack.c.h.b16 %v10840
      %v10997 = vunpack.c.l.b16 %v10841
      %v10998 = vunpack.c.h.b16 %v10841
      %v10999 = vunpack.c.l.b16 %v10842
      %v11000 = vunpack.c.h.b16 %v10842
      %v11001 = vunpack.c.l.b16 %v10843
      %v11002 = vunpack.c.h.b16 %v10843
      %v11003 = vpack.c.b16 %v10899, %v10897
      %v11004 = vpack.c.b16 %v10900, %v10898
      %v11005 = vpack.c.b16 %v10903, %v10901
      %v11006 = vpack.c.b16 %v10904, %v10902
      %v11007 = vpack.c.b16 %v10907, %v10905
      %v11008 = vpack.c.b16 %v10908, %v10906
      %v11009 = vpack.c.b16 %v10911, %v10909
      %v11010 = vpack.c.b16 %v10912, %v10910
      %v11011 = vpack.c.b16 %v10915, %v10913
      %v11012 = vpack.c.b16 %v10916, %v10914
      %v11013 = vpack.c.b16 %v10919, %v10917
      %v11014 = vpack.c.b16 %v10920, %v10918
      %v11015 = vpack.c.b16 %v10923, %v10921
      %v11016 = vpack.c.b16 %v10924, %v10922
      %v11017 = vpack.c.b16 %v10927, %v10925
      %v11018 = vpack.c.b16 %v10928, %v10926
      %v11019 = vpack.c.b16 %v10931, %v10929
      %v11020 = vpack.c.b16 %v10932, %v10930
      %v11021 = vpack.c.b16 %v10935, %v10933
      %v11022 = vpack.c.b16 %v10936, %v10934
      %v11023 = vpack.c.b16 %v10939, %v10937
      %v11024 = vpack.c.b16 %v10940, %v10938
      %v11025 = vpack.c.b16 %v10943, %v10941
      %v11026 = vpack.c.b16 %v10944, %v10942
      %v11027 = vpack.c.b16 %v10947, %v10945
      %v11028 = vpack.c.b16 %v10948, %v10946
      %v11029 = vpack.c.b16 %v10951, %v10949
      %v11030 = vpack.c.b16 %v10952, %v10950
      %v11031 = vpack.c.b16 %v10955, %v10953
      %v11032 = vpack.c.b16 %v10956, %v10954
      %v11033 = vpack.c.b16 %v10959, %v10957
      %v11034 = vpack.c.b16 %v10960, %v10958
      %v11035 = vpack.c.b16 %v10963, %v10961
      %v11036 = vpack.c.b16 %v10964, %v10962
      %v11037 = vpack.c.b16 %v10967, %v10965
      %v11038 = vpack.c.b16 %v10968, %v10966
      %v11039 = vpack.c.b16 %v10971, %v10969
      %v11040 = vpack.c.b16 %v10972, %v10970
      %v11041 = vpack.c.b16 %v10975, %v10973
      %v11042 = vpack.c.b16 %v10976, %v10974
      %v11043 = vpack.c.b16 %v10979, %v10977
      %v11044 = vpack.c.b16 %v10980, %v10978
      %v11045 = vpack.c.b16 %v10983, %v10981
      %v11046 = vpack.c.b16 %v10984, %v10982
      %v11047 = vpack.c.b16 %v10987, %v10985
      %v11048 = vpack.c.b16 %v10988, %v10986
      %v11049 = vpack.c.b16 %v10991, %v10989
      %v11050 = vpack.c.b16 %v10992, %v10990
      %v11051 = vpack.c.b16 %v10995, %v10993
      %v11052 = vpack.c.b16 %v10996, %v10994
      %v11053 = vpack.c.b16 %v10999, %v10997
      %v11054 = vpack.c.b16 %v11000, %v10998
      %v11055 = vpack.c.b16 %v11001, %v11001
      %v11056 = vpack.c.b16 %v11002, %v11002
      %vm11109 = vcmask 293888
      %v11111 = vsel %vm11109, %v10786, 0
      %v11114 = vsel %vm11109, %v10790, 0
      %vm11116 = vcmask 1041408
      %v11118 = vsel %vm11116, %v11055, 0
      %v11121 = vsel %vm11116, %v11056, 0
      %11123 = vmatprep.subr.bf16.mxu0 %v11004
      %11124 = vmatpush1.bf16.msra.mxu0 %v11003
      %11125 = vmatprep.subr.bf16.mxu0 %v11006
      %11126 = vmatpush1.bf16.msra.mxu0 %v11005
      %11127 = vmatprep.subr.bf16.mxu0 %v11008
      %11128 = vmatpush1.bf16.msra.mxu0 %v11007
      %11129 = vmatprep.subr.bf16.mxu0 %v11010
      %11130 = vmatpush1.bf16.msra.mxu0 %v11009
      %11131 = vmatprep.subr.bf16.mxu0 %v11012
      %11132 = vmatpush1.bf16.msra.mxu0 %v11011
      %11133 = vmatprep.subr.bf16.mxu0 %v11014
      %11134 = vmatpush1.bf16.msra.mxu0 %v11013
      %11135 = vmatprep.subr.bf16.mxu0 %v11016
      %11136 = vmatpush1.bf16.msra.mxu0 %v11015
      %11137 = vmatprep.subr.bf16.mxu0 %v11018
      %11138 = vmatpush1.bf16.msra.mxu0 %v11017
      %11139 = vmatprep.subr.bf16.mxu0 %v11020
      %11140 = vmatpush1.bf16.msra.mxu0 %v11019
      %11141 = vmatprep.subr.bf16.mxu0 %v11022
      %11142 = vmatpush1.bf16.msra.mxu0 %v11021
      %11143 = vmatprep.subr.bf16.mxu0 %v11024
      %11144 = vmatpush1.bf16.msra.mxu0 %v11023
      %11145 = vmatprep.subr.bf16.mxu0 %v11026
      %11146 = vmatpush1.bf16.msra.mxu0 %v11025
      %11147 = vmatprep.subr.bf16.mxu0 %v11028
      %11148 = vmatpush1.bf16.msra.mxu0 %v11027
      %11149 = vmatprep.subr.bf16.mxu0 %v11030
      %11150 = vmatpush1.bf16.msra.mxu0 %v11029
      %11151 = vmatprep.subr.bf16.mxu0 %v11032
      %11152 = vmatpush1.bf16.msra.mxu0 %v11031
      %11153 = vmatprep.subr.bf16.mxu0 %v11034
      %11154 = vmatpush1.bf16.msra.mxu0 %v11033
      %11155 = vmatprep.mubr.bf16.mxu0 %v10784
      %11156 = vmatmul.mubr.bf16.gmra.mrb[0].mxu0 %v10783
      %v11157 = vpop.f32.mrb[0].mxu0
      %v11158 = vadd.f32 0.0, %v11157
      %v11159 = vpop.f32.mrb[0].mxu0
      %v11160 = vadd.f32 0.0, %v11159
      %v11161 = vpop.f32.mrb[0].mxu0
      %v11162 = vadd.f32 0.0, %v11161
      %v11163 = vpop.f32.mrb[0].mxu0
      %v11164 = vadd.f32 0.0, %v11163
      %11165 = vmatprep.mubr.bf16.mxu0 %v10788
      %11166 = vmatmul.mubr.bf16.gmra.mrb[0].mxu0 %v10787
      %v11167 = vpop.f32.mrb[0].mxu0
      %v11168 = vadd.f32 0.0, %v11167
      %v11169 = vpop.f32.mrb[0].mxu0
      %v11170 = vadd.f32 0.0, %v11169
      %v11171 = vpop.f32.mrb[0].mxu0
      %v11172 = vpop.f32.mrb[0].mxu0
      %11173 = vdwg.mxu0
      %11174 = vmatprep.subr.bf16.mxu0 %v11036
      %11175 = vmatpush1.bf16.msra.mxu0 %v11035
      %11176 = vmatprep.subr.bf16.mxu0 %v11038
      %11177 = vmatpush1.bf16.msra.mxu0 %v11037
      %11178 = vmatprep.subr.bf16.mxu0 %v11040
      %11179 = vmatpush1.bf16.msra.mxu0 %v11039
      %11180 = vmatprep.subr.bf16.mxu0 %v11042
      %11181 = vmatpush1.bf16.msra.mxu0 %v11041
      %11182 = vmatprep.subr.bf16.mxu0 %v11044
      %11183 = vmatpush1.bf16.msra.mxu0 %v11043
      %11184 = vmatprep.subr.bf16.mxu0 %v11046
      %11185 = vmatpush1.bf16.msra.mxu0 %v11045
      %11186 = vmatprep.subr.bf16.mxu0 %v11048
      %11187 = vmatpush1.bf16.msra.mxu0 %v11047
      %11188 = vmatprep.subr.bf16.mxu0 %v11050
      %11189 = vmatpush1.bf16.msra.mxu0 %v11049
      %11190 = vmatprep.subr.bf16.mxu0 %v11052
      %11191 = vmatpush1.bf16.msra.mxu0 %v11051
      %11192 = vmatprep.subr.bf16.mxu0 %v11054
      %11193 = vmatpush1.bf16.msra.mxu0 %v11053
      %11194 = vmatprep.subr.bf16.mxu0 %v11121
      %11195 = vmatpush1.bf16.msra.mxu0 %v11118
      %11196 = vmatprep.subr.bf16.mxu0 0
      %11197 = vmatpush1.bf16.msra.mxu0 0
      %11198 = vmatprep.subr.bf16.mxu0 0
      %11199 = vmatpush1.bf16.msra.mxu0 0
      %11200 = vmatprep.subr.bf16.mxu0 0
      %11201 = vmatpush1.bf16.msra.mxu0 0
      %11202 = vmatprep.subr.bf16.mxu0 0
      %11203 = vmatpush1.bf16.msra.mxu0 0
      %11204 = vmatprep.subr.bf16.mxu0 0
      %11205 = vmatpush1.bf16.msra.mxu0 0
      %11206 = vmatprep.mubr.bf16.mxu0 %v11111
      %11207 = vmatmul.mubr.bf16.gmra.mrb[0].mxu0 %v10785
      %v11208 = vpop.f32.mrb[0].mxu0
      %v11209 = vadd.f32 %v11158, %v11208
      %v11210 = vpop.f32.mrb[0].mxu0
      %v11211 = vadd.f32 %v11160, %v11210
      %v11212 = vpop.f32.mrb[0].mxu0
      %v11213 = vadd.f32 %v11162, %v11212
      %v11214 = vpop.f32.mrb[0].mxu0
      %v11215 = vadd.f32 %v11164, %v11214
      %11216 = vmatprep.mubr.bf16.mxu0 %v11114
      %11217 = vmatmul.mubr.bf16.gmra.mrb[0].mxu0 %v10789
      %v11218 = vpop.f32.mrb[0].mxu0
      %v11219 = vadd.f32 %v11168, %v11218
      %v11220 = vpop.f32.mrb[0].mxu0
      %v11221 = vadd.f32 %v11170, %v11220
      %v11222 = vpop.f32.mrb[0].mxu0
      %v11223 = vpop.f32.mrb[0].mxu0
      %11224 = vdwg.mxu0
      %v11225 = vld [vmem:[%s12] sm:$0xff]
      %v11226 = vld [vmem:[%s12 + $0x8] sm:$0xff]
      %v11227 = vld [vmem:[%s12 + $0x10] sm:$0xff]
      %v11228 = vld [vmem:[%s12 + $0x18] sm:$0xff]
      %v11229 = vld [vmem:[%s12 + $0x20] sm:$0xff]
      %v11230 = vld [vmem:[%s12 + $0x28] sm:$0xff]
      %v11231 = vld [vmem:[%s12 + $0x30] sm:$0xff]
      %v11232 = vld [vmem:[%s12 + $0x38] sm:$0xff]
      %v11233 = vld [vmem:[%s12 + $0x40] sm:$0xff]
      %v11234 = vld [vmem:[%s12 + $0x48] sm:$0xff]
      %v11235 = vld [vmem:[%s12 + $0x50] sm:$0xff]
      %v11236 = vld [vmem:[%s12 + $0x58] sm:$0xff]
      %v11237 = vld [vmem:[%s12 + $0x60] sm:$0xff]
      %v11238 = vld [vmem:[%s12 + $0x68] sm:$0xff]
      %v11239 = vld [vmem:[%s12 + $0x70] sm:$0xff]
      %v11240 = vld [vmem:[%s12 + $0x78] sm:$0xff]
      %v11241 = vld [vmem:[%s12 + $0x80] sm:$0xff]
      %v11242 = vld [vmem:[%s12 + $0x88] sm:$0xff]
      %v11243 = vld [vmem:[%s12 + $0x90] sm:$0xff]
      %v11244 = vld [vmem:[%s12 + $0x98] sm:$0xff]
      %v11245 = vld [vmem:[%s12 + $0xa0] sm:$0xff]
      %v11246 = vld [vmem:[%s12 + $0xa8] sm:$0xff]
      %v11247 = vld [vmem:[%s12 + $0xb0] sm:$0xff]
      %v11248 = vld [vmem:[%s12 + $0xb8] sm:$0xff]
      %v11249 = vld [vmem:[%s12 + $0xc0] sm:$0xff]
      %v11250 = vld [vmem:[%s12 + $0xc8] sm:$0xff]
      %v11251 = vld [vmem:[%s12 + $0xd0] sm:$0xff]
      %v11252 = vld [vmem:[%s12 + $0xd8] sm:$0xff]
      %v11253 = vld [vmem:[%s12 + $0xe0] sm:$0xff]
      %v11254 = vld [vmem:[%s12 + $0xe8] sm:$0xff]
      %v11255 = vld [vmem:[%s12 + $0xf0] sm:$0xff]
      %v11256 = vld [vmem:[%s12 + $0xf8] sm:$0xff]
      %v11257 = vld [vmem:[%s12 + $0x100] sm:$0xff]
      %v11258 = vld [vmem:[%s12 + $0x108] sm:$0xff]
      %v11259 = vld [vmem:[%s12 + $0x110] sm:$0xff]
      %v11260 = vld [vmem:[%s12 + $0x118] sm:$0xff]
      %v11261 = vld [vmem:[%s12 + $0x120] sm:$0xff]
      %v11262 = vld [vmem:[%s12 + $0x128] sm:$0xff]
      %v11263 = vld [vmem:[%s12 + $0x130] sm:$0xff]
      %v11264 = vld [vmem:[%s12 + $0x138] sm:$0xff]
      %v11265 = vld [vmem:[%s12 + $0x140] sm:$0xff]
      %v11266 = vld [vmem:[%s12 + $0x148] sm:$0xff]
      %v11267 = vld [vmem:[%s12 + $0x150] sm:$0xff]
      %v11268 = vld [vmem:[%s12 + $0x158] sm:$0xff]
      %v11269 = vld [vmem:[%s12 + $0x160] sm:$0xff]
      %v11270 = vld [vmem:[%s12 + $0x168] sm:$0xff]
      %v11271 = vld [vmem:[%s12 + $0x170] sm:$0xff]
      %v11272 = vld [vmem:[%s12 + $0x178] sm:$0xff]
      %v11273 = vld [vmem:[%s12 + $0x180] sm:$0xff]
      %v11274 = vld [vmem:[%s12 + $0x188] sm:$0xff]
      %v11275 = vld [vmem:[%s12 + $0x190] sm:$0xff]
      %v11276 = vld [vmem:[%s12 + $0x198] sm:$0xff]
      %v11277 = vld [vmem:[%s12 + $0x1a0] sm:$0x33]
      %v11331 = vunpack.c.l.b16 %v11225
      %v11332 = vunpack.c.h.b16 %v11225
      %v11333 = vunpack.c.l.b16 %v11226
      %v11334 = vunpack.c.h.b16 %v11226
      %v11335 = vunpack.c.l.b16 %v11227
      %v11336 = vunpack.c.h.b16 %v11227
      %v11337 = vunpack.c.l.b16 %v11228
      %v11338 = vunpack.c.h.b16 %v11228
      %v11339 = vunpack.c.l.b16 %v11229
      %v11340 = vunpack.c.h.b16 %v11229
      %v11341 = vunpack.c.l.b16 %v11230
      %v11342 = vunpack.c.h.b16 %v11230
      %v11343 = vunpack.c.l.b16 %v11231
      %v11344 = vunpack.c.h.b16 %v11231
      %v11345 = vunpack.c.l.b16 %v11232
      %v11346 = vunpack.c.h.b16 %v11232
      %v11347 = vunpack.c.l.b16 %v11233
      %v11348 = vunpack.c.h.b16 %v11233
      %v11349 = vunpack.c.l.b16 %v11234
      %v11350 = vunpack.c.h.b16 %v11234
      %v11351 = vunpack.c.l.b16 %v11235
      %v11352 = vunpack.c.h.b16 %v11235
      %v11353 = vunpack.c.l.b16 %v11236
      %v11354 = vunpack.c.h.b16 %v11236
      %v11355 = vunpack.c.l.b16 %v11237
      %v11356 = vunpack.c.h.b16 %v11237
      %v11357 = vunpack.c.l.b16 %v11238
      %v11358 = vunpack.c.h.b16 %v11238
      %v11359 = vunpack.c.l.b16 %v11239
      %v11360 = vunpack.c.h.b16 %v11239
      %v11361 = vunpack.c.l.b16 %v11240
      %v11362 = vunpack.c.h.b16 %v11240
      %v11363 = vunpack.c.l.b16 %v11241
      %v11364 = vunpack.c.h.b16 %v11241
      %v11365 = vunpack.c.l.b16 %v11242
      %v11366 = vunpack.c.h.b16 %v11242
      %v11367 = vunpack.c.l.b16 %v11243
      %v11368 = vunpack.c.h.b16 %v11243
      %v11369 = vunpack.c.l.b16 %v11244
      %v11370 = vunpack.c.h.b16 %v11244
      %v11371 = vunpack.c.l.b16 %v11245
      %v11372 = vunpack.c.h.b16 %v11245
      %v11373 = vunpack.c.l.b16 %v11246
      %v11374 = vunpack.c.h.b16 %v11246
      %v11375 = vunpack.c.l.b16 %v11247
      %v11376 = vunpack.c.h.b16 %v11247
      %v11377 = vunpack.c.l.b16 %v11248
      %v11378 = vunpack.c.h.b16 %v11248
      %v11379 = vunpack.c.l.b16 %v11249
      %v11380 = vunpack.c.h.b16 %v11249
      %v11381 = vunpack.c.l.b16 %v11250
      %v11382 = vunpack.c.h.b16 %v11250
      %v11383 = vunpack.c.l.b16 %v11251
      %v11384 = vunpack.c.h.b16 %v11251
      %v11385 = vunpack.c.l.b16 %v11252
      %v11386 = vunpack.c.h.b16 %v11252
      %v11387 = vunpack.c.l.b16 %v11253
      %v11388 = vunpack.c.h.b16 %v11253
      %v11389 = vunpack.c.l.b16 %v11254
      %v11390 = vunpack.c.h.b16 %v11254
      %v11391 = vunpack.c.l.b16 %v11255
      %v11392 = vunpack.c.h.b16 %v11255
      %v11393 = vunpack.c.l.b16 %v11256
      %v11394 = vunpack.c.h.b16 %v11256
      %v11395 = vunpack.c.l.b16 %v11257
      %v11396 = vunpack.c.h.b16 %v11257
      %v11397 = vunpack.c.l.b16 %v11258
      %v11398 = vunpack.c.h.b16 %v11258
      %v11399 = vunpack.c.l.b16 %v11259
      %v11400 = vunpack.c.h.b16 %v11259
      %v11401 = vunpack.c.l.b16 %v11260
      %v11402 = vunpack.c.h.b16 %v11260
      %v11403 = vunpack.c.l.b16 %v11261
      %v11404 = vunpack.c.h.b16 %v11261
      %v11405 = vunpack.c.l.b16 %v11262
      %v11406 = vunpack.c.h.b16 %v11262
      %v11407 = vunpack.c.l.b16 %v11263
      %v11408 = vunpack.c.h.b16 %v11263
      %v11409 = vunpack.c.l.b16 %v11264
      %v11410 = vunpack.c.h.b16 %v11264
      %v11411 = vunpack.c.l.b16 %v11265
      %v11412 = vunpack.c.h.b16 %v11265
      %v11413 = vunpack.c.l.b16 %v11266
      %v11414 = vunpack.c.h.b16 %v11266
      %v11415 = vunpack.c.l.b16 %v11267
      %v11416 = vunpack.c.h.b16 %v11267
      %v11417 = vunpack.c.l.b16 %v11268
      %v11418 = vunpack.c.h.b16 %v11268
      %v11419 = vunpack.c.l.b16 %v11269
      %v11420 = vunpack.c.h.b16 %v11269
      %v11421 = vunpack.c.l.b16 %v11270
      %v11422 = vunpack.c.h.b16 %v11270
      %v11423 = vunpack.c.l.b16 %v11271
      %v11424 = vunpack.c.h.b16 %v11271
      %v11425 = vunpack.c.l.b16 %v11272
      %v11426 = vunpack.c.h.b16 %v11272
      %v11427 = vunpack.c.l.b16 %v11273
      %v11428 = vunpack.c.h.b16 %v11273
      %v11429 = vunpack.c.l.b16 %v11274
      %v11430 = vunpack.c.h.b16 %v11274
      %v11431 = vunpack.c.l.b16 %v11275
      %v11432 = vunpack.c.h.b16 %v11275
      %v11433 = vunpack.c.l.b16 %v11276
      %v11434 = vunpack.c.h.b16 %v11276
      %v11435 = vunpack.c.l.b16 %v11277
      %v11436 = vunpack.c.h.b16 %v11277
      %v11437 = vpack.c.b16 %v11333, %v11331
      %v11438 = vpack.c.b16 %v11334, %v11332
      %v11439 = vpack.c.b16 %v11337, %v11335
      %v11440 = vpack.c.b16 %v11338, %v11336
      %v11441 = vpack.c.b16 %v11341, %v11339
      %v11442 = vpack.c.b16 %v11342, %v11340
      %v11443 = vpack.c.b16 %v11345, %v11343
      %v11444 = vpack.c.b16 %v11346, %v11344
      %v11445 = vpack.c.b16 %v11349, %v11347
      %v11446 = vpack.c.b16 %v11350, %v11348
      %v11447 = vpack.c.b16 %v11353, %v11351
      %v11448 = vpack.c.b16 %v11354, %v11352
      %v11449 = vpack.c.b16 %v11357, %v11355
      %v11450 = vpack.c.b16 %v11358, %v11356
      %v11451 = vpack.c.b16 %v11361, %v11359
      %v11452 = vpack.c.b16 %v11362, %v11360
      %v11453 = vpack.c.b16 %v11365, %v11363
      %v11454 = vpack.c.b16 %v11366, %v11364
      %v11455 = vpack.c.b16 %v11369, %v11367
      %v11456 = vpack.c.b16 %v11370, %v11368
      %v11457 = vpack.c.b16 %v11373, %v11371
      %v11458 = vpack.c.b16 %v11374, %v11372
      %v11459 = vpack.c.b16 %v11377, %v11375
      %v11460 = vpack.c.b16 %v11378, %v11376
      %v11461 = vpack.c.b16 %v11381, %v11379
      %v11462 = vpack.c.b16 %v11382, %v11380
      %v11463 = vpack.c.b16 %v11385, %v11383
      %v11464 = vpack.c.b16 %v11386, %v11384
      %v11465 = vpack.c.b16 %v11389, %v11387
      %v11466 = vpack.c.b16 %v11390, %v11388
      %v11467 = vpack.c.b16 %v11393, %v11391
      %v11468 = vpack.c.b16 %v11394, %v11392
      %v11469 = vpack.c.b16 %v11397, %v11395
      %v11470 = vpack.c.b16 %v11398, %v11396
      %v11471 = vpack.c.b16 %v11401, %v11399
      %v11472 = vpack.c.b16 %v11402, %v11400
      %v11473 = vpack.c.b16 %v11405, %v11403
      %v11474 = vpack.c.b16 %v11406, %v11404
      %v11475 = vpack.c.b16 %v11409, %v11407
      %v11476 = vpack.c.b16 %v11410, %v11408
      %v11477 = vpack.c.b16 %v11413, %v11411
      %v11478 = vpack.c.b16 %v11414, %v11412
      %v11479 = vpack.c.b16 %v11417, %v11415
      %v11480 = vpack.c.b16 %v11418, %v11416
      %v11481 = vpack.c.b16 %v11421, %v11419
      %v11482 = vpack.c.b16 %v11422, %v11420
      %v11483 = vpack.c.b16 %v11425, %v11423
      %v11484 = vpack.c.b16 %v11426, %v11424
      %v11485 = vpack.c.b16 %v11429, %v11427
      %v11486 = vpack.c.b16 %v11430, %v11428
      %v11487 = vpack.c.b16 %v11433, %v11431
      %v11488 = vpack.c.b16 %v11434, %v11432
      %v11489 = vpack.c.b16 %v11435, %v11435
      %v11490 = vpack.c.b16 %v11436, %v11436
      %v11544 = vsel %vm11116, %v11489, 0
      %v11547 = vsel %vm11116, %v11490, 0
      %11549 = vmatprep.subr.bf16.mxu0 %v11438
      %11550 = vmatpush1.bf16.msra.mxu0 %v11437
      %11551 = vmatprep.subr.bf16.mxu0 %v11440
      %11552 = vmatpush1.bf16.msra.mxu0 %v11439
      %11553 = vmatprep.subr.bf16.mxu0 %v11442
      %11554 = vmatpush1.bf16.msra.mxu0 %v11441
      %11555 = vmatprep.subr.bf16.mxu0 %v11444
      %11556 = vmatpush1.bf16.msra.mxu0 %v11443
      %11557 = vmatprep.subr.bf16.mxu0 %v11446
      %11558 = vmatpush1.bf16.msra.mxu0 %v11445
      %11559 = vmatprep.subr.bf16.mxu0 %v11448
      %11560 = vmatpush1.bf16.msra.mxu0 %v11447
      %11561 = vmatprep.subr.bf16.mxu0 %v11450
      %11562 = vmatpush1.bf16.msra.mxu0 %v11449
      %11563 = vmatprep.subr.bf16.mxu0 %v11452
      %11564 = vmatpush1.bf16.msra.mxu0 %v11451
      %11565 = vmatprep.subr.bf16.mxu0 %v11454
      %11566 = vmatpush1.bf16.msra.mxu0 %v11453
      %11567 = vmatprep.subr.bf16.mxu0 %v11456
      %11568 = vmatpush1.bf16.msra.mxu0 %v11455
      %11569 = vmatprep.subr.bf16.mxu0 %v11458
      %11570 = vmatpush1.bf16.msra.mxu0 %v11457
      %11571 = vmatprep.subr.bf16.mxu0 %v11460
      %11572 = vmatpush1.bf16.msra.mxu0 %v11459
      %11573 = vmatprep.subr.bf16.mxu0 %v11462
      %11574 = vmatpush1.bf16.msra.mxu0 %v11461
      %11575 = vmatprep.subr.bf16.mxu0 %v11464
      %11576 = vmatpush1.bf16.msra.mxu0 %v11463
      %11577 = vmatprep.subr.bf16.mxu0 %v11466
      %11578 = vmatpush1.bf16.msra.mxu0 %v11465
      %11579 = vmatprep.subr.bf16.mxu0 %v11468
      %11580 = vmatpush1.bf16.msra.mxu0 %v11467
      %11581 = vmatprep.mubr.bf16.mxu0 %v10784
      %11582 = vmatmul.mubr.bf16.gmra.mrb[0].mxu0 %v10783
      %v11583 = vpop.f32.mrb[0].mxu0
      %v11584 = vadd.f32 0.0, %v11583
      %v11585 = vpop.f32.mrb[0].mxu0
      %v11586 = vadd.f32 0.0, %v11585
      %v11587 = vpop.f32.mrb[0].mxu0
      %v11588 = vadd.f32 0.0, %v11587
      %v11589 = vpop.f32.mrb[0].mxu0
      %v11590 = vadd.f32 0.0, %v11589
      %11591 = vmatprep.mubr.bf16.mxu0 %v10788
      %11592 = vmatmul.mubr.bf16.gmra.mrb[0].mxu0 %v10787
      %v11593 = vpop.f32.mrb[0].mxu0
      %v11594 = vadd.f32 0.0, %v11593
      %v11595 = vpop.f32.mrb[0].mxu0
      %v11596 = vadd.f32 0.0, %v11595
      %v11597 = vpop.f32.mrb[0].mxu0
      %v11598 = vpop.f32.mrb[0].mxu0
      %11599 = vdwg.mxu0
      %11600 = vmatprep.subr.bf16.mxu0 %v11470
      %11601 = vmatpush1.bf16.msra.mxu0 %v11469
      %11602 = vmatprep.subr.bf16.mxu0 %v11472
      %11603 = vmatpush1.bf16.msra.mxu0 %v11471
      %11604 = vmatprep.subr.bf16.mxu0 %v11474
      %11605 = vmatpush1.bf16.msra.mxu0 %v11473
      %11606 = vmatprep.subr.bf16.mxu0 %v11476
      %11607 = vmatpush1.bf16.msra.mxu0 %v11475
      %11608 = vmatprep.subr.bf16.mxu0 %v11478
      %11609 = vmatpush1.bf16.msra.mxu0 %v11477
      %11610 = vmatprep.subr.bf16.mxu0 %v11480
      %11611 = vmatpush1.bf16.msra.mxu0 %v11479
      %11612 = vmatprep.subr.bf16.mxu0 %v11482
      %11613 = vmatpush1.bf16.msra.mxu0 %v11481
      %11614 = vmatprep.subr.bf16.mxu0 %v11484
      %11615 = vmatpush1.bf16.msra.mxu0 %v11483
      %11616 = vmatprep.subr.bf16.mxu0 %v11486
      %11617 = vmatpush1.bf16.msra.mxu0 %v11485
      %11618 = vmatprep.subr.bf16.mxu0 %v11488
      %11619 = vmatpush1.bf16.msra.mxu0 %v11487
      %11620 = vmatprep.subr.bf16.mxu0 %v11547
      %11621 = vmatpush1.bf16.msra.mxu0 %v11544
      %11622 = vmatprep.subr.bf16.mxu0 0
      %11623 = vmatpush1.bf16.msra.mxu0 0
      %11624 = vmatprep.subr.bf16.mxu0 0
      %11625 = vmatpush1.bf16.msra.mxu0 0
      %11626 = vmatprep.subr.bf16.mxu0 0
      %11627 = vmatpush1.bf16.msra.mxu0 0
      %11628 = vmatprep.subr.bf16.mxu0 0
      %11629 = vmatpush1.bf16.msra.mxu0 0
      %11630 = vmatprep.subr.bf16.mxu0 0
      %11631 = vmatpush1.bf16.msra.mxu0 0
      %11632 = vmatprep.mubr.bf16.mxu0 %v11111
      %11633 = vmatmul.mubr.bf16.gmra.mrb[0].mxu0 %v10785
      %v11634 = vpop.f32.mrb[0].mxu0
      %v11635 = vadd.f32 %v11584, %v11634
      %v11636 = vpop.f32.mrb[0].mxu0
      %v11637 = vadd.f32 %v11586, %v11636
      %v11638 = vpop.f32.mrb[0].mxu0
      %v11639 = vadd.f32 %v11588, %v11638
      %v11640 = vpop.f32.mrb[0].mxu0
      %v11641 = vadd.f32 %v11590, %v11640
      %11642 = vmatprep.mubr.bf16.mxu0 %v11114
      %11643 = vmatmul.mubr.bf16.gmra.mrb[0].mxu0 %v10789
      %v11644 = vpop.f32.mrb[0].mxu0
      %v11645 = vadd.f32 %v11594, %v11644
      %v11646 = vpop.f32.mrb[0].mxu0
      %v11647 = vadd.f32 %v11596, %v11646
      %v11648 = vpop.f32.mrb[0].mxu0
      %v11649 = vpop.f32.mrb[0].mxu0
      %11650 = vdwg.mxu0
      %v11651 = vmax.f32 %v11209, %v11635
      %v11652 = vmax.f32 %v11211, %v11637
      %v11653 = vmax.f32 %v11213, %v11639
      %v11654 = vmax.f32 %v11215, %v11641
      %v11655 = vmax.f32 %v11219, %v11645
      %v11656 = vmax.f32 %v11221, %v11647
      %v11657 = vmax.f32 %v11651, 0.0
      %v11658 = vmax.f32 %v11652, 0.0
      %v11659 = vmax.f32 %v11653, 0.0
      %v11660 = vmax.f32 %v11654, 0.0
      %v11661 = vmax.f32 %v11655, 0.0
      %v11662 = vmax.f32 %v11656, 0.0
      %11663 = vst [vmem:[%s440] sm:$0xff] %v11657
      %vm11664 = vcmask 670720
      %11665 = vst.msk [vmem:[%s440 + $0x8] sm:$0xff] %vm11664, %v11658
      %11666 = vst [vmem:[%s440 + $0x10] sm:$0xff] %v11659
      %11667 = vst.msk [vmem:[%s440 + $0x18] sm:$0xff] %vm11664, %v11660
      %11668 = vst [vmem:[%s440 + $0x20] sm:$0x1f] %v11661
      %vm11669 = vcmask 667648
      %11670 = vst.msk [vmem:[%s440 + $0x28] sm:$0x1f] %vm11669, %v11662
      %p11671 = scmp.lt.s32.totalorder %s24, 1
      %s11672 = scalar_select %p11671, %s24, 1
      %s11673 = smul.addr %s11672, 6
      %s11674 = smul.addr %s11673, 8
      %s11675 = scalar_lea.vmem %s13, %s11674
      // Predicated region
      $region73: #{tpu_custom_call.1} parent=71 // pred_check
        %p11676 = pneg %p320
      $region74: #{tpu_custom_call.1} parent=71 // pred_check_branch
        %11678 = sbr.rel (%p11676) target = $region76
      $region75: #{tpu_custom_call.1} parent=71 // pred_region
        _
      $region76: #{tpu_custom_call.1} parent=71 // pred_fallthru
        _
    $region72: #{tpu_custom_call.1} parent=5 // pred_fallthru
      _
    %p11679 = scmp.le.s32.totalorder 2, %s19
    // Predicated region
    $region77: #{tpu_custom_call.1} parent=5 // pred_check
      %p11680 = pneg %p11679
    $region78: #{tpu_custom_call.1} parent=5 // pred_check_branch
      %11682 = sbr.rel (%p11680) target = $region80
    $region79: #{tpu_custom_call.1} parent=5 // pred_region
      %s11683 = ssub.s32 %s19, 2
      // Predicated region
      $region81: #{tpu_custom_call.1} parent=79 // pred_check
        %p11684 = pneg %p326
      $region82: #{tpu_custom_call.1} parent=79 // pred_check_branch
        %11686 = sbr.rel (%p11684) target = $region84
      $region83: #{tpu_custom_call.1} parent=79 // pred_region
        %p11687 = scmp.lt.s32.totalorder %s25, 1
        %s11688 = scalar_select %p11687, %s25, 1
        %s11689 = smul.addr %s11688, 6
        %s11690 = smul.addr %s11689, 8
        %s11691 = scalar_lea.vmem %s13, %s11690
      $region84: #{tpu_custom_call.1} parent=79 // pred_fallthru
        _
    $region80: #{tpu_custom_call.1} parent=5 // pred_fallthru
      _
  $region6: #{tpu_custom_call.1} parent=0 // loop_footer
    %s23 = sadd.s32 1, %s19
  $region7: #{tpu_custom_call.1} parent=0 // loop_footer_branch
    %18 = sbr.rel target = $region3
  $region8: #{tpu_custom_call.1} parent=0 // loop_exit
    _

</llo_original>
